<compile_context>
chip_gen: v7x
topology: tpu7x:2x2x1
jax: 0.10.0
libtpu: 0.0.40
codegen_flags: <defaults>
</compile_context>

<pallas_src>
import functools

import jax
import jax.numpy as jnp
from jax import lax
from jax.experimental import pallas as pl
from jax.experimental.pallas import tpu as pltpu


def _round_up(a, b):
  return (a + b - 1) // b * b


def _vmem_limit_bytes():
  cap = None
  try:
    cap = getattr(pltpu.get_tpu_info(), "vmem_capacity_bytes", None)
  except Exception:
    cap = None
  if not cap:
    cap = 64 * 1024 * 1024  # conservative default (v7x-sized)
  # ~5/8 of physical VMEM: ~40 MiB on v7x (64 MiB), 80 MiB on v5e/v6e (128 MiB).
  return int(max(32 * 1024 * 1024, min(cap * 5 // 8, 96 * 1024 * 1024)))


# ------------------------------ Pallas kernel -------------------------------

def _bottleneck_plane_kernel(
    x0_ref, xn_ref, mask_ref,          # raw plane 0 (resident / per-sample), raw plane d+1, interior mask
    w1_ref, w2_ref, w3_ref,            # (Cin,P), (9,3P,P), (P,Cexp); BN scale folded in
    b1_ref, b2_ref, b3_ref,            # (1,P), (1,P), (1,Cexp) folded BN shifts (f32)
    o_ref,                             # (1, H, W, Cexp)
    ring_ref,                          # VMEM (PSp, 3P): conv1 outputs of planes d-1, d, d+1
    xres_ref,                          # VMEM (PSp, Cin): raw plane d (residual carry)
    *, D, H, W, Wp, use_final_relu, compute_dtype):
  P = w1_ref.shape[1]
  Cexp = w3_ref.shape[1]
  PSp = ring_ref.shape[0]
  Lr = H * Wp
  d = pl.program_id(1)

  mask = mask_ref[...]                 # (PSp, 1) f32, 1.0 on interior pixels
  w1 = w1_ref[...]
  b1 = b1_ref[...]

  def conv1_bn_relu(x_raw):
    h = jnp.dot(x_raw.astype(compute_dtype), w1,
                preferred_element_type=jnp.float32)
    # Halo rows must be exactly zero: relu(bn1(0)) != 0 would otherwise leak
    # into conv2's implicit zero padding of the conv1 feature map.
    return (jnp.maximum(h + b1, 0.0) * mask).astype(compute_dtype)

  # ---- depth ring maintenance ------------------------------------------------
  @pl.when(d == 0)
  def _init_ring():                    # new batch sample
    xres_ref[...] = x0_ref[0, 0]                                     # raw plane 0
    ring_ref[:, pl.ds(0, P)] = jnp.zeros((PSp, P), compute_dtype)    # plane -1 (zero pad)
    ring_ref[:, pl.ds(P, P)] = conv1_bn_relu(x0_ref[0, 0])           # plane 0

  @pl.when(d > 0)
  def _shift_ring():                   # [d-2, d-1, d] -> [d-1, d, *]
    ring_ref[:, pl.ds(0, P)] = ring_ref[:, pl.ds(P, P)]
    ring_ref[:, pl.ds(P, P)] = ring_ref[:, pl.ds(2 * P, P)]

  @pl.when(d + 1 < D)
  def _conv1_next():
    ring_ref[:, pl.ds(2 * P, P)] = conv1_bn_relu(xn_ref[0, 0])       # plane d+1

  @pl.when(d + 1 >= D)
  def _zero_next():
    ring_ref[:, pl.ds(2 * P, P)] = jnp.zeros((PSp, P), compute_dtype)  # depth zero pad

  # ---- conv2 (3x3x3, pad 1): 9 shifted-row matmuls with K = 3P ----------------
  acc = jnp.zeros((Lr, P), jnp.float32)
  for dy in range(3):
    for dx in range(3):
      off = dy * Wp + dx
      acc = acc + jnp.dot(ring_ref[pl.ds(off, Lr), :], w2_ref[dy * 3 + dx],
                          preferred_element_type=jnp.float32)
  y2 = jnp.maximum(acc + b2_ref[...], 0.0)                           # bn2 shift + relu

  # ---- conv3 (1x1x1) + bn3 shift + residual (+ final relu), f32 epilogue ------
  y3 = jnp.dot(y2.astype(compute_dtype), w3_ref[...],
               preferred_element_type=jnp.float32) + b3_ref[...]
  y3 = y3 + xres_ref[pl.ds(Wp + 1, Lr), :].astype(jnp.float32)       # residual (plane d interior)
  if use_final_relu:
    y3 = jnp.maximum(y3, 0.0)

  # Single dense store: drop the alignment/padding columns of each image row.
  o_ref[0] = y3.reshape(H, Wp, Cexp)[:, :W, :].astype(o_ref.dtype)

  # Carry raw plane d+1 (clamped) for the next step's residual add.
  xres_ref[...] = xn_ref[0, 0]


# ------------------------------- JAX wrapper ---------------------------------

def bn_fold(gamma, beta, mean, var, eps=1e-5):
  scale = gamma / jnp.sqrt(var + eps)
  shift = beta - mean * scale
  return scale, shift


def bottleneck3d(x, params, use_final_relu=True, compute_dtype=None):
  """x: (N, D, H, W, Cin) with Cin == planes * 4 (stride 1, no downsample)."""
  n, dD, h, w, cin = x.shape
  planes = params["w1"].shape[1]
  cexp = params["w3"].shape[1]
  assert cexp == cin, "residual path requires inplanes == planes * expansion"
  if compute_dtype is None:
    compute_dtype = x.dtype          # pass jnp.bfloat16 for full MXU rate (v5e/v6e/v7x)
  compute_dtype = jnp.dtype(compute_dtype)

  # Sublane-aligned row stride of the flattened padded plane.
  sub = max(8, 32 // compute_dtype.itemsize)       # 8 for f32, 16 for bf16
  wp = _round_up(w + 2, sub)
  psp = (h + 2) * wp + sub                         # tap offsets reach 2*wp+2 past H*wp rows
  lr = h * wp

  s1, b1 = bn_fold(*params["bn1"])
  s2, b2 = bn_fold(*params["bn2"])
  s3, b3 = bn_fold(*params["bn3"])

  # Fold BN scale into the conv output channels; keep only the shift as bias.
  w1f = (params["w1"] * s1[None, :]).astype(compute_dtype)
  w2f = (params["w2"] * s2[None, :]).reshape(3, 3, 3, planes, planes)
  # Merge the 3 depth taps along the MXU K dimension: (kH,kW) x (kD*P) x P.
  w2f = jnp.transpose(w2f, (1, 2, 0, 3, 4)).reshape(9, 3 * planes, planes)
  w2f = w2f.astype(compute_dtype)
  w3f = (params["w3"] * s3[None, :]).astype(compute_dtype)
  b1f = b1.reshape(1, planes).astype(jnp.float32)
  b2f = b2.reshape(1, planes).astype(jnp.float32)
  b3f = b3.reshape(1, cexp).astype(jnp.float32)

  # Zero-pad H/W by 1, pad W to the aligned stride wp, and flatten each plane
  # row-major to (psp, Cin).  Depth is NOT padded: the kernel masks the depth
  # edges and the leading-plane index is clamped in the index_map.
  xpad = jnp.pad(x, ((0, 0), (0, 0), (1, 1), (1, wp - w - 1), (0, 0)))
  xpad = xpad.reshape(n, dD, (h + 2) * wp, cin)
  xpad = jnp.pad(xpad, ((0, 0), (0, 0), (0, psp - (h + 2) * wp), (0, 0)))

  # Interior mask of a padded plane, precomputed once (no per-step iota/div/mod).
  my = (jnp.arange(h + 2) >= 1) & (jnp.arange(h + 2) <= h)
  mx = (jnp.arange(wp) >= 1) & (jnp.arange(wp) <= w)
  mask = (my[:, None] & mx[None, :]).reshape(-1)
  mask = jnp.pad(mask, (0, psp - (h + 2) * wp)).astype(jnp.float32).reshape(psp, 1)

  kernel = functools.partial(
      _bottleneck_plane_kernel, D=dD, H=h, W=w, Wp=wp,
      use_final_relu=use_final_relu, compute_dtype=compute_dtype)

  flops = 2 * n * dD * (psp * cin * planes                 # conv1 (once per plane)
                        + 9 * lr * 3 * planes * planes     # conv2 (merged taps)
                        + lr * planes * cexp)              # conv3
  bytes_accessed = (n * (dD + 1) * psp * cin * x.dtype.itemsize   # ~1 plane fetch / step
                    + n * dD * h * w * cexp * x.dtype.itemsize    # output
                    + (w1f.size + w2f.size + w3f.size) * compute_dtype.itemsize)

  def run(single_buffer_consts):
    def const_spec(shape):
      index_map = lambda ni, di, _nd=len(shape): (0,) * _nd
      if single_buffer_consts:
        return pl.BlockSpec(shape, index_map, pipeline_mode=pl.Buffered(1))
      return pl.BlockSpec(shape, index_map)

    in_specs = [
        # Raw plane 0: constant block index per sample -> DMA'd once per n,
        # only read at d == 0 (ring init + first residual).
        pl.BlockSpec((1, 1, psp, cin), lambda ni, di: (ni, 0, 0, 0)),
        # Leading raw plane d+1 (clamped at the top depth edge).
        pl.BlockSpec((1, 1, psp, cin),
                     lambda ni, di: (ni, jnp.minimum(di + 1, dD - 1), 0, 0)),
        const_spec((psp, 1)),                    # interior mask
        const_spec((cin, planes)),               # w1 (bn1 scale folded)
        const_spec((9, 3 * planes, planes)),     # w2, depth taps merged along K
        const_spec((planes, cexp)),              # w3 (bn3 scale folded)
        const_spec((1, planes)),                 # bn1 shift
        const_spec((1, planes)),                 # bn2 shift
        const_spec((1, cexp)),                   # bn3 shift
    ]
    out_spec = pl.BlockSpec((1, h, w, cexp),
                            lambda ni, di: (ni * dD + di, 0, 0, 0))

    return pl.pallas_call(
        kernel,
        out_shape=jax.ShapeDtypeStruct((n * dD, h, w, cexp), x.dtype),
        grid=(n, dD),
        in_specs=in_specs,
        out_specs=out_spec,
        scratch_shapes=[
            pltpu.VMEM((psp, 3 * planes), compute_dtype),  # conv1 depth ring
            pltpu.VMEM((psp, cin), x.dtype),               # residual plane carry
        ],
        compiler_params=pltpu.CompilerParams(
            # d must be sequential ("arbitrary"): the ring / residual scratch
            # carries state across the depth axis.  N stays "parallel".
            dimension_semantics=("parallel", "arbitrary"),
            vmem_limit_bytes=_vmem_limit_bytes()),
        cost_estimate=pl.CostEstimate(
            flops=flops, transcendentals=0, bytes_accessed=bytes_accessed),
    )(xpad, xpad, mask, w1f, w2f, w3f, b1f, b2f, b3f)

  try:
    out = run(single_buffer_consts=True)   # pl.Buffered(1) on constant operands
  except Exception:
    # TODO(synk): drop this fallback once Buffered(1) single-buffering of
    # constant-index operands is guaranteed on the deployed jax version.
    out = run(single_buffer_consts=False)

  return out.reshape(n, dD, h, w, cexp)


# ---------------------------- pure-JAX reference -----------------------------

def reference(x, params, use_final_relu=True, eps=1e-5):
  def bn(y, g, b, mu, v):
    return g * (y - mu) / jnp.sqrt(v + eps) + b

  dn = ("NDHWC", "DHWIO", "NDHWC")
  cin = x.shape[-1]
  planes = params["w1"].shape[1]
  w1 = params["w1"].reshape(1, 1, 1, cin, planes)
  w2 = params["w2"].reshape(3, 3, 3, planes, planes)
  w3 = params["w3"].reshape(1, 1, 1, planes, 4 * planes)

  out = lax.conv_general_dilated(x, w1, (1, 1, 1), "VALID", dimension_numbers=dn)
  out = jax.nn.relu(bn(out, *params["bn1"]))
  out = lax.conv_general_dilated(out, w2, (1, 1, 1), [(1, 1)] * 3,
                                 dimension_numbers=dn)
  out = jax.nn.relu(bn(out, *params["bn2"]))
  out = lax.conv_general_dilated(out, w3, (1, 1, 1), "VALID",
                                 dimension_numbers=dn)
  out = bn(out, *params["bn3"]) + x
  if use_final_relu:
    out = jax.nn.relu(out)
  return out


# ---------------------------------- main -------------------------------------

if __name__ == "__main__":
  key = jax.random.PRNGKey(0)
  keys = jax.random.split(key, 8)

  N, D, H, W = 2, 4, 8, 8
  planes = 4
  inplanes = planes * 4          # expansion=4 -> residual add needs Cin == 4*planes

  x = jax.random.normal(keys[0], (N, D, H, W, inplanes), jnp.float32)

  def bn_params(k, c):
    k1, k2, k3, k4 = jax.random.split(k, 4)
    gamma = 1.0 + 0.1 * jax.random.normal(k1, (c,), jnp.float32)
    beta = 0.1 * jax.random.normal(k2, (c,), jnp.float32)
    mean = 0.1 * jax.random.normal(k3, (c,), jnp.float32)
    var = 1.0 + 0.1 * jax.random.uniform(k4, (c,), jnp.float32)
    return (gamma, beta, mean, var)

  params = {
      # conv weights stored as (K_in, C_out); K_in = Cin (1x1x1) or 27*planes (3x3x3)
      "w1": 0.1 * jax.random.normal(keys[1], (inplanes, planes), jnp.float32),
      "w2": 0.1 * jax.random.normal(keys[2], (27 * planes, planes), jnp.float32),
      "w3": 0.1 * jax.random.normal(keys[3], (planes, 4 * planes), jnp.float32),
      "bn1": bn_params(keys[4], planes),
      "bn2": bn_params(keys[5], planes),
      "bn3": bn_params(keys[6], 4 * planes),
  }

  ref = reference(x, params, use_final_relu=True)

  # f32 path: tight check against the pure-JAX reference.
  out = jax.block_until_ready(bottleneck3d(x, params, use_final_relu=True))
  err = float(jnp.max(jnp.abs(out - ref)))
  assert jnp.allclose(out, ref, atol=2e-4, rtol=2e-4), f"f32 max abs err {err}"

  # bf16 MXU path (recommended on v5e/v6e/v7x): bf16 matmul operands, f32
  # accumulation + f32 epilogue/residual.  Bounded-error check vs f32 reference.
  out_bf16 = jax.block_until_ready(
      bottleneck3d(x, params, use_final_relu=True, compute_dtype=jnp.bfloat16))
  assert bool(jnp.all(jnp.isfinite(out_bf16)))
  rel = float(jnp.linalg.norm((out_bf16 - ref).astype(jnp.float32)) /
              (float(jnp.linalg.norm(ref)) + 1e-12))
  assert rel < 0.05, f"bf16 relative L2 error {rel}"

  print("KERNEL_OK")
</pallas_src>

<mosaic_0001>
module attributes {stable_mosaic.version = 11 : i64} {
  func.func @_bottleneck_plane_kernel(%arg0: i32, %arg1: i32, %arg2: memref<1x1x168x16xf32, #tpu.memory_space<vmem>>, %arg3: memref<1x1x168x16xf32, #tpu.memory_space<vmem>>, %arg4: memref<168x1xf32, #tpu.memory_space<vmem>>, %arg5: memref<16x4xf32, #tpu.memory_space<vmem>>, %arg6: memref<9x12x4xf32, #tpu.memory_space<vmem>>, %arg7: memref<4x16xf32, #tpu.memory_space<vmem>>, %arg8: memref<1x4xf32, #tpu.memory_space<vmem>>, %arg9: memref<1x4xf32, #tpu.memory_space<vmem>>, %arg10: memref<1x16xf32, #tpu.memory_space<vmem>>, %arg11: memref<1x8x8x16xf32, #tpu.memory_space<vmem>>, %arg12: memref<168x12xf32, #tpu.memory_space<vmem>>, %arg13: memref<168x16xf32, #tpu.memory_space<vmem>>) attributes {dimension_semantics = [#tpu.dimension_semantics<parallel>, #tpu.dimension_semantics<arbitrary>], iteration_bounds = array<i64: 2, 4>, scalar_prefetch = 0 : i64, scratch_operands = 2 : i64, tpu.core_type = #tpu.core_type<tc>, window_params = [{transform_indices = @transform_0, window_bounds = array<i64: 1, 1, 168, 16>}, {transform_indices = @transform_1, window_bounds = array<i64: 1, 1, 168, 16>}, {pipeline_mode = #tpu.pipeline_mode<synchronous>, transform_indices = @transform_2, window_bounds = array<i64: 168, 1>}, {pipeline_mode = #tpu.pipeline_mode<synchronous>, transform_indices = @transform_3, window_bounds = array<i64: 16, 4>}, {pipeline_mode = #tpu.pipeline_mode<synchronous>, transform_indices = @transform_4, window_bounds = array<i64: 9, 12, 4>}, {pipeline_mode = #tpu.pipeline_mode<synchronous>, transform_indices = @transform_5, window_bounds = array<i64: 4, 16>}, {pipeline_mode = #tpu.pipeline_mode<synchronous>, transform_indices = @transform_6, window_bounds = array<i64: 1, 4>}, {pipeline_mode = #tpu.pipeline_mode<synchronous>, transform_indices = @transform_7, window_bounds = array<i64: 1, 4>}, {pipeline_mode = #tpu.pipeline_mode<synchronous>, transform_indices = @transform_8, window_bounds = array<i64: 1, 16>}, {transform_indices = @transform_9, window_bounds = array<i64: 1, 8, 8, 16>}]} {
    %c0 = arith.constant 0 : index
    %c0_0 = arith.constant 0 : index
    %0 = vector.load %arg4[%c0, %c0_0] : memref<168x1xf32, #tpu.memory_space<vmem>>, vector<168x1xf32>
    %c0_1 = arith.constant 0 : index
    %c0_2 = arith.constant 0 : index
    %1 = vector.load %arg5[%c0_1, %c0_2] : memref<16x4xf32, #tpu.memory_space<vmem>>, vector<16x4xf32>
    %c0_3 = arith.constant 0 : index
    %c0_4 = arith.constant 0 : index
    %2 = vector.load %arg8[%c0_3, %c0_4] : memref<1x4xf32, #tpu.memory_space<vmem>>, vector<1x4xf32>
    %c0_i32 = arith.constant 0 : i32
    %3 = arith.cmpi eq, %arg1, %c0_i32 : i32
    %4 = arith.extui %3 : i1 to i32
    %c0_i32_5 = arith.constant 0 : i32
    %5 = arith.cmpi ne, %4, %c0_i32_5 : i32
    scf.if %5 {
      %c0_73 = arith.constant 0 : index
      %c0_74 = arith.constant 0 : index
      %c0_75 = arith.constant 0 : index
      %c0_76 = arith.constant 0 : index
      %85 = vector.load %arg2[%c0_73, %c0_74, %c0_75, %c0_76] : memref<1x1x168x16xf32, #tpu.memory_space<vmem>>, vector<1x1x168x16xf32>
      %86 = vector.shape_cast %85 : vector<1x1x168x16xf32> to vector<168x16xf32>
      %c0_77 = arith.constant 0 : index
      %c0_78 = arith.constant 0 : index
      %87 = vector.load %arg13[%c0_77, %c0_78] : memref<168x16xf32, #tpu.memory_space<vmem>>, vector<168x16xf32>
      tpu.vector_store %arg13[%c0_77, %c0_78], %86 {strides = array<i32>} : memref<168x16xf32, #tpu.memory_space<vmem>>, vector<168x16xf32>,
      %cst_79 = arith.constant 0.000000e+00 : f32
      %88 = vector.broadcast %cst_79 : f32 to vector<168x4xf32>
      %c0_80 = arith.constant 0 : index
      %c0_81 = arith.constant 0 : index
      %89 = vector.load %arg12[%c0_80, %c0_81] : memref<168x12xf32, #tpu.memory_space<vmem>>, vector<168x4xf32>
      tpu.vector_store %arg12[%c0_80, %c0_81], %88 {strides = array<i32>} : memref<168x12xf32, #tpu.memory_space<vmem>>, vector<168x4xf32>,
      %c0_82 = arith.constant 0 : index
      %c0_83 = arith.constant 0 : index
      %c0_84 = arith.constant 0 : index
      %c0_85 = arith.constant 0 : index
      %90 = vector.load %arg2[%c0_82, %c0_83, %c0_84, %c0_85] : memref<1x1x168x16xf32, #tpu.memory_space<vmem>>, vector<1x1x168x16xf32>
      %91 = vector.shape_cast %90 : vector<1x1x168x16xf32> to vector<168x16xf32>
      %cst_86 = arith.constant dense<0.000000e+00> : vector<168x4xf32>
      %92 = tpu.matmul %91, %1, %cst_86 {dimension_numbers = #tpu.dot_dimension_numbers<[1], [0], [0], [1], [0, 0, 1, 1], [], []>} : vector<168x16xf32>, vector<16x4xf32>, vector<168x4xf32> -> vector<168x4xf32>
      %93 = vector.broadcast %2 : vector<1x4xf32> to vector<168x4xf32>
      %94 = arith.addf %92, %93 : vector<168x4xf32>
      %cst_87 = arith.constant 0.000000e+00 : f32
      %95 = vector.broadcast %cst_87 : f32 to vector<168x4xf32>
      %96 = arith.maximumf %94, %95 : vector<168x4xf32>
      %97 = vector.broadcast %0 : vector<168x1xf32> to vector<168x4xf32>
      %98 = arith.mulf %96, %97 : vector<168x4xf32>
      %c0_88 = arith.constant 0 : index
      %c4_89 = arith.constant 4 : index
      %99 = vector.load %arg12[%c0_88, %c4_89] : memref<168x12xf32, #tpu.memory_space<vmem>>, vector<168x4xf32>
      tpu.vector_store %arg12[%c0_88, %c4_89], %98 {strides = array<i32>} : memref<168x12xf32, #tpu.memory_space<vmem>>, vector<168x4xf32>,
    } else {
    }
    %c0_i32_6 = arith.constant 0 : i32
    %6 = arith.cmpi sgt, %arg1, %c0_i32_6 : i32
    %7 = arith.extui %6 : i1 to i32
    %c0_i32_7 = arith.constant 0 : i32
    %8 = arith.cmpi ne, %7, %c0_i32_7 : i32
    scf.if %8 {
      %c0_73 = arith.constant 0 : index
      %c4_74 = arith.constant 4 : index
      %85 = vector.load %arg12[%c0_73, %c4_74] : memref<168x12xf32, #tpu.memory_space<vmem>>, vector<168x4xf32>
      %c0_75 = arith.constant 0 : index
      %c0_76 = arith.constant 0 : index
      %86 = vector.load %arg12[%c0_75, %c0_76] : memref<168x12xf32, #tpu.memory_space<vmem>>, vector<168x4xf32>
      tpu.vector_store %arg12[%c0_75, %c0_76], %85 {strides = array<i32>} : memref<168x12xf32, #tpu.memory_space<vmem>>, vector<168x4xf32>,
      %c0_77 = arith.constant 0 : index
      %c8_78 = arith.constant 8 : index
      %87 = vector.load %arg12[%c0_77, %c8_78] : memref<168x12xf32, #tpu.memory_space<vmem>>, vector<168x4xf32>
      %c0_79 = arith.constant 0 : index
      %c4_80 = arith.constant 4 : index
      %88 = vector.load %arg12[%c0_79, %c4_80] : memref<168x12xf32, #tpu.memory_space<vmem>>, vector<168x4xf32>
      tpu.vector_store %arg12[%c0_79, %c4_80], %87 {strides = array<i32>} : memref<168x12xf32, #tpu.memory_space<vmem>>, vector<168x4xf32>,
    } else {
    }
    %c1_i32 = arith.constant 1 : i32
    %9 = arith.addi %arg1, %c1_i32 : i32
    %c4_i32 = arith.constant 4 : i32
    %10 = arith.cmpi slt, %9, %c4_i32 : i32
    %11 = arith.extui %10 : i1 to i32
    %c0_i32_8 = arith.constant 0 : i32
    %12 = arith.cmpi ne, %11, %c0_i32_8 : i32
    scf.if %12 {
      %c0_73 = arith.constant 0 : index
      %c0_74 = arith.constant 0 : index
      %c0_75 = arith.constant 0 : index
      %c0_76 = arith.constant 0 : index
      %85 = vector.load %arg3[%c0_73, %c0_74, %c0_75, %c0_76] : memref<1x1x168x16xf32, #tpu.memory_space<vmem>>, vector<1x1x168x16xf32>
      %86 = vector.shape_cast %85 : vector<1x1x168x16xf32> to vector<168x16xf32>
      %cst_77 = arith.constant dense<0.000000e+00> : vector<168x4xf32>
      %87 = tpu.matmul %86, %1, %cst_77 {dimension_numbers = #tpu.dot_dimension_numbers<[1], [0], [0], [1], [0, 0, 1, 1], [], []>} : vector<168x16xf32>, vector<16x4xf32>, vector<168x4xf32> -> vector<168x4xf32>
      %88 = vector.broadcast %2 : vector<1x4xf32> to vector<168x4xf32>
      %89 = arith.addf %87, %88 : vector<168x4xf32>
      %cst_78 = arith.constant 0.000000e+00 : f32
      %90 = vector.broadcast %cst_78 : f32 to vector<168x4xf32>
      %91 = arith.maximumf %89, %90 : vector<168x4xf32>
      %92 = vector.broadcast %0 : vector<168x1xf32> to vector<168x4xf32>
      %93 = arith.mulf %91, %92 : vector<168x4xf32>
      %c0_79 = arith.constant 0 : index
      %c8_80 = arith.constant 8 : index
      %94 = vector.load %arg12[%c0_79, %c8_80] : memref<168x12xf32, #tpu.memory_space<vmem>>, vector<168x4xf32>
      tpu.vector_store %arg12[%c0_79, %c8_80], %93 {strides = array<i32>} : memref<168x12xf32, #tpu.memory_space<vmem>>, vector<168x4xf32>,
    } else {
    }
    %c1_i32_9 = arith.constant 1 : i32
    %13 = arith.addi %arg1, %c1_i32_9 : i32
    %c4_i32_10 = arith.constant 4 : i32
    %14 = arith.cmpi sge, %13, %c4_i32_10 : i32
    %15 = arith.extui %14 : i1 to i32
    %c0_i32_11 = arith.constant 0 : i32
    %16 = arith.cmpi ne, %15, %c0_i32_11 : i32
    scf.if %16 {
      %cst_73 = arith.constant 0.000000e+00 : f32
      %85 = vector.broadcast %cst_73 : f32 to vector<168x4xf32>
      %c0_74 = arith.constant 0 : index
      %c8_75 = arith.constant 8 : index
      %86 = vector.load %arg12[%c0_74, %c8_75] : memref<168x12xf32, #tpu.memory_space<vmem>>, vector<168x4xf32>
      tpu.vector_store %arg12[%c0_74, %c8_75], %85 {strides = array<i32>} : memref<168x12xf32, #tpu.memory_space<vmem>>, vector<168x4xf32>,
    } else {
    }
    %cst = arith.constant 0.000000e+00 : f32
    %17 = vector.broadcast %cst : f32 to vector<128x4xf32>
    %c0_12 = arith.constant 0 : index
    %c0_13 = arith.constant 0 : index
    %18 = vector.load %arg12[%c0_12, %c0_13] : memref<168x12xf32, #tpu.memory_space<vmem>>, vector<128x12xf32>
    %c0_14 = arith.constant 0 : index
    %c0_15 = arith.constant 0 : index
    %c0_16 = arith.constant 0 : index
    %19 = vector.load %arg6[%c0_14, %c0_15, %c0_16] : memref<9x12x4xf32, #tpu.memory_space<vmem>>, vector<1x12x4xf32>
    %20 = vector.shape_cast %19 : vector<1x12x4xf32> to vector<12x4xf32>
    %cst_17 = arith.constant dense<0.000000e+00> : vector<128x4xf32>
    %21 = tpu.matmul %18, %20, %cst_17 {dimension_numbers = #tpu.dot_dimension_numbers<[1], [0], [0], [1], [0, 0, 1, 1], [], []>} : vector<128x12xf32>, vector<12x4xf32>, vector<128x4xf32> -> vector<128x4xf32>
    %22 = arith.addf %17, %21 : vector<128x4xf32>
    %c1 = arith.constant 1 : index
    %c0_18 = arith.constant 0 : index
    %23 = vector.load %arg12[%c1, %c0_18] : memref<168x12xf32, #tpu.memory_space<vmem>>, vector<128x12xf32>
    %c1_19 = arith.constant 1 : index
    %c0_20 = arith.constant 0 : index
    %c0_21 = arith.constant 0 : index
    %24 = vector.load %arg6[%c1_19, %c0_20, %c0_21] : memref<9x12x4xf32, #tpu.memory_space<vmem>>, vector<1x12x4xf32>
    %25 = vector.shape_cast %24 : vector<1x12x4xf32> to vector<12x4xf32>
    %cst_22 = arith.constant dense<0.000000e+00> : vector<128x4xf32>
    %26 = tpu.matmul %23, %25, %cst_22 {dimension_numbers = #tpu.dot_dimension_numbers<[1], [0], [0], [1], [0, 0, 1, 1], [], []>} : vector<128x12xf32>, vector<12x4xf32>, vector<128x4xf32> -> vector<128x4xf32>
    %27 = arith.addf %22, %26 : vector<128x4xf32>
    %c2 = arith.constant 2 : index
    %c0_23 = arith.constant 0 : index
    %28 = vector.load %arg12[%c2, %c0_23] : memref<168x12xf32, #tpu.memory_space<vmem>>, vector<128x12xf32>
    %c2_24 = arith.constant 2 : index
    %c0_25 = arith.constant 0 : index
    %c0_26 = arith.constant 0 : index
    %29 = vector.load %arg6[%c2_24, %c0_25, %c0_26] : memref<9x12x4xf32, #tpu.memory_space<vmem>>, vector<1x12x4xf32>
    %30 = vector.shape_cast %29 : vector<1x12x4xf32> to vector<12x4xf32>
    %cst_27 = arith.constant dense<0.000000e+00> : vector<128x4xf32>
    %31 = tpu.matmul %28, %30, %cst_27 {dimension_numbers = #tpu.dot_dimension_numbers<[1], [0], [0], [1], [0, 0, 1, 1], [], []>} : vector<128x12xf32>, vector<12x4xf32>, vector<128x4xf32> -> vector<128x4xf32>
    %32 = arith.addf %27, %31 : vector<128x4xf32>
    %c16 = arith.constant 16 : index
    %c0_28 = arith.constant 0 : index
    %33 = vector.load %arg12[%c16, %c0_28] : memref<168x12xf32, #tpu.memory_space<vmem>>, vector<128x12xf32>
    %c3 = arith.constant 3 : index
    %c0_29 = arith.constant 0 : index
    %c0_30 = arith.constant 0 : index
    %34 = vector.load %arg6[%c3, %c0_29, %c0_30] : memref<9x12x4xf32, #tpu.memory_space<vmem>>, vector<1x12x4xf32>
    %35 = vector.shape_cast %34 : vector<1x12x4xf32> to vector<12x4xf32>
    %cst_31 = arith.constant dense<0.000000e+00> : vector<128x4xf32>
    %36 = tpu.matmul %33, %35, %cst_31 {dimension_numbers = #tpu.dot_dimension_numbers<[1], [0], [0], [1], [0, 0, 1, 1], [], []>} : vector<128x12xf32>, vector<12x4xf32>, vector<128x4xf32> -> vector<128x4xf32>
    %37 = arith.addf %32, %36 : vector<128x4xf32>
    %c17 = arith.constant 17 : index
    %c0_32 = arith.constant 0 : index
    %38 = vector.load %arg12[%c17, %c0_32] : memref<168x12xf32, #tpu.memory_space<vmem>>, vector<128x12xf32>
    %c4 = arith.constant 4 : index
    %c0_33 = arith.constant 0 : index
    %c0_34 = arith.constant 0 : index
    %39 = vector.load %arg6[%c4, %c0_33, %c0_34] : memref<9x12x4xf32, #tpu.memory_space<vmem>>, vector<1x12x4xf32>
    %40 = vector.shape_cast %39 : vector<1x12x4xf32> to vector<12x4xf32>
    %cst_35 = arith.constant dense<0.000000e+00> : vector<128x4xf32>
    %41 = tpu.matmul %38, %40, %cst_35 {dimension_numbers = #tpu.dot_dimension_numbers<[1], [0], [0], [1], [0, 0, 1, 1], [], []>} : vector<128x12xf32>, vector<12x4xf32>, vector<128x4xf32> -> vector<128x4xf32>
    %42 = arith.addf %37, %41 : vector<128x4xf32>
    %c18 = arith.constant 18 : index
    %c0_36 = arith.constant 0 : index
    %43 = vector.load %arg12[%c18, %c0_36] : memref<168x12xf32, #tpu.memory_space<vmem>>, vector<128x12xf32>
    %c5 = arith.constant 5 : index
    %c0_37 = arith.constant 0 : index
    %c0_38 = arith.constant 0 : index
    %44 = vector.load %arg6[%c5, %c0_37, %c0_38] : memref<9x12x4xf32, #tpu.memory_space<vmem>>, vector<1x12x4xf32>
    %45 = vector.shape_cast %44 : vector<1x12x4xf32> to vector<12x4xf32>
    %cst_39 = arith.constant dense<0.000000e+00> : vector<128x4xf32>
    %46 = tpu.matmul %43, %45, %cst_39 {dimension_numbers = #tpu.dot_dimension_numbers<[1], [0], [0], [1], [0, 0, 1, 1], [], []>} : vector<128x12xf32>, vector<12x4xf32>, vector<128x4xf32> -> vector<128x4xf32>
    %47 = arith.addf %42, %46 : vector<128x4xf32>
    %c32 = arith.constant 32 : index
    %c0_40 = arith.constant 0 : index
    %48 = vector.load %arg12[%c32, %c0_40] : memref<168x12xf32, #tpu.memory_space<vmem>>, vector<128x12xf32>
    %c6 = arith.constant 6 : index
    %c0_41 = arith.constant 0 : index
    %c0_42 = arith.constant 0 : index
    %49 = vector.load %arg6[%c6, %c0_41, %c0_42] : memref<9x12x4xf32, #tpu.memory_space<vmem>>, vector<1x12x4xf32>
    %50 = vector.shape_cast %49 : vector<1x12x4xf32> to vector<12x4xf32>
    %cst_43 = arith.constant dense<0.000000e+00> : vector<128x4xf32>
    %51 = tpu.matmul %48, %50, %cst_43 {dimension_numbers = #tpu.dot_dimension_numbers<[1], [0], [0], [1], [0, 0, 1, 1], [], []>} : vector<128x12xf32>, vector<12x4xf32>, vector<128x4xf32> -> vector<128x4xf32>
    %52 = arith.addf %47, %51 : vector<128x4xf32>
    %c33 = arith.constant 33 : index
    %c0_44 = arith.constant 0 : index
    %53 = vector.load %arg12[%c33, %c0_44] : memref<168x12xf32, #tpu.memory_space<vmem>>, vector<128x12xf32>
    %c7 = arith.constant 7 : index
    %c0_45 = arith.constant 0 : index
    %c0_46 = arith.constant 0 : index
    %54 = vector.load %arg6[%c7, %c0_45, %c0_46] : memref<9x12x4xf32, #tpu.memory_space<vmem>>, vector<1x12x4xf32>
    %55 = vector.shape_cast %54 : vector<1x12x4xf32> to vector<12x4xf32>
    %cst_47 = arith.constant dense<0.000000e+00> : vector<128x4xf32>
    %56 = tpu.matmul %53, %55, %cst_47 {dimension_numbers = #tpu.dot_dimension_numbers<[1], [0], [0], [1], [0, 0, 1, 1], [], []>} : vector<128x12xf32>, vector<12x4xf32>, vector<128x4xf32> -> vector<128x4xf32>
    %57 = arith.addf %52, %56 : vector<128x4xf32>
    %c34 = arith.constant 34 : index
    %c0_48 = arith.constant 0 : index
    %58 = vector.load %arg12[%c34, %c0_48] : memref<168x12xf32, #tpu.memory_space<vmem>>, vector<128x12xf32>
    %c8 = arith.constant 8 : index
    %c0_49 = arith.constant 0 : index
    %c0_50 = arith.constant 0 : index
    %59 = vector.load %arg6[%c8, %c0_49, %c0_50] : memref<9x12x4xf32, #tpu.memory_space<vmem>>, vector<1x12x4xf32>
    %60 = vector.shape_cast %59 : vector<1x12x4xf32> to vector<12x4xf32>
    %cst_51 = arith.constant dense<0.000000e+00> : vector<128x4xf32>
    %61 = tpu.matmul %58, %60, %cst_51 {dimension_numbers = #tpu.dot_dimension_numbers<[1], [0], [0], [1], [0, 0, 1, 1], [], []>} : vector<128x12xf32>, vector<12x4xf32>, vector<128x4xf32> -> vector<128x4xf32>
    %62 = arith.addf %57, %61 : vector<128x4xf32>
    %c0_52 = arith.constant 0 : index
    %c0_53 = arith.constant 0 : index
    %63 = vector.load %arg9[%c0_52, %c0_53] : memref<1x4xf32, #tpu.memory_space<vmem>>, vector<1x4xf32>
    %64 = vector.broadcast %63 : vector<1x4xf32> to vector<128x4xf32>
    %65 = arith.addf %62, %64 : vector<128x4xf32>
    %cst_54 = arith.constant 0.000000e+00 : f32
    %66 = vector.broadcast %cst_54 : f32 to vector<128x4xf32>
    %67 = arith.maximumf %65, %66 : vector<128x4xf32>
    %c0_55 = arith.constant 0 : index
    %c0_56 = arith.constant 0 : index
    %68 = vector.load %arg7[%c0_55, %c0_56] : memref<4x16xf32, #tpu.memory_space<vmem>>, vector<4x16xf32>
    %cst_57 = arith.constant dense<0.000000e+00> : vector<128x16xf32>
    %69 = tpu.matmul %67, %68, %cst_57 {dimension_numbers = #tpu.dot_dimension_numbers<[1], [0], [0], [1], [0, 0, 1, 1], [], []>} : vector<128x4xf32>, vector<4x16xf32>, vector<128x16xf32> -> vector<128x16xf32>
    %c0_58 = arith.constant 0 : index
    %c0_59 = arith.constant 0 : index
    %70 = vector.load %arg10[%c0_58, %c0_59] : memref<1x16xf32, #tpu.memory_space<vmem>>, vector<1x16xf32>
    %71 = vector.broadcast %70 : vector<1x16xf32> to vector<128x16xf32>
    %72 = arith.addf %69, %71 : vector<128x16xf32>
    %c17_60 = arith.constant 17 : index
    %c0_61 = arith.constant 0 : index
    %73 = vector.load %arg13[%c17_60, %c0_61] : memref<168x16xf32, #tpu.memory_space<vmem>>, vector<128x16xf32>
    %74 = arith.addf %72, %73 : vector<128x16xf32>
    %cst_62 = arith.constant 0.000000e+00 : f32
    %75 = vector.broadcast %cst_62 : f32 to vector<128x16xf32>
    %76 = arith.maximumf %74, %75 : vector<128x16xf32>
    %77 = vector.shape_cast %76 : vector<128x16xf32> to vector<8x16x16xf32>
    %78 = vector.extract_strided_slice %77 {offsets = [0, 0, 0], sizes = [8, 8, 16], strides = [1, 1, 1]} : vector<8x16x16xf32> to vector<8x8x16xf32>
    %c0_63 = arith.constant 0 : index
    %c0_64 = arith.constant 0 : index
    %c0_65 = arith.constant 0 : index
    %c0_66 = arith.constant 0 : index
    %79 = vector.load %arg11[%c0_63, %c0_64, %c0_65, %c0_66] : memref<1x8x8x16xf32, #tpu.memory_space<vmem>>, vector<1x8x8x16xf32>
    %80 = vector.shape_cast %79 : vector<1x8x8x16xf32> to vector<8x8x16xf32>
    %81 = vector.shape_cast %78 : vector<8x8x16xf32> to vector<1x8x8x16xf32>
    tpu.vector_store %arg11[%c0_63, %c0_64, %c0_65, %c0_66], %81 {strides = array<i32>} : memref<1x8x8x16xf32, #tpu.memory_space<vmem>>, vector<1x8x8x16xf32>,
    %c0_67 = arith.constant 0 : index
    %c0_68 = arith.constant 0 : index
    %c0_69 = arith.constant 0 : index
    %c0_70 = arith.constant 0 : index
    %82 = vector.load %arg3[%c0_67, %c0_68, %c0_69, %c0_70] : memref<1x1x168x16xf32, #tpu.memory_space<vmem>>, vector<1x1x168x16xf32>
    %83 = vector.shape_cast %82 : vector<1x1x168x16xf32> to vector<168x16xf32>
    %c0_71 = arith.constant 0 : index
    %c0_72 = arith.constant 0 : index
    %84 = vector.load %arg13[%c0_71, %c0_72] : memref<168x16xf32, #tpu.memory_space<vmem>>, vector<168x16xf32>
    tpu.vector_store %arg13[%c0_71, %c0_72], %83 {strides = array<i32>} : memref<168x16xf32, #tpu.memory_space<vmem>>, vector<168x16xf32>,
    return
  }
  func.func @transform_0(%arg0: i32, %arg1: i32) -> (i32, i32, i32, i32) {
    %c0_i32 = arith.constant 0 : i32
    %c0_i32_0 = arith.constant 0 : i32
    %c0_i32_1 = arith.constant 0 : i32
    %c0_i32_2 = arith.constant 0 : i32
    return %arg0, %c0_i32, %c0_i32_0, %c0_i32_1 : i32, i32, i32, i32
  }
  func.func @transform_1(%arg0: i32, %arg1: i32) -> (i32, i32, i32, i32) {
    %c1_i32 = arith.constant 1 : i32
    %0 = arith.addi %arg1, %c1_i32 : i32
    %c3_i32 = arith.constant 3 : i32
    %1 = arith.minsi %0, %c3_i32 : i32
    %c0_i32 = arith.constant 0 : i32
    %c0_i32_0 = arith.constant 0 : i32
    %c0_i32_1 = arith.constant 0 : i32
    return %arg0, %1, %c0_i32, %c0_i32_0 : i32, i32, i32, i32
  }
  func.func @transform_2(%arg0: i32, %arg1: i32) -> (i32, i32) {
    %c0_i32 = arith.constant 0 : i32
    %c0_i32_0 = arith.constant 0 : i32
    %c0_i32_1 = arith.constant 0 : i32
    return %c0_i32, %c0_i32_0 : i32, i32
  }
  func.func @transform_3(%arg0: i32, %arg1: i32) -> (i32, i32) {
    %c0_i32 = arith.constant 0 : i32
    %c0_i32_0 = arith.constant 0 : i32
    %c0_i32_1 = arith.constant 0 : i32
    return %c0_i32, %c0_i32_0 : i32, i32
  }
  func.func @transform_4(%arg0: i32, %arg1: i32) -> (i32, i32, i32) {
    %c0_i32 = arith.constant 0 : i32
    %c0_i32_0 = arith.constant 0 : i32
    %c0_i32_1 = arith.constant 0 : i32
    %c0_i32_2 = arith.constant 0 : i32
    return %c0_i32, %c0_i32_0, %c0_i32_1 : i32, i32, i32
  }
  func.func @transform_5(%arg0: i32, %arg1: i32) -> (i32, i32) {
    %c0_i32 = arith.constant 0 : i32
    %c0_i32_0 = arith.constant 0 : i32
    %c0_i32_1 = arith.constant 0 : i32
    return %c0_i32, %c0_i32_0 : i32, i32
  }
  func.func @transform_6(%arg0: i32, %arg1: i32) -> (i32, i32) {
    %c0_i32 = arith.constant 0 : i32
    %c0_i32_0 = arith.constant 0 : i32
    %c0_i32_1 = arith.constant 0 : i32
    return %c0_i32, %c0_i32_0 : i32, i32
  }
  func.func @transform_7(%arg0: i32, %arg1: i32) -> (i32, i32) {
    %c0_i32 = arith.constant 0 : i32
    %c0_i32_0 = arith.constant 0 : i32
    %c0_i32_1 = arith.constant 0 : i32
    return %c0_i32, %c0_i32_0 : i32, i32
  }
  func.func @transform_8(%arg0: i32, %arg1: i32) -> (i32, i32) {
    %c0_i32 = arith.constant 0 : i32
    %c0_i32_0 = arith.constant 0 : i32
    %c0_i32_1 = arith.constant 0 : i32
    return %c0_i32, %c0_i32_0 : i32, i32
  }
  func.func @transform_9(%arg0: i32, %arg1: i32) -> (i32, i32, i32, i32) {
    %c4_i32 = arith.constant 4 : i32
    %0 = arith.muli %arg0, %c4_i32 : i32
    %1 = arith.addi %0, %arg1 : i32
    %c0_i32 = arith.constant 0 : i32
    %c0_i32_0 = arith.constant 0 : i32
    %c0_i32_1 = arith.constant 0 : i32
    %c0_i32_2 = arith.constant 0 : i32
    return %1, %c0_i32, %c0_i32_0, %c0_i32_1 : i32, i32, i32, i32
  }
}

module attributes {stable_mosaic.version = 11 : i64} {
  func.func @_bottleneck_plane_kernel(%arg0: i32, %arg1: i32, %arg2: memref<1x1x168x16xf32, #tpu.memory_space<vmem>>, %arg3: memref<1x1x168x16xf32, #tpu.memory_space<vmem>>, %arg4: memref<168x1xf32, #tpu.memory_space<vmem>>, %arg5: memref<16x4xf32, #tpu.memory_space<vmem>>, %arg6: memref<9x12x4xf32, #tpu.memory_space<vmem>>, %arg7: memref<4x16xf32, #tpu.memory_space<vmem>>, %arg8: memref<1x4xf32, #tpu.memory_space<vmem>>, %arg9: memref<1x4xf32, #tpu.memory_space<vmem>>, %arg10: memref<1x16xf32, #tpu.memory_space<vmem>>, %arg11: memref<1x8x8x16xf32, #tpu.memory_space<vmem>>, %arg12: memref<168x12xf32, #tpu.memory_space<vmem>>, %arg13: memref<168x16xf32, #tpu.memory_space<vmem>>) attributes {dimension_semantics = [#tpu.dimension_semantics<parallel>, #tpu.dimension_semantics<arbitrary>], iteration_bounds = array<i64: 2, 4>, scalar_prefetch = 0 : i64, scratch_operands = 2 : i64, tpu.core_type = #tpu.core_type<tc>, window_params = [{transform_indices = @transform_0, window_bounds = array<i64: 1, 1, 168, 16>}, {transform_indices = @transform_1, window_bounds = array<i64: 1, 1, 168, 16>}, {pipeline_mode = #tpu.pipeline_mode<synchronous>, transform_indices = @transform_2, window_bounds = array<i64: 168, 1>}, {pipeline_mode = #tpu.pipeline_mode<synchronous>, transform_indices = @transform_3, window_bounds = array<i64: 16, 4>}, {pipeline_mode = #tpu.pipeline_mode<synchronous>, transform_indices = @transform_4, window_bounds = array<i64: 9, 12, 4>}, {pipeline_mode = #tpu.pipeline_mode<synchronous>, transform_indices = @transform_5, window_bounds = array<i64: 4, 16>}, {pipeline_mode = #tpu.pipeline_mode<synchronous>, transform_indices = @transform_6, window_bounds = array<i64: 1, 4>}, {pipeline_mode = #tpu.pipeline_mode<synchronous>, transform_indices = @transform_7, window_bounds = array<i64: 1, 4>}, {pipeline_mode = #tpu.pipeline_mode<synchronous>, transform_indices = @transform_8, window_bounds = array<i64: 1, 16>}, {transform_indices = @transform_9, window_bounds = array<i64: 1, 8, 8, 16>}]} {
    %c0 = arith.constant 0 : index
    %c0_0 = arith.constant 0 : index
    %0 = vector.load %arg4[%c0, %c0_0] : memref<168x1xf32, #tpu.memory_space<vmem>>, vector<168x1xf32>
    %c0_1 = arith.constant 0 : index
    %c0_2 = arith.constant 0 : index
    %1 = vector.load %arg5[%c0_1, %c0_2] : memref<16x4xf32, #tpu.memory_space<vmem>>, vector<16x4xf32>
    %c0_3 = arith.constant 0 : index
    %c0_4 = arith.constant 0 : index
    %2 = vector.load %arg8[%c0_3, %c0_4] : memref<1x4xf32, #tpu.memory_space<vmem>>, vector<1x4xf32>
    %c0_i32 = arith.constant 0 : i32
    %3 = arith.cmpi eq, %arg1, %c0_i32 : i32
    %4 = arith.extui %3 : i1 to i32
    %c0_i32_5 = arith.constant 0 : i32
    %5 = arith.cmpi ne, %4, %c0_i32_5 : i32
    scf.if %5 {
      %c0_73 = arith.constant 0 : index
      %c0_74 = arith.constant 0 : index
      %c0_75 = arith.constant 0 : index
      %c0_76 = arith.constant 0 : index
      %85 = vector.load %arg2[%c0_73, %c0_74, %c0_75, %c0_76] : memref<1x1x168x16xf32, #tpu.memory_space<vmem>>, vector<1x1x168x16xf32>
      %86 = vector.shape_cast %85 : vector<1x1x168x16xf32> to vector<168x16xf32>
      %c0_77 = arith.constant 0 : index
      %c0_78 = arith.constant 0 : index
      %87 = vector.load %arg13[%c0_77, %c0_78] : memref<168x16xf32, #tpu.memory_space<vmem>>, vector<168x16xf32>
      tpu.vector_store %arg13[%c0_77, %c0_78], %86 {strides = array<i32>} : memref<168x16xf32, #tpu.memory_space<vmem>>, vector<168x16xf32>,
      %cst_79 = arith.constant 0.000000e+00 : f32
      %88 = vector.broadcast %cst_79 : f32 to vector<168x4xf32>
      %c0_80 = arith.constant 0 : index
      %c0_81 = arith.constant 0 : index
      %89 = vector.load %arg12[%c0_80, %c0_81] : memref<168x12xf32, #tpu.memory_space<vmem>>, vector<168x4xf32>
      tpu.vector_store %arg12[%c0_80, %c0_81], %88 {strides = array<i32>} : memref<168x12xf32, #tpu.memory_space<vmem>>, vector<168x4xf32>,
      %c0_82 = arith.constant 0 : index
      %c0_83 = arith.constant 0 : index
      %c0_84 = arith.constant 0 : index
      %c0_85 = arith.constant 0 : index
      %90 = vector.load %arg2[%c0_82, %c0_83, %c0_84, %c0_85] : memref<1x1x168x16xf32, #tpu.memory_space<vmem>>, vector<1x1x168x16xf32>
      %91 = vector.shape_cast %90 : vector<1x1x168x16xf32> to vector<168x16xf32>
      %cst_86 = arith.constant dense<0.000000e+00> : vector<168x4xf32>
      %92 = tpu.matmul %91, %1, %cst_86 {dimension_numbers = #tpu.dot_dimension_numbers<[1], [0], [0], [1], [0, 0, 1, 1], [], []>} : vector<168x16xf32>, vector<16x4xf32>, vector<168x4xf32> -> vector<168x4xf32>
      %93 = vector.broadcast %2 : vector<1x4xf32> to vector<168x4xf32>
      %94 = arith.addf %92, %93 : vector<168x4xf32>
      %cst_87 = arith.constant 0.000000e+00 : f32
      %95 = vector.broadcast %cst_87 : f32 to vector<168x4xf32>
      %96 = arith.maximumf %94, %95 : vector<168x4xf32>
      %97 = vector.broadcast %0 : vector<168x1xf32> to vector<168x4xf32>
      %98 = arith.mulf %96, %97 : vector<168x4xf32>
      %c0_88 = arith.constant 0 : index
      %c4_89 = arith.constant 4 : index
      %99 = vector.load %arg12[%c0_88, %c4_89] : memref<168x12xf32, #tpu.memory_space<vmem>>, vector<168x4xf32>
      tpu.vector_store %arg12[%c0_88, %c4_89], %98 {strides = array<i32>} : memref<168x12xf32, #tpu.memory_space<vmem>>, vector<168x4xf32>,
    } else {
    }
    %c0_i32_6 = arith.constant 0 : i32
    %6 = arith.cmpi sgt, %arg1, %c0_i32_6 : i32
    %7 = arith.extui %6 : i1 to i32
    %c0_i32_7 = arith.constant 0 : i32
    %8 = arith.cmpi ne, %7, %c0_i32_7 : i32
    scf.if %8 {
      %c0_73 = arith.constant 0 : index
      %c4_74 = arith.constant 4 : index
      %85 = vector.load %arg12[%c0_73, %c4_74] : memref<168x12xf32, #tpu.memory_space<vmem>>, vector<168x4xf32>
      %c0_75 = arith.constant 0 : index
      %c0_76 = arith.constant 0 : index
      %86 = vector.load %arg12[%c0_75, %c0_76] : memref<168x12xf32, #tpu.memory_space<vmem>>, vector<168x4xf32>
      tpu.vector_store %arg12[%c0_75, %c0_76], %85 {strides = array<i32>} : memref<168x12xf32, #tpu.memory_space<vmem>>, vector<168x4xf32>,
      %c0_77 = arith.constant 0 : index
      %c8_78 = arith.constant 8 : index
      %87 = vector.load %arg12[%c0_77, %c8_78] : memref<168x12xf32, #tpu.memory_space<vmem>>, vector<168x4xf32>
      %c0_79 = arith.constant 0 : index
      %c4_80 = arith.constant 4 : index
      %88 = vector.load %arg12[%c0_79, %c4_80] : memref<168x12xf32, #tpu.memory_space<vmem>>, vector<168x4xf32>
      tpu.vector_store %arg12[%c0_79, %c4_80], %87 {strides = array<i32>} : memref<168x12xf32, #tpu.memory_space<vmem>>, vector<168x4xf32>,
    } else {
    }
    %c1_i32 = arith.constant 1 : i32
    %9 = arith.addi %arg1, %c1_i32 : i32
    %c4_i32 = arith.constant 4 : i32
    %10 = arith.cmpi slt, %9, %c4_i32 : i32
    %11 = arith.extui %10 : i1 to i32
    %c0_i32_8 = arith.constant 0 : i32
    %12 = arith.cmpi ne, %11, %c0_i32_8 : i32
    scf.if %12 {
      %c0_73 = arith.constant 0 : index
      %c0_74 = arith.constant 0 : index
      %c0_75 = arith.constant 0 : index
      %c0_76 = arith.constant 0 : index
      %85 = vector.load %arg3[%c0_73, %c0_74, %c0_75, %c0_76] : memref<1x1x168x16xf32, #tpu.memory_space<vmem>>, vector<1x1x168x16xf32>
      %86 = vector.shape_cast %85 : vector<1x1x168x16xf32> to vector<168x16xf32>
      %cst_77 = arith.constant dense<0.000000e+00> : vector<168x4xf32>
      %87 = tpu.matmul %86, %1, %cst_77 {dimension_numbers = #tpu.dot_dimension_numbers<[1], [0], [0], [1], [0, 0, 1, 1], [], []>} : vector<168x16xf32>, vector<16x4xf32>, vector<168x4xf32> -> vector<168x4xf32>
      %88 = vector.broadcast %2 : vector<1x4xf32> to vector<168x4xf32>
      %89 = arith.addf %87, %88 : vector<168x4xf32>
      %cst_78 = arith.constant 0.000000e+00 : f32
      %90 = vector.broadcast %cst_78 : f32 to vector<168x4xf32>
      %91 = arith.maximumf %89, %90 : vector<168x4xf32>
      %92 = vector.broadcast %0 : vector<168x1xf32> to vector<168x4xf32>
      %93 = arith.mulf %91, %92 : vector<168x4xf32>
      %c0_79 = arith.constant 0 : index
      %c8_80 = arith.constant 8 : index
      %94 = vector.load %arg12[%c0_79, %c8_80] : memref<168x12xf32, #tpu.memory_space<vmem>>, vector<168x4xf32>
      tpu.vector_store %arg12[%c0_79, %c8_80], %93 {strides = array<i32>} : memref<168x12xf32, #tpu.memory_space<vmem>>, vector<168x4xf32>,
    } else {
    }
    %c1_i32_9 = arith.constant 1 : i32
    %13 = arith.addi %arg1, %c1_i32_9 : i32
    %c4_i32_10 = arith.constant 4 : i32
    %14 = arith.cmpi sge, %13, %c4_i32_10 : i32
    %15 = arith.extui %14 : i1 to i32
    %c0_i32_11 = arith.constant 0 : i32
    %16 = arith.cmpi ne, %15, %c0_i32_11 : i32
    scf.if %16 {
      %cst_73 = arith.constant 0.000000e+00 : f32
      %85 = vector.broadcast %cst_73 : f32 to vector<168x4xf32>
      %c0_74 = arith.constant 0 : index
      %c8_75 = arith.constant 8 : index
      %86 = vector.load %arg12[%c0_74, %c8_75] : memref<168x12xf32, #tpu.memory_space<vmem>>, vector<168x4xf32>
      tpu.vector_store %arg12[%c0_74, %c8_75], %85 {strides = array<i32>} : memref<168x12xf32, #tpu.memory_space<vmem>>, vector<168x4xf32>,
    } else {
    }
    %cst = arith.constant 0.000000e+00 : f32
    %17 = vector.broadcast %cst : f32 to vector<128x4xf32>
    %c0_12 = arith.constant 0 : index
    %c0_13 = arith.constant 0 : index
    %18 = vector.load %arg12[%c0_12, %c0_13] : memref<168x12xf32, #tpu.memory_space<vmem>>, vector<128x12xf32>
    %c0_14 = arith.constant 0 : index
    %c0_15 = arith.constant 0 : index
    %c0_16 = arith.constant 0 : index
    %19 = vector.load %arg6[%c0_14, %c0_15, %c0_16] : memref<9x12x4xf32, #tpu.memory_space<vmem>>, vector<1x12x4xf32>
    %20 = vector.shape_cast %19 : vector<1x12x4xf32> to vector<12x4xf32>
    %cst_17 = arith.constant dense<0.000000e+00> : vector<128x4xf32>
    %21 = tpu.matmul %18, %20, %cst_17 {dimension_numbers = #tpu.dot_dimension_numbers<[1], [0], [0], [1], [0, 0, 1, 1], [], []>} : vector<128x12xf32>, vector<12x4xf32>, vector<128x4xf32> -> vector<128x4xf32>
    %22 = arith.addf %17, %21 : vector<128x4xf32>
    %c1 = arith.constant 1 : index
    %c0_18 = arith.constant 0 : index
    %23 = vector.load %arg12[%c1, %c0_18] : memref<168x12xf32, #tpu.memory_space<vmem>>, vector<128x12xf32>
    %c1_19 = arith.constant 1 : index
    %c0_20 = arith.constant 0 : index
    %c0_21 = arith.constant 0 : index
    %24 = vector.load %arg6[%c1_19, %c0_20, %c0_21] : memref<9x12x4xf32, #tpu.memory_space<vmem>>, vector<1x12x4xf32>
    %25 = vector.shape_cast %24 : vector<1x12x4xf32> to vector<12x4xf32>
    %cst_22 = arith.constant dense<0.000000e+00> : vector<128x4xf32>
    %26 = tpu.matmul %23, %25, %cst_22 {dimension_numbers = #tpu.dot_dimension_numbers<[1], [0], [0], [1], [0, 0, 1, 1], [], []>} : vector<128x12xf32>, vector<12x4xf32>, vector<128x4xf32> -> vector<128x4xf32>
    %27 = arith.addf %22, %26 : vector<128x4xf32>
    %c2 = arith.constant 2 : index
    %c0_23 = arith.constant 0 : index
    %28 = vector.load %arg12[%c2, %c0_23] : memref<168x12xf32, #tpu.memory_space<vmem>>, vector<128x12xf32>
    %c2_24 = arith.constant 2 : index
    %c0_25 = arith.constant 0 : index
    %c0_26 = arith.constant 0 : index
    %29 = vector.load %arg6[%c2_24, %c0_25, %c0_26] : memref<9x12x4xf32, #tpu.memory_space<vmem>>, vector<1x12x4xf32>
    %30 = vector.shape_cast %29 : vector<1x12x4xf32> to vector<12x4xf32>
    %cst_27 = arith.constant dense<0.000000e+00> : vector<128x4xf32>
    %31 = tpu.matmul %28, %30, %cst_27 {dimension_numbers = #tpu.dot_dimension_numbers<[1], [0], [0], [1], [0, 0, 1, 1], [], []>} : vector<128x12xf32>, vector<12x4xf32>, vector<128x4xf32> -> vector<128x4xf32>
    %32 = arith.addf %27, %31 : vector<128x4xf32>
    %c16 = arith.constant 16 : index
    %c0_28 = arith.constant 0 : index
    %33 = vector.load %arg12[%c16, %c0_28] : memref<168x12xf32, #tpu.memory_space<vmem>>, vector<128x12xf32>
    %c3 = arith.constant 3 : index
    %c0_29 = arith.constant 0 : index
    %c0_30 = arith.constant 0 : index
    %34 = vector.load %arg6[%c3, %c0_29, %c0_30] : memref<9x12x4xf32, #tpu.memory_space<vmem>>, vector<1x12x4xf32>
    %35 = vector.shape_cast %34 : vector<1x12x4xf32> to vector<12x4xf32>
    %cst_31 = arith.constant dense<0.000000e+00> : vector<128x4xf32>
    %36 = tpu.matmul %33, %35, %cst_31 {dimension_numbers = #tpu.dot_dimension_numbers<[1], [0], [0], [1], [0, 0, 1, 1], [], []>} : vector<128x12xf32>, vector<12x4xf32>, vector<128x4xf32> -> vector<128x4xf32>
    %37 = arith.addf %32, %36 : vector<128x4xf32>
    %c17 = arith.constant 17 : index
    %c0_32 = arith.constant 0 : index
    %38 = vector.load %arg12[%c17, %c0_32] : memref<168x12xf32, #tpu.memory_space<vmem>>, vector<128x12xf32>
    %c4 = arith.constant 4 : index
    %c0_33 = arith.constant 0 : index
    %c0_34 = arith.constant 0 : index
    %39 = vector.load %arg6[%c4, %c0_33, %c0_34] : memref<9x12x4xf32, #tpu.memory_space<vmem>>, vector<1x12x4xf32>
    %40 = vector.shape_cast %39 : vector<1x12x4xf32> to vector<12x4xf32>
    %cst_35 = arith.constant dense<0.000000e+00> : vector<128x4xf32>
    %41 = tpu.matmul %38, %40, %cst_35 {dimension_numbers = #tpu.dot_dimension_numbers<[1], [0], [0], [1], [0, 0, 1, 1], [], []>} : vector<128x12xf32>, vector<12x4xf32>, vector<128x4xf32> -> vector<128x4xf32>
    %42 = arith.addf %37, %41 : vector<128x4xf32>
    %c18 = arith.constant 18 : index
    %c0_36 = arith.constant 0 : index
    %43 = vector.load %arg12[%c18, %c0_36] : memref<168x12xf32, #tpu.memory_space<vmem>>, vector<128x12xf32>
    %c5 = arith.constant 5 : index
    %c0_37 = arith.constant 0 : index
    %c0_38 = arith.constant 0 : index
    %44 = vector.load %arg6[%c5, %c0_37, %c0_38] : memref<9x12x4xf32, #tpu.memory_space<vmem>>, vector<1x12x4xf32>
    %45 = vector.shape_cast %44 : vector<1x12x4xf32> to vector<12x4xf32>
    %cst_39 = arith.constant dense<0.000000e+00> : vector<128x4xf32>
    %46 = tpu.matmul %43, %45, %cst_39 {dimension_numbers = #tpu.dot_dimension_numbers<[1], [0], [0], [1], [0, 0, 1, 1], [], []>} : vector<128x12xf32>, vector<12x4xf32>, vector<128x4xf32> -> vector<128x4xf32>
    %47 = arith.addf %42, %46 : vector<128x4xf32>
    %c32 = arith.constant 32 : index
    %c0_40 = arith.constant 0 : index
    %48 = vector.load %arg12[%c32, %c0_40] : memref<168x12xf32, #tpu.memory_space<vmem>>, vector<128x12xf32>
    %c6 = arith.constant 6 : index
    %c0_41 = arith.constant 0 : index
    %c0_42 = arith.constant 0 : index
    %49 = vector.load %arg6[%c6, %c0_41, %c0_42] : memref<9x12x4xf32, #tpu.memory_space<vmem>>, vector<1x12x4xf32>
    %50 = vector.shape_cast %49 : vector<1x12x4xf32> to vector<12x4xf32>
    %cst_43 = arith.constant dense<0.000000e+00> : vector<128x4xf32>
    %51 = tpu.matmul %48, %50, %cst_43 {dimension_numbers = #tpu.dot_dimension_numbers<[1], [0], [0], [1], [0, 0, 1, 1], [], []>} : vector<128x12xf32>, vector<12x4xf32>, vector<128x4xf32> -> vector<128x4xf32>
    %52 = arith.addf %47, %51 : vector<128x4xf32>
    %c33 = arith.constant 33 : index
    %c0_44 = arith.constant 0 : index
    %53 = vector.load %arg12[%c33, %c0_44] : memref<168x12xf32, #tpu.memory_space<vmem>>, vector<128x12xf32>
    %c7 = arith.constant 7 : index
    %c0_45 = arith.constant 0 : index
    %c0_46 = arith.constant 0 : index
    %54 = vector.load %arg6[%c7, %c0_45, %c0_46] : memref<9x12x4xf32, #tpu.memory_space<vmem>>, vector<1x12x4xf32>
    %55 = vector.shape_cast %54 : vector<1x12x4xf32> to vector<12x4xf32>
    %cst_47 = arith.constant dense<0.000000e+00> : vector<128x4xf32>
    %56 = tpu.matmul %53, %55, %cst_47 {dimension_numbers = #tpu.dot_dimension_numbers<[1], [0], [0], [1], [0, 0, 1, 1], [], []>} : vector<128x12xf32>, vector<12x4xf32>, vector<128x4xf32> -> vector<128x4xf32>
    %57 = arith.addf %52, %56 : vector<128x4xf32>
    %c34 = arith.constant 34 : index
    %c0_48 = arith.constant 0 : index
    %58 = vector.load %arg12[%c34, %c0_48] : memref<168x12xf32, #tpu.memory_space<vmem>>, vector<128x12xf32>
    %c8 = arith.constant 8 : index
    %c0_49 = arith.constant 0 : index
    %c0_50 = arith.constant 0 : index
    %59 = vector.load %arg6[%c8, %c0_49, %c0_50] : memref<9x12x4xf32, #tpu.memory_space<vmem>>, vector<1x12x4xf32>
    %60 = vector.shape_cast %59 : vector<1x12x4xf32> to vector<12x4xf32>
    %cst_51 = arith.constant dense<0.000000e+00> : vector<128x4xf32>
    %61 = tpu.matmul %58, %60, %cst_51 {dimension_numbers = #tpu.dot_dimension_numbers<[1], [0], [0], [1], [0, 0, 1, 1], [], []>} : vector<128x12xf32>, vector<12x4xf32>, vector<128x4xf32> -> vector<128x4xf32>
    %62 = arith.addf %57, %61 : vector<128x4xf32>
    %c0_52 = arith.constant 0 : index
    %c0_53 = arith.constant 0 : index
    %63 = vector.load %arg9[%c0_52, %c0_53] : memref<1x4xf32, #tpu.memory_space<vmem>>, vector<1x4xf32>
    %64 = vector.broadcast %63 : vector<1x4xf32> to vector<128x4xf32>
    %65 = arith.addf %62, %64 : vector<128x4xf32>
    %cst_54 = arith.constant 0.000000e+00 : f32
    %66 = vector.broadcast %cst_54 : f32 to vector<128x4xf32>
    %67 = arith.maximumf %65, %66 : vector<128x4xf32>
    %c0_55 = arith.constant 0 : index
    %c0_56 = arith.constant 0 : index
    %68 = vector.load %arg7[%c0_55, %c0_56] : memref<4x16xf32, #tpu.memory_space<vmem>>, vector<4x16xf32>
    %cst_57 = arith.constant dense<0.000000e+00> : vector<128x16xf32>
    %69 = tpu.matmul %67, %68, %cst_57 {dimension_numbers = #tpu.dot_dimension_numbers<[1], [0], [0], [1], [0, 0, 1, 1], [], []>} : vector<128x4xf32>, vector<4x16xf32>, vector<128x16xf32> -> vector<128x16xf32>
    %c0_58 = arith.constant 0 : index
    %c0_59 = arith.constant 0 : index
    %70 = vector.load %arg10[%c0_58, %c0_59] : memref<1x16xf32, #tpu.memory_space<vmem>>, vector<1x16xf32>
    %71 = vector.broadcast %70 : vector<1x16xf32> to vector<128x16xf32>
    %72 = arith.addf %69, %71 : vector<128x16xf32>
    %c17_60 = arith.constant 17 : index
    %c0_61 = arith.constant 0 : index
    %73 = vector.load %arg13[%c17_60, %c0_61] : memref<168x16xf32, #tpu.memory_space<vmem>>, vector<128x16xf32>
    %74 = arith.addf %72, %73 : vector<128x16xf32>
    %cst_62 = arith.constant 0.000000e+00 : f32
    %75 = vector.broadcast %cst_62 : f32 to vector<128x16xf32>
    %76 = arith.maximumf %74, %75 : vector<128x16xf32>
    %77 = vector.shape_cast %76 : vector<128x16xf32> to vector<8x16x16xf32>
    %78 = vector.extract_strided_slice %77 {offsets = [0, 0, 0], sizes = [8, 8, 16], strides = [1, 1, 1]} : vector<8x16x16xf32> to vector<8x8x16xf32>
    %c0_63 = arith.constant 0 : index
    %c0_64 = arith.constant 0 : index
    %c0_65 = arith.constant 0 : index
    %c0_66 = arith.constant 0 : index
    %79 = vector.load %arg11[%c0_63, %c0_64, %c0_65, %c0_66] : memref<1x8x8x16xf32, #tpu.memory_space<vmem>>, vector<1x8x8x16xf32>
    %80 = vector.shape_cast %79 : vector<1x8x8x16xf32> to vector<8x8x16xf32>
    %81 = vector.shape_cast %78 : vector<8x8x16xf32> to vector<1x8x8x16xf32>
    tpu.vector_store %arg11[%c0_63, %c0_64, %c0_65, %c0_66], %81 {strides = array<i32>} : memref<1x8x8x16xf32, #tpu.memory_space<vmem>>, vector<1x8x8x16xf32>,
    %c0_67 = arith.constant 0 : index
    %c0_68 = arith.constant 0 : index
    %c0_69 = arith.constant 0 : index
    %c0_70 = arith.constant 0 : index
    %82 = vector.load %arg3[%c0_67, %c0_68, %c0_69, %c0_70] : memref<1x1x168x16xf32, #tpu.memory_space<vmem>>, vector<1x1x168x16xf32>
    %83 = vector.shape_cast %82 : vector<1x1x168x16xf32> to vector<168x16xf32>
    %c0_71 = arith.constant 0 : index
    %c0_72 = arith.constant 0 : index
    %84 = vector.load %arg13[%c0_71, %c0_72] : memref<168x16xf32, #tpu.memory_space<vmem>>, vector<168x16xf32>
    tpu.vector_store %arg13[%c0_71, %c0_72], %83 {strides = array<i32>} : memref<168x16xf32, #tpu.memory_space<vmem>>, vector<168x16xf32>,
    return
  }
  func.func @transform_0(%arg0: i32, %arg1: i32) -> (i32, i32, i32, i32) {
    %c0_i32 = arith.constant 0 : i32
    %c0_i32_0 = arith.constant 0 : i32
    %c0_i32_1 = arith.constant 0 : i32
    %c0_i32_2 = arith.constant 0 : i32
    return %arg0, %c0_i32, %c0_i32_0, %c0_i32_1 : i32, i32, i32, i32
  }
  func.func @transform_1(%arg0: i32, %arg1: i32) -> (i32, i32, i32, i32) {
    %c1_i32 = arith.constant 1 : i32
    %0 = arith.addi %arg1, %c1_i32 : i32
    %c3_i32 = arith.constant 3 : i32
    %1 = arith.minsi %0, %c3_i32 : i32
    %c0_i32 = arith.constant 0 : i32
    %c0_i32_0 = arith.constant 0 : i32
    %c0_i32_1 = arith.constant 0 : i32
    return %arg0, %1, %c0_i32, %c0_i32_0 : i32, i32, i32, i32
  }
  func.func @transform_2(%arg0: i32, %arg1: i32) -> (i32, i32) {
    %c0_i32 = arith.constant 0 : i32
    %c0_i32_0 = arith.constant 0 : i32
    %c0_i32_1 = arith.constant 0 : i32
    return %c0_i32, %c0_i32_0 : i32, i32
  }
  func.func @transform_3(%arg0: i32, %arg1: i32) -> (i32, i32) {
    %c0_i32 = arith.constant 0 : i32
    %c0_i32_0 = arith.constant 0 : i32
    %c0_i32_1 = arith.constant 0 : i32
    return %c0_i32, %c0_i32_0 : i32, i32
  }
  func.func @transform_4(%arg0: i32, %arg1: i32) -> (i32, i32, i32) {
    %c0_i32 = arith.constant 0 : i32
    %c0_i32_0 = arith.constant 0 : i32
    %c0_i32_1 = arith.constant 0 : i32
    %c0_i32_2 = arith.constant 0 : i32
    return %c0_i32, %c0_i32_0, %c0_i32_1 : i32, i32, i32
  }
  func.func @transform_5(%arg0: i32, %arg1: i32) -> (i32, i32) {
    %c0_i32 = arith.constant 0 : i32
    %c0_i32_0 = arith.constant 0 : i32
    %c0_i32_1 = arith.constant 0 : i32
    return %c0_i32, %c0_i32_0 : i32, i32
  }
  func.func @transform_6(%arg0: i32, %arg1: i32) -> (i32, i32) {
    %c0_i32 = arith.constant 0 : i32
    %c0_i32_0 = arith.constant 0 : i32
    %c0_i32_1 = arith.constant 0 : i32
    return %c0_i32, %c0_i32_0 : i32, i32
  }
  func.func @transform_7(%arg0: i32, %arg1: i32) -> (i32, i32) {
    %c0_i32 = arith.constant 0 : i32
    %c0_i32_0 = arith.constant 0 : i32
    %c0_i32_1 = arith.constant 0 : i32
    return %c0_i32, %c0_i32_0 : i32, i32
  }
  func.func @transform_8(%arg0: i32, %arg1: i32) -> (i32, i32) {
    %c0_i32 = arith.constant 0 : i32
    %c0_i32_0 = arith.constant 0 : i32
    %c0_i32_1 = arith.constant 0 : i32
    return %c0_i32, %c0_i32_0 : i32, i32
  }
  func.func @transform_9(%arg0: i32, %arg1: i32) -> (i32, i32, i32, i32) {
    %c4_i32 = arith.constant 4 : i32
    %0 = arith.muli %arg0, %c4_i32 : i32
    %1 = arith.addi %0, %arg1 : i32
    %c0_i32 = arith.constant 0 : i32
    %c0_i32_0 = arith.constant 0 : i32
    %c0_i32_1 = arith.constant 0 : i32
    %c0_i32_2 = arith.constant 0 : i32
    return %1, %c0_i32, %c0_i32_0, %c0_i32_1 : i32, i32, i32, i32
  }
}

</mosaic_0001>

<llo_original>
// kernel: tpu_custom_call.1
$region0: #{tpu_custom_call.1}
  #allocation0 [shape = 'u32[]', space=smem, size = 0x4, offset = 0x4, fixed_abs, tag = 'smem constant byte address 0x4 - core index']
  #allocation1 [shape = 'u32[144,128]{1,0:T(1,128)}', space=vmem, size = 0x12000, scoped, tag = 'internal scratch']
  #allocation2 [shape = 'f32[168,12]{1,0:T(8,128)}', space=vmem, size = 0x15000, scoped, tag = 'scratch operand']
  #allocation3 [shape = 'f32[168,16]{1,0:T(8,128)}', space=vmem, size = 0x15000, scoped, tag = 'scratch operand']
  %s0 = inlined_call_operand.vmem [shape: f32[2,4,168,16], index: 0, kind: input, shape index: {}]
  %s1 = inlined_call_operand.vmem [shape: f32[2,4,168,16], index: 1, kind: input, shape index: {}]
  %s2 = inlined_call_operand.vmem [shape: f32[168,1], index: 2, kind: input, shape index: {}]
  %s3 = inlined_call_operand.vmem [shape: f32[16,4], index: 3, kind: input, shape index: {}]
  %s4 = inlined_call_operand.vmem [shape: f32[9,12,4], index: 4, kind: input, shape index: {}]
  %s5 = inlined_call_operand.vmem [shape: f32[4,16], index: 5, kind: input, shape index: {}]
  %s6 = inlined_call_operand.vmem [shape: f32[1,4], index: 6, kind: input, shape index: {}]
  %s7 = inlined_call_operand.vmem [shape: f32[1,4], index: 7, kind: input, shape index: {}]
  %s8 = inlined_call_operand.vmem [shape: f32[1,16], index: 8, kind: input, shape index: {}]
  %s9 = inlined_call_operand.hbm [shape: f32[8,8,8,16], index: 9, kind: output, shape index: {}]
  %s10 = sld [smem:[#allocation0]]
  $region85: #{tpu_custom_call.1} parent=0
    _
  %s12 = ssub.s32 1, %s10
  %s13 = scalar_select 0, %s12, %s10
  $region1: #{tpu_custom_call.1} parent=0
    #allocation4 [shape = 'u8[65536]{0}', space=vmem, size = 0x10000, scoped, tag = 'output window, operand 0']
    #allocation5 [shape = 's32[2]{0}', space=sflag, size = 0x8, scoped, tag = 'scoped memory for tpu_custom_call.1']
    %14 = vsyncpa [#allocation5], 0
    %s15 = scalar_lea.sflag [#allocation5], 1
    %16 = vsyncpa %s15, 0
    loop: start=0, step=1, limit=10
    $region2: #{tpu_custom_call.1} parent=1 // loop_pre_header
      _
    $region3: #{tpu_custom_call.1} parent=1 // loop_header
      %s18 = sphi 0, %s22
      %p19 = scmp.ge.s32.totalorder %s18, 10
      %s25 = sphi 0, %s37
      %s26 = sphi 0, %s33
      %s27 = sphi 0, %s25
      %s28 = sphi 0, %s26
      %s29 = sphi 0, %s27
      %s30 = sphi 0, %s28
      %s40 = sphi 0, %s42
      %s43 = sphi 0, %s40
      %s44 = sphi 0, %s43
      %s60 = sphi 0, %s44
      %s74 = sphi 0, %s76
      %s77 = sphi 0, %s74
      %s78 = sphi 0, %s77
      %s94 = sphi 0, %s78
      %s98 = sphi 0, %s98
      %s100 = sphi 0, %s98
      %s101 = sphi 0, %s100
      %s115 = sphi 0, %s101
      %s119 = sphi 0, %s119
      %s121 = sphi 0, %s119
      %s122 = sphi 0, %s121
      %s136 = sphi 0, %s122
      %s140 = sphi 0, %s140
      %s142 = sphi 0, %s140
      %s143 = sphi 0, %s142
      %s157 = sphi 0, %s143
      %s161 = sphi 0, %s161
      %s163 = sphi 0, %s161
      %s164 = sphi 0, %s163
      %s178 = sphi 0, %s164
      %s182 = sphi 0, %s182
      %s184 = sphi 0, %s182
      %s185 = sphi 0, %s184
      %s199 = sphi 0, %s185
      %s203 = sphi 0, %s203
      %s205 = sphi 0, %s203
      %s206 = sphi 0, %s205
      %s220 = sphi 0, %s206
      %s224 = sphi 0, %s224
      %s226 = sphi 0, %s224
      %s227 = sphi 0, %s226
      %s241 = sphi 0, %s227
      %s251 = sphi 0, %s253
      %s254 = sphi 0, %s251
      %s255 = sphi 0, %s254
      %s271 = sphi 0, %s255
    $region4: #{tpu_custom_call.1} parent=1 // loop_header_branch
      %21 = sbr.rel (%p19) target = $region8
    $region5: #{tpu_custom_call.1} parent=1 // loop_body
      %s23 = ssub.s32 %s18, 1
      %s24 = ssub.s32 %s18, 2
      %s31 = sadd.s32 1, %s26
      %p32 = scmp.ge.s32.totalorder %s31, 4
      %s33 = scalar_select %p32, 0, %s31
      %s34 = sadd.s32 1, %s25
      %s35 = scalar_select %p32, %s34, %s25
      %p36 = scmp.ge.s32.totalorder %s35, 2
      %s37 = scalar_select %p36, 0, %s35
      %s38 = ssub.s32 %s25, %s37
      %p39 = scmp.eq.s32.totalorder %s38, 0
      %s41 = sadd.s32 %s40, 1
      %s42 = scalar_select %p39, %s40, %s41
      %p45 = pneg %p39
      %p46 = scmp.eq.s32.totalorder %s18, 7
      %p47 = por %p45, %p46
      %p48 = scmp.ne.s32.totalorder %s40, %s43
      %p49 = scmp.eq.s32.totalorder %s18, 0
      %p50 = por %p48, %p49
      %p51 = scmp.ne.s32.totalorder %s40, %s43
      %p52 = scmp.eq.s32.totalorder %s23, 7
      %p53 = por %p51, %p52
      %p54 = scmp.ne.s32.totalorder %s43, %s44
      %p55 = scmp.eq.s32.totalorder %s23, 0
      %p56 = por %p54, %p55
      %p57 = scmp.ne.s32.totalorder %s43, %s44
      %p58 = scmp.eq.s32.totalorder %s24, 7
      %p59 = por %p57, %p58
      %p61 = scmp.ne.s32.totalorder %s44, %s60
      %p62 = scmp.eq.s32.totalorder %s24, 0
      %p63 = por %p61, %p62
      %s64 = sadd.s32 %s26, 1
      %p65 = scmp.lt.s32.totalorder %s64, 3
      %s66 = scalar_select %p65, %s64, 3
      %s67 = sadd.s32 %s33, 1
      %p68 = scmp.lt.s32.totalorder %s67, 3
      %s69 = scalar_select %p68, %s67, 3
      %s70 = ssub.s32 %s25, %s37
      %s71 = ssub.s32 %s66, %s69
      %s72 = sor.u32 %s70, %s71
      %p73 = scmp.eq.s32.totalorder %s72, 0
      %s75 = sadd.s32 %s74, 1
      %s76 = scalar_select %p73, %s74, %s75
      %p79 = pneg %p73
      %p80 = scmp.eq.s32.totalorder %s18, 7
      %p81 = por %p79, %p80
      %p82 = scmp.ne.s32.totalorder %s74, %s77
      %p83 = scmp.eq.s32.totalorder %s18, 0
      %p84 = por %p82, %p83
      %p85 = scmp.ne.s32.totalorder %s74, %s77
      %p86 = scmp.eq.s32.totalorder %s23, 7
      %p87 = por %p85, %p86
      %p88 = scmp.ne.s32.totalorder %s77, %s78
      %p89 = scmp.eq.s32.totalorder %s23, 0
      %p90 = por %p88, %p89
      %p91 = scmp.ne.s32.totalorder %s77, %s78
      %p92 = scmp.eq.s32.totalorder %s24, 7
      %p93 = por %p91, %p92
      %p95 = scmp.ne.s32.totalorder %s78, %s94
      %p96 = scmp.eq.s32.totalorder %s24, 0
      %p97 = por %p95, %p96
      %s99 = sadd.s32 %s98, 1
      %p102 = scmp.eq.s32.totalorder %s18, 7
      %p103 = scmp.ne.s32.totalorder %s98, %s100
      %p104 = scmp.eq.s32.totalorder %s18, 0
      %p105 = por %p103, %p104
      %p106 = scmp.ne.s32.totalorder %s98, %s100
      %p107 = scmp.eq.s32.totalorder %s23, 7
      %p108 = por %p106, %p107
      %p109 = scmp.ne.s32.totalorder %s100, %s101
      %p110 = scmp.eq.s32.totalorder %s23, 0
      %p111 = por %p109, %p110
      %p112 = scmp.ne.s32.totalorder %s100, %s101
      %p113 = scmp.eq.s32.totalorder %s24, 7
      %p114 = por %p112, %p113
      %p116 = scmp.ne.s32.totalorder %s101, %s115
      %p117 = scmp.eq.s32.totalorder %s24, 0
      %p118 = por %p116, %p117
      %s120 = sadd.s32 %s119, 1
      %p123 = scmp.eq.s32.totalorder %s18, 7
      %p124 = scmp.ne.s32.totalorder %s119, %s121
      %p125 = scmp.eq.s32.totalorder %s18, 0
      %p126 = por %p124, %p125
      %p127 = scmp.ne.s32.totalorder %s119, %s121
      %p128 = scmp.eq.s32.totalorder %s23, 7
      %p129 = por %p127, %p128
      %p130 = scmp.ne.s32.totalorder %s121, %s122
      %p131 = scmp.eq.s32.totalorder %s23, 0
      %p132 = por %p130, %p131
      %p133 = scmp.ne.s32.totalorder %s121, %s122
      %p134 = scmp.eq.s32.totalorder %s24, 7
      %p135 = por %p133, %p134
      %p137 = scmp.ne.s32.totalorder %s122, %s136
      %p138 = scmp.eq.s32.totalorder %s24, 0
      %p139 = por %p137, %p138
      %s141 = sadd.s32 %s140, 1
      %p144 = scmp.eq.s32.totalorder %s18, 7
      %p145 = scmp.ne.s32.totalorder %s140, %s142
      %p146 = scmp.eq.s32.totalorder %s18, 0
      %p147 = por %p145, %p146
      %p148 = scmp.ne.s32.totalorder %s140, %s142
      %p149 = scmp.eq.s32.totalorder %s23, 7
      %p150 = por %p148, %p149
      %p151 = scmp.ne.s32.totalorder %s142, %s143
      %p152 = scmp.eq.s32.totalorder %s23, 0
      %p153 = por %p151, %p152
      %p154 = scmp.ne.s32.totalorder %s142, %s143
      %p155 = scmp.eq.s32.totalorder %s24, 7
      %p156 = por %p154, %p155
      %p158 = scmp.ne.s32.totalorder %s143, %s157
      %p159 = scmp.eq.s32.totalorder %s24, 0
      %p160 = por %p158, %p159
      %s162 = sadd.s32 %s161, 1
      %p165 = scmp.eq.s32.totalorder %s18, 7
      %p166 = scmp.ne.s32.totalorder %s161, %s163
      %p167 = scmp.eq.s32.totalorder %s18, 0
      %p168 = por %p166, %p167
      %p169 = scmp.ne.s32.totalorder %s161, %s163
      %p170 = scmp.eq.s32.totalorder %s23, 7
      %p171 = por %p169, %p170
      %p172 = scmp.ne.s32.totalorder %s163, %s164
      %p173 = scmp.eq.s32.totalorder %s23, 0
      %p174 = por %p172, %p173
      %p175 = scmp.ne.s32.totalorder %s163, %s164
      %p176 = scmp.eq.s32.totalorder %s24, 7
      %p177 = por %p175, %p176
      %p179 = scmp.ne.s32.totalorder %s164, %s178
      %p180 = scmp.eq.s32.totalorder %s24, 0
      %p181 = por %p179, %p180
      %s183 = sadd.s32 %s182, 1
      %p186 = scmp.eq.s32.totalorder %s18, 7
      %p187 = scmp.ne.s32.totalorder %s182, %s184
      %p188 = scmp.eq.s32.totalorder %s18, 0
      %p189 = por %p187, %p188
      %p190 = scmp.ne.s32.totalorder %s182, %s184
      %p191 = scmp.eq.s32.totalorder %s23, 7
      %p192 = por %p190, %p191
      %p193 = scmp.ne.s32.totalorder %s184, %s185
      %p194 = scmp.eq.s32.totalorder %s23, 0
      %p195 = por %p193, %p194
      %p196 = scmp.ne.s32.totalorder %s184, %s185
      %p197 = scmp.eq.s32.totalorder %s24, 7
      %p198 = por %p196, %p197
      %p200 = scmp.ne.s32.totalorder %s185, %s199
      %p201 = scmp.eq.s32.totalorder %s24, 0
      %p202 = por %p200, %p201
      %s204 = sadd.s32 %s203, 1
      %p207 = scmp.eq.s32.totalorder %s18, 7
      %p208 = scmp.ne.s32.totalorder %s203, %s205
      %p209 = scmp.eq.s32.totalorder %s18, 0
      %p210 = por %p208, %p209
      %p211 = scmp.ne.s32.totalorder %s203, %s205
      %p212 = scmp.eq.s32.totalorder %s23, 7
      %p213 = por %p211, %p212
      %p214 = scmp.ne.s32.totalorder %s205, %s206
      %p215 = scmp.eq.s32.totalorder %s23, 0
      %p216 = por %p214, %p215
      %p217 = scmp.ne.s32.totalorder %s205, %s206
      %p218 = scmp.eq.s32.totalorder %s24, 7
      %p219 = por %p217, %p218
      %p221 = scmp.ne.s32.totalorder %s206, %s220
      %p222 = scmp.eq.s32.totalorder %s24, 0
      %p223 = por %p221, %p222
      %s225 = sadd.s32 %s224, 1
      %p228 = scmp.eq.s32.totalorder %s18, 7
      %p229 = scmp.ne.s32.totalorder %s224, %s226
      %p230 = scmp.eq.s32.totalorder %s18, 0
      %p231 = por %p229, %p230
      %p232 = scmp.ne.s32.totalorder %s224, %s226
      %p233 = scmp.eq.s32.totalorder %s23, 7
      %p234 = por %p232, %p233
      %p235 = scmp.ne.s32.totalorder %s226, %s227
      %p236 = scmp.eq.s32.totalorder %s23, 0
      %p237 = por %p235, %p236
      %p238 = scmp.ne.s32.totalorder %s226, %s227
      %p239 = scmp.eq.s32.totalorder %s24, 7
      %p240 = por %p238, %p239
      %p242 = scmp.ne.s32.totalorder %s227, %s241
      %p243 = scmp.eq.s32.totalorder %s24, 0
      %p244 = por %p242, %p243
      %s245 = smul.u32 %s25, 4
      %s246 = sadd.s32 %s245, %s26
      %s247 = smul.u32 %s37, 4
      %s248 = sadd.s32 %s247, %s33
      %s249 = ssub.s32 %s246, %s248
      %p250 = scmp.eq.s32.totalorder %s249, 0
      %s252 = sadd.s32 %s251, 1
      %s253 = scalar_select %p250, %s251, %s252
      %p256 = pneg %p250
      %p257 = scmp.eq.s32.totalorder %s18, 7
      %p258 = por %p256, %p257
      %p259 = scmp.ne.s32.totalorder %s251, %s254
      %p260 = scmp.eq.s32.totalorder %s18, 0
      %p261 = por %p259, %p260
      %p262 = scmp.ne.s32.totalorder %s251, %s254
      %p263 = scmp.eq.s32.totalorder %s23, 7
      %p264 = por %p262, %p263
      %p265 = scmp.ne.s32.totalorder %s254, %s255
      %p266 = scmp.eq.s32.totalorder %s23, 0
      %p267 = por %p265, %p266
      %p268 = scmp.ne.s32.totalorder %s254, %s255
      %p269 = scmp.eq.s32.totalorder %s24, 7
      %p270 = por %p268, %p269
      %p272 = scmp.ne.s32.totalorder %s255, %s271
      %p273 = scmp.eq.s32.totalorder %s24, 0
      %p274 = por %p272, %p273
      %p275 = scmp.le.s32.totalorder 1, %s18
      %p276 = scmp.lt.s32.totalorder %s18, 9
      %p277 = pnand %p275, %p276
      %p278 = pneg %p277
      // Predicated region
      $region9: #{tpu_custom_call.1} parent=5 // pred_check
        _
      $region10: #{tpu_custom_call.1} parent=5 // pred_check_branch
        %280 = sbr.rel (%p277) target = $region12
      $region11: #{tpu_custom_call.1} parent=5 // pred_region
        %s281 = ssub.s32 %s18, 1
        // Predicated region
        $region13: #{tpu_custom_call.1} parent=11 // pred_check
          %p282 = pneg %p111
        $region14: #{tpu_custom_call.1} parent=11 // pred_check_branch
          %284 = sbr.rel (%p282) target = $region16
        $region15: #{tpu_custom_call.1} parent=11 // pred_region
          _
        $region16: #{tpu_custom_call.1} parent=11 // pred_fallthru
          _
        // Predicated region
        $region17: #{tpu_custom_call.1} parent=11 // pred_check
          %p285 = pneg %p132
        $region18: #{tpu_custom_call.1} parent=11 // pred_check_branch
          %287 = sbr.rel (%p285) target = $region20
        $region19: #{tpu_custom_call.1} parent=11 // pred_region
          _
        $region20: #{tpu_custom_call.1} parent=11 // pred_fallthru
          _
        // Predicated region
        $region21: #{tpu_custom_call.1} parent=11 // pred_check
          %p288 = pneg %p153
        $region22: #{tpu_custom_call.1} parent=11 // pred_check_branch
          %290 = sbr.rel (%p288) target = $region24
        $region23: #{tpu_custom_call.1} parent=11 // pred_region
          _
        $region24: #{tpu_custom_call.1} parent=11 // pred_fallthru
          _
        // Predicated region
        $region25: #{tpu_custom_call.1} parent=11 // pred_check
          %p291 = pneg %p174
        $region26: #{tpu_custom_call.1} parent=11 // pred_check_branch
          %293 = sbr.rel (%p291) target = $region28
        $region27: #{tpu_custom_call.1} parent=11 // pred_region
          _
        $region28: #{tpu_custom_call.1} parent=11 // pred_fallthru
          _
        // Predicated region
        $region29: #{tpu_custom_call.1} parent=11 // pred_check
          %p294 = pneg %p195
        $region30: #{tpu_custom_call.1} parent=11 // pred_check_branch
          %296 = sbr.rel (%p294) target = $region32
        $region31: #{tpu_custom_call.1} parent=11 // pred_region
          _
        $region32: #{tpu_custom_call.1} parent=11 // pred_fallthru
          _
        // Predicated region
        $region33: #{tpu_custom_call.1} parent=11 // pred_check
          %p297 = pneg %p216
        $region34: #{tpu_custom_call.1} parent=11 // pred_check_branch
          %299 = sbr.rel (%p297) target = $region36
        $region35: #{tpu_custom_call.1} parent=11 // pred_region
          _
        $region36: #{tpu_custom_call.1} parent=11 // pred_fallthru
          _
        // Predicated region
        $region37: #{tpu_custom_call.1} parent=11 // pred_check
          %p300 = pneg %p237
        $region38: #{tpu_custom_call.1} parent=11 // pred_check_branch
          %302 = sbr.rel (%p300) target = $region40
        $region39: #{tpu_custom_call.1} parent=11 // pred_region
          _
        $region40: #{tpu_custom_call.1} parent=11 // pred_fallthru
          _
      $region12: #{tpu_custom_call.1} parent=5 // pred_fallthru
        _
      %p303 = scmp.lt.s32.totalorder %s18, 8
      // Predicated region
      $region41: #{tpu_custom_call.1} parent=5 // pred_check
        %p304 = pneg %p303
      $region42: #{tpu_custom_call.1} parent=5 // pred_check_branch
        %306 = sbr.rel (%p304) target = $region44
      $region43: #{tpu_custom_call.1} parent=5 // pred_region
        // Predicated region
        $region45: #{tpu_custom_call.1} parent=43 // pred_check
          %p307 = pneg %p50
        $region46: #{tpu_custom_call.1} parent=43 // pred_check_branch
          %309 = sbr.rel (%p307) target = $region48
        $region47: #{tpu_custom_call.1} parent=43 // pred_region
          %p310 = scmp.lt.s32.totalorder %s25, 1
          %s311 = scalar_select %p310, %s25, 1
          %s312 = smul.addr %s311, 84
          %s313 = smul.addr %s312, 8
          %s314 = scalar_lea.vmem %s0, %s313
        $region48: #{tpu_custom_call.1} parent=43 // pred_fallthru
          _
        // Predicated region
        $region49: #{tpu_custom_call.1} parent=43 // pred_check
          %p315 = pneg %p84
        $region50: #{tpu_custom_call.1} parent=43 // pred_check_branch
          %317 = sbr.rel (%p315) target = $region52
        $region51: #{tpu_custom_call.1} parent=43 // pred_region
          %s318 = sadd.s32 %s26, 1
          %p319 = scmp.lt.s32.totalorder %s318, 3
          %s320 = scalar_select %p319, %s318, 3
          %p321 = scmp.lt.s32.totalorder %s25, 1
          %s322 = scalar_select %p321, %s25, 1
          %p323 = scmp.lt.s32.totalorder %s320, 3
          %s324 = scalar_select %p323, %s320, 3
          %s325 = smul.addr %s324, 21
          %s326 = smul.addr %s322, 84
          %s327 = sadd.s32 %s325, %s326
          %s328 = smul.addr %s327, 8
          %s329 = scalar_lea.vmem %s1, %s328
          %s330 = sadd.s32 %s26, 1
          %p331 = scmp.lt.s32.totalorder %s330, 3
          %s332 = scalar_select %p331, %s330, 3
        $region52: #{tpu_custom_call.1} parent=43 // pred_fallthru
          _
      $region44: #{tpu_custom_call.1} parent=5 // pred_fallthru
        _
      %p333 = scmp.le.s32.totalorder 1, %s18
      %p334 = scmp.lt.s32.totalorder %s18, 9
      %p335 = pnand %p333, %p334
      %p336 = pneg %p335
      // Predicated region
      $region53: #{tpu_custom_call.1} parent=5 // pred_check
        _
      $region54: #{tpu_custom_call.1} parent=5 // pred_check_branch
        %338 = sbr.rel (%p335) target = $region56
      $region55: #{tpu_custom_call.1} parent=5 // pred_region
        %s339 = ssub.s32 %s18, 1
        %p340 = scmp.lt.s32.totalorder %s27, 1
        %s341 = scalar_select %p340, %s27, 1
        %s342 = smul.addr %s341, 84
        %s343 = smul.addr %s342, 8
        %s344 = scalar_lea.vmem %s0, %s343
        %p345 = pneg %p56
        %p346 = pneg %p53
        %s347 = sadd.s32 %s28, 1
        %p348 = scmp.lt.s32.totalorder %s347, 3
        %s349 = scalar_select %p348, %s347, 3
        %p350 = scmp.lt.s32.totalorder %s27, 1
        %s351 = scalar_select %p350, %s27, 1
        %p352 = scmp.lt.s32.totalorder %s349, 3
        %s353 = scalar_select %p352, %s349, 3
        %s354 = smul.addr %s353, 21
        %s355 = smul.addr %s351, 84
        %s356 = sadd.s32 %s354, %s355
        %s357 = smul.addr %s356, 8
        %s358 = scalar_lea.vmem %s1, %s357
        %p359 = pneg %p90
        %p360 = pneg %p87
        %p361 = pneg %p111
        %p362 = pneg %p108
        %p363 = pneg %p132
        %p364 = pneg %p129
        %p365 = pneg %p153
        %p366 = pneg %p150
        %p367 = pneg %p174
        %p368 = pneg %p171
        %p369 = pneg %p195
        %p370 = pneg %p192
        %p371 = pneg %p216
        %p372 = pneg %p213
        %p373 = pneg %p237
        %p374 = pneg %p234
        %p375 = pneg %p267
        %p376 = pneg %p264
        %s377 = sand.u32 %s254, 1
        %s378 = scalar_lea.sflag [#allocation5], %s377
        %s379 = sand.u32 %s254, 1
        %s380 = smul.addr %s379, 64
        %s381 = scalar_lea.vmem [#allocation4], %s380
        %p382 = scmp.lt.s32.totalorder %s27, 1
        %s383 = scalar_select %p382, %s27, 1
        %s384 = smul.addr %s383, 84
        %s385 = smul.addr %s384, 8
        %s386 = scalar_lea.vmem %s0, %s385
        %s387 = sadd.s32 %s28, 1
        %p388 = scmp.lt.s32.totalorder %s387, 3
        %s389 = scalar_select %p388, %s387, 3
        %p390 = scmp.lt.s32.totalorder %s27, 1
        %s391 = scalar_select %p390, %s27, 1
        %p392 = scmp.lt.s32.totalorder %s389, 3
        %s393 = scalar_select %p392, %s389, 3
        %s394 = smul.addr %s393, 21
        %s395 = smul.addr %s391, 84
        %s396 = sadd.s32 %s394, %s395
        %s397 = smul.addr %s396, 8
        %s398 = scalar_lea.vmem %s1, %s397
        %s399 = sadd.s32 %s28, 1
        %p400 = scmp.lt.s32.totalorder %s399, 3
        %s401 = scalar_select %p400, %s399, 3
        %s402 = smul.u32 %s27, 4
        %s403 = sadd.s32 %s402, %s28
        %v404 = vld [vmem:[%s2] sm:$0xff]
        %v405 = vld [vmem:[%s2 + $0x8] sm:$0xff]
        %v406 = vld [vmem:[%s2 + $0x10] sm:$0xff]
        %v407 = vld [vmem:[%s2 + $0x18] sm:$0xff]
        %v408 = vld [vmem:[%s2 + $0x20] sm:$0xff]
        %v409 = vld [vmem:[%s2 + $0x28] sm:$0xff]
        %v410 = vld [vmem:[%s2 + $0x30] sm:$0xff]
        %v411 = vld [vmem:[%s2 + $0x38] sm:$0xff]
        %v412 = vld [vmem:[%s2 + $0x40] sm:$0xff]
        %v413 = vld [vmem:[%s2 + $0x48] sm:$0xff]
        %v414 = vld [vmem:[%s2 + $0x50] sm:$0xff]
        %v415 = vld [vmem:[%s2 + $0x58] sm:$0xff]
        %v416 = vld [vmem:[%s2 + $0x60] sm:$0xff]
        %v417 = vld [vmem:[%s2 + $0x68] sm:$0xff]
        %v418 = vld [vmem:[%s2 + $0x70] sm:$0xff]
        %v419 = vld [vmem:[%s2 + $0x78] sm:$0xff]
        %v420 = vld [vmem:[%s2 + $0x80] sm:$0xff]
        %v421 = vld [vmem:[%s2 + $0x88] sm:$0xff]
        %v422 = vld [vmem:[%s2 + $0x90] sm:$0xff]
        %v423 = vld [vmem:[%s2 + $0x98] sm:$0xff]
        %v424 = vld [vmem:[%s2 + $0xa0] sm:$0xff]
        %v425 = vld [vmem:[%s3] sm:$0xff]
        %v426 = vld [vmem:[%s3 + $0x8] sm:$0xff]
        %v427 = vld [vmem:[%s6] sm:$0x1]
        %p428 = scmp.eq.s32.totalorder %s28, 0
        // Predicated region
        $region57: #{tpu_custom_call.1} parent=55 // pred_check
          %p429 = pneg %p428
        $region58: #{tpu_custom_call.1} parent=55 // pred_check_branch
          %431 = sbr.rel (%p429) target = $region60
        $region59: #{tpu_custom_call.1} parent=55 // pred_region
          %v432 = vld [vmem:[%s386] sm:$0xff]
          %v433 = vld [vmem:[%s386 + $0x8] sm:$0xff]
          %v434 = vld [vmem:[%s386 + $0x10] sm:$0xff]
          %v435 = vld [vmem:[%s386 + $0x18] sm:$0xff]
          %v436 = vld [vmem:[%s386 + $0x20] sm:$0xff]
          %v437 = vld [vmem:[%s386 + $0x28] sm:$0xff]
          %v438 = vld [vmem:[%s386 + $0x30] sm:$0xff]
          %v439 = vld [vmem:[%s386 + $0x38] sm:$0xff]
          %v440 = vld [vmem:[%s386 + $0x40] sm:$0xff]
          %v441 = vld [vmem:[%s386 + $0x48] sm:$0xff]
          %v442 = vld [vmem:[%s386 + $0x50] sm:$0xff]
          %v443 = vld [vmem:[%s386 + $0x58] sm:$0xff]
          %v444 = vld [vmem:[%s386 + $0x60] sm:$0xff]
          %v445 = vld [vmem:[%s386 + $0x68] sm:$0xff]
          %v446 = vld [vmem:[%s386 + $0x70] sm:$0xff]
          %v447 = vld [vmem:[%s386 + $0x78] sm:$0xff]
          %v448 = vld [vmem:[%s386 + $0x80] sm:$0xff]
          %v449 = vld [vmem:[%s386 + $0x88] sm:$0xff]
          %v450 = vld [vmem:[%s386 + $0x90] sm:$0xff]
          %v451 = vld [vmem:[%s386 + $0x98] sm:$0xff]
          %v452 = vld [vmem:[%s386 + $0xa0] sm:$0xff]
          %vm453 = vcmask 130048
          %454 = vst.msk [vmem:[#allocation3] sm:$0xff] %vm453, %v432
          %455 = vst.msk [vmem:[#allocation3 + $0x8] sm:$0xff] %vm453, %v433
          %456 = vst.msk [vmem:[#allocation3 + $0x10] sm:$0xff] %vm453, %v434
          %457 = vst.msk [vmem:[#allocation3 + $0x18] sm:$0xff] %vm453, %v435
          %458 = vst.msk [vmem:[#allocation3 + $0x20] sm:$0xff] %vm453, %v436
          %459 = vst.msk [vmem:[#allocation3 + $0x28] sm:$0xff] %vm453, %v437
          %460 = vst.msk [vmem:[#allocation3 + $0x30] sm:$0xff] %vm453, %v438
          %461 = vst.msk [vmem:[#allocation3 + $0x38] sm:$0xff] %vm453, %v439
          %462 = vst.msk [vmem:[#allocation3 + $0x40] sm:$0xff] %vm453, %v440
          %463 = vst.msk [vmem:[#allocation3 + $0x48] sm:$0xff] %vm453, %v441
          %464 = vst.msk [vmem:[#allocation3 + $0x50] sm:$0xff] %vm453, %v442
          %465 = vst.msk [vmem:[#allocation3 + $0x58] sm:$0xff] %vm453, %v443
          %466 = vst.msk [vmem:[#allocation3 + $0x60] sm:$0xff] %vm453, %v444
          %467 = vst.msk [vmem:[#allocation3 + $0x68] sm:$0xff] %vm453, %v445
          %468 = vst.msk [vmem:[#allocation3 + $0x70] sm:$0xff] %vm453, %v446
          %469 = vst.msk [vmem:[#allocation3 + $0x78] sm:$0xff] %vm453, %v447
          %470 = vst.msk [vmem:[#allocation3 + $0x80] sm:$0xff] %vm453, %v448
          %471 = vst.msk [vmem:[#allocation3 + $0x88] sm:$0xff] %vm453, %v449
          %472 = vst.msk [vmem:[#allocation3 + $0x90] sm:$0xff] %vm453, %v450
          %473 = vst.msk [vmem:[#allocation3 + $0x98] sm:$0xff] %vm453, %v451
          %474 = vst.msk [vmem:[#allocation3 + $0xa0] sm:$0xff] %vm453, %v452
          %vm475 = vcmask 31744
          %476 = vst.msk [vmem:[#allocation2] sm:$0xff] %vm475, 0.0
          %477 = vst.msk [vmem:[#allocation2 + $0x8] sm:$0xff] %vm475, 0.0
          %478 = vst.msk [vmem:[#allocation2 + $0x10] sm:$0xff] %vm475, 0.0
          %479 = vst.msk [vmem:[#allocation2 + $0x18] sm:$0xff] %vm475, 0.0
          %480 = vst.msk [vmem:[#allocation2 + $0x20] sm:$0xff] %vm475, 0.0
          %481 = vst.msk [vmem:[#allocation2 + $0x28] sm:$0xff] %vm475, 0.0
          %482 = vst.msk [vmem:[#allocation2 + $0x30] sm:$0xff] %vm475, 0.0
          %483 = vst.msk [vmem:[#allocation2 + $0x38] sm:$0xff] %vm475, 0.0
          %484 = vst.msk [vmem:[#allocation2 + $0x40] sm:$0xff] %vm475, 0.0
          %485 = vst.msk [vmem:[#allocation2 + $0x48] sm:$0xff] %vm475, 0.0
          %486 = vst.msk [vmem:[#allocation2 + $0x50] sm:$0xff] %vm475, 0.0
          %487 = vst.msk [vmem:[#allocation2 + $0x58] sm:$0xff] %vm475, 0.0
          %488 = vst.msk [vmem:[#allocation2 + $0x60] sm:$0xff] %vm475, 0.0
          %489 = vst.msk [vmem:[#allocation2 + $0x68] sm:$0xff] %vm475, 0.0
          %490 = vst.msk [vmem:[#allocation2 + $0x70] sm:$0xff] %vm475, 0.0
          %491 = vst.msk [vmem:[#allocation2 + $0x78] sm:$0xff] %vm475, 0.0
          %492 = vst.msk [vmem:[#allocation2 + $0x80] sm:$0xff] %vm475, 0.0
          %493 = vst.msk [vmem:[#allocation2 + $0x88] sm:$0xff] %vm475, 0.0
          %494 = vst.msk [vmem:[#allocation2 + $0x90] sm:$0xff] %vm475, 0.0
          %495 = vst.msk [vmem:[#allocation2 + $0x98] sm:$0xff] %vm475, 0.0
          %496 = vst.msk [vmem:[#allocation2 + $0xa0] sm:$0xff] %vm475, 0.0
          %v497 = vld [vmem:[%s386] sm:$0xff]
          %v498 = vld [vmem:[%s386 + $0x8] sm:$0xff]
          %v499 = vld [vmem:[%s386 + $0x10] sm:$0xff]
          %v500 = vld [vmem:[%s386 + $0x18] sm:$0xff]
          %v501 = vld [vmem:[%s386 + $0x20] sm:$0xff]
          %v502 = vld [vmem:[%s386 + $0x28] sm:$0xff]
          %v503 = vld [vmem:[%s386 + $0x30] sm:$0xff]
          %v504 = vld [vmem:[%s386 + $0x38] sm:$0xff]
          %v505 = vld [vmem:[%s386 + $0x40] sm:$0xff]
          %v506 = vld [vmem:[%s386 + $0x48] sm:$0xff]
          %v507 = vld [vmem:[%s386 + $0x50] sm:$0xff]
          %v508 = vld [vmem:[%s386 + $0x58] sm:$0xff]
          %v509 = vld [vmem:[%s386 + $0x60] sm:$0xff]
          %v510 = vld [vmem:[%s386 + $0x68] sm:$0xff]
          %v511 = vld [vmem:[%s386 + $0x70] sm:$0xff]
          %v512 = vld [vmem:[%s386 + $0x78] sm:$0xff]
          %v513 = vld [vmem:[%s386 + $0x80] sm:$0xff]
          %v514 = vld [vmem:[%s386 + $0x88] sm:$0xff]
          %v515 = vld [vmem:[%s386 + $0x90] sm:$0xff]
          %v516 = vld [vmem:[%s386 + $0x98] sm:$0xff]
          %v517 = vld [vmem:[%s386 + $0xa0] sm:$0xff]
          %v519 = vlaneseq
          %v520 = vshrl.u32 %v519, 7
          %v521 = vsub.s32 0, %v520
          %v522 = vrot.slane %v427, %v521
          %v525 = vsel %vm453, %v497, 0
          %v528 = vsel %vm453, %v498, 0
          %v531 = vsel %vm453, %v499, 0
          %v534 = vsel %vm453, %v500, 0
          %v537 = vsel %vm453, %v501, 0
          %v540 = vsel %vm453, %v502, 0
          %v543 = vsel %vm453, %v503, 0
          %v546 = vsel %vm453, %v504, 0
          %v549 = vsel %vm453, %v505, 0
          %v552 = vsel %vm453, %v506, 0
          %v555 = vsel %vm453, %v507, 0
          %v558 = vsel %vm453, %v508, 0
          %v561 = vsel %vm453, %v509, 0
          %v564 = vsel %vm453, %v510, 0
          %v567 = vsel %vm453, %v511, 0
          %v570 = vsel %vm453, %v512, 0
          %v573 = vsel %vm453, %v513, 0
          %v576 = vsel %vm453, %v514, 0
          %v579 = vsel %vm453, %v515, 0
          %v582 = vsel %vm453, %v516, 0
          %v585 = vsel %vm453, %v517, 0
          %587 = vmatprep.subr.mxu0 0.0
          %588 = vmatpush1.msra.mxu0 %v425
          %589 = vmatprep.subr.mxu0 0.0
          %590 = vmatpush1.msra.mxu0 %v426
          %591 = vmatprep.subr.mxu0 0.0
          %592 = vmatpush1.msra.mxu0 0.0
          %593 = vmatprep.subr.mxu0 0.0
          %594 = vmatpush1.msra.mxu0 0.0
          %595 = vmatprep.subr.mxu0 0.0
          %596 = vmatpush1.msra.mxu0 0.0
          %597 = vmatprep.subr.mxu0 0.0
          %598 = vmatpush1.msra.mxu0 0.0
          %599 = vmatprep.subr.mxu0 0.0
          %600 = vmatpush1.msra.mxu0 0.0
          %601 = vmatprep.subr.mxu0 0.0
          %602 = vmatpush1.msra.mxu0 0.0
          %603 = vmatprep.subr.mxu0 0.0
          %604 = vmatpush1.msra.mxu0 0.0
          %605 = vmatprep.subr.mxu0 0.0
          %606 = vmatpush1.msra.mxu0 0.0
          %607 = vmatprep.subr.mxu0 0.0
          %608 = vmatpush1.msra.mxu0 0.0
          %609 = vmatprep.subr.mxu0 0.0
          %610 = vmatpush1.msra.mxu0 0.0
          %611 = vmatprep.subr.mxu0 0.0
          %612 = vmatpush1.msra.mxu0 0.0
          %613 = vmatprep.subr.mxu0 0.0
          %614 = vmatpush1.msra.mxu0 0.0
          %615 = vmatprep.subr.mxu0 0.0
          %616 = vmatpush1.msra.mxu0 0.0
          %617 = vmatprep.subr.mxu0 0.0
          %618 = vmatpush1.msra.mxu0 0.0
          %619 = vmatprep.subr.mxu0 0.0
          %620 = vmatpush1.msra.mxu0 0.0
          %621 = vmatprep.subr.mxu0 0.0
          %622 = vmatpush1.msra.mxu0 0.0
          %623 = vmatprep.subr.mxu0 0.0
          %624 = vmatpush1.msra.mxu0 0.0
          %625 = vmatprep.subr.mxu0 0.0
          %626 = vmatpush1.msra.mxu0 0.0
          %627 = vmatprep.subr.mxu0 0.0
          %628 = vmatpush1.msra.mxu0 0.0
          %629 = vmatprep.subr.mxu0 0.0
          %630 = vmatpush1.msra.mxu0 0.0
          %631 = vmatprep.subr.mxu0 0.0
          %632 = vmatpush1.msra.mxu0 0.0
          %633 = vmatprep.subr.mxu0 0.0
          %634 = vmatpush1.msra.mxu0 0.0
          %635 = vmatprep.subr.mxu0 0.0
          %636 = vmatpush1.msra.mxu0 0.0
          %637 = vmatprep.subr.mxu0 0.0
          %638 = vmatpush1.msra.mxu0 0.0
          %639 = vmatprep.subr.mxu0 0.0
          %640 = vmatpush1.msra.mxu0 0.0
          %641 = vmatprep.subr.mxu0 0.0
          %642 = vmatpush1.msra.mxu0 0.0
          %643 = vmatprep.subr.mxu0 0.0
          %644 = vmatpush1.msra.mxu0 0.0
          %645 = vmatprep.subr.mxu0 0.0
          %646 = vmatpush1.msra.mxu0 0.0
          %647 = vmatprep.subr.mxu0 0.0
          %648 = vmatpush1.msra.mxu0 0.0
          %649 = vmatprep.subr.mxu0 0.0
          %650 = vmatpush1.msra.mxu0 0.0
          %651 = vmatprep.mubr.f32.mxu0 0.0
          %652 = vmatmul.mubr.f32.gmra.mrb[0].mxu0 %v525
          %v653 = vpop.f32.mrb[0].mxu0
          %v654 = vadd.f32 %v522, %v653
          %v655 = vpop.f32.mrb[0].mxu0
          %656 = vmatprep.mubr.f32.mxu0 0.0
          %657 = vmatmul.mubr.f32.gmra.mrb[0].mxu0 %v528
          %v658 = vpop.f32.mrb[0].mxu0
          %v659 = vadd.f32 %v522, %v658
          %v660 = vpop.f32.mrb[0].mxu0
          %661 = vmatprep.mubr.f32.mxu0 0.0
          %662 = vmatmul.mubr.f32.gmra.mrb[0].mxu0 %v531
          %v663 = vpop.f32.mrb[0].mxu0
          %v664 = vadd.f32 %v522, %v663
          %v665 = vpop.f32.mrb[0].mxu0
          %666 = vmatprep.mubr.f32.mxu0 0.0
          %667 = vmatmul.mubr.f32.gmra.mrb[0].mxu0 %v534
          %v668 = vpop.f32.mrb[0].mxu0
          %v669 = vadd.f32 %v522, %v668
          %v670 = vpop.f32.mrb[0].mxu0
          %671 = vmatprep.mubr.f32.mxu0 0.0
          %672 = vmatmul.mubr.f32.gmra.mrb[0].mxu0 %v537
          %v673 = vpop.f32.mrb[0].mxu0
          %v674 = vadd.f32 %v522, %v673
          %v675 = vpop.f32.mrb[0].mxu0
          %676 = vmatprep.mubr.f32.mxu0 0.0
          %677 = vmatmul.mubr.f32.gmra.mrb[0].mxu0 %v540
          %v678 = vpop.f32.mrb[0].mxu0
          %v679 = vadd.f32 %v522, %v678
          %v680 = vpop.f32.mrb[0].mxu0
          %681 = vmatprep.mubr.f32.mxu0 0.0
          %682 = vmatmul.mubr.f32.gmra.mrb[0].mxu0 %v543
          %v683 = vpop.f32.mrb[0].mxu0
          %v684 = vadd.f32 %v522, %v683
          %v685 = vpop.f32.mrb[0].mxu0
          %686 = vmatprep.mubr.f32.mxu0 0.0
          %687 = vmatmul.mubr.f32.gmra.mrb[0].mxu0 %v546
          %v688 = vpop.f32.mrb[0].mxu0
          %v689 = vadd.f32 %v522, %v688
          %v690 = vpop.f32.mrb[0].mxu0
          %691 = vmatprep.mubr.f32.mxu0 0.0
          %692 = vmatmul.mubr.f32.gmra.mrb[0].mxu0 %v549
          %v693 = vpop.f32.mrb[0].mxu0
          %v694 = vadd.f32 %v522, %v693
          %v695 = vpop.f32.mrb[0].mxu0
          %696 = vmatprep.mubr.f32.mxu0 0.0
          %697 = vmatmul.mubr.f32.gmra.mrb[0].mxu0 %v552
          %v698 = vpop.f32.mrb[0].mxu0
          %v699 = vadd.f32 %v522, %v698
          %v700 = vpop.f32.mrb[0].mxu0
          %701 = vmatprep.mubr.f32.mxu0 0.0
          %702 = vmatmul.mubr.f32.gmra.mrb[0].mxu0 %v555
          %v703 = vpop.f32.mrb[0].mxu0
          %v704 = vadd.f32 %v522, %v703
          %v705 = vpop.f32.mrb[0].mxu0
          %706 = vmatprep.mubr.f32.mxu0 0.0
          %707 = vmatmul.mubr.f32.gmra.mrb[0].mxu0 %v558
          %v708 = vpop.f32.mrb[0].mxu0
          %v709 = vadd.f32 %v522, %v708
          %v710 = vpop.f32.mrb[0].mxu0
          %711 = vmatprep.mubr.f32.mxu0 0.0
          %712 = vmatmul.mubr.f32.gmra.mrb[0].mxu0 %v561
          %v713 = vpop.f32.mrb[0].mxu0
          %v714 = vadd.f32 %v522, %v713
          %v715 = vpop.f32.mrb[0].mxu0
          %716 = vmatprep.mubr.f32.mxu0 0.0
          %717 = vmatmul.mubr.f32.gmra.mrb[0].mxu0 %v564
          %v718 = vpop.f32.mrb[0].mxu0
          %v719 = vadd.f32 %v522, %v718
          %v720 = vpop.f32.mrb[0].mxu0
          %721 = vmatprep.mubr.f32.mxu0 0.0
          %722 = vmatmul.mubr.f32.gmra.mrb[0].mxu0 %v567
          %v723 = vpop.f32.mrb[0].mxu0
          %v724 = vadd.f32 %v522, %v723
          %v725 = vpop.f32.mrb[0].mxu0
          %726 = vmatprep.mubr.f32.mxu0 0.0
          %727 = vmatmul.mubr.f32.gmra.mrb[0].mxu0 %v570
          %v728 = vpop.f32.mrb[0].mxu0
          %v729 = vadd.f32 %v522, %v728
          %v730 = vpop.f32.mrb[0].mxu0
          %731 = vmatprep.mubr.f32.mxu0 0.0
          %732 = vmatmul.mubr.f32.gmra.mrb[0].mxu0 %v573
          %v733 = vpop.f32.mrb[0].mxu0
          %v734 = vadd.f32 %v522, %v733
          %v735 = vpop.f32.mrb[0].mxu0
          %736 = vmatprep.mubr.f32.mxu0 0.0
          %737 = vmatmul.mubr.f32.gmra.mrb[0].mxu0 %v576
          %v738 = vpop.f32.mrb[0].mxu0
          %v739 = vadd.f32 %v522, %v738
          %v740 = vpop.f32.mrb[0].mxu0
          %741 = vmatprep.mubr.f32.mxu0 0.0
          %742 = vmatmul.mubr.f32.gmra.mrb[0].mxu0 %v579
          %v743 = vpop.f32.mrb[0].mxu0
          %v744 = vadd.f32 %v522, %v743
          %v745 = vpop.f32.mrb[0].mxu0
          %746 = vmatprep.mubr.f32.mxu0 0.0
          %747 = vmatmul.mubr.f32.gmra.mrb[0].mxu0 %v582
          %v748 = vpop.f32.mrb[0].mxu0
          %v749 = vadd.f32 %v522, %v748
          %v750 = vpop.f32.mrb[0].mxu0
          %751 = vmatprep.mubr.f32.mxu0 0.0
          %752 = vmatmul.mubr.f32.gmra.mrb[0].mxu0 %v585
          %v753 = vpop.f32.mrb[0].mxu0
          %v754 = vadd.f32 %v522, %v753
          %v755 = vpop.f32.mrb[0].mxu0
          %756 = vdwg.mxu0
          %v757 = vmax.f32 %v654, 0.0
          %v758 = vmax.f32 %v659, 0.0
          %v759 = vmax.f32 %v664, 0.0
          %v760 = vmax.f32 %v669, 0.0
          %v761 = vmax.f32 %v674, 0.0
          %v762 = vmax.f32 %v679, 0.0
          %v763 = vmax.f32 %v684, 0.0
          %v764 = vmax.f32 %v689, 0.0
          %v765 = vmax.f32 %v694, 0.0
          %v766 = vmax.f32 %v699, 0.0
          %v767 = vmax.f32 %v704, 0.0
          %v768 = vmax.f32 %v709, 0.0
          %v769 = vmax.f32 %v714, 0.0
          %v770 = vmax.f32 %v719, 0.0
          %v771 = vmax.f32 %v724, 0.0
          %v772 = vmax.f32 %v729, 0.0
          %v773 = vmax.f32 %v734, 0.0
          %v774 = vmax.f32 %v739, 0.0
          %v775 = vmax.f32 %v744, 0.0
          %v776 = vmax.f32 %v749, 0.0
          %v777 = vmax.f32 %v754, 0.0
          %779 = vset.pattern.permute.xlu0 0
          %780 = vperm.xlu0 %779, %v404
          %v781 = vpop.permute.xlu0 %780
          %784 = vset.pattern.permute.xlu0 0
          %785 = vperm.xlu0 %784, %v405
          %v786 = vpop.permute.xlu0 %785
          %789 = vset.pattern.permute.xlu0 0
          %790 = vperm.xlu0 %789, %v406
          %v791 = vpop.permute.xlu0 %790
          %794 = vset.pattern.permute.xlu0 0
          %795 = vperm.xlu0 %794, %v407
          %v796 = vpop.permute.xlu0 %795
          %799 = vset.pattern.permute.xlu0 0
          %800 = vperm.xlu0 %799, %v408
          %v801 = vpop.permute.xlu0 %800
          %804 = vset.pattern.permute.xlu0 0
          %805 = vperm.xlu0 %804, %v409
          %v806 = vpop.permute.xlu0 %805
          %809 = vset.pattern.permute.xlu0 0
          %810 = vperm.xlu0 %809, %v410
          %v811 = vpop.permute.xlu0 %810
          %814 = vset.pattern.permute.xlu0 0
          %815 = vperm.xlu0 %814, %v411
          %v816 = vpop.permute.xlu0 %815
          %819 = vset.pattern.permute.xlu0 0
          %820 = vperm.xlu0 %819, %v412
          %v821 = vpop.permute.xlu0 %820
          %824 = vset.pattern.permute.xlu0 0
          %825 = vperm.xlu0 %824, %v413
          %v826 = vpop.permute.xlu0 %825
          %829 = vset.pattern.permute.xlu0 0
          %830 = vperm.xlu0 %829, %v414
          %v831 = vpop.permute.xlu0 %830
          %834 = vset.pattern.permute.xlu0 0
          %835 = vperm.xlu0 %834, %v415
          %v836 = vpop.permute.xlu0 %835
          %839 = vset.pattern.permute.xlu0 0
          %840 = vperm.xlu0 %839, %v416
          %v841 = vpop.permute.xlu0 %840
          %844 = vset.pattern.permute.xlu0 0
          %845 = vperm.xlu0 %844, %v417
          %v846 = vpop.permute.xlu0 %845
          %849 = vset.pattern.permute.xlu0 0
          %850 = vperm.xlu0 %849, %v418
          %v851 = vpop.permute.xlu0 %850
          %854 = vset.pattern.permute.xlu0 0
          %855 = vperm.xlu0 %854, %v419
          %v856 = vpop.permute.xlu0 %855
          %859 = vset.pattern.permute.xlu0 0
          %860 = vperm.xlu0 %859, %v420
          %v861 = vpop.permute.xlu0 %860
          %864 = vset.pattern.permute.xlu0 0
          %865 = vperm.xlu0 %864, %v421
          %v866 = vpop.permute.xlu0 %865
          %869 = vset.pattern.permute.xlu0 0
          %870 = vperm.xlu0 %869, %v422
          %v871 = vpop.permute.xlu0 %870
          %874 = vset.pattern.permute.xlu0 0
          %875 = vperm.xlu0 %874, %v423
          %v876 = vpop.permute.xlu0 %875
          %879 = vset.pattern.permute.xlu0 0
          %880 = vperm.xlu0 %879, %v424
          %v881 = vpop.permute.xlu0 %880
          %v883 = vmul.f32 %v757, %v781
          %v884 = vmul.f32 %v758, %v786
          %v885 = vmul.f32 %v759, %v791
          %v886 = vmul.f32 %v760, %v796
          %v887 = vmul.f32 %v761, %v801
          %v888 = vmul.f32 %v762, %v806
          %v889 = vmul.f32 %v763, %v811
          %v890 = vmul.f32 %v764, %v816
          %v891 = vmul.f32 %v765, %v821
          %v892 = vmul.f32 %v766, %v826
          %v893 = vmul.f32 %v767, %v831
          %v894 = vmul.f32 %v768, %v836
          %v895 = vmul.f32 %v769, %v841
          %v896 = vmul.f32 %v770, %v846
          %v897 = vmul.f32 %v771, %v851
          %v898 = vmul.f32 %v772, %v856
          %v899 = vmul.f32 %v773, %v861
          %v900 = vmul.f32 %v774, %v866
          %v901 = vmul.f32 %v775, %v871
          %v902 = vmul.f32 %v776, %v876
          %v903 = vmul.f32 %v777, %v881
          %925 = vrot.lane.b32.xlu0 %v883, 4
          %v926 = vpop.permute.xlu0 %925
          %927 = vrot.lane.b32.xlu0 %v884, 4
          %v928 = vpop.permute.xlu0 %927
          %929 = vrot.lane.b32.xlu0 %v885, 4
          %v930 = vpop.permute.xlu0 %929
          %931 = vrot.lane.b32.xlu0 %v886, 4
          %v932 = vpop.permute.xlu0 %931
          %933 = vrot.lane.b32.xlu0 %v887, 4
          %v934 = vpop.permute.xlu0 %933
          %935 = vrot.lane.b32.xlu0 %v888, 4
          %v936 = vpop.permute.xlu0 %935
          %937 = vrot.lane.b32.xlu0 %v889, 4
          %v938 = vpop.permute.xlu0 %937
          %939 = vrot.lane.b32.xlu0 %v890, 4
          %v940 = vpop.permute.xlu0 %939
          %941 = vrot.lane.b32.xlu0 %v891, 4
          %v942 = vpop.permute.xlu0 %941
          %943 = vrot.lane.b32.xlu0 %v892, 4
          %v944 = vpop.permute.xlu0 %943
          %945 = vrot.lane.b32.xlu0 %v893, 4
          %v946 = vpop.permute.xlu0 %945
          %947 = vrot.lane.b32.xlu0 %v894, 4
          %v948 = vpop.permute.xlu0 %947
          %949 = vrot.lane.b32.xlu0 %v895, 4
          %v950 = vpop.permute.xlu0 %949
          %951 = vrot.lane.b32.xlu0 %v896, 4
          %v952 = vpop.permute.xlu0 %951
          %953 = vrot.lane.b32.xlu0 %v897, 4
          %v954 = vpop.permute.xlu0 %953
          %955 = vrot.lane.b32.xlu0 %v898, 4
          %v956 = vpop.permute.xlu0 %955
          %957 = vrot.lane.b32.xlu0 %v899, 4
          %v958 = vpop.permute.xlu0 %957
          %959 = vrot.lane.b32.xlu0 %v900, 4
          %v960 = vpop.permute.xlu0 %959
          %961 = vrot.lane.b32.xlu0 %v901, 4
          %v962 = vpop.permute.xlu0 %961
          %963 = vrot.lane.b32.xlu0 %v902, 4
          %v964 = vpop.permute.xlu0 %963
          %965 = vrot.lane.b32.xlu0 %v903, 4
          %v966 = vpop.permute.xlu0 %965
          %vm988 = vcmask 64544
          %989 = vst.msk [vmem:[#allocation2] sm:$0xff] %vm988, %v926
          %990 = vst.msk [vmem:[#allocation2 + $0x8] sm:$0xff] %vm988, %v928
          %991 = vst.msk [vmem:[#allocation2 + $0x10] sm:$0xff] %vm988, %v930
          %992 = vst.msk [vmem:[#allocation2 + $0x18] sm:$0xff] %vm988, %v932
          %993 = vst.msk [vmem:[#allocation2 + $0x20] sm:$0xff] %vm988, %v934
          %994 = vst.msk [vmem:[#allocation2 + $0x28] sm:$0xff] %vm988, %v936
          %995 = vst.msk [vmem:[#allocation2 + $0x30] sm:$0xff] %vm988, %v938
          %996 = vst.msk [vmem:[#allocation2 + $0x38] sm:$0xff] %vm988, %v940
          %997 = vst.msk [vmem:[#allocation2 + $0x40] sm:$0xff] %vm988, %v942
          %998 = vst.msk [vmem:[#allocation2 + $0x48] sm:$0xff] %vm988, %v944
          %999 = vst.msk [vmem:[#allocation2 + $0x50] sm:$0xff] %vm988, %v946
          %1000 = vst.msk [vmem:[#allocation2 + $0x58] sm:$0xff] %vm988, %v948
          %1001 = vst.msk [vmem:[#allocation2 + $0x60] sm:$0xff] %vm988, %v950
          %1002 = vst.msk [vmem:[#allocation2 + $0x68] sm:$0xff] %vm988, %v952
          %1003 = vst.msk [vmem:[#allocation2 + $0x70] sm:$0xff] %vm988, %v954
          %1004 = vst.msk [vmem:[#allocation2 + $0x78] sm:$0xff] %vm988, %v956
          %1005 = vst.msk [vmem:[#allocation2 + $0x80] sm:$0xff] %vm988, %v958
          %1006 = vst.msk [vmem:[#allocation2 + $0x88] sm:$0xff] %vm988, %v960
          %1007 = vst.msk [vmem:[#allocation2 + $0x90] sm:$0xff] %vm988, %v962
          %1008 = vst.msk [vmem:[#allocation2 + $0x98] sm:$0xff] %vm988, %v964
          %1009 = vst.msk [vmem:[#allocation2 + $0xa0] sm:$0xff] %vm988, %v966
        $region60: #{tpu_custom_call.1} parent=55 // pred_fallthru
          _
        %p1010 = scmp.gt.s32.totalorder %s28, 0
        // Predicated region
        $region61: #{tpu_custom_call.1} parent=55 // pred_check
          %p1011 = pneg %p1010
        $region62: #{tpu_custom_call.1} parent=55 // pred_check_branch
          %1013 = sbr.rel (%p1011) target = $region64
        $region63: #{tpu_custom_call.1} parent=55 // pred_region
          %v1014 = vld [vmem:[#allocation2] sm:$0xff]
          %v1015 = vld [vmem:[#allocation2 + $0x8] sm:$0xff]
          %v1016 = vld [vmem:[#allocation2 + $0x10] sm:$0xff]
          %v1017 = vld [vmem:[#allocation2 + $0x18] sm:$0xff]
          %v1018 = vld [vmem:[#allocation2 + $0x20] sm:$0xff]
          %v1019 = vld [vmem:[#allocation2 + $0x28] sm:$0xff]
          %v1020 = vld [vmem:[#allocation2 + $0x30] sm:$0xff]
          %v1021 = vld [vmem:[#allocation2 + $0x38] sm:$0xff]
          %v1022 = vld [vmem:[#allocation2 + $0x40] sm:$0xff]
          %v1023 = vld [vmem:[#allocation2 + $0x48] sm:$0xff]
          %v1024 = vld [vmem:[#allocation2 + $0x50] sm:$0xff]
          %v1025 = vld [vmem:[#allocation2 + $0x58] sm:$0xff]
          %v1026 = vld [vmem:[#allocation2 + $0x60] sm:$0xff]
          %v1027 = vld [vmem:[#allocation2 + $0x68] sm:$0xff]
          %v1028 = vld [vmem:[#allocation2 + $0x70] sm:$0xff]
          %v1029 = vld [vmem:[#allocation2 + $0x78] sm:$0xff]
          %v1030 = vld [vmem:[#allocation2 + $0x80] sm:$0xff]
          %v1031 = vld [vmem:[#allocation2 + $0x88] sm:$0xff]
          %v1032 = vld [vmem:[#allocation2 + $0x90] sm:$0xff]
          %v1033 = vld [vmem:[#allocation2 + $0x98] sm:$0xff]
          %v1034 = vld [vmem:[#allocation2 + $0xa0] sm:$0xff]
          %1056 = vrot.lane.b32.xlu0 %v1014, 124
          %v1057 = vpop.permute.xlu0 %1056
          %1058 = vrot.lane.b32.xlu0 %v1015, 124
          %v1059 = vpop.permute.xlu0 %1058
          %1060 = vrot.lane.b32.xlu0 %v1016, 124
          %v1061 = vpop.permute.xlu0 %1060
          %1062 = vrot.lane.b32.xlu0 %v1017, 124
          %v1063 = vpop.permute.xlu0 %1062
          %1064 = vrot.lane.b32.xlu0 %v1018, 124
          %v1065 = vpop.permute.xlu0 %1064
          %1066 = vrot.lane.b32.xlu0 %v1019, 124
          %v1067 = vpop.permute.xlu0 %1066
          %1068 = vrot.lane.b32.xlu0 %v1020, 124
          %v1069 = vpop.permute.xlu0 %1068
          %1070 = vrot.lane.b32.xlu0 %v1021, 124
          %v1071 = vpop.permute.xlu0 %1070
          %1072 = vrot.lane.b32.xlu0 %v1022, 124
          %v1073 = vpop.permute.xlu0 %1072
          %1074 = vrot.lane.b32.xlu0 %v1023, 124
          %v1075 = vpop.permute.xlu0 %1074
          %1076 = vrot.lane.b32.xlu0 %v1024, 124
          %v1077 = vpop.permute.xlu0 %1076
          %1078 = vrot.lane.b32.xlu0 %v1025, 124
          %v1079 = vpop.permute.xlu0 %1078
          %1080 = vrot.lane.b32.xlu0 %v1026, 124
          %v1081 = vpop.permute.xlu0 %1080
          %1082 = vrot.lane.b32.xlu0 %v1027, 124
          %v1083 = vpop.permute.xlu0 %1082
          %1084 = vrot.lane.b32.xlu0 %v1028, 124
          %v1085 = vpop.permute.xlu0 %1084
          %1086 = vrot.lane.b32.xlu0 %v1029, 124
          %v1087 = vpop.permute.xlu0 %1086
          %1088 = vrot.lane.b32.xlu0 %v1030, 124
          %v1089 = vpop.permute.xlu0 %1088
          %1090 = vrot.lane.b32.xlu0 %v1031, 124
          %v1091 = vpop.permute.xlu0 %1090
          %1092 = vrot.lane.b32.xlu0 %v1032, 124
          %v1093 = vpop.permute.xlu0 %1092
          %1094 = vrot.lane.b32.xlu0 %v1033, 124
          %v1095 = vpop.permute.xlu0 %1094
          %1096 = vrot.lane.b32.xlu0 %v1034, 124
          %v1097 = vpop.permute.xlu0 %1096
          %vm1119 = vcmask 31744
          %1120 = vst.msk [vmem:[#allocation2] sm:$0xff] %vm1119, %v1057
          %1121 = vst.msk [vmem:[#allocation2 + $0x8] sm:$0xff] %vm1119, %v1059
          %1122 = vst.msk [vmem:[#allocation2 + $0x10] sm:$0xff] %vm1119, %v1061
          %1123 = vst.msk [vmem:[#allocation2 + $0x18] sm:$0xff] %vm1119, %v1063
          %1124 = vst.msk [vmem:[#allocation2 + $0x20] sm:$0xff] %vm1119, %v1065
          %1125 = vst.msk [vmem:[#allocation2 + $0x28] sm:$0xff] %vm1119, %v1067
          %1126 = vst.msk [vmem:[#allocation2 + $0x30] sm:$0xff] %vm1119, %v1069
          %1127 = vst.msk [vmem:[#allocation2 + $0x38] sm:$0xff] %vm1119, %v1071
          %1128 = vst.msk [vmem:[#allocation2 + $0x40] sm:$0xff] %vm1119, %v1073
          %1129 = vst.msk [vmem:[#allocation2 + $0x48] sm:$0xff] %vm1119, %v1075
          %1130 = vst.msk [vmem:[#allocation2 + $0x50] sm:$0xff] %vm1119, %v1077
          %1131 = vst.msk [vmem:[#allocation2 + $0x58] sm:$0xff] %vm1119, %v1079
          %1132 = vst.msk [vmem:[#allocation2 + $0x60] sm:$0xff] %vm1119, %v1081
          %1133 = vst.msk [vmem:[#allocation2 + $0x68] sm:$0xff] %vm1119, %v1083
          %1134 = vst.msk [vmem:[#allocation2 + $0x70] sm:$0xff] %vm1119, %v1085
          %1135 = vst.msk [vmem:[#allocation2 + $0x78] sm:$0xff] %vm1119, %v1087
          %1136 = vst.msk [vmem:[#allocation2 + $0x80] sm:$0xff] %vm1119, %v1089
          %1137 = vst.msk [vmem:[#allocation2 + $0x88] sm:$0xff] %vm1119, %v1091
          %1138 = vst.msk [vmem:[#allocation2 + $0x90] sm:$0xff] %vm1119, %v1093
          %1139 = vst.msk [vmem:[#allocation2 + $0x98] sm:$0xff] %vm1119, %v1095
          %1140 = vst.msk [vmem:[#allocation2 + $0xa0] sm:$0xff] %vm1119, %v1097
          %v1141 = vld [vmem:[#allocation2] sm:$0xff]
          %v1142 = vld [vmem:[#allocation2 + $0x8] sm:$0xff]
          %v1143 = vld [vmem:[#allocation2 + $0x10] sm:$0xff]
          %v1144 = vld [vmem:[#allocation2 + $0x18] sm:$0xff]
          %v1145 = vld [vmem:[#allocation2 + $0x20] sm:$0xff]
          %v1146 = vld [vmem:[#allocation2 + $0x28] sm:$0xff]
          %v1147 = vld [vmem:[#allocation2 + $0x30] sm:$0xff]
          %v1148 = vld [vmem:[#allocation2 + $0x38] sm:$0xff]
          %v1149 = vld [vmem:[#allocation2 + $0x40] sm:$0xff]
          %v1150 = vld [vmem:[#allocation2 + $0x48] sm:$0xff]
          %v1151 = vld [vmem:[#allocation2 + $0x50] sm:$0xff]
          %v1152 = vld [vmem:[#allocation2 + $0x58] sm:$0xff]
          %v1153 = vld [vmem:[#allocation2 + $0x60] sm:$0xff]
          %v1154 = vld [vmem:[#allocation2 + $0x68] sm:$0xff]
          %v1155 = vld [vmem:[#allocation2 + $0x70] sm:$0xff]
          %v1156 = vld [vmem:[#allocation2 + $0x78] sm:$0xff]
          %v1157 = vld [vmem:[#allocation2 + $0x80] sm:$0xff]
          %v1158 = vld [vmem:[#allocation2 + $0x88] sm:$0xff]
          %v1159 = vld [vmem:[#allocation2 + $0x90] sm:$0xff]
          %v1160 = vld [vmem:[#allocation2 + $0x98] sm:$0xff]
          %v1161 = vld [vmem:[#allocation2 + $0xa0] sm:$0xff]
          %1183 = vrot.lane.b32.xlu0 %v1141, 124
          %v1184 = vpop.permute.xlu0 %1183
          %1185 = vrot.lane.b32.xlu0 %v1142, 124
          %v1186 = vpop.permute.xlu0 %1185
          %1187 = vrot.lane.b32.xlu0 %v1143, 124
          %v1188 = vpop.permute.xlu0 %1187
          %1189 = vrot.lane.b32.xlu0 %v1144, 124
          %v1190 = vpop.permute.xlu0 %1189
          %1191 = vrot.lane.b32.xlu0 %v1145, 124
          %v1192 = vpop.permute.xlu0 %1191
          %1193 = vrot.lane.b32.xlu0 %v1146, 124
          %v1194 = vpop.permute.xlu0 %1193
          %1195 = vrot.lane.b32.xlu0 %v1147, 124
          %v1196 = vpop.permute.xlu0 %1195
          %1197 = vrot.lane.b32.xlu0 %v1148, 124
          %v1198 = vpop.permute.xlu0 %1197
          %1199 = vrot.lane.b32.xlu0 %v1149, 124
          %v1200 = vpop.permute.xlu0 %1199
          %1201 = vrot.lane.b32.xlu0 %v1150, 124
          %v1202 = vpop.permute.xlu0 %1201
          %1203 = vrot.lane.b32.xlu0 %v1151, 124
          %v1204 = vpop.permute.xlu0 %1203
          %1205 = vrot.lane.b32.xlu0 %v1152, 124
          %v1206 = vpop.permute.xlu0 %1205
          %1207 = vrot.lane.b32.xlu0 %v1153, 124
          %v1208 = vpop.permute.xlu0 %1207
          %1209 = vrot.lane.b32.xlu0 %v1154, 124
          %v1210 = vpop.permute.xlu0 %1209
          %1211 = vrot.lane.b32.xlu0 %v1155, 124
          %v1212 = vpop.permute.xlu0 %1211
          %1213 = vrot.lane.b32.xlu0 %v1156, 124
          %v1214 = vpop.permute.xlu0 %1213
          %1215 = vrot.lane.b32.xlu0 %v1157, 124
          %v1216 = vpop.permute.xlu0 %1215
          %1217 = vrot.lane.b32.xlu0 %v1158, 124
          %v1218 = vpop.permute.xlu0 %1217
          %1219 = vrot.lane.b32.xlu0 %v1159, 124
          %v1220 = vpop.permute.xlu0 %1219
          %1221 = vrot.lane.b32.xlu0 %v1160, 124
          %v1222 = vpop.permute.xlu0 %1221
          %1223 = vrot.lane.b32.xlu0 %v1161, 124
          %v1224 = vpop.permute.xlu0 %1223
          %vm1246 = vcmask 64544
          %1247 = vst.msk [vmem:[#allocation2] sm:$0xff] %vm1246, %v1184
          %1248 = vst.msk [vmem:[#allocation2 + $0x8] sm:$0xff] %vm1246, %v1186
          %1249 = vst.msk [vmem:[#allocation2 + $0x10] sm:$0xff] %vm1246, %v1188
          %1250 = vst.msk [vmem:[#allocation2 + $0x18] sm:$0xff] %vm1246, %v1190
          %1251 = vst.msk [vmem:[#allocation2 + $0x20] sm:$0xff] %vm1246, %v1192
          %1252 = vst.msk [vmem:[#allocation2 + $0x28] sm:$0xff] %vm1246, %v1194
          %1253 = vst.msk [vmem:[#allocation2 + $0x30] sm:$0xff] %vm1246, %v1196
          %1254 = vst.msk [vmem:[#allocation2 + $0x38] sm:$0xff] %vm1246, %v1198
          %1255 = vst.msk [vmem:[#allocation2 + $0x40] sm:$0xff] %vm1246, %v1200
          %1256 = vst.msk [vmem:[#allocation2 + $0x48] sm:$0xff] %vm1246, %v1202
          %1257 = vst.msk [vmem:[#allocation2 + $0x50] sm:$0xff] %vm1246, %v1204
          %1258 = vst.msk [vmem:[#allocation2 + $0x58] sm:$0xff] %vm1246, %v1206
          %1259 = vst.msk [vmem:[#allocation2 + $0x60] sm:$0xff] %vm1246, %v1208
          %1260 = vst.msk [vmem:[#allocation2 + $0x68] sm:$0xff] %vm1246, %v1210
          %1261 = vst.msk [vmem:[#allocation2 + $0x70] sm:$0xff] %vm1246, %v1212
          %1262 = vst.msk [vmem:[#allocation2 + $0x78] sm:$0xff] %vm1246, %v1214
          %1263 = vst.msk [vmem:[#allocation2 + $0x80] sm:$0xff] %vm1246, %v1216
          %1264 = vst.msk [vmem:[#allocation2 + $0x88] sm:$0xff] %vm1246, %v1218
          %1265 = vst.msk [vmem:[#allocation2 + $0x90] sm:$0xff] %vm1246, %v1220
          %1266 = vst.msk [vmem:[#allocation2 + $0x98] sm:$0xff] %vm1246, %v1222
          %1267 = vst.msk [vmem:[#allocation2 + $0xa0] sm:$0xff] %vm1246, %v1224
        $region64: #{tpu_custom_call.1} parent=55 // pred_fallthru
          _
        %s1268 = sadd.s32 %s28, 1
        %p1269 = scmp.lt.s32.totalorder %s1268, 4
        // Predicated region
        $region65: #{tpu_custom_call.1} parent=55 // pred_check
          %p1270 = pneg %p1269
        $region66: #{tpu_custom_call.1} parent=55 // pred_check_branch
          %1272 = sbr.rel (%p1270) target = $region68
        $region67: #{tpu_custom_call.1} parent=55 // pred_region
          %v1273 = vld [vmem:[%s398] sm:$0xff]
          %v1274 = vld [vmem:[%s398 + $0x8] sm:$0xff]
          %v1275 = vld [vmem:[%s398 + $0x10] sm:$0xff]
          %v1276 = vld [vmem:[%s398 + $0x18] sm:$0xff]
          %v1277 = vld [vmem:[%s398 + $0x20] sm:$0xff]
          %v1278 = vld [vmem:[%s398 + $0x28] sm:$0xff]
          %v1279 = vld [vmem:[%s398 + $0x30] sm:$0xff]
          %v1280 = vld [vmem:[%s398 + $0x38] sm:$0xff]
          %v1281 = vld [vmem:[%s398 + $0x40] sm:$0xff]
          %v1282 = vld [vmem:[%s398 + $0x48] sm:$0xff]
          %v1283 = vld [vmem:[%s398 + $0x50] sm:$0xff]
          %v1284 = vld [vmem:[%s398 + $0x58] sm:$0xff]
          %v1285 = vld [vmem:[%s398 + $0x60] sm:$0xff]
          %v1286 = vld [vmem:[%s398 + $0x68] sm:$0xff]
          %v1287 = vld [vmem:[%s398 + $0x70] sm:$0xff]
          %v1288 = vld [vmem:[%s398 + $0x78] sm:$0xff]
          %v1289 = vld [vmem:[%s398 + $0x80] sm:$0xff]
          %v1290 = vld [vmem:[%s398 + $0x88] sm:$0xff]
          %v1291 = vld [vmem:[%s398 + $0x90] sm:$0xff]
          %v1292 = vld [vmem:[%s398 + $0x98] sm:$0xff]
          %v1293 = vld [vmem:[%s398 + $0xa0] sm:$0xff]
          %v1295 = vlaneseq
          %v1296 = vshrl.u32 %v1295, 7
          %v1297 = vsub.s32 0, %v1296
          %v1298 = vrot.slane %v427, %v1297
          %vm1300 = vcmask 130048
          %v1302 = vsel %vm1300, %v1273, 0
          %v1305 = vsel %vm1300, %v1274, 0
          %v1308 = vsel %vm1300, %v1275, 0
          %v1311 = vsel %vm1300, %v1276, 0
          %v1314 = vsel %vm1300, %v1277, 0
          %v1317 = vsel %vm1300, %v1278, 0
          %v1320 = vsel %vm1300, %v1279, 0
          %v1323 = vsel %vm1300, %v1280, 0
          %v1326 = vsel %vm1300, %v1281, 0
          %v1329 = vsel %vm1300, %v1282, 0
          %v1332 = vsel %vm1300, %v1283, 0
          %v1335 = vsel %vm1300, %v1284, 0
          %v1338 = vsel %vm1300, %v1285, 0
          %v1341 = vsel %vm1300, %v1286, 0
          %v1344 = vsel %vm1300, %v1287, 0
          %v1347 = vsel %vm1300, %v1288, 0
          %v1350 = vsel %vm1300, %v1289, 0
          %v1353 = vsel %vm1300, %v1290, 0
          %v1356 = vsel %vm1300, %v1291, 0
          %v1359 = vsel %vm1300, %v1292, 0
          %v1362 = vsel %vm1300, %v1293, 0
          %1364 = vmatprep.subr.mxu0 0.0
          %1365 = vmatpush1.msra.mxu0 %v425
          %1366 = vmatprep.subr.mxu0 0.0
          %1367 = vmatpush1.msra.mxu0 %v426
          %1368 = vmatprep.subr.mxu0 0.0
          %1369 = vmatpush1.msra.mxu0 0.0
          %1370 = vmatprep.subr.mxu0 0.0
          %1371 = vmatpush1.msra.mxu0 0.0
          %1372 = vmatprep.subr.mxu0 0.0
          %1373 = vmatpush1.msra.mxu0 0.0
          %1374 = vmatprep.subr.mxu0 0.0
          %1375 = vmatpush1.msra.mxu0 0.0
          %1376 = vmatprep.subr.mxu0 0.0
          %1377 = vmatpush1.msra.mxu0 0.0
          %1378 = vmatprep.subr.mxu0 0.0
          %1379 = vmatpush1.msra.mxu0 0.0
          %1380 = vmatprep.subr.mxu0 0.0
          %1381 = vmatpush1.msra.mxu0 0.0
          %1382 = vmatprep.subr.mxu0 0.0
          %1383 = vmatpush1.msra.mxu0 0.0
          %1384 = vmatprep.subr.mxu0 0.0
          %1385 = vmatpush1.msra.mxu0 0.0
          %1386 = vmatprep.subr.mxu0 0.0
          %1387 = vmatpush1.msra.mxu0 0.0
          %1388 = vmatprep.subr.mxu0 0.0
          %1389 = vmatpush1.msra.mxu0 0.0
          %1390 = vmatprep.subr.mxu0 0.0
          %1391 = vmatpush1.msra.mxu0 0.0
          %1392 = vmatprep.subr.mxu0 0.0
          %1393 = vmatpush1.msra.mxu0 0.0
          %1394 = vmatprep.subr.mxu0 0.0
          %1395 = vmatpush1.msra.mxu0 0.0
          %1396 = vmatprep.subr.mxu0 0.0
          %1397 = vmatpush1.msra.mxu0 0.0
          %1398 = vmatprep.subr.mxu0 0.0
          %1399 = vmatpush1.msra.mxu0 0.0
          %1400 = vmatprep.subr.mxu0 0.0
          %1401 = vmatpush1.msra.mxu0 0.0
          %1402 = vmatprep.subr.mxu0 0.0
          %1403 = vmatpush1.msra.mxu0 0.0
          %1404 = vmatprep.subr.mxu0 0.0
          %1405 = vmatpush1.msra.mxu0 0.0
          %1406 = vmatprep.subr.mxu0 0.0
          %1407 = vmatpush1.msra.mxu0 0.0
          %1408 = vmatprep.subr.mxu0 0.0
          %1409 = vmatpush1.msra.mxu0 0.0
          %1410 = vmatprep.subr.mxu0 0.0
          %1411 = vmatpush1.msra.mxu0 0.0
          %1412 = vmatprep.subr.mxu0 0.0
          %1413 = vmatpush1.msra.mxu0 0.0
          %1414 = vmatprep.subr.mxu0 0.0
          %1415 = vmatpush1.msra.mxu0 0.0
          %1416 = vmatprep.subr.mxu0 0.0
          %1417 = vmatpush1.msra.mxu0 0.0
          %1418 = vmatprep.subr.mxu0 0.0
          %1419 = vmatpush1.msra.mxu0 0.0
          %1420 = vmatprep.subr.mxu0 0.0
          %1421 = vmatpush1.msra.mxu0 0.0
          %1422 = vmatprep.subr.mxu0 0.0
          %1423 = vmatpush1.msra.mxu0 0.0
          %1424 = vmatprep.subr.mxu0 0.0
          %1425 = vmatpush1.msra.mxu0 0.0
          %1426 = vmatprep.subr.mxu0 0.0
          %1427 = vmatpush1.msra.mxu0 0.0
          %1428 = vmatprep.mubr.f32.mxu0 0.0
          %1429 = vmatmul.mubr.f32.gmra.mrb[0].mxu0 %v1302
          %v1430 = vpop.f32.mrb[0].mxu0
          %v1431 = vadd.f32 %v1298, %v1430
          %v1432 = vpop.f32.mrb[0].mxu0
          %1433 = vmatprep.mubr.f32.mxu0 0.0
          %1434 = vmatmul.mubr.f32.gmra.mrb[0].mxu0 %v1305
          %v1435 = vpop.f32.mrb[0].mxu0
          %v1436 = vadd.f32 %v1298, %v1435
          %v1437 = vpop.f32.mrb[0].mxu0
          %1438 = vmatprep.mubr.f32.mxu0 0.0
          %1439 = vmatmul.mubr.f32.gmra.mrb[0].mxu0 %v1308
          %v1440 = vpop.f32.mrb[0].mxu0
          %v1441 = vadd.f32 %v1298, %v1440
          %v1442 = vpop.f32.mrb[0].mxu0
          %1443 = vmatprep.mubr.f32.mxu0 0.0
          %1444 = vmatmul.mubr.f32.gmra.mrb[0].mxu0 %v1311
          %v1445 = vpop.f32.mrb[0].mxu0
          %v1446 = vadd.f32 %v1298, %v1445
          %v1447 = vpop.f32.mrb[0].mxu0
          %1448 = vmatprep.mubr.f32.mxu0 0.0
          %1449 = vmatmul.mubr.f32.gmra.mrb[0].mxu0 %v1314
          %v1450 = vpop.f32.mrb[0].mxu0
          %v1451 = vadd.f32 %v1298, %v1450
          %v1452 = vpop.f32.mrb[0].mxu0
          %1453 = vmatprep.mubr.f32.mxu0 0.0
          %1454 = vmatmul.mubr.f32.gmra.mrb[0].mxu0 %v1317
          %v1455 = vpop.f32.mrb[0].mxu0
          %v1456 = vadd.f32 %v1298, %v1455
          %v1457 = vpop.f32.mrb[0].mxu0
          %1458 = vmatprep.mubr.f32.mxu0 0.0
          %1459 = vmatmul.mubr.f32.gmra.mrb[0].mxu0 %v1320
          %v1460 = vpop.f32.mrb[0].mxu0
          %v1461 = vadd.f32 %v1298, %v1460
          %v1462 = vpop.f32.mrb[0].mxu0
          %1463 = vmatprep.mubr.f32.mxu0 0.0
          %1464 = vmatmul.mubr.f32.gmra.mrb[0].mxu0 %v1323
          %v1465 = vpop.f32.mrb[0].mxu0
          %v1466 = vadd.f32 %v1298, %v1465
          %v1467 = vpop.f32.mrb[0].mxu0
          %1468 = vmatprep.mubr.f32.mxu0 0.0
          %1469 = vmatmul.mubr.f32.gmra.mrb[0].mxu0 %v1326
          %v1470 = vpop.f32.mrb[0].mxu0
          %v1471 = vadd.f32 %v1298, %v1470
          %v1472 = vpop.f32.mrb[0].mxu0
          %1473 = vmatprep.mubr.f32.mxu0 0.0
          %1474 = vmatmul.mubr.f32.gmra.mrb[0].mxu0 %v1329
          %v1475 = vpop.f32.mrb[0].mxu0
          %v1476 = vadd.f32 %v1298, %v1475
          %v1477 = vpop.f32.mrb[0].mxu0
          %1478 = vmatprep.mubr.f32.mxu0 0.0
          %1479 = vmatmul.mubr.f32.gmra.mrb[0].mxu0 %v1332
          %v1480 = vpop.f32.mrb[0].mxu0
          %v1481 = vadd.f32 %v1298, %v1480
          %v1482 = vpop.f32.mrb[0].mxu0
          %1483 = vmatprep.mubr.f32.mxu0 0.0
          %1484 = vmatmul.mubr.f32.gmra.mrb[0].mxu0 %v1335
          %v1485 = vpop.f32.mrb[0].mxu0
          %v1486 = vadd.f32 %v1298, %v1485
          %v1487 = vpop.f32.mrb[0].mxu0
          %1488 = vmatprep.mubr.f32.mxu0 0.0
          %1489 = vmatmul.mubr.f32.gmra.mrb[0].mxu0 %v1338
          %v1490 = vpop.f32.mrb[0].mxu0
          %v1491 = vadd.f32 %v1298, %v1490
          %v1492 = vpop.f32.mrb[0].mxu0
          %1493 = vmatprep.mubr.f32.mxu0 0.0
          %1494 = vmatmul.mubr.f32.gmra.mrb[0].mxu0 %v1341
          %v1495 = vpop.f32.mrb[0].mxu0
          %v1496 = vadd.f32 %v1298, %v1495
          %v1497 = vpop.f32.mrb[0].mxu0
          %1498 = vmatprep.mubr.f32.mxu0 0.0
          %1499 = vmatmul.mubr.f32.gmra.mrb[0].mxu0 %v1344
          %v1500 = vpop.f32.mrb[0].mxu0
          %v1501 = vadd.f32 %v1298, %v1500
          %v1502 = vpop.f32.mrb[0].mxu0
          %1503 = vmatprep.mubr.f32.mxu0 0.0
          %1504 = vmatmul.mubr.f32.gmra.mrb[0].mxu0 %v1347
          %v1505 = vpop.f32.mrb[0].mxu0
          %v1506 = vadd.f32 %v1298, %v1505
          %v1507 = vpop.f32.mrb[0].mxu0
          %1508 = vmatprep.mubr.f32.mxu0 0.0
          %1509 = vmatmul.mubr.f32.gmra.mrb[0].mxu0 %v1350
          %v1510 = vpop.f32.mrb[0].mxu0
          %v1511 = vadd.f32 %v1298, %v1510
          %v1512 = vpop.f32.mrb[0].mxu0
          %1513 = vmatprep.mubr.f32.mxu0 0.0
          %1514 = vmatmul.mubr.f32.gmra.mrb[0].mxu0 %v1353
          %v1515 = vpop.f32.mrb[0].mxu0
          %v1516 = vadd.f32 %v1298, %v1515
          %v1517 = vpop.f32.mrb[0].mxu0
          %1518 = vmatprep.mubr.f32.mxu0 0.0
          %1519 = vmatmul.mubr.f32.gmra.mrb[0].mxu0 %v1356
          %v1520 = vpop.f32.mrb[0].mxu0
          %v1521 = vadd.f32 %v1298, %v1520
          %v1522 = vpop.f32.mrb[0].mxu0
          %1523 = vmatprep.mubr.f32.mxu0 0.0
          %1524 = vmatmul.mubr.f32.gmra.mrb[0].mxu0 %v1359
          %v1525 = vpop.f32.mrb[0].mxu0
          %v1526 = vadd.f32 %v1298, %v1525
          %v1527 = vpop.f32.mrb[0].mxu0
          %1528 = vmatprep.mubr.f32.mxu0 0.0
          %1529 = vmatmul.mubr.f32.gmra.mrb[0].mxu0 %v1362
          %v1530 = vpop.f32.mrb[0].mxu0
          %v1531 = vadd.f32 %v1298, %v1530
          %v1532 = vpop.f32.mrb[0].mxu0
          %1533 = vdwg.mxu0
          %v1534 = vmax.f32 %v1431, 0.0
          %v1535 = vmax.f32 %v1436, 0.0
          %v1536 = vmax.f32 %v1441, 0.0
          %v1537 = vmax.f32 %v1446, 0.0
          %v1538 = vmax.f32 %v1451, 0.0
          %v1539 = vmax.f32 %v1456, 0.0
          %v1540 = vmax.f32 %v1461, 0.0
          %v1541 = vmax.f32 %v1466, 0.0
          %v1542 = vmax.f32 %v1471, 0.0
          %v1543 = vmax.f32 %v1476, 0.0
          %v1544 = vmax.f32 %v1481, 0.0
          %v1545 = vmax.f32 %v1486, 0.0
          %v1546 = vmax.f32 %v1491, 0.0
          %v1547 = vmax.f32 %v1496, 0.0
          %v1548 = vmax.f32 %v1501, 0.0
          %v1549 = vmax.f32 %v1506, 0.0
          %v1550 = vmax.f32 %v1511, 0.0
          %v1551 = vmax.f32 %v1516, 0.0
          %v1552 = vmax.f32 %v1521, 0.0
          %v1553 = vmax.f32 %v1526, 0.0
          %v1554 = vmax.f32 %v1531, 0.0
          %1556 = vset.pattern.permute.xlu0 0
          %1557 = vperm.xlu0 %1556, %v404
          %v1558 = vpop.permute.xlu0 %1557
          %1561 = vset.pattern.permute.xlu0 0
          %1562 = vperm.xlu0 %1561, %v405
          %v1563 = vpop.permute.xlu0 %1562
          %1566 = vset.pattern.permute.xlu0 0
          %1567 = vperm.xlu0 %1566, %v406
          %v1568 = vpop.permute.xlu0 %1567
          %1571 = vset.pattern.permute.xlu0 0
          %1572 = vperm.xlu0 %1571, %v407
          %v1573 = vpop.permute.xlu0 %1572
          %1576 = vset.pattern.permute.xlu0 0
          %1577 = vperm.xlu0 %1576, %v408
          %v1578 = vpop.permute.xlu0 %1577
          %1581 = vset.pattern.permute.xlu0 0
          %1582 = vperm.xlu0 %1581, %v409
          %v1583 = vpop.permute.xlu0 %1582
          %1586 = vset.pattern.permute.xlu0 0
          %1587 = vperm.xlu0 %1586, %v410
          %v1588 = vpop.permute.xlu0 %1587
          %1591 = vset.pattern.permute.xlu0 0
          %1592 = vperm.xlu0 %1591, %v411
          %v1593 = vpop.permute.xlu0 %1592
          %1596 = vset.pattern.permute.xlu0 0
          %1597 = vperm.xlu0 %1596, %v412
          %v1598 = vpop.permute.xlu0 %1597
          %1601 = vset.pattern.permute.xlu0 0
          %1602 = vperm.xlu0 %1601, %v413
          %v1603 = vpop.permute.xlu0 %1602
          %1606 = vset.pattern.permute.xlu0 0
          %1607 = vperm.xlu0 %1606, %v414
          %v1608 = vpop.permute.xlu0 %1607
          %1611 = vset.pattern.permute.xlu0 0
          %1612 = vperm.xlu0 %1611, %v415
          %v1613 = vpop.permute.xlu0 %1612
          %1616 = vset.pattern.permute.xlu0 0
          %1617 = vperm.xlu0 %1616, %v416
          %v1618 = vpop.permute.xlu0 %1617
          %1621 = vset.pattern.permute.xlu0 0
          %1622 = vperm.xlu0 %1621, %v417
          %v1623 = vpop.permute.xlu0 %1622
          %1626 = vset.pattern.permute.xlu0 0
          %1627 = vperm.xlu0 %1626, %v418
          %v1628 = vpop.permute.xlu0 %1627
          %1631 = vset.pattern.permute.xlu0 0
          %1632 = vperm.xlu0 %1631, %v419
          %v1633 = vpop.permute.xlu0 %1632
          %1636 = vset.pattern.permute.xlu0 0
          %1637 = vperm.xlu0 %1636, %v420
          %v1638 = vpop.permute.xlu0 %1637
          %1641 = vset.pattern.permute.xlu0 0
          %1642 = vperm.xlu0 %1641, %v421
          %v1643 = vpop.permute.xlu0 %1642
          %1646 = vset.pattern.permute.xlu0 0
          %1647 = vperm.xlu0 %1646, %v422
          %v1648 = vpop.permute.xlu0 %1647
          %1651 = vset.pattern.permute.xlu0 0
          %1652 = vperm.xlu0 %1651, %v423
          %v1653 = vpop.permute.xlu0 %1652
          %1656 = vset.pattern.permute.xlu0 0
          %1657 = vperm.xlu0 %1656, %v424
          %v1658 = vpop.permute.xlu0 %1657
          %v1660 = vmul.f32 %v1534, %v1558
          %v1661 = vmul.f32 %v1535, %v1563
          %v1662 = vmul.f32 %v1536, %v1568
          %v1663 = vmul.f32 %v1537, %v1573
          %v1664 = vmul.f32 %v1538, %v1578
          %v1665 = vmul.f32 %v1539, %v1583
          %v1666 = vmul.f32 %v1540, %v1588
          %v1667 = vmul.f32 %v1541, %v1593
          %v1668 = vmul.f32 %v1542, %v1598
          %v1669 = vmul.f32 %v1543, %v1603
          %v1670 = vmul.f32 %v1544, %v1608
          %v1671 = vmul.f32 %v1545, %v1613
          %v1672 = vmul.f32 %v1546, %v1618
          %v1673 = vmul.f32 %v1547, %v1623
          %v1674 = vmul.f32 %v1548, %v1628
          %v1675 = vmul.f32 %v1549, %v1633
          %v1676 = vmul.f32 %v1550, %v1638
          %v1677 = vmul.f32 %v1551, %v1643
          %v1678 = vmul.f32 %v1552, %v1648
          %v1679 = vmul.f32 %v1553, %v1653
          %v1680 = vmul.f32 %v1554, %v1658
          %1702 = vrot.lane.b32.xlu0 %v1660, 8
          %v1703 = vpop.permute.xlu0 %1702
          %1704 = vrot.lane.b32.xlu0 %v1661, 8
          %v1705 = vpop.permute.xlu0 %1704
          %1706 = vrot.lane.b32.xlu0 %v1662, 8
          %v1707 = vpop.permute.xlu0 %1706
          %1708 = vrot.lane.b32.xlu0 %v1663, 8
          %v1709 = vpop.permute.xlu0 %1708
          %1710 = vrot.lane.b32.xlu0 %v1664, 8
          %v1711 = vpop.permute.xlu0 %1710
          %1712 = vrot.lane.b32.xlu0 %v1665, 8
          %v1713 = vpop.permute.xlu0 %1712
          %1714 = vrot.lane.b32.xlu0 %v1666, 8
          %v1715 = vpop.permute.xlu0 %1714
          %1716 = vrot.lane.b32.xlu0 %v1667, 8
          %v1717 = vpop.permute.xlu0 %1716
          %1718 = vrot.lane.b32.xlu0 %v1668, 8
          %v1719 = vpop.permute.xlu0 %1718
          %1720 = vrot.lane.b32.xlu0 %v1669, 8
          %v1721 = vpop.permute.xlu0 %1720
          %1722 = vrot.lane.b32.xlu0 %v1670, 8
          %v1723 = vpop.permute.xlu0 %1722
          %1724 = vrot.lane.b32.xlu0 %v1671, 8
          %v1725 = vpop.permute.xlu0 %1724
          %1726 = vrot.lane.b32.xlu0 %v1672, 8
          %v1727 = vpop.permute.xlu0 %1726
          %1728 = vrot.lane.b32.xlu0 %v1673, 8
          %v1729 = vpop.permute.xlu0 %1728
          %1730 = vrot.lane.b32.xlu0 %v1674, 8
          %v1731 = vpop.permute.xlu0 %1730
          %1732 = vrot.lane.b32.xlu0 %v1675, 8
          %v1733 = vpop.permute.xlu0 %1732
          %1734 = vrot.lane.b32.xlu0 %v1676, 8
          %v1735 = vpop.permute.xlu0 %1734
          %1736 = vrot.lane.b32.xlu0 %v1677, 8
          %v1737 = vpop.permute.xlu0 %1736
          %1738 = vrot.lane.b32.xlu0 %v1678, 8
          %v1739 = vpop.permute.xlu0 %1738
          %1740 = vrot.lane.b32.xlu0 %v1679, 8
          %v1741 = vpop.permute.xlu0 %1740
          %1742 = vrot.lane.b32.xlu0 %v1680, 8
          %v1743 = vpop.permute.xlu0 %1742
          %vm1765 = vcmask 97344
          %1766 = vst.msk [vmem:[#allocation2] sm:$0xff] %vm1765, %v1703
          %1767 = vst.msk [vmem:[#allocation2 + $0x8] sm:$0xff] %vm1765, %v1705
          %1768 = vst.msk [vmem:[#allocation2 + $0x10] sm:$0xff] %vm1765, %v1707
          %1769 = vst.msk [vmem:[#allocation2 + $0x18] sm:$0xff] %vm1765, %v1709
          %1770 = vst.msk [vmem:[#allocation2 + $0x20] sm:$0xff] %vm1765, %v1711
          %1771 = vst.msk [vmem:[#allocation2 + $0x28] sm:$0xff] %vm1765, %v1713
          %1772 = vst.msk [vmem:[#allocation2 + $0x30] sm:$0xff] %vm1765, %v1715
          %1773 = vst.msk [vmem:[#allocation2 + $0x38] sm:$0xff] %vm1765, %v1717
          %1774 = vst.msk [vmem:[#allocation2 + $0x40] sm:$0xff] %vm1765, %v1719
          %1775 = vst.msk [vmem:[#allocation2 + $0x48] sm:$0xff] %vm1765, %v1721
          %1776 = vst.msk [vmem:[#allocation2 + $0x50] sm:$0xff] %vm1765, %v1723
          %1777 = vst.msk [vmem:[#allocation2 + $0x58] sm:$0xff] %vm1765, %v1725
          %1778 = vst.msk [vmem:[#allocation2 + $0x60] sm:$0xff] %vm1765, %v1727
          %1779 = vst.msk [vmem:[#allocation2 + $0x68] sm:$0xff] %vm1765, %v1729
          %1780 = vst.msk [vmem:[#allocation2 + $0x70] sm:$0xff] %vm1765, %v1731
          %1781 = vst.msk [vmem:[#allocation2 + $0x78] sm:$0xff] %vm1765, %v1733
          %1782 = vst.msk [vmem:[#allocation2 + $0x80] sm:$0xff] %vm1765, %v1735
          %1783 = vst.msk [vmem:[#allocation2 + $0x88] sm:$0xff] %vm1765, %v1737
          %1784 = vst.msk [vmem:[#allocation2 + $0x90] sm:$0xff] %vm1765, %v1739
          %1785 = vst.msk [vmem:[#allocation2 + $0x98] sm:$0xff] %vm1765, %v1741
          %1786 = vst.msk [vmem:[#allocation2 + $0xa0] sm:$0xff] %vm1765, %v1743
        $region68: #{tpu_custom_call.1} parent=55 // pred_fallthru
          _
        %p1787 = scmp.ge.s32.totalorder %s1268, 4
        // Predicated region
        $region69: #{tpu_custom_call.1} parent=55 // pred_check
          %p1788 = pneg %p1787
        $region70: #{tpu_custom_call.1} parent=55 // pred_check_branch
          %1790 = sbr.rel (%p1788) target = $region72
        $region71: #{tpu_custom_call.1} parent=55 // pred_region
          %vm1791 = vcmask 97344
          %1792 = vst.msk [vmem:[#allocation2] sm:$0xff] %vm1791, 0.0
          %1793 = vst.msk [vmem:[#allocation2 + $0x8] sm:$0xff] %vm1791, 0.0
          %1794 = vst.msk [vmem:[#allocation2 + $0x10] sm:$0xff] %vm1791, 0.0
          %1795 = vst.msk [vmem:[#allocation2 + $0x18] sm:$0xff] %vm1791, 0.0
          %1796 = vst.msk [vmem:[#allocation2 + $0x20] sm:$0xff] %vm1791, 0.0
          %1797 = vst.msk [vmem:[#allocation2 + $0x28] sm:$0xff] %vm1791, 0.0
          %1798 = vst.msk [vmem:[#allocation2 + $0x30] sm:$0xff] %vm1791, 0.0
          %1799 = vst.msk [vmem:[#allocation2 + $0x38] sm:$0xff] %vm1791, 0.0
          %1800 = vst.msk [vmem:[#allocation2 + $0x40] sm:$0xff] %vm1791, 0.0
          %1801 = vst.msk [vmem:[#allocation2 + $0x48] sm:$0xff] %vm1791, 0.0
          %1802 = vst.msk [vmem:[#allocation2 + $0x50] sm:$0xff] %vm1791, 0.0
          %1803 = vst.msk [vmem:[#allocation2 + $0x58] sm:$0xff] %vm1791, 0.0
          %1804 = vst.msk [vmem:[#allocation2 + $0x60] sm:$0xff] %vm1791, 0.0
          %1805 = vst.msk [vmem:[#allocation2 + $0x68] sm:$0xff] %vm1791, 0.0
          %1806 = vst.msk [vmem:[#allocation2 + $0x70] sm:$0xff] %vm1791, 0.0
          %1807 = vst.msk [vmem:[#allocation2 + $0x78] sm:$0xff] %vm1791, 0.0
          %1808 = vst.msk [vmem:[#allocation2 + $0x80] sm:$0xff] %vm1791, 0.0
          %1809 = vst.msk [vmem:[#allocation2 + $0x88] sm:$0xff] %vm1791, 0.0
          %1810 = vst.msk [vmem:[#allocation2 + $0x90] sm:$0xff] %vm1791, 0.0
          %1811 = vst.msk [vmem:[#allocation2 + $0x98] sm:$0xff] %vm1791, 0.0
          %1812 = vst.msk [vmem:[#allocation2 + $0xa0] sm:$0xff] %vm1791, 0.0
        $region72: #{tpu_custom_call.1} parent=55 // pred_fallthru
          _
        %v1813 = vld [vmem:[#allocation2] sm:$0xff]
        %v1814 = vld [vmem:[#allocation2 + $0x8] sm:$0xff]
        %v1815 = vld [vmem:[#allocation2 + $0x10] sm:$0xff]
        %v1816 = vld [vmem:[#allocation2 + $0x18] sm:$0xff]
        %v1817 = vld [vmem:[#allocation2 + $0x20] sm:$0xff]
        %v1818 = vld [vmem:[#allocation2 + $0x28] sm:$0xff]
        %v1819 = vld [vmem:[#allocation2 + $0x30] sm:$0xff]
        %v1820 = vld [vmem:[#allocation2 + $0x38] sm:$0xff]
        %v1821 = vld [vmem:[#allocation2 + $0x40] sm:$0xff]
        %v1822 = vld [vmem:[#allocation2 + $0x48] sm:$0xff]
        %v1823 = vld [vmem:[#allocation2 + $0x50] sm:$0xff]
        %v1824 = vld [vmem:[#allocation2 + $0x58] sm:$0xff]
        %v1825 = vld [vmem:[#allocation2 + $0x60] sm:$0xff]
        %v1826 = vld [vmem:[#allocation2 + $0x68] sm:$0xff]
        %v1827 = vld [vmem:[#allocation2 + $0x70] sm:$0xff]
        %v1828 = vld [vmem:[#allocation2 + $0x78] sm:$0xff]
        %v1829 = vld [vmem:[%s4] sm:$0xff]
        %v1830 = vld [vmem:[%s4 + $0x8] sm:$0xf]
        %v1831 = vld [vmem:[#allocation2 + $0x1] sm:$0xff]
        %v1832 = vld [vmem:[#allocation2 + $0x9] sm:$0xff]
        %v1833 = vld [vmem:[#allocation2 + $0x11] sm:$0xff]
        %v1834 = vld [vmem:[#allocation2 + $0x19] sm:$0xff]
        %v1835 = vld [vmem:[#allocation2 + $0x21] sm:$0xff]
        %v1836 = vld [vmem:[#allocation2 + $0x29] sm:$0xff]
        %v1837 = vld [vmem:[#allocation2 + $0x31] sm:$0xff]
        %v1838 = vld [vmem:[#allocation2 + $0x39] sm:$0xff]
        %v1839 = vld [vmem:[#allocation2 + $0x41] sm:$0xff]
        %v1840 = vld [vmem:[#allocation2 + $0x49] sm:$0xff]
        %v1841 = vld [vmem:[#allocation2 + $0x51] sm:$0xff]
        %v1842 = vld [vmem:[#allocation2 + $0x59] sm:$0xff]
        %v1843 = vld [vmem:[#allocation2 + $0x61] sm:$0xff]
        %v1844 = vld [vmem:[#allocation2 + $0x69] sm:$0xff]
        %v1845 = vld [vmem:[#allocation2 + $0x71] sm:$0xff]
        %v1846 = vld [vmem:[#allocation2 + $0x79] sm:$0xff]
        %s1847 = scalar_lea.vmem %s4, 16
        %v1848 = vld [vmem:[%s1847] sm:$0xff]
        %v1849 = vld [vmem:[%s1847 + $0x8] sm:$0xf]
        %vm1850 = vcmask 97280
        %v1852 = vsel %vm1850, %v1831, 0
        %v1855 = vsel %vm1850, %v1832, 0
        %v1858 = vsel %vm1850, %v1833, 0
        %v1861 = vsel %vm1850, %v1834, 0
        %v1864 = vsel %vm1850, %v1835, 0
        %v1867 = vsel %vm1850, %v1836, 0
        %v1870 = vsel %vm1850, %v1837, 0
        %v1873 = vsel %vm1850, %v1838, 0
        %v1876 = vsel %vm1850, %v1839, 0
        %v1879 = vsel %vm1850, %v1840, 0
        %v1882 = vsel %vm1850, %v1841, 0
        %v1885 = vsel %vm1850, %v1842, 0
        %v1888 = vsel %vm1850, %v1843, 0
        %v1891 = vsel %vm1850, %v1844, 0
        %v1894 = vsel %vm1850, %v1845, 0
        %v1897 = vsel %vm1850, %v1846, 0
        %vm1899 = vcmask 1043456
        %v1901 = vsel %vm1899, %v1849, 0
        %1903 = vmatprep.subr.mxu0 0.0
        %1904 = vmatpush1.msra.mxu0 %v1848
        %1905 = vmatprep.subr.mxu0 0.0
        %1906 = vmatpush1.msra.mxu0 %v1901
        %1907 = vmatprep.subr.mxu0 0.0
        %1908 = vmatpush1.msra.mxu0 0.0
        %1909 = vmatprep.subr.mxu0 0.0
        %1910 = vmatpush1.msra.mxu0 0.0
        %1911 = vmatprep.subr.mxu0 0.0
        %1912 = vmatpush1.msra.mxu0 0.0
        %1913 = vmatprep.subr.mxu0 0.0
        %1914 = vmatpush1.msra.mxu0 0.0
        %1915 = vmatprep.subr.mxu0 0.0
        %1916 = vmatpush1.msra.mxu0 0.0
        %1917 = vmatprep.subr.mxu0 0.0
        %1918 = vmatpush1.msra.mxu0 0.0
        %1919 = vmatprep.subr.mxu0 0.0
        %1920 = vmatpush1.msra.mxu0 0.0
        %1921 = vmatprep.subr.mxu0 0.0
        %1922 = vmatpush1.msra.mxu0 0.0
        %1923 = vmatprep.subr.mxu0 0.0
        %1924 = vmatpush1.msra.mxu0 0.0
        %1925 = vmatprep.subr.mxu0 0.0
        %1926 = vmatpush1.msra.mxu0 0.0
        %1927 = vmatprep.subr.mxu0 0.0
        %1928 = vmatpush1.msra.mxu0 0.0
        %1929 = vmatprep.subr.mxu0 0.0
        %1930 = vmatpush1.msra.mxu0 0.0
        %1931 = vmatprep.subr.mxu0 0.0
        %1932 = vmatpush1.msra.mxu0 0.0
        %1933 = vmatprep.subr.mxu0 0.0
        %1934 = vmatpush1.msra.mxu0 0.0
        %1935 = vmatprep.subr.mxu0 0.0
        %1936 = vmatpush1.msra.mxu0 0.0
        %1937 = vmatprep.subr.mxu0 0.0
        %1938 = vmatpush1.msra.mxu0 0.0
        %1939 = vmatprep.subr.mxu0 0.0
        %1940 = vmatpush1.msra.mxu0 0.0
        %1941 = vmatprep.subr.mxu0 0.0
        %1942 = vmatpush1.msra.mxu0 0.0
        %1943 = vmatprep.subr.mxu0 0.0
        %1944 = vmatpush1.msra.mxu0 0.0
        %1945 = vmatprep.subr.mxu0 0.0
        %1946 = vmatpush1.msra.mxu0 0.0
        %1947 = vmatprep.subr.mxu0 0.0
        %1948 = vmatpush1.msra.mxu0 0.0
        %1949 = vmatprep.subr.mxu0 0.0
        %1950 = vmatpush1.msra.mxu0 0.0
        %1951 = vmatprep.subr.mxu0 0.0
        %1952 = vmatpush1.msra.mxu0 0.0
        %1953 = vmatprep.subr.mxu0 0.0
        %1954 = vmatpush1.msra.mxu0 0.0
        %1955 = vmatprep.subr.mxu0 0.0
        %1956 = vmatpush1.msra.mxu0 0.0
        %1957 = vmatprep.subr.mxu0 0.0
        %1958 = vmatpush1.msra.mxu0 0.0
        %1959 = vmatprep.subr.mxu0 0.0
        %1960 = vmatpush1.msra.mxu0 0.0
        %1961 = vmatprep.subr.mxu0 0.0
        %1962 = vmatpush1.msra.mxu0 0.0
        %1963 = vmatprep.subr.mxu0 0.0
        %1964 = vmatpush1.msra.mxu0 0.0
        %1965 = vmatprep.subr.mxu0 0.0
        %1966 = vmatpush1.msra.mxu0 0.0
        %1967 = vmatprep.mubr.f32.mxu0 0.0
        %1968 = vmatmul.mubr.f32.gmra.mrb[0].mxu0 %v1852
        %v1969 = vpop.f32.mrb[0].mxu0
        %v1970 = vadd.f32 0.0, %v1969
        %v1971 = vpop.f32.mrb[0].mxu0
        %1972 = vmatprep.mubr.f32.mxu0 0.0
        %1973 = vmatmul.mubr.f32.gmra.mrb[0].mxu0 %v1855
        %v1974 = vpop.f32.mrb[0].mxu0
        %v1975 = vadd.f32 0.0, %v1974
        %v1976 = vpop.f32.mrb[0].mxu0
        %1977 = vmatprep.mubr.f32.mxu0 0.0
        %1978 = vmatmul.mubr.f32.gmra.mrb[0].mxu0 %v1858
        %v1979 = vpop.f32.mrb[0].mxu0
        %v1980 = vadd.f32 0.0, %v1979
        %v1981 = vpop.f32.mrb[0].mxu0
        %1982 = vmatprep.mubr.f32.mxu0 0.0
        %1983 = vmatmul.mubr.f32.gmra.mrb[0].mxu0 %v1861
        %v1984 = vpop.f32.mrb[0].mxu0
        %v1985 = vadd.f32 0.0, %v1984
        %v1986 = vpop.f32.mrb[0].mxu0
        %1987 = vmatprep.mubr.f32.mxu0 0.0
        %1988 = vmatmul.mubr.f32.gmra.mrb[0].mxu0 %v1864
        %v1989 = vpop.f32.mrb[0].mxu0
        %v1990 = vadd.f32 0.0, %v1989
        %v1991 = vpop.f32.mrb[0].mxu0
        %1992 = vmatprep.mubr.f32.mxu0 0.0
        %1993 = vmatmul.mubr.f32.gmra.mrb[0].mxu0 %v1867
        %v1994 = vpop.f32.mrb[0].mxu0
        %v1995 = vadd.f32 0.0, %v1994
        %v1996 = vpop.f32.mrb[0].mxu0
        %1997 = vmatprep.mubr.f32.mxu0 0.0
        %1998 = vmatmul.mubr.f32.gmra.mrb[0].mxu0 %v1870
        %v1999 = vpop.f32.mrb[0].mxu0
        %v2000 = vadd.f32 0.0, %v1999
        %v2001 = vpop.f32.mrb[0].mxu0
        %2002 = vmatprep.mubr.f32.mxu0 0.0
        %2003 = vmatmul.mubr.f32.gmra.mrb[0].mxu0 %v1873
        %v2004 = vpop.f32.mrb[0].mxu0
        %v2005 = vadd.f32 0.0, %v2004
        %v2006 = vpop.f32.mrb[0].mxu0
        %2007 = vmatprep.mubr.f32.mxu0 0.0
        %2008 = vmatmul.mubr.f32.gmra.mrb[0].mxu0 %v1876
        %v2009 = vpop.f32.mrb[0].mxu0
        %v2010 = vadd.f32 0.0, %v2009
        %v2011 = vpop.f32.mrb[0].mxu0
        %2012 = vmatprep.mubr.f32.mxu0 0.0
        %2013 = vmatmul.mubr.f32.gmra.mrb[0].mxu0 %v1879
        %v2014 = vpop.f32.mrb[0].mxu0
        %v2015 = vadd.f32 0.0, %v2014
        %v2016 = vpop.f32.mrb[0].mxu0
        %2017 = vmatprep.mubr.f32.mxu0 0.0
        %2018 = vmatmul.mubr.f32.gmra.mrb[0].mxu0 %v1882
        %v2019 = vpop.f32.mrb[0].mxu0
        %v2020 = vadd.f32 0.0, %v2019
        %v2021 = vpop.f32.mrb[0].mxu0
        %2022 = vmatprep.mubr.f32.mxu0 0.0
        %2023 = vmatmul.mubr.f32.gmra.mrb[0].mxu0 %v1885
        %v2024 = vpop.f32.mrb[0].mxu0
        %v2025 = vadd.f32 0.0, %v2024
        %v2026 = vpop.f32.mrb[0].mxu0
        %2027 = vmatprep.mubr.f32.mxu0 0.0
        %2028 = vmatmul.mubr.f32.gmra.mrb[0].mxu0 %v1888
        %v2029 = vpop.f32.mrb[0].mxu0
        %v2030 = vadd.f32 0.0, %v2029
        %v2031 = vpop.f32.mrb[0].mxu0
        %2032 = vmatprep.mubr.f32.mxu0 0.0
        %2033 = vmatmul.mubr.f32.gmra.mrb[0].mxu0 %v1891
        %v2034 = vpop.f32.mrb[0].mxu0
        %v2035 = vadd.f32 0.0, %v2034
        %v2036 = vpop.f32.mrb[0].mxu0
        %2037 = vmatprep.mubr.f32.mxu0 0.0
        %2038 = vmatmul.mubr.f32.gmra.mrb[0].mxu0 %v1894
        %v2039 = vpop.f32.mrb[0].mxu0
        %v2040 = vadd.f32 0.0, %v2039
        %v2041 = vpop.f32.mrb[0].mxu0
        %2042 = vmatprep.mubr.f32.mxu0 0.0
        %2043 = vmatmul.mubr.f32.gmra.mrb[0].mxu0 %v1897
        %v2044 = vpop.f32.mrb[0].mxu0
        %v2045 = vadd.f32 0.0, %v2044
        %v2046 = vpop.f32.mrb[0].mxu0
        %2047 = vdwg.mxu0
        %v2049 = vsel %vm1850, %v1813, 0
        %v2052 = vsel %vm1850, %v1814, 0
        %v2055 = vsel %vm1850, %v1815, 0
        %v2058 = vsel %vm1850, %v1816, 0
        %v2061 = vsel %vm1850, %v1817, 0
        %v2064 = vsel %vm1850, %v1818, 0
        %v2067 = vsel %vm1850, %v1819, 0
        %v2070 = vsel %vm1850, %v1820, 0
        %v2073 = vsel %vm1850, %v1821, 0
        %v2076 = vsel %vm1850, %v1822, 0
        %v2079 = vsel %vm1850, %v1823, 0
        %v2082 = vsel %vm1850, %v1824, 0
        %v2085 = vsel %vm1850, %v1825, 0
        %v2088 = vsel %vm1850, %v1826, 0
        %v2091 = vsel %vm1850, %v1827, 0
        %v2094 = vsel %vm1850, %v1828, 0
        %v2097 = vsel %vm1899, %v1830, 0
        %2099 = vmatprep.subr.mxu0 0.0
        %2100 = vmatpush1.msra.mxu0 %v1829
        %2101 = vmatprep.subr.mxu0 0.0
        %2102 = vmatpush1.msra.mxu0 %v2097
        %2103 = vmatprep.subr.mxu0 0.0
        %2104 = vmatpush1.msra.mxu0 0.0
        %2105 = vmatprep.subr.mxu0 0.0
        %2106 = vmatpush1.msra.mxu0 0.0
        %2107 = vmatprep.subr.mxu0 0.0
        %2108 = vmatpush1.msra.mxu0 0.0
        %2109 = vmatprep.subr.mxu0 0.0
        %2110 = vmatpush1.msra.mxu0 0.0
        %2111 = vmatprep.subr.mxu0 0.0
        %2112 = vmatpush1.msra.mxu0 0.0
        %2113 = vmatprep.subr.mxu0 0.0
        %2114 = vmatpush1.msra.mxu0 0.0
        %2115 = vmatprep.subr.mxu0 0.0
        %2116 = vmatpush1.msra.mxu0 0.0
        %2117 = vmatprep.subr.mxu0 0.0
        %2118 = vmatpush1.msra.mxu0 0.0
        %2119 = vmatprep.subr.mxu0 0.0
        %2120 = vmatpush1.msra.mxu0 0.0
        %2121 = vmatprep.subr.mxu0 0.0
        %2122 = vmatpush1.msra.mxu0 0.0
        %2123 = vmatprep.subr.mxu0 0.0
        %2124 = vmatpush1.msra.mxu0 0.0
        %2125 = vmatprep.subr.mxu0 0.0
        %2126 = vmatpush1.msra.mxu0 0.0
        %2127 = vmatprep.subr.mxu0 0.0
        %2128 = vmatpush1.msra.mxu0 0.0
        %2129 = vmatprep.subr.mxu0 0.0
        %2130 = vmatpush1.msra.mxu0 0.0
        %2131 = vmatprep.subr.mxu0 0.0
        %2132 = vmatpush1.msra.mxu0 0.0
        %2133 = vmatprep.subr.mxu0 0.0
        %2134 = vmatpush1.msra.mxu0 0.0
        %2135 = vmatprep.subr.mxu0 0.0
        %2136 = vmatpush1.msra.mxu0 0.0
        %2137 = vmatprep.subr.mxu0 0.0
        %2138 = vmatpush1.msra.mxu0 0.0
        %2139 = vmatprep.subr.mxu0 0.0
        %2140 = vmatpush1.msra.mxu0 0.0
        %2141 = vmatprep.subr.mxu0 0.0
        %2142 = vmatpush1.msra.mxu0 0.0
        %2143 = vmatprep.subr.mxu0 0.0
        %2144 = vmatpush1.msra.mxu0 0.0
        %2145 = vmatprep.subr.mxu0 0.0
        %2146 = vmatpush1.msra.mxu0 0.0
        %2147 = vmatprep.subr.mxu0 0.0
        %2148 = vmatpush1.msra.mxu0 0.0
        %2149 = vmatprep.subr.mxu0 0.0
        %2150 = vmatpush1.msra.mxu0 0.0
        %2151 = vmatprep.subr.mxu0 0.0
        %2152 = vmatpush1.msra.mxu0 0.0
        %2153 = vmatprep.subr.mxu0 0.0
        %2154 = vmatpush1.msra.mxu0 0.0
        %2155 = vmatprep.subr.mxu0 0.0
        %2156 = vmatpush1.msra.mxu0 0.0
        %2157 = vmatprep.subr.mxu0 0.0
        %2158 = vmatpush1.msra.mxu0 0.0
        %2159 = vmatprep.subr.mxu0 0.0
        %2160 = vmatpush1.msra.mxu0 0.0
        %2161 = vmatprep.subr.mxu0 0.0
        %2162 = vmatpush1.msra.mxu0 0.0
        %2163 = vmatprep.mubr.f32.mxu0 0.0
        %2164 = vmatmul.mubr.f32.gmra.mrb[0].mxu0 %v2049
        %v2165 = vpop.f32.mrb[0].mxu0
        %v2166 = vadd.f32 %v1970, %v2165
        %v2167 = vpop.f32.mrb[0].mxu0
        %2168 = vmatprep.mubr.f32.mxu0 0.0
        %2169 = vmatmul.mubr.f32.gmra.mrb[0].mxu0 %v2052
        %v2170 = vpop.f32.mrb[0].mxu0
        %v2171 = vadd.f32 %v1975, %v2170
        %v2172 = vpop.f32.mrb[0].mxu0
        %2173 = vmatprep.mubr.f32.mxu0 0.0
        %2174 = vmatmul.mubr.f32.gmra.mrb[0].mxu0 %v2055
        %v2175 = vpop.f32.mrb[0].mxu0
        %v2176 = vadd.f32 %v1980, %v2175
        %v2177 = vpop.f32.mrb[0].mxu0
        %2178 = vmatprep.mubr.f32.mxu0 0.0
        %2179 = vmatmul.mubr.f32.gmra.mrb[0].mxu0 %v2058
        %v2180 = vpop.f32.mrb[0].mxu0
        %v2181 = vadd.f32 %v1985, %v2180
        %v2182 = vpop.f32.mrb[0].mxu0
        %2183 = vmatprep.mubr.f32.mxu0 0.0
        %2184 = vmatmul.mubr.f32.gmra.mrb[0].mxu0 %v2061
        %v2185 = vpop.f32.mrb[0].mxu0
        %v2186 = vadd.f32 %v1990, %v2185
        %v2187 = vpop.f32.mrb[0].mxu0
        %2188 = vmatprep.mubr.f32.mxu0 0.0
        %2189 = vmatmul.mubr.f32.gmra.mrb[0].mxu0 %v2064
        %v2190 = vpop.f32.mrb[0].mxu0
        %v2191 = vadd.f32 %v1995, %v2190
        %v2192 = vpop.f32.mrb[0].mxu0
        %2193 = vmatprep.mubr.f32.mxu0 0.0
        %2194 = vmatmul.mubr.f32.gmra.mrb[0].mxu0 %v2067
        %v2195 = vpop.f32.mrb[0].mxu0
        %v2196 = vadd.f32 %v2000, %v2195
        %v2197 = vpop.f32.mrb[0].mxu0
        %2198 = vmatprep.mubr.f32.mxu0 0.0
        %2199 = vmatmul.mubr.f32.gmra.mrb[0].mxu0 %v2070
        %v2200 = vpop.f32.mrb[0].mxu0
        %v2201 = vadd.f32 %v2005, %v2200
        %v2202 = vpop.f32.mrb[0].mxu0
        %2203 = vmatprep.mubr.f32.mxu0 0.0
        %2204 = vmatmul.mubr.f32.gmra.mrb[0].mxu0 %v2073
        %v2205 = vpop.f32.mrb[0].mxu0
        %v2206 = vadd.f32 %v2010, %v2205
        %v2207 = vpop.f32.mrb[0].mxu0
        %2208 = vmatprep.mubr.f32.mxu0 0.0
        %2209 = vmatmul.mubr.f32.gmra.mrb[0].mxu0 %v2076
        %v2210 = vpop.f32.mrb[0].mxu0
        %v2211 = vadd.f32 %v2015, %v2210
        %v2212 = vpop.f32.mrb[0].mxu0
        %2213 = vmatprep.mubr.f32.mxu0 0.0
        %2214 = vmatmul.mubr.f32.gmra.mrb[0].mxu0 %v2079
        %v2215 = vpop.f32.mrb[0].mxu0
        %v2216 = vadd.f32 %v2020, %v2215
        %v2217 = vpop.f32.mrb[0].mxu0
        %2218 = vmatprep.mubr.f32.mxu0 0.0
        %2219 = vmatmul.mubr.f32.gmra.mrb[0].mxu0 %v2082
        %v2220 = vpop.f32.mrb[0].mxu0
        %v2221 = vadd.f32 %v2025, %v2220
        %v2222 = vpop.f32.mrb[0].mxu0
        %2223 = vmatprep.mubr.f32.mxu0 0.0
        %2224 = vmatmul.mubr.f32.gmra.mrb[0].mxu0 %v2085
        %v2225 = vpop.f32.mrb[0].mxu0
        %v2226 = vadd.f32 %v2030, %v2225
        %v2227 = vpop.f32.mrb[0].mxu0
        %2228 = vmatprep.mubr.f32.mxu0 0.0
        %2229 = vmatmul.mubr.f32.gmra.mrb[0].mxu0 %v2088
        %v2230 = vpop.f32.mrb[0].mxu0
        %v2231 = vadd.f32 %v2035, %v2230
        %v2232 = vpop.f32.mrb[0].mxu0
        %2233 = vmatprep.mubr.f32.mxu0 0.0
        %2234 = vmatmul.mubr.f32.gmra.mrb[0].mxu0 %v2091
        %v2235 = vpop.f32.mrb[0].mxu0
        %v2236 = vadd.f32 %v2040, %v2235
        %v2237 = vpop.f32.mrb[0].mxu0
        %2238 = vmatprep.mubr.f32.mxu0 0.0
        %2239 = vmatmul.mubr.f32.gmra.mrb[0].mxu0 %v2094
        %v2240 = vpop.f32.mrb[0].mxu0
        %v2241 = vadd.f32 %v2045, %v2240
        %v2242 = vpop.f32.mrb[0].mxu0
        %2243 = vdwg.mxu0
        %v2244 = vld [vmem:[#allocation2 + $0x2] sm:$0xff]
        %v2245 = vld [vmem:[#allocation2 + $0xa] sm:$0xff]
        %v2246 = vld [vmem:[#allocation2 + $0x12] sm:$0xff]
        %v2247 = vld [vmem:[#allocation2 + $0x1a] sm:$0xff]
        %v2248 = vld [vmem:[#allocation2 + $0x22] sm:$0xff]
        %v2249 = vld [vmem:[#allocation2 + $0x2a] sm:$0xff]
        %v2250 = vld [vmem:[#allocation2 + $0x32] sm:$0xff]
        %v2251 = vld [vmem:[#allocation2 + $0x3a] sm:$0xff]
        %v2252 = vld [vmem:[#allocation2 + $0x42] sm:$0xff]
        %v2253 = vld [vmem:[#allocation2 + $0x4a] sm:$0xff]
        %v2254 = vld [vmem:[#allocation2 + $0x52] sm:$0xff]
        %v2255 = vld [vmem:[#allocation2 + $0x5a] sm:$0xff]
        %v2256 = vld [vmem:[#allocation2 + $0x62] sm:$0xff]
        %v2257 = vld [vmem:[#allocation2 + $0x6a] sm:$0xff]
        %v2258 = vld [vmem:[#allocation2 + $0x72] sm:$0xff]
        %v2259 = vld [vmem:[#allocation2 + $0x7a] sm:$0xff]
        %s2260 = scalar_lea.vmem %s4, 32
        %v2261 = vld [vmem:[%s2260] sm:$0xff]
        %v2262 = vld [vmem:[%s2260 + $0x8] sm:$0xf]
        %v2264 = vsel %vm1850, %v2244, 0
        %v2267 = vsel %vm1850, %v2245, 0
        %v2270 = vsel %vm1850, %v2246, 0
        %v2273 = vsel %vm1850, %v2247, 0
        %v2276 = vsel %vm1850, %v2248, 0
        %v2279 = vsel %vm1850, %v2249, 0
        %v2282 = vsel %vm1850, %v2250, 0
        %v2285 = vsel %vm1850, %v2251, 0
        %v2288 = vsel %vm1850, %v2252, 0
        %v2291 = vsel %vm1850, %v2253, 0
        %v2294 = vsel %vm1850, %v2254, 0
        %v2297 = vsel %vm1850, %v2255, 0
        %v2300 = vsel %vm1850, %v2256, 0
        %v2303 = vsel %vm1850, %v2257, 0
        %v2306 = vsel %vm1850, %v2258, 0
        %v2309 = vsel %vm1850, %v2259, 0
        %v2312 = vsel %vm1899, %v2262, 0
        %2314 = vmatprep.subr.mxu0 0.0
        %2315 = vmatpush1.msra.mxu0 %v2261
        %2316 = vmatprep.subr.mxu0 0.0
        %2317 = vmatpush1.msra.mxu0 %v2312
        %2318 = vmatprep.subr.mxu0 0.0
        %2319 = vmatpush1.msra.mxu0 0.0
        %2320 = vmatprep.subr.mxu0 0.0
        %2321 = vmatpush1.msra.mxu0 0.0
        %2322 = vmatprep.subr.mxu0 0.0
        %2323 = vmatpush1.msra.mxu0 0.0
        %2324 = vmatprep.subr.mxu0 0.0
        %2325 = vmatpush1.msra.mxu0 0.0
        %2326 = vmatprep.subr.mxu0 0.0
        %2327 = vmatpush1.msra.mxu0 0.0
        %2328 = vmatprep.subr.mxu0 0.0
        %2329 = vmatpush1.msra.mxu0 0.0
        %2330 = vmatprep.subr.mxu0 0.0
        %2331 = vmatpush1.msra.mxu0 0.0
        %2332 = vmatprep.subr.mxu0 0.0
        %2333 = vmatpush1.msra.mxu0 0.0
        %2334 = vmatprep.subr.mxu0 0.0
        %2335 = vmatpush1.msra.mxu0 0.0
        %2336 = vmatprep.subr.mxu0 0.0
        %2337 = vmatpush1.msra.mxu0 0.0
        %2338 = vmatprep.subr.mxu0 0.0
        %2339 = vmatpush1.msra.mxu0 0.0
        %2340 = vmatprep.subr.mxu0 0.0
        %2341 = vmatpush1.msra.mxu0 0.0
        %2342 = vmatprep.subr.mxu0 0.0
        %2343 = vmatpush1.msra.mxu0 0.0
        %2344 = vmatprep.subr.mxu0 0.0
        %2345 = vmatpush1.msra.mxu0 0.0
        %2346 = vmatprep.subr.mxu0 0.0
        %2347 = vmatpush1.msra.mxu0 0.0
        %2348 = vmatprep.subr.mxu0 0.0
        %2349 = vmatpush1.msra.mxu0 0.0
        %2350 = vmatprep.subr.mxu0 0.0
        %2351 = vmatpush1.msra.mxu0 0.0
        %2352 = vmatprep.subr.mxu0 0.0
        %2353 = vmatpush1.msra.mxu0 0.0
        %2354 = vmatprep.subr.mxu0 0.0
        %2355 = vmatpush1.msra.mxu0 0.0
        %2356 = vmatprep.subr.mxu0 0.0
        %2357 = vmatpush1.msra.mxu0 0.0
        %2358 = vmatprep.subr.mxu0 0.0
        %2359 = vmatpush1.msra.mxu0 0.0
        %2360 = vmatprep.subr.mxu0 0.0
        %2361 = vmatpush1.msra.mxu0 0.0
        %2362 = vmatprep.subr.mxu0 0.0
        %2363 = vmatpush1.msra.mxu0 0.0
        %2364 = vmatprep.subr.mxu0 0.0
        %2365 = vmatpush1.msra.mxu0 0.0
        %2366 = vmatprep.subr.mxu0 0.0
        %2367 = vmatpush1.msra.mxu0 0.0
        %2368 = vmatprep.subr.mxu0 0.0
        %2369 = vmatpush1.msra.mxu0 0.0
        %2370 = vmatprep.subr.mxu0 0.0
        %2371 = vmatpush1.msra.mxu0 0.0
        %2372 = vmatprep.subr.mxu0 0.0
        %2373 = vmatpush1.msra.mxu0 0.0
        %2374 = vmatprep.subr.mxu0 0.0
        %2375 = vmatpush1.msra.mxu0 0.0
        %2376 = vmatprep.subr.mxu0 0.0
        %2377 = vmatpush1.msra.mxu0 0.0
        %2378 = vmatprep.mubr.f32.mxu0 0.0
        %2379 = vmatmul.mubr.f32.gmra.mrb[0].mxu0 %v2264
        %v2380 = vpop.f32.mrb[0].mxu0
        %v2381 = vadd.f32 0.0, %v2380
        %v2382 = vpop.f32.mrb[0].mxu0
        %2383 = vmatprep.mubr.f32.mxu0 0.0
        %2384 = vmatmul.mubr.f32.gmra.mrb[0].mxu0 %v2267
        %v2385 = vpop.f32.mrb[0].mxu0
        %v2386 = vadd.f32 0.0, %v2385
        %v2387 = vpop.f32.mrb[0].mxu0
        %2388 = vmatprep.mubr.f32.mxu0 0.0
        %2389 = vmatmul.mubr.f32.gmra.mrb[0].mxu0 %v2270
        %v2390 = vpop.f32.mrb[0].mxu0
        %v2391 = vadd.f32 0.0, %v2390
        %v2392 = vpop.f32.mrb[0].mxu0
        %2393 = vmatprep.mubr.f32.mxu0 0.0
        %2394 = vmatmul.mubr.f32.gmra.mrb[0].mxu0 %v2273
        %v2395 = vpop.f32.mrb[0].mxu0
        %v2396 = vadd.f32 0.0, %v2395
        %v2397 = vpop.f32.mrb[0].mxu0
        %2398 = vmatprep.mubr.f32.mxu0 0.0
        %2399 = vmatmul.mubr.f32.gmra.mrb[0].mxu0 %v2276
        %v2400 = vpop.f32.mrb[0].mxu0
        %v2401 = vadd.f32 0.0, %v2400
        %v2402 = vpop.f32.mrb[0].mxu0
        %2403 = vmatprep.mubr.f32.mxu0 0.0
        %2404 = vmatmul.mubr.f32.gmra.mrb[0].mxu0 %v2279
        %v2405 = vpop.f32.mrb[0].mxu0
        %v2406 = vadd.f32 0.0, %v2405
        %v2407 = vpop.f32.mrb[0].mxu0
        %2408 = vmatprep.mubr.f32.mxu0 0.0
        %2409 = vmatmul.mubr.f32.gmra.mrb[0].mxu0 %v2282
        %v2410 = vpop.f32.mrb[0].mxu0
        %v2411 = vadd.f32 0.0, %v2410
        %v2412 = vpop.f32.mrb[0].mxu0
        %2413 = vmatprep.mubr.f32.mxu0 0.0
        %2414 = vmatmul.mubr.f32.gmra.mrb[0].mxu0 %v2285
        %v2415 = vpop.f32.mrb[0].mxu0
        %v2416 = vadd.f32 0.0, %v2415
        %v2417 = vpop.f32.mrb[0].mxu0
        %2418 = vmatprep.mubr.f32.mxu0 0.0
        %2419 = vmatmul.mubr.f32.gmra.mrb[0].mxu0 %v2288
        %v2420 = vpop.f32.mrb[0].mxu0
        %v2421 = vadd.f32 0.0, %v2420
        %v2422 = vpop.f32.mrb[0].mxu0
        %2423 = vmatprep.mubr.f32.mxu0 0.0
        %2424 = vmatmul.mubr.f32.gmra.mrb[0].mxu0 %v2291
        %v2425 = vpop.f32.mrb[0].mxu0
        %v2426 = vadd.f32 0.0, %v2425
        %v2427 = vpop.f32.mrb[0].mxu0
        %2428 = vmatprep.mubr.f32.mxu0 0.0
        %2429 = vmatmul.mubr.f32.gmra.mrb[0].mxu0 %v2294
        %v2430 = vpop.f32.mrb[0].mxu0
        %v2431 = vadd.f32 0.0, %v2430
        %v2432 = vpop.f32.mrb[0].mxu0
        %2433 = vmatprep.mubr.f32.mxu0 0.0
        %2434 = vmatmul.mubr.f32.gmra.mrb[0].mxu0 %v2297
        %v2435 = vpop.f32.mrb[0].mxu0
        %v2436 = vadd.f32 0.0, %v2435
        %v2437 = vpop.f32.mrb[0].mxu0
        %2438 = vmatprep.mubr.f32.mxu0 0.0
        %2439 = vmatmul.mubr.f32.gmra.mrb[0].mxu0 %v2300
        %v2440 = vpop.f32.mrb[0].mxu0
        %v2441 = vadd.f32 0.0, %v2440
        %v2442 = vpop.f32.mrb[0].mxu0
        %2443 = vmatprep.mubr.f32.mxu0 0.0
        %2444 = vmatmul.mubr.f32.gmra.mrb[0].mxu0 %v2303
        %v2445 = vpop.f32.mrb[0].mxu0
        %v2446 = vadd.f32 0.0, %v2445
        %v2447 = vpop.f32.mrb[0].mxu0
        %2448 = vmatprep.mubr.f32.mxu0 0.0
        %2449 = vmatmul.mubr.f32.gmra.mrb[0].mxu0 %v2306
        %v2450 = vpop.f32.mrb[0].mxu0
        %v2451 = vadd.f32 0.0, %v2450
        %v2452 = vpop.f32.mrb[0].mxu0
        %2453 = vmatprep.mubr.f32.mxu0 0.0
        %2454 = vmatmul.mubr.f32.gmra.mrb[0].mxu0 %v2309
        %v2455 = vpop.f32.mrb[0].mxu0
        %v2456 = vadd.f32 0.0, %v2455
        %v2457 = vpop.f32.mrb[0].mxu0
        %2458 = vdwg.mxu0
        %v2459 = vadd.f32 %v2166, %v2381
        %v2460 = vadd.f32 %v2171, %v2386
        %v2461 = vadd.f32 %v2176, %v2391
        %v2462 = vadd.f32 %v2181, %v2396
        %v2463 = vadd.f32 %v2186, %v2401
        %v2464 = vadd.f32 %v2191, %v2406
        %v2465 = vadd.f32 %v2196, %v2411
        %v2466 = vadd.f32 %v2201, %v2416
        %v2467 = vadd.f32 %v2206, %v2421
        %v2468 = vadd.f32 %v2211, %v2426
        %v2469 = vadd.f32 %v2216, %v2431
        %v2470 = vadd.f32 %v2221, %v2436
        %v2471 = vadd.f32 %v2226, %v2441
        %v2472 = vadd.f32 %v2231, %v2446
        %v2473 = vadd.f32 %v2236, %v2451
        %v2474 = vadd.f32 %v2241, %v2456
        %v2475 = vld [vmem:[#allocation2 + $0x10] sm:$0xff]
        %v2476 = vld [vmem:[#allocation2 + $0x18] sm:$0xff]
        %v2477 = vld [vmem:[#allocation2 + $0x20] sm:$0xff]
        %v2478 = vld [vmem:[#allocation2 + $0x28] sm:$0xff]
        %v2479 = vld [vmem:[#allocation2 + $0x30] sm:$0xff]
        %v2480 = vld [vmem:[#allocation2 + $0x38] sm:$0xff]
        %v2481 = vld [vmem:[#allocation2 + $0x40] sm:$0xff]
        %v2482 = vld [vmem:[#allocation2 + $0x48] sm:$0xff]
        %v2483 = vld [vmem:[#allocation2 + $0x50] sm:$0xff]
        %v2484 = vld [vmem:[#allocation2 + $0x58] sm:$0xff]
        %v2485 = vld [vmem:[#allocation2 + $0x60] sm:$0xff]
        %v2486 = vld [vmem:[#allocation2 + $0x68] sm:$0xff]
        %v2487 = vld [vmem:[#allocation2 + $0x70] sm:$0xff]
        %v2488 = vld [vmem:[#allocation2 + $0x78] sm:$0xff]
        %v2489 = vld [vmem:[#allocation2 + $0x80] sm:$0xff]
        %v2490 = vld [vmem:[#allocation2 + $0x88] sm:$0xff]
        %s2491 = scalar_lea.vmem %s4, 48
        %v2492 = vld [vmem:[%s2491] sm:$0xff]
        %v2493 = vld [vmem:[%s2491 + $0x8] sm:$0xf]
        %v2495 = vsel %vm1850, %v2475, 0
        %v2498 = vsel %vm1850, %v2476, 0
        %v2501 = vsel %vm1850, %v2477, 0
        %v2504 = vsel %vm1850, %v2478, 0
        %v2507 = vsel %vm1850, %v2479, 0
        %v2510 = vsel %vm1850, %v2480, 0
        %v2513 = vsel %vm1850, %v2481, 0
        %v2516 = vsel %vm1850, %v2482, 0
        %v2519 = vsel %vm1850, %v2483, 0
        %v2522 = vsel %vm1850, %v2484, 0
        %v2525 = vsel %vm1850, %v2485, 0
        %v2528 = vsel %vm1850, %v2486, 0
        %v2531 = vsel %vm1850, %v2487, 0
        %v2534 = vsel %vm1850, %v2488, 0
        %v2537 = vsel %vm1850, %v2489, 0
        %v2540 = vsel %vm1850, %v2490, 0
        %v2543 = vsel %vm1899, %v2493, 0
        %2545 = vmatprep.subr.mxu0 0.0
        %2546 = vmatpush1.msra.mxu0 %v2492
        %2547 = vmatprep.subr.mxu0 0.0
        %2548 = vmatpush1.msra.mxu0 %v2543
        %2549 = vmatprep.subr.mxu0 0.0
        %2550 = vmatpush1.msra.mxu0 0.0
        %2551 = vmatprep.subr.mxu0 0.0
        %2552 = vmatpush1.msra.mxu0 0.0
        %2553 = vmatprep.subr.mxu0 0.0
        %2554 = vmatpush1.msra.mxu0 0.0
        %2555 = vmatprep.subr.mxu0 0.0
        %2556 = vmatpush1.msra.mxu0 0.0
        %2557 = vmatprep.subr.mxu0 0.0
        %2558 = vmatpush1.msra.mxu0 0.0
        %2559 = vmatprep.subr.mxu0 0.0
        %2560 = vmatpush1.msra.mxu0 0.0
        %2561 = vmatprep.subr.mxu0 0.0
        %2562 = vmatpush1.msra.mxu0 0.0
        %2563 = vmatprep.subr.mxu0 0.0
        %2564 = vmatpush1.msra.mxu0 0.0
        %2565 = vmatprep.subr.mxu0 0.0
        %2566 = vmatpush1.msra.mxu0 0.0
        %2567 = vmatprep.subr.mxu0 0.0
        %2568 = vmatpush1.msra.mxu0 0.0
        %2569 = vmatprep.subr.mxu0 0.0
        %2570 = vmatpush1.msra.mxu0 0.0
        %2571 = vmatprep.subr.mxu0 0.0
        %2572 = vmatpush1.msra.mxu0 0.0
        %2573 = vmatprep.subr.mxu0 0.0
        %2574 = vmatpush1.msra.mxu0 0.0
        %2575 = vmatprep.subr.mxu0 0.0
        %2576 = vmatpush1.msra.mxu0 0.0
        %2577 = vmatprep.subr.mxu0 0.0
        %2578 = vmatpush1.msra.mxu0 0.0
        %2579 = vmatprep.subr.mxu0 0.0
        %2580 = vmatpush1.msra.mxu0 0.0
        %2581 = vmatprep.subr.mxu0 0.0
        %2582 = vmatpush1.msra.mxu0 0.0
        %2583 = vmatprep.subr.mxu0 0.0
        %2584 = vmatpush1.msra.mxu0 0.0
        %2585 = vmatprep.subr.mxu0 0.0
        %2586 = vmatpush1.msra.mxu0 0.0
        %2587 = vmatprep.subr.mxu0 0.0
        %2588 = vmatpush1.msra.mxu0 0.0
        %2589 = vmatprep.subr.mxu0 0.0
        %2590 = vmatpush1.msra.mxu0 0.0
        %2591 = vmatprep.subr.mxu0 0.0
        %2592 = vmatpush1.msra.mxu0 0.0
        %2593 = vmatprep.subr.mxu0 0.0
        %2594 = vmatpush1.msra.mxu0 0.0
        %2595 = vmatprep.subr.mxu0 0.0
        %2596 = vmatpush1.msra.mxu0 0.0
        %2597 = vmatprep.subr.mxu0 0.0
        %2598 = vmatpush1.msra.mxu0 0.0
        %2599 = vmatprep.subr.mxu0 0.0
        %2600 = vmatpush1.msra.mxu0 0.0
        %2601 = vmatprep.subr.mxu0 0.0
        %2602 = vmatpush1.msra.mxu0 0.0
        %2603 = vmatprep.subr.mxu0 0.0
        %2604 = vmatpush1.msra.mxu0 0.0
        %2605 = vmatprep.subr.mxu0 0.0
        %2606 = vmatpush1.msra.mxu0 0.0
        %2607 = vmatprep.subr.mxu0 0.0
        %2608 = vmatpush1.msra.mxu0 0.0
        %2609 = vmatprep.mubr.f32.mxu0 0.0
        %2610 = vmatmul.mubr.f32.gmra.mrb[0].mxu0 %v2495
        %v2611 = vpop.f32.mrb[0].mxu0
        %v2612 = vadd.f32 0.0, %v2611
        %v2613 = vpop.f32.mrb[0].mxu0
        %2614 = vmatprep.mubr.f32.mxu0 0.0
        %2615 = vmatmul.mubr.f32.gmra.mrb[0].mxu0 %v2498
        %v2616 = vpop.f32.mrb[0].mxu0
        %v2617 = vadd.f32 0.0, %v2616
        %v2618 = vpop.f32.mrb[0].mxu0
        %2619 = vmatprep.mubr.f32.mxu0 0.0
        %2620 = vmatmul.mubr.f32.gmra.mrb[0].mxu0 %v2501
        %v2621 = vpop.f32.mrb[0].mxu0
        %v2622 = vadd.f32 0.0, %v2621
        %v2623 = vpop.f32.mrb[0].mxu0
        %2624 = vmatprep.mubr.f32.mxu0 0.0
        %2625 = vmatmul.mubr.f32.gmra.mrb[0].mxu0 %v2504
        %v2626 = vpop.f32.mrb[0].mxu0
        %v2627 = vadd.f32 0.0, %v2626
        %v2628 = vpop.f32.mrb[0].mxu0
        %2629 = vmatprep.mubr.f32.mxu0 0.0
        %2630 = vmatmul.mubr.f32.gmra.mrb[0].mxu0 %v2507
        %v2631 = vpop.f32.mrb[0].mxu0
        %v2632 = vadd.f32 0.0, %v2631
        %v2633 = vpop.f32.mrb[0].mxu0
        %2634 = vmatprep.mubr.f32.mxu0 0.0
        %2635 = vmatmul.mubr.f32.gmra.mrb[0].mxu0 %v2510
        %v2636 = vpop.f32.mrb[0].mxu0
        %v2637 = vadd.f32 0.0, %v2636
        %v2638 = vpop.f32.mrb[0].mxu0
        %2639 = vmatprep.mubr.f32.mxu0 0.0
        %2640 = vmatmul.mubr.f32.gmra.mrb[0].mxu0 %v2513
        %v2641 = vpop.f32.mrb[0].mxu0
        %v2642 = vadd.f32 0.0, %v2641
        %v2643 = vpop.f32.mrb[0].mxu0
        %2644 = vmatprep.mubr.f32.mxu0 0.0
        %2645 = vmatmul.mubr.f32.gmra.mrb[0].mxu0 %v2516
        %v2646 = vpop.f32.mrb[0].mxu0
        %v2647 = vadd.f32 0.0, %v2646
        %v2648 = vpop.f32.mrb[0].mxu0
        %2649 = vmatprep.mubr.f32.mxu0 0.0
        %2650 = vmatmul.mubr.f32.gmra.mrb[0].mxu0 %v2519
        %v2651 = vpop.f32.mrb[0].mxu0
        %v2652 = vadd.f32 0.0, %v2651
        %v2653 = vpop.f32.mrb[0].mxu0
        %2654 = vmatprep.mubr.f32.mxu0 0.0
        %2655 = vmatmul.mubr.f32.gmra.mrb[0].mxu0 %v2522
        %v2656 = vpop.f32.mrb[0].mxu0
        %v2657 = vadd.f32 0.0, %v2656
        %v2658 = vpop.f32.mrb[0].mxu0
        %2659 = vmatprep.mubr.f32.mxu0 0.0
        %2660 = vmatmul.mubr.f32.gmra.mrb[0].mxu0 %v2525
        %v2661 = vpop.f32.mrb[0].mxu0
        %v2662 = vadd.f32 0.0, %v2661
        %v2663 = vpop.f32.mrb[0].mxu0
        %2664 = vmatprep.mubr.f32.mxu0 0.0
        %2665 = vmatmul.mubr.f32.gmra.mrb[0].mxu0 %v2528
        %v2666 = vpop.f32.mrb[0].mxu0
        %v2667 = vadd.f32 0.0, %v2666
        %v2668 = vpop.f32.mrb[0].mxu0
        %2669 = vmatprep.mubr.f32.mxu0 0.0
        %2670 = vmatmul.mubr.f32.gmra.mrb[0].mxu0 %v2531
        %v2671 = vpop.f32.mrb[0].mxu0
        %v2672 = vadd.f32 0.0, %v2671
        %v2673 = vpop.f32.mrb[0].mxu0
        %2674 = vmatprep.mubr.f32.mxu0 0.0
        %2675 = vmatmul.mubr.f32.gmra.mrb[0].mxu0 %v2534
        %v2676 = vpop.f32.mrb[0].mxu0
        %v2677 = vadd.f32 0.0, %v2676
        %v2678 = vpop.f32.mrb[0].mxu0
        %2679 = vmatprep.mubr.f32.mxu0 0.0
        %2680 = vmatmul.mubr.f32.gmra.mrb[0].mxu0 %v2537
        %v2681 = vpop.f32.mrb[0].mxu0
        %v2682 = vadd.f32 0.0, %v2681
        %v2683 = vpop.f32.mrb[0].mxu0
        %2684 = vmatprep.mubr.f32.mxu0 0.0
        %2685 = vmatmul.mubr.f32.gmra.mrb[0].mxu0 %v2540
        %v2686 = vpop.f32.mrb[0].mxu0
        %v2687 = vadd.f32 0.0, %v2686
        %v2688 = vpop.f32.mrb[0].mxu0
        %2689 = vdwg.mxu0
        %v2690 = vadd.f32 %v2459, %v2612
        %v2691 = vadd.f32 %v2460, %v2617
        %v2692 = vadd.f32 %v2461, %v2622
        %v2693 = vadd.f32 %v2462, %v2627
        %v2694 = vadd.f32 %v2463, %v2632
        %v2695 = vadd.f32 %v2464, %v2637
        %v2696 = vadd.f32 %v2465, %v2642
        %v2697 = vadd.f32 %v2466, %v2647
        %v2698 = vadd.f32 %v2467, %v2652
        %v2699 = vadd.f32 %v2468, %v2657
        %v2700 = vadd.f32 %v2469, %v2662
        %v2701 = vadd.f32 %v2470, %v2667
        %v2702 = vadd.f32 %v2471, %v2672
        %v2703 = vadd.f32 %v2472, %v2677
        %v2704 = vadd.f32 %v2473, %v2682
        %v2705 = vadd.f32 %v2474, %v2687
        %v2706 = vld [vmem:[#allocation2 + $0x11] sm:$0xff]
        %v2707 = vld [vmem:[#allocation2 + $0x19] sm:$0xff]
        %v2708 = vld [vmem:[#allocation2 + $0x21] sm:$0xff]
        %v2709 = vld [vmem:[#allocation2 + $0x29] sm:$0xff]
        %v2710 = vld [vmem:[#allocation2 + $0x31] sm:$0xff]
        %v2711 = vld [vmem:[#allocation2 + $0x39] sm:$0xff]
        %v2712 = vld [vmem:[#allocation2 + $0x41] sm:$0xff]
        %v2713 = vld [vmem:[#allocation2 + $0x49] sm:$0xff]
        %v2714 = vld [vmem:[#allocation2 + $0x51] sm:$0xff]
        %v2715 = vld [vmem:[#allocation2 + $0x59] sm:$0xff]
        %v2716 = vld [vmem:[#allocation2 + $0x61] sm:$0xff]
        %v2717 = vld [vmem:[#allocation2 + $0x69] sm:$0xff]
        %v2718 = vld [vmem:[#allocation2 + $0x71] sm:$0xff]
        %v2719 = vld [vmem:[#allocation2 + $0x79] sm:$0xff]
        %v2720 = vld [vmem:[#allocation2 + $0x81] sm:$0xff]
        %v2721 = vld [vmem:[#allocation2 + $0x89] sm:$0xff]
        %s2722 = scalar_lea.vmem %s4, 64
        %v2723 = vld [vmem:[%s2722] sm:$0xff]
        %v2724 = vld [vmem:[%s2722 + $0x8] sm:$0xf]
        %v2726 = vsel %vm1850, %v2706, 0
        %v2729 = vsel %vm1850, %v2707, 0
        %v2732 = vsel %vm1850, %v2708, 0
        %v2735 = vsel %vm1850, %v2709, 0
        %v2738 = vsel %vm1850, %v2710, 0
        %v2741 = vsel %vm1850, %v2711, 0
        %v2744 = vsel %vm1850, %v2712, 0
        %v2747 = vsel %vm1850, %v2713, 0
        %v2750 = vsel %vm1850, %v2714, 0
        %v2753 = vsel %vm1850, %v2715, 0
        %v2756 = vsel %vm1850, %v2716, 0
        %v2759 = vsel %vm1850, %v2717, 0
        %v2762 = vsel %vm1850, %v2718, 0
        %v2765 = vsel %vm1850, %v2719, 0
        %v2768 = vsel %vm1850, %v2720, 0
        %v2771 = vsel %vm1850, %v2721, 0
        %v2774 = vsel %vm1899, %v2724, 0
        %2776 = vmatprep.subr.mxu0 0.0
        %2777 = vmatpush1.msra.mxu0 %v2723
        %2778 = vmatprep.subr.mxu0 0.0
        %2779 = vmatpush1.msra.mxu0 %v2774
        %2780 = vmatprep.subr.mxu0 0.0
        %2781 = vmatpush1.msra.mxu0 0.0
        %2782 = vmatprep.subr.mxu0 0.0
        %2783 = vmatpush1.msra.mxu0 0.0
        %2784 = vmatprep.subr.mxu0 0.0
        %2785 = vmatpush1.msra.mxu0 0.0
        %2786 = vmatprep.subr.mxu0 0.0
        %2787 = vmatpush1.msra.mxu0 0.0
        %2788 = vmatprep.subr.mxu0 0.0
        %2789 = vmatpush1.msra.mxu0 0.0
        %2790 = vmatprep.subr.mxu0 0.0
        %2791 = vmatpush1.msra.mxu0 0.0
        %2792 = vmatprep.subr.mxu0 0.0
        %2793 = vmatpush1.msra.mxu0 0.0
        %2794 = vmatprep.subr.mxu0 0.0
        %2795 = vmatpush1.msra.mxu0 0.0
        %2796 = vmatprep.subr.mxu0 0.0
        %2797 = vmatpush1.msra.mxu0 0.0
        %2798 = vmatprep.subr.mxu0 0.0
        %2799 = vmatpush1.msra.mxu0 0.0
        %2800 = vmatprep.subr.mxu0 0.0
        %2801 = vmatpush1.msra.mxu0 0.0
        %2802 = vmatprep.subr.mxu0 0.0
        %2803 = vmatpush1.msra.mxu0 0.0
        %2804 = vmatprep.subr.mxu0 0.0
        %2805 = vmatpush1.msra.mxu0 0.0
        %2806 = vmatprep.subr.mxu0 0.0
        %2807 = vmatpush1.msra.mxu0 0.0
        %2808 = vmatprep.subr.mxu0 0.0
        %2809 = vmatpush1.msra.mxu0 0.0
        %2810 = vmatprep.subr.mxu0 0.0
        %2811 = vmatpush1.msra.mxu0 0.0
        %2812 = vmatprep.subr.mxu0 0.0
        %2813 = vmatpush1.msra.mxu0 0.0
        %2814 = vmatprep.subr.mxu0 0.0
        %2815 = vmatpush1.msra.mxu0 0.0
        %2816 = vmatprep.subr.mxu0 0.0
        %2817 = vmatpush1.msra.mxu0 0.0
        %2818 = vmatprep.subr.mxu0 0.0
        %2819 = vmatpush1.msra.mxu0 0.0
        %2820 = vmatprep.subr.mxu0 0.0
        %2821 = vmatpush1.msra.mxu0 0.0
        %2822 = vmatprep.subr.mxu0 0.0
        %2823 = vmatpush1.msra.mxu0 0.0
        %2824 = vmatprep.subr.mxu0 0.0
        %2825 = vmatpush1.msra.mxu0 0.0
        %2826 = vmatprep.subr.mxu0 0.0
        %2827 = vmatpush1.msra.mxu0 0.0
        %2828 = vmatprep.subr.mxu0 0.0
        %2829 = vmatpush1.msra.mxu0 0.0
        %2830 = vmatprep.subr.mxu0 0.0
        %2831 = vmatpush1.msra.mxu0 0.0
        %2832 = vmatprep.subr.mxu0 0.0
        %2833 = vmatpush1.msra.mxu0 0.0
        %2834 = vmatprep.subr.mxu0 0.0
        %2835 = vmatpush1.msra.mxu0 0.0
        %2836 = vmatprep.subr.mxu0 0.0
        %2837 = vmatpush1.msra.mxu0 0.0
        %2838 = vmatprep.subr.mxu0 0.0
        %2839 = vmatpush1.msra.mxu0 0.0
        %2840 = vmatprep.mubr.f32.mxu0 0.0
        %2841 = vmatmul.mubr.f32.gmra.mrb[0].mxu0 %v2726
        %v2842 = vpop.f32.mrb[0].mxu0
        %v2843 = vadd.f32 0.0, %v2842
        %v2844 = vpop.f32.mrb[0].mxu0
        %2845 = vmatprep.mubr.f32.mxu0 0.0
        %2846 = vmatmul.mubr.f32.gmra.mrb[0].mxu0 %v2729
        %v2847 = vpop.f32.mrb[0].mxu0
        %v2848 = vadd.f32 0.0, %v2847
        %v2849 = vpop.f32.mrb[0].mxu0
        %2850 = vmatprep.mubr.f32.mxu0 0.0
        %2851 = vmatmul.mubr.f32.gmra.mrb[0].mxu0 %v2732
        %v2852 = vpop.f32.mrb[0].mxu0
        %v2853 = vadd.f32 0.0, %v2852
        %v2854 = vpop.f32.mrb[0].mxu0
        %2855 = vmatprep.mubr.f32.mxu0 0.0
        %2856 = vmatmul.mubr.f32.gmra.mrb[0].mxu0 %v2735
        %v2857 = vpop.f32.mrb[0].mxu0
        %v2858 = vadd.f32 0.0, %v2857
        %v2859 = vpop.f32.mrb[0].mxu0
        %2860 = vmatprep.mubr.f32.mxu0 0.0
        %2861 = vmatmul.mubr.f32.gmra.mrb[0].mxu0 %v2738
        %v2862 = vpop.f32.mrb[0].mxu0
        %v2863 = vadd.f32 0.0, %v2862
        %v2864 = vpop.f32.mrb[0].mxu0
        %2865 = vmatprep.mubr.f32.mxu0 0.0
        %2866 = vmatmul.mubr.f32.gmra.mrb[0].mxu0 %v2741
        %v2867 = vpop.f32.mrb[0].mxu0
        %v2868 = vadd.f32 0.0, %v2867
        %v2869 = vpop.f32.mrb[0].mxu0
        %2870 = vmatprep.mubr.f32.mxu0 0.0
        %2871 = vmatmul.mubr.f32.gmra.mrb[0].mxu0 %v2744
        %v2872 = vpop.f32.mrb[0].mxu0
        %v2873 = vadd.f32 0.0, %v2872
        %v2874 = vpop.f32.mrb[0].mxu0
        %2875 = vmatprep.mubr.f32.mxu0 0.0
        %2876 = vmatmul.mubr.f32.gmra.mrb[0].mxu0 %v2747
        %v2877 = vpop.f32.mrb[0].mxu0
        %v2878 = vadd.f32 0.0, %v2877
        %v2879 = vpop.f32.mrb[0].mxu0
        %2880 = vmatprep.mubr.f32.mxu0 0.0
        %2881 = vmatmul.mubr.f32.gmra.mrb[0].mxu0 %v2750
        %v2882 = vpop.f32.mrb[0].mxu0
        %v2883 = vadd.f32 0.0, %v2882
        %v2884 = vpop.f32.mrb[0].mxu0
        %2885 = vmatprep.mubr.f32.mxu0 0.0
        %2886 = vmatmul.mubr.f32.gmra.mrb[0].mxu0 %v2753
        %v2887 = vpop.f32.mrb[0].mxu0
        %v2888 = vadd.f32 0.0, %v2887
        %v2889 = vpop.f32.mrb[0].mxu0
        %2890 = vmatprep.mubr.f32.mxu0 0.0
        %2891 = vmatmul.mubr.f32.gmra.mrb[0].mxu0 %v2756
        %v2892 = vpop.f32.mrb[0].mxu0
        %v2893 = vadd.f32 0.0, %v2892
        %v2894 = vpop.f32.mrb[0].mxu0
        %2895 = vmatprep.mubr.f32.mxu0 0.0
        %2896 = vmatmul.mubr.f32.gmra.mrb[0].mxu0 %v2759
        %v2897 = vpop.f32.mrb[0].mxu0
        %v2898 = vadd.f32 0.0, %v2897
        %v2899 = vpop.f32.mrb[0].mxu0
        %2900 = vmatprep.mubr.f32.mxu0 0.0
        %2901 = vmatmul.mubr.f32.gmra.mrb[0].mxu0 %v2762
        %v2902 = vpop.f32.mrb[0].mxu0
        %v2903 = vadd.f32 0.0, %v2902
        %v2904 = vpop.f32.mrb[0].mxu0
        %2905 = vmatprep.mubr.f32.mxu0 0.0
        %2906 = vmatmul.mubr.f32.gmra.mrb[0].mxu0 %v2765
        %v2907 = vpop.f32.mrb[0].mxu0
        %v2908 = vadd.f32 0.0, %v2907
        %v2909 = vpop.f32.mrb[0].mxu0
        %2910 = vmatprep.mubr.f32.mxu0 0.0
        %2911 = vmatmul.mubr.f32.gmra.mrb[0].mxu0 %v2768
        %v2912 = vpop.f32.mrb[0].mxu0
        %v2913 = vadd.f32 0.0, %v2912
        %v2914 = vpop.f32.mrb[0].mxu0
        %2915 = vmatprep.mubr.f32.mxu0 0.0
        %2916 = vmatmul.mubr.f32.gmra.mrb[0].mxu0 %v2771
        %v2917 = vpop.f32.mrb[0].mxu0
        %v2918 = vadd.f32 0.0, %v2917
        %v2919 = vpop.f32.mrb[0].mxu0
        %2920 = vdwg.mxu0
        %v2921 = vadd.f32 %v2690, %v2843
        %v2922 = vadd.f32 %v2691, %v2848
        %v2923 = vadd.f32 %v2692, %v2853
        %v2924 = vadd.f32 %v2693, %v2858
        %v2925 = vadd.f32 %v2694, %v2863
        %v2926 = vadd.f32 %v2695, %v2868
        %v2927 = vadd.f32 %v2696, %v2873
        %v2928 = vadd.f32 %v2697, %v2878
        %v2929 = vadd.f32 %v2698, %v2883
        %v2930 = vadd.f32 %v2699, %v2888
        %v2931 = vadd.f32 %v2700, %v2893
        %v2932 = vadd.f32 %v2701, %v2898
        %v2933 = vadd.f32 %v2702, %v2903
        %v2934 = vadd.f32 %v2703, %v2908
        %v2935 = vadd.f32 %v2704, %v2913
        %v2936 = vadd.f32 %v2705, %v2918
        %v2937 = vld [vmem:[#allocation2 + $0x12] sm:$0xff]
        %v2938 = vld [vmem:[#allocation2 + $0x1a] sm:$0xff]
        %v2939 = vld [vmem:[#allocation2 + $0x22] sm:$0xff]
        %v2940 = vld [vmem:[#allocation2 + $0x2a] sm:$0xff]
        %v2941 = vld [vmem:[#allocation2 + $0x32] sm:$0xff]
        %v2942 = vld [vmem:[#allocation2 + $0x3a] sm:$0xff]
        %v2943 = vld [vmem:[#allocation2 + $0x42] sm:$0xff]
        %v2944 = vld [vmem:[#allocation2 + $0x4a] sm:$0xff]
        %v2945 = vld [vmem:[#allocation2 + $0x52] sm:$0xff]
        %v2946 = vld [vmem:[#allocation2 + $0x5a] sm:$0xff]
        %v2947 = vld [vmem:[#allocation2 + $0x62] sm:$0xff]
        %v2948 = vld [vmem:[#allocation2 + $0x6a] sm:$0xff]
        %v2949 = vld [vmem:[#allocation2 + $0x72] sm:$0xff]
        %v2950 = vld [vmem:[#allocation2 + $0x7a] sm:$0xff]
        %v2951 = vld [vmem:[#allocation2 + $0x82] sm:$0xff]
        %v2952 = vld [vmem:[#allocation2 + $0x8a] sm:$0xff]
        %s2953 = scalar_lea.vmem %s4, 80
        %v2954 = vld [vmem:[%s2953] sm:$0xff]
        %v2955 = vld [vmem:[%s2953 + $0x8] sm:$0xf]
        %v2957 = vsel %vm1850, %v2937, 0
        %v2960 = vsel %vm1850, %v2938, 0
        %v2963 = vsel %vm1850, %v2939, 0
        %v2966 = vsel %vm1850, %v2940, 0
        %v2969 = vsel %vm1850, %v2941, 0
        %v2972 = vsel %vm1850, %v2942, 0
        %v2975 = vsel %vm1850, %v2943, 0
        %v2978 = vsel %vm1850, %v2944, 0
        %v2981 = vsel %vm1850, %v2945, 0
        %v2984 = vsel %vm1850, %v2946, 0
        %v2987 = vsel %vm1850, %v2947, 0
        %v2990 = vsel %vm1850, %v2948, 0
        %v2993 = vsel %vm1850, %v2949, 0
        %v2996 = vsel %vm1850, %v2950, 0
        %v2999 = vsel %vm1850, %v2951, 0
        %v3002 = vsel %vm1850, %v2952, 0
        %v3005 = vsel %vm1899, %v2955, 0
        %3007 = vmatprep.subr.mxu0 0.0
        %3008 = vmatpush1.msra.mxu0 %v2954
        %3009 = vmatprep.subr.mxu0 0.0
        %3010 = vmatpush1.msra.mxu0 %v3005
        %3011 = vmatprep.subr.mxu0 0.0
        %3012 = vmatpush1.msra.mxu0 0.0
        %3013 = vmatprep.subr.mxu0 0.0
        %3014 = vmatpush1.msra.mxu0 0.0
        %3015 = vmatprep.subr.mxu0 0.0
        %3016 = vmatpush1.msra.mxu0 0.0
        %3017 = vmatprep.subr.mxu0 0.0
        %3018 = vmatpush1.msra.mxu0 0.0
        %3019 = vmatprep.subr.mxu0 0.0
        %3020 = vmatpush1.msra.mxu0 0.0
        %3021 = vmatprep.subr.mxu0 0.0
        %3022 = vmatpush1.msra.mxu0 0.0
        %3023 = vmatprep.subr.mxu0 0.0
        %3024 = vmatpush1.msra.mxu0 0.0
        %3025 = vmatprep.subr.mxu0 0.0
        %3026 = vmatpush1.msra.mxu0 0.0
        %3027 = vmatprep.subr.mxu0 0.0
        %3028 = vmatpush1.msra.mxu0 0.0
        %3029 = vmatprep.subr.mxu0 0.0
        %3030 = vmatpush1.msra.mxu0 0.0
        %3031 = vmatprep.subr.mxu0 0.0
        %3032 = vmatpush1.msra.mxu0 0.0
        %3033 = vmatprep.subr.mxu0 0.0
        %3034 = vmatpush1.msra.mxu0 0.0
        %3035 = vmatprep.subr.mxu0 0.0
        %3036 = vmatpush1.msra.mxu0 0.0
        %3037 = vmatprep.subr.mxu0 0.0
        %3038 = vmatpush1.msra.mxu0 0.0
        %3039 = vmatprep.subr.mxu0 0.0
        %3040 = vmatpush1.msra.mxu0 0.0
        %3041 = vmatprep.subr.mxu0 0.0
        %3042 = vmatpush1.msra.mxu0 0.0
        %3043 = vmatprep.subr.mxu0 0.0
        %3044 = vmatpush1.msra.mxu0 0.0
        %3045 = vmatprep.subr.mxu0 0.0
        %3046 = vmatpush1.msra.mxu0 0.0
        %3047 = vmatprep.subr.mxu0 0.0
        %3048 = vmatpush1.msra.mxu0 0.0
        %3049 = vmatprep.subr.mxu0 0.0
        %3050 = vmatpush1.msra.mxu0 0.0
        %3051 = vmatprep.subr.mxu0 0.0
        %3052 = vmatpush1.msra.mxu0 0.0
        %3053 = vmatprep.subr.mxu0 0.0
        %3054 = vmatpush1.msra.mxu0 0.0
        %3055 = vmatprep.subr.mxu0 0.0
        %3056 = vmatpush1.msra.mxu0 0.0
        %3057 = vmatprep.subr.mxu0 0.0
        %3058 = vmatpush1.msra.mxu0 0.0
        %3059 = vmatprep.subr.mxu0 0.0
        %3060 = vmatpush1.msra.mxu0 0.0
        %3061 = vmatprep.subr.mxu0 0.0
        %3062 = vmatpush1.msra.mxu0 0.0
        %3063 = vmatprep.subr.mxu0 0.0
        %3064 = vmatpush1.msra.mxu0 0.0
        %3065 = vmatprep.subr.mxu0 0.0
        %3066 = vmatpush1.msra.mxu0 0.0
        %3067 = vmatprep.subr.mxu0 0.0
        %3068 = vmatpush1.msra.mxu0 0.0
        %3069 = vmatprep.subr.mxu0 0.0
        %3070 = vmatpush1.msra.mxu0 0.0
        %3071 = vmatprep.mubr.f32.mxu0 0.0
        %3072 = vmatmul.mubr.f32.gmra.mrb[0].mxu0 %v2957
        %v3073 = vpop.f32.mrb[0].mxu0
        %v3074 = vadd.f32 0.0, %v3073
        %v3075 = vpop.f32.mrb[0].mxu0
        %3076 = vmatprep.mubr.f32.mxu0 0.0
        %3077 = vmatmul.mubr.f32.gmra.mrb[0].mxu0 %v2960
        %v3078 = vpop.f32.mrb[0].mxu0
        %v3079 = vadd.f32 0.0, %v3078
        %v3080 = vpop.f32.mrb[0].mxu0
        %3081 = vmatprep.mubr.f32.mxu0 0.0
        %3082 = vmatmul.mubr.f32.gmra.mrb[0].mxu0 %v2963
        %v3083 = vpop.f32.mrb[0].mxu0
        %v3084 = vadd.f32 0.0, %v3083
        %v3085 = vpop.f32.mrb[0].mxu0
        %3086 = vmatprep.mubr.f32.mxu0 0.0
        %3087 = vmatmul.mubr.f32.gmra.mrb[0].mxu0 %v2966
        %v3088 = vpop.f32.mrb[0].mxu0
        %v3089 = vadd.f32 0.0, %v3088
        %v3090 = vpop.f32.mrb[0].mxu0
        %3091 = vmatprep.mubr.f32.mxu0 0.0
        %3092 = vmatmul.mubr.f32.gmra.mrb[0].mxu0 %v2969
        %v3093 = vpop.f32.mrb[0].mxu0
        %v3094 = vadd.f32 0.0, %v3093
        %v3095 = vpop.f32.mrb[0].mxu0
        %3096 = vmatprep.mubr.f32.mxu0 0.0
        %3097 = vmatmul.mubr.f32.gmra.mrb[0].mxu0 %v2972
        %v3098 = vpop.f32.mrb[0].mxu0
        %v3099 = vadd.f32 0.0, %v3098
        %v3100 = vpop.f32.mrb[0].mxu0
        %3101 = vmatprep.mubr.f32.mxu0 0.0
        %3102 = vmatmul.mubr.f32.gmra.mrb[0].mxu0 %v2975
        %v3103 = vpop.f32.mrb[0].mxu0
        %v3104 = vadd.f32 0.0, %v3103
        %v3105 = vpop.f32.mrb[0].mxu0
        %3106 = vmatprep.mubr.f32.mxu0 0.0
        %3107 = vmatmul.mubr.f32.gmra.mrb[0].mxu0 %v2978
        %v3108 = vpop.f32.mrb[0].mxu0
        %v3109 = vadd.f32 0.0, %v3108
        %v3110 = vpop.f32.mrb[0].mxu0
        %3111 = vmatprep.mubr.f32.mxu0 0.0
        %3112 = vmatmul.mubr.f32.gmra.mrb[0].mxu0 %v2981
        %v3113 = vpop.f32.mrb[0].mxu0
        %v3114 = vadd.f32 0.0, %v3113
        %v3115 = vpop.f32.mrb[0].mxu0
        %3116 = vmatprep.mubr.f32.mxu0 0.0
        %3117 = vmatmul.mubr.f32.gmra.mrb[0].mxu0 %v2984
        %v3118 = vpop.f32.mrb[0].mxu0
        %v3119 = vadd.f32 0.0, %v3118
        %v3120 = vpop.f32.mrb[0].mxu0
        %3121 = vmatprep.mubr.f32.mxu0 0.0
        %3122 = vmatmul.mubr.f32.gmra.mrb[0].mxu0 %v2987
        %v3123 = vpop.f32.mrb[0].mxu0
        %v3124 = vadd.f32 0.0, %v3123
        %v3125 = vpop.f32.mrb[0].mxu0
        %3126 = vmatprep.mubr.f32.mxu0 0.0
        %3127 = vmatmul.mubr.f32.gmra.mrb[0].mxu0 %v2990
        %v3128 = vpop.f32.mrb[0].mxu0
        %v3129 = vadd.f32 0.0, %v3128
        %v3130 = vpop.f32.mrb[0].mxu0
        %3131 = vmatprep.mubr.f32.mxu0 0.0
        %3132 = vmatmul.mubr.f32.gmra.mrb[0].mxu0 %v2993
        %v3133 = vpop.f32.mrb[0].mxu0
        %v3134 = vadd.f32 0.0, %v3133
        %v3135 = vpop.f32.mrb[0].mxu0
        %3136 = vmatprep.mubr.f32.mxu0 0.0
        %3137 = vmatmul.mubr.f32.gmra.mrb[0].mxu0 %v2996
        %v3138 = vpop.f32.mrb[0].mxu0
        %v3139 = vadd.f32 0.0, %v3138
        %v3140 = vpop.f32.mrb[0].mxu0
        %3141 = vmatprep.mubr.f32.mxu0 0.0
        %3142 = vmatmul.mubr.f32.gmra.mrb[0].mxu0 %v2999
        %v3143 = vpop.f32.mrb[0].mxu0
        %v3144 = vadd.f32 0.0, %v3143
        %v3145 = vpop.f32.mrb[0].mxu0
        %3146 = vmatprep.mubr.f32.mxu0 0.0
        %3147 = vmatmul.mubr.f32.gmra.mrb[0].mxu0 %v3002
        %v3148 = vpop.f32.mrb[0].mxu0
        %v3149 = vadd.f32 0.0, %v3148
        %v3150 = vpop.f32.mrb[0].mxu0
        %3151 = vdwg.mxu0
        %v3152 = vadd.f32 %v2921, %v3074
        %v3153 = vadd.f32 %v2922, %v3079
        %v3154 = vadd.f32 %v2923, %v3084
        %v3155 = vadd.f32 %v2924, %v3089
        %v3156 = vadd.f32 %v2925, %v3094
        %v3157 = vadd.f32 %v2926, %v3099
        %v3158 = vadd.f32 %v2927, %v3104
        %v3159 = vadd.f32 %v2928, %v3109
        %v3160 = vadd.f32 %v2929, %v3114
        %v3161 = vadd.f32 %v2930, %v3119
        %v3162 = vadd.f32 %v2931, %v3124
        %v3163 = vadd.f32 %v2932, %v3129
        %v3164 = vadd.f32 %v2933, %v3134
        %v3165 = vadd.f32 %v2934, %v3139
        %v3166 = vadd.f32 %v2935, %v3144
        %v3167 = vadd.f32 %v2936, %v3149
        %v3168 = vld [vmem:[#allocation2 + $0x20] sm:$0xff]
        %v3169 = vld [vmem:[#allocation2 + $0x28] sm:$0xff]
        %v3170 = vld [vmem:[#allocation2 + $0x30] sm:$0xff]
        %v3171 = vld [vmem:[#allocation2 + $0x38] sm:$0xff]
        %v3172 = vld [vmem:[#allocation2 + $0x40] sm:$0xff]
        %v3173 = vld [vmem:[#allocation2 + $0x48] sm:$0xff]
        %v3174 = vld [vmem:[#allocation2 + $0x50] sm:$0xff]
        %v3175 = vld [vmem:[#allocation2 + $0x58] sm:$0xff]
        %v3176 = vld [vmem:[#allocation2 + $0x60] sm:$0xff]
        %v3177 = vld [vmem:[#allocation2 + $0x68] sm:$0xff]
        %v3178 = vld [vmem:[#allocation2 + $0x70] sm:$0xff]
        %v3179 = vld [vmem:[#allocation2 + $0x78] sm:$0xff]
        %v3180 = vld [vmem:[#allocation2 + $0x80] sm:$0xff]
        %v3181 = vld [vmem:[#allocation2 + $0x88] sm:$0xff]
        %v3182 = vld [vmem:[#allocation2 + $0x90] sm:$0xff]
        %v3183 = vld [vmem:[#allocation2 + $0x98] sm:$0xff]
        %s3184 = scalar_lea.vmem %s4, 96
        %v3185 = vld [vmem:[%s3184] sm:$0xff]
        %v3186 = vld [vmem:[%s3184 + $0x8] sm:$0xf]
        %v3188 = vsel %vm1850, %v3168, 0
        %v3191 = vsel %vm1850, %v3169, 0
        %v3194 = vsel %vm1850, %v3170, 0
        %v3197 = vsel %vm1850, %v3171, 0
        %v3200 = vsel %vm1850, %v3172, 0
        %v3203 = vsel %vm1850, %v3173, 0
        %v3206 = vsel %vm1850, %v3174, 0
        %v3209 = vsel %vm1850, %v3175, 0
        %v3212 = vsel %vm1850, %v3176, 0
        %v3215 = vsel %vm1850, %v3177, 0
        %v3218 = vsel %vm1850, %v3178, 0
        %v3221 = vsel %vm1850, %v3179, 0
        %v3224 = vsel %vm1850, %v3180, 0
        %v3227 = vsel %vm1850, %v3181, 0
        %v3230 = vsel %vm1850, %v3182, 0
        %v3233 = vsel %vm1850, %v3183, 0
        %v3236 = vsel %vm1899, %v3186, 0
        %3238 = vmatprep.subr.mxu0 0.0
        %3239 = vmatpush1.msra.mxu0 %v3185
        %3240 = vmatprep.subr.mxu0 0.0
        %3241 = vmatpush1.msra.mxu0 %v3236
        %3242 = vmatprep.subr.mxu0 0.0
        %3243 = vmatpush1.msra.mxu0 0.0
        %3244 = vmatprep.subr.mxu0 0.0
        %3245 = vmatpush1.msra.mxu0 0.0
        %3246 = vmatprep.subr.mxu0 0.0
        %3247 = vmatpush1.msra.mxu0 0.0
        %3248 = vmatprep.subr.mxu0 0.0
        %3249 = vmatpush1.msra.mxu0 0.0
        %3250 = vmatprep.subr.mxu0 0.0
        %3251 = vmatpush1.msra.mxu0 0.0
        %3252 = vmatprep.subr.mxu0 0.0
        %3253 = vmatpush1.msra.mxu0 0.0
        %3254 = vmatprep.subr.mxu0 0.0
        %3255 = vmatpush1.msra.mxu0 0.0
        %3256 = vmatprep.subr.mxu0 0.0
        %3257 = vmatpush1.msra.mxu0 0.0
        %3258 = vmatprep.subr.mxu0 0.0
        %3259 = vmatpush1.msra.mxu0 0.0
        %3260 = vmatprep.subr.mxu0 0.0
        %3261 = vmatpush1.msra.mxu0 0.0
        %3262 = vmatprep.subr.mxu0 0.0
        %3263 = vmatpush1.msra.mxu0 0.0
        %3264 = vmatprep.subr.mxu0 0.0
        %3265 = vmatpush1.msra.mxu0 0.0
        %3266 = vmatprep.subr.mxu0 0.0
        %3267 = vmatpush1.msra.mxu0 0.0
        %3268 = vmatprep.subr.mxu0 0.0
        %3269 = vmatpush1.msra.mxu0 0.0
        %3270 = vmatprep.subr.mxu0 0.0
        %3271 = vmatpush1.msra.mxu0 0.0
        %3272 = vmatprep.subr.mxu0 0.0
        %3273 = vmatpush1.msra.mxu0 0.0
        %3274 = vmatprep.subr.mxu0 0.0
        %3275 = vmatpush1.msra.mxu0 0.0
        %3276 = vmatprep.subr.mxu0 0.0
        %3277 = vmatpush1.msra.mxu0 0.0
        %3278 = vmatprep.subr.mxu0 0.0
        %3279 = vmatpush1.msra.mxu0 0.0
        %3280 = vmatprep.subr.mxu0 0.0
        %3281 = vmatpush1.msra.mxu0 0.0
        %3282 = vmatprep.subr.mxu0 0.0
        %3283 = vmatpush1.msra.mxu0 0.0
        %3284 = vmatprep.subr.mxu0 0.0
        %3285 = vmatpush1.msra.mxu0 0.0
        %3286 = vmatprep.subr.mxu0 0.0
        %3287 = vmatpush1.msra.mxu0 0.0
        %3288 = vmatprep.subr.mxu0 0.0
        %3289 = vmatpush1.msra.mxu0 0.0
        %3290 = vmatprep.subr.mxu0 0.0
        %3291 = vmatpush1.msra.mxu0 0.0
        %3292 = vmatprep.subr.mxu0 0.0
        %3293 = vmatpush1.msra.mxu0 0.0
        %3294 = vmatprep.subr.mxu0 0.0
        %3295 = vmatpush1.msra.mxu0 0.0
        %3296 = vmatprep.subr.mxu0 0.0
        %3297 = vmatpush1.msra.mxu0 0.0
        %3298 = vmatprep.subr.mxu0 0.0
        %3299 = vmatpush1.msra.mxu0 0.0
        %3300 = vmatprep.subr.mxu0 0.0
        %3301 = vmatpush1.msra.mxu0 0.0
        %3302 = vmatprep.mubr.f32.mxu0 0.0
        %3303 = vmatmul.mubr.f32.gmra.mrb[0].mxu0 %v3188
        %v3304 = vpop.f32.mrb[0].mxu0
        %v3305 = vadd.f32 0.0, %v3304
        %v3306 = vpop.f32.mrb[0].mxu0
        %3307 = vmatprep.mubr.f32.mxu0 0.0
        %3308 = vmatmul.mubr.f32.gmra.mrb[0].mxu0 %v3191
        %v3309 = vpop.f32.mrb[0].mxu0
        %v3310 = vadd.f32 0.0, %v3309
        %v3311 = vpop.f32.mrb[0].mxu0
        %3312 = vmatprep.mubr.f32.mxu0 0.0
        %3313 = vmatmul.mubr.f32.gmra.mrb[0].mxu0 %v3194
        %v3314 = vpop.f32.mrb[0].mxu0
        %v3315 = vadd.f32 0.0, %v3314
        %v3316 = vpop.f32.mrb[0].mxu0
        %3317 = vmatprep.mubr.f32.mxu0 0.0
        %3318 = vmatmul.mubr.f32.gmra.mrb[0].mxu0 %v3197
        %v3319 = vpop.f32.mrb[0].mxu0
        %v3320 = vadd.f32 0.0, %v3319
        %v3321 = vpop.f32.mrb[0].mxu0
        %3322 = vmatprep.mubr.f32.mxu0 0.0
        %3323 = vmatmul.mubr.f32.gmra.mrb[0].mxu0 %v3200
        %v3324 = vpop.f32.mrb[0].mxu0
        %v3325 = vadd.f32 0.0, %v3324
        %v3326 = vpop.f32.mrb[0].mxu0
        %3327 = vmatprep.mubr.f32.mxu0 0.0
        %3328 = vmatmul.mubr.f32.gmra.mrb[0].mxu0 %v3203
        %v3329 = vpop.f32.mrb[0].mxu0
        %v3330 = vadd.f32 0.0, %v3329
        %v3331 = vpop.f32.mrb[0].mxu0
        %3332 = vmatprep.mubr.f32.mxu0 0.0
        %3333 = vmatmul.mubr.f32.gmra.mrb[0].mxu0 %v3206
        %v3334 = vpop.f32.mrb[0].mxu0
        %v3335 = vadd.f32 0.0, %v3334
        %v3336 = vpop.f32.mrb[0].mxu0
        %3337 = vmatprep.mubr.f32.mxu0 0.0
        %3338 = vmatmul.mubr.f32.gmra.mrb[0].mxu0 %v3209
        %v3339 = vpop.f32.mrb[0].mxu0
        %v3340 = vadd.f32 0.0, %v3339
        %v3341 = vpop.f32.mrb[0].mxu0
        %3342 = vmatprep.mubr.f32.mxu0 0.0
        %3343 = vmatmul.mubr.f32.gmra.mrb[0].mxu0 %v3212
        %v3344 = vpop.f32.mrb[0].mxu0
        %v3345 = vadd.f32 0.0, %v3344
        %v3346 = vpop.f32.mrb[0].mxu0
        %3347 = vmatprep.mubr.f32.mxu0 0.0
        %3348 = vmatmul.mubr.f32.gmra.mrb[0].mxu0 %v3215
        %v3349 = vpop.f32.mrb[0].mxu0
        %v3350 = vadd.f32 0.0, %v3349
        %v3351 = vpop.f32.mrb[0].mxu0
        %3352 = vmatprep.mubr.f32.mxu0 0.0
        %3353 = vmatmul.mubr.f32.gmra.mrb[0].mxu0 %v3218
        %v3354 = vpop.f32.mrb[0].mxu0
        %v3355 = vadd.f32 0.0, %v3354
        %v3356 = vpop.f32.mrb[0].mxu0
        %3357 = vmatprep.mubr.f32.mxu0 0.0
        %3358 = vmatmul.mubr.f32.gmra.mrb[0].mxu0 %v3221
        %v3359 = vpop.f32.mrb[0].mxu0
        %v3360 = vadd.f32 0.0, %v3359
        %v3361 = vpop.f32.mrb[0].mxu0
        %3362 = vmatprep.mubr.f32.mxu0 0.0
        %3363 = vmatmul.mubr.f32.gmra.mrb[0].mxu0 %v3224
        %v3364 = vpop.f32.mrb[0].mxu0
        %v3365 = vadd.f32 0.0, %v3364
        %v3366 = vpop.f32.mrb[0].mxu0
        %3367 = vmatprep.mubr.f32.mxu0 0.0
        %3368 = vmatmul.mubr.f32.gmra.mrb[0].mxu0 %v3227
        %v3369 = vpop.f32.mrb[0].mxu0
        %v3370 = vadd.f32 0.0, %v3369
        %v3371 = vpop.f32.mrb[0].mxu0
        %3372 = vmatprep.mubr.f32.mxu0 0.0
        %3373 = vmatmul.mubr.f32.gmra.mrb[0].mxu0 %v3230
        %v3374 = vpop.f32.mrb[0].mxu0
        %v3375 = vadd.f32 0.0, %v3374
        %v3376 = vpop.f32.mrb[0].mxu0
        %3377 = vmatprep.mubr.f32.mxu0 0.0
        %3378 = vmatmul.mubr.f32.gmra.mrb[0].mxu0 %v3233
        %v3379 = vpop.f32.mrb[0].mxu0
        %v3380 = vadd.f32 0.0, %v3379
        %v3381 = vpop.f32.mrb[0].mxu0
        %3382 = vdwg.mxu0
        %v3383 = vadd.f32 %v3152, %v3305
        %v3384 = vadd.f32 %v3153, %v3310
        %v3385 = vadd.f32 %v3154, %v3315
        %v3386 = vadd.f32 %v3155, %v3320
        %v3387 = vadd.f32 %v3156, %v3325
        %v3388 = vadd.f32 %v3157, %v3330
        %v3389 = vadd.f32 %v3158, %v3335
        %v3390 = vadd.f32 %v3159, %v3340
        %v3391 = vadd.f32 %v3160, %v3345
        %v3392 = vadd.f32 %v3161, %v3350
        %v3393 = vadd.f32 %v3162, %v3355
        %v3394 = vadd.f32 %v3163, %v3360
        %v3395 = vadd.f32 %v3164, %v3365
        %v3396 = vadd.f32 %v3165, %v3370
        %v3397 = vadd.f32 %v3166, %v3375
        %v3398 = vadd.f32 %v3167, %v3380
        %v3399 = vld [vmem:[#allocation2 + $0x21] sm:$0xff]
        %v3400 = vld [vmem:[#allocation2 + $0x29] sm:$0xff]
        %v3401 = vld [vmem:[#allocation2 + $0x31] sm:$0xff]
        %v3402 = vld [vmem:[#allocation2 + $0x39] sm:$0xff]
        %v3403 = vld [vmem:[#allocation2 + $0x41] sm:$0xff]
        %v3404 = vld [vmem:[#allocation2 + $0x49] sm:$0xff]
        %v3405 = vld [vmem:[#allocation2 + $0x51] sm:$0xff]
        %v3406 = vld [vmem:[#allocation2 + $0x59] sm:$0xff]
        %v3407 = vld [vmem:[#allocation2 + $0x61] sm:$0xff]
        %v3408 = vld [vmem:[#allocation2 + $0x69] sm:$0xff]
        %v3409 = vld [vmem:[#allocation2 + $0x71] sm:$0xff]
        %v3410 = vld [vmem:[#allocation2 + $0x79] sm:$0xff]
        %v3411 = vld [vmem:[#allocation2 + $0x81] sm:$0xff]
        %v3412 = vld [vmem:[#allocation2 + $0x89] sm:$0xff]
        %v3413 = vld [vmem:[#allocation2 + $0x91] sm:$0xff]
        %v3414 = vld [vmem:[#allocation2 + $0x99] sm:$0xff]
        %s3415 = scalar_lea.vmem %s4, 112
        %v3416 = vld [vmem:[%s3415] sm:$0xff]
        %v3417 = vld [vmem:[%s3415 + $0x8] sm:$0xf]
        %v3419 = vsel %vm1850, %v3399, 0
        %v3422 = vsel %vm1850, %v3400, 0
        %v3425 = vsel %vm1850, %v3401, 0
        %v3428 = vsel %vm1850, %v3402, 0
        %v3431 = vsel %vm1850, %v3403, 0
        %v3434 = vsel %vm1850, %v3404, 0
        %v3437 = vsel %vm1850, %v3405, 0
        %v3440 = vsel %vm1850, %v3406, 0
        %v3443 = vsel %vm1850, %v3407, 0
        %v3446 = vsel %vm1850, %v3408, 0
        %v3449 = vsel %vm1850, %v3409, 0
        %v3452 = vsel %vm1850, %v3410, 0
        %v3455 = vsel %vm1850, %v3411, 0
        %v3458 = vsel %vm1850, %v3412, 0
        %v3461 = vsel %vm1850, %v3413, 0
        %v3464 = vsel %vm1850, %v3414, 0
        %v3467 = vsel %vm1899, %v3417, 0
        %3469 = vmatprep.subr.mxu0 0.0
        %3470 = vmatpush1.msra.mxu0 %v3416
        %3471 = vmatprep.subr.mxu0 0.0
        %3472 = vmatpush1.msra.mxu0 %v3467
        %3473 = vmatprep.subr.mxu0 0.0
        %3474 = vmatpush1.msra.mxu0 0.0
        %3475 = vmatprep.subr.mxu0 0.0
        %3476 = vmatpush1.msra.mxu0 0.0
        %3477 = vmatprep.subr.mxu0 0.0
        %3478 = vmatpush1.msra.mxu0 0.0
        %3479 = vmatprep.subr.mxu0 0.0
        %3480 = vmatpush1.msra.mxu0 0.0
        %3481 = vmatprep.subr.mxu0 0.0
        %3482 = vmatpush1.msra.mxu0 0.0
        %3483 = vmatprep.subr.mxu0 0.0
        %3484 = vmatpush1.msra.mxu0 0.0
        %3485 = vmatprep.subr.mxu0 0.0
        %3486 = vmatpush1.msra.mxu0 0.0
        %3487 = vmatprep.subr.mxu0 0.0
        %3488 = vmatpush1.msra.mxu0 0.0
        %3489 = vmatprep.subr.mxu0 0.0
        %3490 = vmatpush1.msra.mxu0 0.0
        %3491 = vmatprep.subr.mxu0 0.0
        %3492 = vmatpush1.msra.mxu0 0.0
        %3493 = vmatprep.subr.mxu0 0.0
        %3494 = vmatpush1.msra.mxu0 0.0
        %3495 = vmatprep.subr.mxu0 0.0
        %3496 = vmatpush1.msra.mxu0 0.0
        %3497 = vmatprep.subr.mxu0 0.0
        %3498 = vmatpush1.msra.mxu0 0.0
        %3499 = vmatprep.subr.mxu0 0.0
        %3500 = vmatpush1.msra.mxu0 0.0
        %3501 = vmatprep.subr.mxu0 0.0
        %3502 = vmatpush1.msra.mxu0 0.0
        %3503 = vmatprep.subr.mxu0 0.0
        %3504 = vmatpush1.msra.mxu0 0.0
        %3505 = vmatprep.subr.mxu0 0.0
        %3506 = vmatpush1.msra.mxu0 0.0
        %3507 = vmatprep.subr.mxu0 0.0
        %3508 = vmatpush1.msra.mxu0 0.0
        %3509 = vmatprep.subr.mxu0 0.0
        %3510 = vmatpush1.msra.mxu0 0.0
        %3511 = vmatprep.subr.mxu0 0.0
        %3512 = vmatpush1.msra.mxu0 0.0
        %3513 = vmatprep.subr.mxu0 0.0
        %3514 = vmatpush1.msra.mxu0 0.0
        %3515 = vmatprep.subr.mxu0 0.0
        %3516 = vmatpush1.msra.mxu0 0.0
        %3517 = vmatprep.subr.mxu0 0.0
        %3518 = vmatpush1.msra.mxu0 0.0
        %3519 = vmatprep.subr.mxu0 0.0
        %3520 = vmatpush1.msra.mxu0 0.0
        %3521 = vmatprep.subr.mxu0 0.0
        %3522 = vmatpush1.msra.mxu0 0.0
        %3523 = vmatprep.subr.mxu0 0.0
        %3524 = vmatpush1.msra.mxu0 0.0
        %3525 = vmatprep.subr.mxu0 0.0
        %3526 = vmatpush1.msra.mxu0 0.0
        %3527 = vmatprep.subr.mxu0 0.0
        %3528 = vmatpush1.msra.mxu0 0.0
        %3529 = vmatprep.subr.mxu0 0.0
        %3530 = vmatpush1.msra.mxu0 0.0
        %3531 = vmatprep.subr.mxu0 0.0
        %3532 = vmatpush1.msra.mxu0 0.0
        %3533 = vmatprep.mubr.f32.mxu0 0.0
        %3534 = vmatmul.mubr.f32.gmra.mrb[0].mxu0 %v3419
        %v3535 = vpop.f32.mrb[0].mxu0
        %v3536 = vadd.f32 0.0, %v3535
        %v3537 = vpop.f32.mrb[0].mxu0
        %3538 = vmatprep.mubr.f32.mxu0 0.0
        %3539 = vmatmul.mubr.f32.gmra.mrb[0].mxu0 %v3422
        %v3540 = vpop.f32.mrb[0].mxu0
        %v3541 = vadd.f32 0.0, %v3540
        %v3542 = vpop.f32.mrb[0].mxu0
        %3543 = vmatprep.mubr.f32.mxu0 0.0
        %3544 = vmatmul.mubr.f32.gmra.mrb[0].mxu0 %v3425
        %v3545 = vpop.f32.mrb[0].mxu0
        %v3546 = vadd.f32 0.0, %v3545
        %v3547 = vpop.f32.mrb[0].mxu0
        %3548 = vmatprep.mubr.f32.mxu0 0.0
        %3549 = vmatmul.mubr.f32.gmra.mrb[0].mxu0 %v3428
        %v3550 = vpop.f32.mrb[0].mxu0
        %v3551 = vadd.f32 0.0, %v3550
        %v3552 = vpop.f32.mrb[0].mxu0
        %3553 = vmatprep.mubr.f32.mxu0 0.0
        %3554 = vmatmul.mubr.f32.gmra.mrb[0].mxu0 %v3431
        %v3555 = vpop.f32.mrb[0].mxu0
        %v3556 = vadd.f32 0.0, %v3555
        %v3557 = vpop.f32.mrb[0].mxu0
        %3558 = vmatprep.mubr.f32.mxu0 0.0
        %3559 = vmatmul.mubr.f32.gmra.mrb[0].mxu0 %v3434
        %v3560 = vpop.f32.mrb[0].mxu0
        %v3561 = vadd.f32 0.0, %v3560
        %v3562 = vpop.f32.mrb[0].mxu0
        %3563 = vmatprep.mubr.f32.mxu0 0.0
        %3564 = vmatmul.mubr.f32.gmra.mrb[0].mxu0 %v3437
        %v3565 = vpop.f32.mrb[0].mxu0
        %v3566 = vadd.f32 0.0, %v3565
        %v3567 = vpop.f32.mrb[0].mxu0
        %3568 = vmatprep.mubr.f32.mxu0 0.0
        %3569 = vmatmul.mubr.f32.gmra.mrb[0].mxu0 %v3440
        %v3570 = vpop.f32.mrb[0].mxu0
        %v3571 = vadd.f32 0.0, %v3570
        %v3572 = vpop.f32.mrb[0].mxu0
        %3573 = vmatprep.mubr.f32.mxu0 0.0
        %3574 = vmatmul.mubr.f32.gmra.mrb[0].mxu0 %v3443
        %v3575 = vpop.f32.mrb[0].mxu0
        %v3576 = vadd.f32 0.0, %v3575
        %v3577 = vpop.f32.mrb[0].mxu0
        %3578 = vmatprep.mubr.f32.mxu0 0.0
        %3579 = vmatmul.mubr.f32.gmra.mrb[0].mxu0 %v3446
        %v3580 = vpop.f32.mrb[0].mxu0
        %v3581 = vadd.f32 0.0, %v3580
        %v3582 = vpop.f32.mrb[0].mxu0
        %3583 = vmatprep.mubr.f32.mxu0 0.0
        %3584 = vmatmul.mubr.f32.gmra.mrb[0].mxu0 %v3449
        %v3585 = vpop.f32.mrb[0].mxu0
        %v3586 = vadd.f32 0.0, %v3585
        %v3587 = vpop.f32.mrb[0].mxu0
        %3588 = vmatprep.mubr.f32.mxu0 0.0
        %3589 = vmatmul.mubr.f32.gmra.mrb[0].mxu0 %v3452
        %v3590 = vpop.f32.mrb[0].mxu0
        %v3591 = vadd.f32 0.0, %v3590
        %v3592 = vpop.f32.mrb[0].mxu0
        %3593 = vmatprep.mubr.f32.mxu0 0.0
        %3594 = vmatmul.mubr.f32.gmra.mrb[0].mxu0 %v3455
        %v3595 = vpop.f32.mrb[0].mxu0
        %v3596 = vadd.f32 0.0, %v3595
        %v3597 = vpop.f32.mrb[0].mxu0
        %3598 = vmatprep.mubr.f32.mxu0 0.0
        %3599 = vmatmul.mubr.f32.gmra.mrb[0].mxu0 %v3458
        %v3600 = vpop.f32.mrb[0].mxu0
        %v3601 = vadd.f32 0.0, %v3600
        %v3602 = vpop.f32.mrb[0].mxu0
        %3603 = vmatprep.mubr.f32.mxu0 0.0
        %3604 = vmatmul.mubr.f32.gmra.mrb[0].mxu0 %v3461
        %v3605 = vpop.f32.mrb[0].mxu0
        %v3606 = vadd.f32 0.0, %v3605
        %v3607 = vpop.f32.mrb[0].mxu0
        %3608 = vmatprep.mubr.f32.mxu0 0.0
        %3609 = vmatmul.mubr.f32.gmra.mrb[0].mxu0 %v3464
        %v3610 = vpop.f32.mrb[0].mxu0
        %v3611 = vadd.f32 0.0, %v3610
        %v3612 = vpop.f32.mrb[0].mxu0
        %3613 = vdwg.mxu0
        %v3614 = vadd.f32 %v3383, %v3536
        %v3615 = vadd.f32 %v3384, %v3541
        %v3616 = vadd.f32 %v3385, %v3546
        %v3617 = vadd.f32 %v3386, %v3551
        %v3618 = vadd.f32 %v3387, %v3556
        %v3619 = vadd.f32 %v3388, %v3561
        %v3620 = vadd.f32 %v3389, %v3566
        %v3621 = vadd.f32 %v3390, %v3571
        %v3622 = vadd.f32 %v3391, %v3576
        %v3623 = vadd.f32 %v3392, %v3581
        %v3624 = vadd.f32 %v3393, %v3586
        %v3625 = vadd.f32 %v3394, %v3591
        %v3626 = vadd.f32 %v3395, %v3596
        %v3627 = vadd.f32 %v3396, %v3601
        %v3628 = vadd.f32 %v3397, %v3606
        %v3629 = vadd.f32 %v3398, %v3611
        %v3630 = vld [vmem:[#allocation2 + $0x22] sm:$0xff]
        %v3631 = vld [vmem:[#allocation2 + $0x2a] sm:$0xff]
        %v3632 = vld [vmem:[#allocation2 + $0x32] sm:$0xff]
        %v3633 = vld [vmem:[#allocation2 + $0x3a] sm:$0xff]
        %v3634 = vld [vmem:[#allocation2 + $0x42] sm:$0xff]
        %v3635 = vld [vmem:[#allocation2 + $0x4a] sm:$0xff]
        %v3636 = vld [vmem:[#allocation2 + $0x52] sm:$0xff]
        %v3637 = vld [vmem:[#allocation2 + $0x5a] sm:$0xff]
        %v3638 = vld [vmem:[#allocation2 + $0x62] sm:$0xff]
        %v3639 = vld [vmem:[#allocation2 + $0x6a] sm:$0xff]
        %v3640 = vld [vmem:[#allocation2 + $0x72] sm:$0xff]
        %v3641 = vld [vmem:[#allocation2 + $0x7a] sm:$0xff]
        %v3642 = vld [vmem:[#allocation2 + $0x82] sm:$0xff]
        %v3643 = vld [vmem:[#allocation2 + $0x8a] sm:$0xff]
        %v3644 = vld [vmem:[#allocation2 + $0x92] sm:$0xff]
        %v3645 = vld [vmem:[#allocation2 + $0x9a] sm:$0xff]
        %s3646 = scalar_lea.vmem %s4, 128
        %v3647 = vld [vmem:[%s3646] sm:$0xff]
        %v3648 = vld [vmem:[%s3646 + $0x8] sm:$0xf]
        %v3650 = vsel %vm1850, %v3630, 0
        %v3653 = vsel %vm1850, %v3631, 0
        %v3656 = vsel %vm1850, %v3632, 0
        %v3659 = vsel %vm1850, %v3633, 0
        %v3662 = vsel %vm1850, %v3634, 0
        %v3665 = vsel %vm1850, %v3635, 0
        %v3668 = vsel %vm1850, %v3636, 0
        %v3671 = vsel %vm1850, %v3637, 0
        %v3674 = vsel %vm1850, %v3638, 0
        %v3677 = vsel %vm1850, %v3639, 0
        %v3680 = vsel %vm1850, %v3640, 0
        %v3683 = vsel %vm1850, %v3641, 0
        %v3686 = vsel %vm1850, %v3642, 0
        %v3689 = vsel %vm1850, %v3643, 0
        %v3692 = vsel %vm1850, %v3644, 0
        %v3695 = vsel %vm1850, %v3645, 0
        %v3698 = vsel %vm1899, %v3648, 0
        %3700 = vmatprep.subr.mxu0 0.0
        %3701 = vmatpush1.msra.mxu0 %v3647
        %3702 = vmatprep.subr.mxu0 0.0
        %3703 = vmatpush1.msra.mxu0 %v3698
        %3704 = vmatprep.subr.mxu0 0.0
        %3705 = vmatpush1.msra.mxu0 0.0
        %3706 = vmatprep.subr.mxu0 0.0
        %3707 = vmatpush1.msra.mxu0 0.0
        %3708 = vmatprep.subr.mxu0 0.0
        %3709 = vmatpush1.msra.mxu0 0.0
        %3710 = vmatprep.subr.mxu0 0.0
        %3711 = vmatpush1.msra.mxu0 0.0
        %3712 = vmatprep.subr.mxu0 0.0
        %3713 = vmatpush1.msra.mxu0 0.0
        %3714 = vmatprep.subr.mxu0 0.0
        %3715 = vmatpush1.msra.mxu0 0.0
        %3716 = vmatprep.subr.mxu0 0.0
        %3717 = vmatpush1.msra.mxu0 0.0
        %3718 = vmatprep.subr.mxu0 0.0
        %3719 = vmatpush1.msra.mxu0 0.0
        %3720 = vmatprep.subr.mxu0 0.0
        %3721 = vmatpush1.msra.mxu0 0.0
        %3722 = vmatprep.subr.mxu0 0.0
        %3723 = vmatpush1.msra.mxu0 0.0
        %3724 = vmatprep.subr.mxu0 0.0
        %3725 = vmatpush1.msra.mxu0 0.0
        %3726 = vmatprep.subr.mxu0 0.0
        %3727 = vmatpush1.msra.mxu0 0.0
        %3728 = vmatprep.subr.mxu0 0.0
        %3729 = vmatpush1.msra.mxu0 0.0
        %3730 = vmatprep.subr.mxu0 0.0
        %3731 = vmatpush1.msra.mxu0 0.0
        %3732 = vmatprep.subr.mxu0 0.0
        %3733 = vmatpush1.msra.mxu0 0.0
        %3734 = vmatprep.subr.mxu0 0.0
        %3735 = vmatpush1.msra.mxu0 0.0
        %3736 = vmatprep.subr.mxu0 0.0
        %3737 = vmatpush1.msra.mxu0 0.0
        %3738 = vmatprep.subr.mxu0 0.0
        %3739 = vmatpush1.msra.mxu0 0.0
        %3740 = vmatprep.subr.mxu0 0.0
        %3741 = vmatpush1.msra.mxu0 0.0
        %3742 = vmatprep.subr.mxu0 0.0
        %3743 = vmatpush1.msra.mxu0 0.0
        %3744 = vmatprep.subr.mxu0 0.0
        %3745 = vmatpush1.msra.mxu0 0.0
        %3746 = vmatprep.subr.mxu0 0.0
        %3747 = vmatpush1.msra.mxu0 0.0
        %3748 = vmatprep.subr.mxu0 0.0
        %3749 = vmatpush1.msra.mxu0 0.0
        %3750 = vmatprep.subr.mxu0 0.0
        %3751 = vmatpush1.msra.mxu0 0.0
        %3752 = vmatprep.subr.mxu0 0.0
        %3753 = vmatpush1.msra.mxu0 0.0
        %3754 = vmatprep.subr.mxu0 0.0
        %3755 = vmatpush1.msra.mxu0 0.0
        %3756 = vmatprep.subr.mxu0 0.0
        %3757 = vmatpush1.msra.mxu0 0.0
        %3758 = vmatprep.subr.mxu0 0.0
        %3759 = vmatpush1.msra.mxu0 0.0
        %3760 = vmatprep.subr.mxu0 0.0
        %3761 = vmatpush1.msra.mxu0 0.0
        %3762 = vmatprep.subr.mxu0 0.0
        %3763 = vmatpush1.msra.mxu0 0.0
        %3764 = vmatprep.mubr.f32.mxu0 0.0
        %3765 = vmatmul.mubr.f32.gmra.mrb[0].mxu0 %v3650
        %v3766 = vpop.f32.mrb[0].mxu0
        %v3767 = vadd.f32 0.0, %v3766
        %v3768 = vpop.f32.mrb[0].mxu0
        %3769 = vmatprep.mubr.f32.mxu0 0.0
        %3770 = vmatmul.mubr.f32.gmra.mrb[0].mxu0 %v3653
        %v3771 = vpop.f32.mrb[0].mxu0
        %v3772 = vadd.f32 0.0, %v3771
        %v3773 = vpop.f32.mrb[0].mxu0
        %3774 = vmatprep.mubr.f32.mxu0 0.0
        %3775 = vmatmul.mubr.f32.gmra.mrb[0].mxu0 %v3656
        %v3776 = vpop.f32.mrb[0].mxu0
        %v3777 = vadd.f32 0.0, %v3776
        %v3778 = vpop.f32.mrb[0].mxu0
        %3779 = vmatprep.mubr.f32.mxu0 0.0
        %3780 = vmatmul.mubr.f32.gmra.mrb[0].mxu0 %v3659
        %v3781 = vpop.f32.mrb[0].mxu0
        %v3782 = vadd.f32 0.0, %v3781
        %v3783 = vpop.f32.mrb[0].mxu0
        %3784 = vmatprep.mubr.f32.mxu0 0.0
        %3785 = vmatmul.mubr.f32.gmra.mrb[0].mxu0 %v3662
        %v3786 = vpop.f32.mrb[0].mxu0
        %v3787 = vadd.f32 0.0, %v3786
        %v3788 = vpop.f32.mrb[0].mxu0
        %3789 = vmatprep.mubr.f32.mxu0 0.0
        %3790 = vmatmul.mubr.f32.gmra.mrb[0].mxu0 %v3665
        %v3791 = vpop.f32.mrb[0].mxu0
        %v3792 = vadd.f32 0.0, %v3791
        %v3793 = vpop.f32.mrb[0].mxu0
        %3794 = vmatprep.mubr.f32.mxu0 0.0
        %3795 = vmatmul.mubr.f32.gmra.mrb[0].mxu0 %v3668
        %v3796 = vpop.f32.mrb[0].mxu0
        %v3797 = vadd.f32 0.0, %v3796
        %v3798 = vpop.f32.mrb[0].mxu0
        %3799 = vmatprep.mubr.f32.mxu0 0.0
        %3800 = vmatmul.mubr.f32.gmra.mrb[0].mxu0 %v3671
        %v3801 = vpop.f32.mrb[0].mxu0
        %v3802 = vadd.f32 0.0, %v3801
        %v3803 = vpop.f32.mrb[0].mxu0
        %3804 = vmatprep.mubr.f32.mxu0 0.0
        %3805 = vmatmul.mubr.f32.gmra.mrb[0].mxu0 %v3674
        %v3806 = vpop.f32.mrb[0].mxu0
        %v3807 = vadd.f32 0.0, %v3806
        %v3808 = vpop.f32.mrb[0].mxu0
        %3809 = vmatprep.mubr.f32.mxu0 0.0
        %3810 = vmatmul.mubr.f32.gmra.mrb[0].mxu0 %v3677
        %v3811 = vpop.f32.mrb[0].mxu0
        %v3812 = vadd.f32 0.0, %v3811
        %v3813 = vpop.f32.mrb[0].mxu0
        %3814 = vmatprep.mubr.f32.mxu0 0.0
        %3815 = vmatmul.mubr.f32.gmra.mrb[0].mxu0 %v3680
        %v3816 = vpop.f32.mrb[0].mxu0
        %v3817 = vadd.f32 0.0, %v3816
        %v3818 = vpop.f32.mrb[0].mxu0
        %3819 = vmatprep.mubr.f32.mxu0 0.0
        %3820 = vmatmul.mubr.f32.gmra.mrb[0].mxu0 %v3683
        %v3821 = vpop.f32.mrb[0].mxu0
        %v3822 = vadd.f32 0.0, %v3821
        %v3823 = vpop.f32.mrb[0].mxu0
        %3824 = vmatprep.mubr.f32.mxu0 0.0
        %3825 = vmatmul.mubr.f32.gmra.mrb[0].mxu0 %v3686
        %v3826 = vpop.f32.mrb[0].mxu0
        %v3827 = vadd.f32 0.0, %v3826
        %v3828 = vpop.f32.mrb[0].mxu0
        %3829 = vmatprep.mubr.f32.mxu0 0.0
        %3830 = vmatmul.mubr.f32.gmra.mrb[0].mxu0 %v3689
        %v3831 = vpop.f32.mrb[0].mxu0
        %v3832 = vadd.f32 0.0, %v3831
        %v3833 = vpop.f32.mrb[0].mxu0
        %3834 = vmatprep.mubr.f32.mxu0 0.0
        %3835 = vmatmul.mubr.f32.gmra.mrb[0].mxu0 %v3692
        %v3836 = vpop.f32.mrb[0].mxu0
        %v3837 = vadd.f32 0.0, %v3836
        %v3838 = vpop.f32.mrb[0].mxu0
        %3839 = vmatprep.mubr.f32.mxu0 0.0
        %3840 = vmatmul.mubr.f32.gmra.mrb[0].mxu0 %v3695
        %v3841 = vpop.f32.mrb[0].mxu0
        %v3842 = vadd.f32 0.0, %v3841
        %v3843 = vpop.f32.mrb[0].mxu0
        %3844 = vdwg.mxu0
        %v3845 = vadd.f32 %v3614, %v3767
        %v3846 = vadd.f32 %v3615, %v3772
        %v3847 = vadd.f32 %v3616, %v3777
        %v3848 = vadd.f32 %v3617, %v3782
        %v3849 = vadd.f32 %v3618, %v3787
        %v3850 = vadd.f32 %v3619, %v3792
        %v3851 = vadd.f32 %v3620, %v3797
        %v3852 = vadd.f32 %v3621, %v3802
        %v3853 = vadd.f32 %v3622, %v3807
        %v3854 = vadd.f32 %v3623, %v3812
        %v3855 = vadd.f32 %v3624, %v3817
        %v3856 = vadd.f32 %v3625, %v3822
        %v3857 = vadd.f32 %v3626, %v3827
        %v3858 = vadd.f32 %v3627, %v3832
        %v3859 = vadd.f32 %v3628, %v3837
        %v3860 = vadd.f32 %v3629, %v3842
        %v3861 = vld [vmem:[%s7] sm:$0x1]
        %v3863 = vlaneseq
        %v3864 = vshrl.u32 %v3863, 7
        %v3865 = vsub.s32 0, %v3864
        %v3866 = vrot.slane %v3861, %v3865
        %v3868 = vadd.f32 %v3845, %v3866
        %v3869 = vadd.f32 %v3846, %v3866
        %v3870 = vadd.f32 %v3847, %v3866
        %v3871 = vadd.f32 %v3848, %v3866
        %v3872 = vadd.f32 %v3849, %v3866
        %v3873 = vadd.f32 %v3850, %v3866
        %v3874 = vadd.f32 %v3851, %v3866
        %v3875 = vadd.f32 %v3852, %v3866
        %v3876 = vadd.f32 %v3853, %v3866
        %v3877 = vadd.f32 %v3854, %v3866
        %v3878 = vadd.f32 %v3855, %v3866
        %v3879 = vadd.f32 %v3856, %v3866
        %v3880 = vadd.f32 %v3857, %v3866
        %v3881 = vadd.f32 %v3858, %v3866
        %v3882 = vadd.f32 %v3859, %v3866
        %v3883 = vadd.f32 %v3860, %v3866
        %v3884 = vmax.f32 %v3868, 0.0
        %v3885 = vmax.f32 %v3869, 0.0
        %v3886 = vmax.f32 %v3870, 0.0
        %v3887 = vmax.f32 %v3871, 0.0
        %v3888 = vmax.f32 %v3872, 0.0
        %v3889 = vmax.f32 %v3873, 0.0
        %v3890 = vmax.f32 %v3874, 0.0
        %v3891 = vmax.f32 %v3875, 0.0
        %v3892 = vmax.f32 %v3876, 0.0
        %v3893 = vmax.f32 %v3877, 0.0
        %v3894 = vmax.f32 %v3878, 0.0
        %v3895 = vmax.f32 %v3879, 0.0
        %v3896 = vmax.f32 %v3880, 0.0
        %v3897 = vmax.f32 %v3881, 0.0
        %v3898 = vmax.f32 %v3882, 0.0
        %v3899 = vmax.f32 %v3883, 0.0
        %v3900 = vld [vmem:[%s5] sm:$0xf]
        %v3901 = vld [vmem:[%s8] sm:$0x1]
        %v3903 = vlaneseq
        %v3904 = vshrl.u32 %v3903, 7
        %v3905 = vsub.s32 0, %v3904
        %v3906 = vrot.slane %v3901, %v3905
        %vm3908 = vcmask 31744
        %v3910 = vsel %vm3908, %v3884, 0
        %v3913 = vsel %vm3908, %v3885, 0
        %v3916 = vsel %vm3908, %v3886, 0
        %v3919 = vsel %vm3908, %v3887, 0
        %v3922 = vsel %vm3908, %v3888, 0
        %v3925 = vsel %vm3908, %v3889, 0
        %v3928 = vsel %vm3908, %v3890, 0
        %v3931 = vsel %vm3908, %v3891, 0
        %v3934 = vsel %vm3908, %v3892, 0
        %v3937 = vsel %vm3908, %v3893, 0
        %v3940 = vsel %vm3908, %v3894, 0
        %v3943 = vsel %vm3908, %v3895, 0
        %v3946 = vsel %vm3908, %v3896, 0
        %v3949 = vsel %vm3908, %v3897, 0
        %v3952 = vsel %vm3908, %v3898, 0
        %v3955 = vsel %vm3908, %v3899, 0
        %v3958 = vsel %vm1899, %v3900, 0
        %3960 = vmatprep.subr.mxu0 0.0
        %3961 = vmatpush1.msra.mxu0 %v3958
        %3962 = vmatprep.subr.mxu0 0.0
        %3963 = vmatpush1.msra.mxu0 0.0
        %3964 = vmatprep.subr.mxu0 0.0
        %3965 = vmatpush1.msra.mxu0 0.0
        %3966 = vmatprep.subr.mxu0 0.0
        %3967 = vmatpush1.msra.mxu0 0.0
        %3968 = vmatprep.subr.mxu0 0.0
        %3969 = vmatpush1.msra.mxu0 0.0
        %3970 = vmatprep.subr.mxu0 0.0
        %3971 = vmatpush1.msra.mxu0 0.0
        %3972 = vmatprep.subr.mxu0 0.0
        %3973 = vmatpush1.msra.mxu0 0.0
        %3974 = vmatprep.subr.mxu0 0.0
        %3975 = vmatpush1.msra.mxu0 0.0
        %3976 = vmatprep.subr.mxu0 0.0
        %3977 = vmatpush1.msra.mxu0 0.0
        %3978 = vmatprep.subr.mxu0 0.0
        %3979 = vmatpush1.msra.mxu0 0.0
        %3980 = vmatprep.subr.mxu0 0.0
        %3981 = vmatpush1.msra.mxu0 0.0
        %3982 = vmatprep.subr.mxu0 0.0
        %3983 = vmatpush1.msra.mxu0 0.0
        %3984 = vmatprep.subr.mxu0 0.0
        %3985 = vmatpush1.msra.mxu0 0.0
        %3986 = vmatprep.subr.mxu0 0.0
        %3987 = vmatpush1.msra.mxu0 0.0
        %3988 = vmatprep.subr.mxu0 0.0
        %3989 = vmatpush1.msra.mxu0 0.0
        %3990 = vmatprep.subr.mxu0 0.0
        %3991 = vmatpush1.msra.mxu0 0.0
        %3992 = vmatprep.subr.mxu0 0.0
        %3993 = vmatpush1.msra.mxu0 0.0
        %3994 = vmatprep.subr.mxu0 0.0
        %3995 = vmatpush1.msra.mxu0 0.0
        %3996 = vmatprep.subr.mxu0 0.0
        %3997 = vmatpush1.msra.mxu0 0.0
        %3998 = vmatprep.subr.mxu0 0.0
        %3999 = vmatpush1.msra.mxu0 0.0
        %4000 = vmatprep.subr.mxu0 0.0
        %4001 = vmatpush1.msra.mxu0 0.0
        %4002 = vmatprep.subr.mxu0 0.0
        %4003 = vmatpush1.msra.mxu0 0.0
        %4004 = vmatprep.subr.mxu0 0.0
        %4005 = vmatpush1.msra.mxu0 0.0
        %4006 = vmatprep.subr.mxu0 0.0
        %4007 = vmatpush1.msra.mxu0 0.0
        %4008 = vmatprep.subr.mxu0 0.0
        %4009 = vmatpush1.msra.mxu0 0.0
        %4010 = vmatprep.subr.mxu0 0.0
        %4011 = vmatpush1.msra.mxu0 0.0
        %4012 = vmatprep.subr.mxu0 0.0
        %4013 = vmatpush1.msra.mxu0 0.0
        %4014 = vmatprep.subr.mxu0 0.0
        %4015 = vmatpush1.msra.mxu0 0.0
        %4016 = vmatprep.subr.mxu0 0.0
        %4017 = vmatpush1.msra.mxu0 0.0
        %4018 = vmatprep.subr.mxu0 0.0
        %4019 = vmatpush1.msra.mxu0 0.0
        %4020 = vmatprep.subr.mxu0 0.0
        %4021 = vmatpush1.msra.mxu0 0.0
        %4022 = vmatprep.subr.mxu0 0.0
        %4023 = vmatpush1.msra.mxu0 0.0
        %4024 = vmatprep.mubr.f32.mxu0 0.0
        %4025 = vmatmul.mubr.f32.gmra.mrb[0].mxu0 %v3910
        %v4026 = vpop.f32.mrb[0].mxu0
        %v4027 = vadd.f32 %v3906, %v4026
        %v4028 = vpop.f32.mrb[0].mxu0
        %4029 = vmatprep.mubr.f32.mxu0 0.0
        %4030 = vmatmul.mubr.f32.gmra.mrb[0].mxu0 %v3913
        %v4031 = vpop.f32.mrb[0].mxu0
        %v4032 = vpop.f32.mrb[0].mxu0
        %4033 = vmatprep.mubr.f32.mxu0 0.0
        %4034 = vmatmul.mubr.f32.gmra.mrb[0].mxu0 %v3916
        %v4035 = vpop.f32.mrb[0].mxu0
        %v4036 = vadd.f32 %v3906, %v4035
        %v4037 = vpop.f32.mrb[0].mxu0
        %4038 = vmatprep.mubr.f32.mxu0 0.0
        %4039 = vmatmul.mubr.f32.gmra.mrb[0].mxu0 %v3919
        %v4040 = vpop.f32.mrb[0].mxu0
        %v4041 = vpop.f32.mrb[0].mxu0
        %4042 = vmatprep.mubr.f32.mxu0 0.0
        %4043 = vmatmul.mubr.f32.gmra.mrb[0].mxu0 %v3922
        %v4044 = vpop.f32.mrb[0].mxu0
        %v4045 = vadd.f32 %v3906, %v4044
        %v4046 = vpop.f32.mrb[0].mxu0
        %4047 = vmatprep.mubr.f32.mxu0 0.0
        %4048 = vmatmul.mubr.f32.gmra.mrb[0].mxu0 %v3925
        %v4049 = vpop.f32.mrb[0].mxu0
        %v4050 = vpop.f32.mrb[0].mxu0
        %4051 = vmatprep.mubr.f32.mxu0 0.0
        %4052 = vmatmul.mubr.f32.gmra.mrb[0].mxu0 %v3928
        %v4053 = vpop.f32.mrb[0].mxu0
        %v4054 = vadd.f32 %v3906, %v4053
        %v4055 = vpop.f32.mrb[0].mxu0
        %4056 = vmatprep.mubr.f32.mxu0 0.0
        %4057 = vmatmul.mubr.f32.gmra.mrb[0].mxu0 %v3931
        %v4058 = vpop.f32.mrb[0].mxu0
        %v4059 = vpop.f32.mrb[0].mxu0
        %4060 = vmatprep.mubr.f32.mxu0 0.0
        %4061 = vmatmul.mubr.f32.gmra.mrb[0].mxu0 %v3934
        %v4062 = vpop.f32.mrb[0].mxu0
        %v4063 = vadd.f32 %v3906, %v4062
        %v4064 = vpop.f32.mrb[0].mxu0
        %4065 = vmatprep.mubr.f32.mxu0 0.0
        %4066 = vmatmul.mubr.f32.gmra.mrb[0].mxu0 %v3937
        %v4067 = vpop.f32.mrb[0].mxu0
        %v4068 = vpop.f32.mrb[0].mxu0
        %4069 = vmatprep.mubr.f32.mxu0 0.0
        %4070 = vmatmul.mubr.f32.gmra.mrb[0].mxu0 %v3940
        %v4071 = vpop.f32.mrb[0].mxu0
        %v4072 = vadd.f32 %v3906, %v4071
        %v4073 = vpop.f32.mrb[0].mxu0
        %4074 = vmatprep.mubr.f32.mxu0 0.0
        %4075 = vmatmul.mubr.f32.gmra.mrb[0].mxu0 %v3943
        %v4076 = vpop.f32.mrb[0].mxu0
        %v4077 = vpop.f32.mrb[0].mxu0
        %4078 = vmatprep.mubr.f32.mxu0 0.0
        %4079 = vmatmul.mubr.f32.gmra.mrb[0].mxu0 %v3946
        %v4080 = vpop.f32.mrb[0].mxu0
        %v4081 = vadd.f32 %v3906, %v4080
        %v4082 = vpop.f32.mrb[0].mxu0
        %4083 = vmatprep.mubr.f32.mxu0 0.0
        %4084 = vmatmul.mubr.f32.gmra.mrb[0].mxu0 %v3949
        %v4085 = vpop.f32.mrb[0].mxu0
        %v4086 = vpop.f32.mrb[0].mxu0
        %4087 = vmatprep.mubr.f32.mxu0 0.0
        %4088 = vmatmul.mubr.f32.gmra.mrb[0].mxu0 %v3952
        %v4089 = vpop.f32.mrb[0].mxu0
        %v4090 = vadd.f32 %v3906, %v4089
        %v4091 = vpop.f32.mrb[0].mxu0
        %4092 = vmatprep.mubr.f32.mxu0 0.0
        %4093 = vmatmul.mubr.f32.gmra.mrb[0].mxu0 %v3955
        %v4094 = vpop.f32.mrb[0].mxu0
        %v4095 = vpop.f32.mrb[0].mxu0
        %4096 = vdwg.mxu0
        %v4097 = vld [vmem:[#allocation3 + $0x11] sm:$0xff]
        %v4098 = vld [vmem:[#allocation3 + $0x21] sm:$0xff]
        %v4099 = vld [vmem:[#allocation3 + $0x31] sm:$0xff]
        %v4100 = vld [vmem:[#allocation3 + $0x41] sm:$0xff]
        %v4101 = vld [vmem:[#allocation3 + $0x51] sm:$0xff]
        %v4102 = vld [vmem:[#allocation3 + $0x61] sm:$0xff]
        %v4103 = vld [vmem:[#allocation3 + $0x71] sm:$0xff]
        %v4104 = vld [vmem:[#allocation3 + $0x81] sm:$0xff]
        %v4105 = vadd.f32 %v4027, %v4097
        %v4106 = vadd.f32 %v4036, %v4098
        %v4107 = vadd.f32 %v4045, %v4099
        %v4108 = vadd.f32 %v4054, %v4100
        %v4109 = vadd.f32 %v4063, %v4101
        %v4110 = vadd.f32 %v4072, %v4102
        %v4111 = vadd.f32 %v4081, %v4103
        %v4112 = vadd.f32 %v4090, %v4104
        %v4113 = vmax.f32 %v4105, 0.0
        %v4114 = vmax.f32 %v4106, 0.0
        %v4115 = vmax.f32 %v4107, 0.0
        %v4116 = vmax.f32 %v4108, 0.0
        %v4117 = vmax.f32 %v4109, 0.0
        %v4118 = vmax.f32 %v4110, 0.0
        %v4119 = vmax.f32 %v4111, 0.0
        %v4120 = vmax.f32 %v4112, 0.0
        %vm4121 = vcmask 130048
        %4122 = vst.msk [vmem:[%s381] sm:$0xff] %vm4121, %v4113
        %4123 = vst.msk [vmem:[%s381 + $0x8] sm:$0xff] %vm4121, %v4114
        %4124 = vst.msk [vmem:[%s381 + $0x10] sm:$0xff] %vm4121, %v4115
        %4125 = vst.msk [vmem:[%s381 + $0x18] sm:$0xff] %vm4121, %v4116
        %4126 = vst.msk [vmem:[%s381 + $0x20] sm:$0xff] %vm4121, %v4117
        %4127 = vst.msk [vmem:[%s381 + $0x28] sm:$0xff] %vm4121, %v4118
        %4128 = vst.msk [vmem:[%s381 + $0x30] sm:$0xff] %vm4121, %v4119
        %4129 = vst.msk [vmem:[%s381 + $0x38] sm:$0xff] %vm4121, %v4120
        %v4130 = vld [vmem:[%s398] sm:$0xff]
        %v4131 = vld [vmem:[%s398 + $0x8] sm:$0xff]
        %v4132 = vld [vmem:[%s398 + $0x10] sm:$0xff]
        %v4133 = vld [vmem:[%s398 + $0x18] sm:$0xff]
        %v4134 = vld [vmem:[%s398 + $0x20] sm:$0xff]
        %v4135 = vld [vmem:[%s398 + $0x28] sm:$0xff]
        %v4136 = vld [vmem:[%s398 + $0x30] sm:$0xff]
        %v4137 = vld [vmem:[%s398 + $0x38] sm:$0xff]
        %v4138 = vld [vmem:[%s398 + $0x40] sm:$0xff]
        %v4139 = vld [vmem:[%s398 + $0x48] sm:$0xff]
        %v4140 = vld [vmem:[%s398 + $0x50] sm:$0xff]
        %v4141 = vld [vmem:[%s398 + $0x58] sm:$0xff]
        %v4142 = vld [vmem:[%s398 + $0x60] sm:$0xff]
        %v4143 = vld [vmem:[%s398 + $0x68] sm:$0xff]
        %v4144 = vld [vmem:[%s398 + $0x70] sm:$0xff]
        %v4145 = vld [vmem:[%s398 + $0x78] sm:$0xff]
        %v4146 = vld [vmem:[%s398 + $0x80] sm:$0xff]
        %v4147 = vld [vmem:[%s398 + $0x88] sm:$0xff]
        %v4148 = vld [vmem:[%s398 + $0x90] sm:$0xff]
        %v4149 = vld [vmem:[%s398 + $0x98] sm:$0xff]
        %v4150 = vld [vmem:[%s398 + $0xa0] sm:$0xff]
        %4151 = vst.msk [vmem:[#allocation3] sm:$0xff] %vm4121, %v4130
        %4152 = vst.msk [vmem:[#allocation3 + $0x8] sm:$0xff] %vm4121, %v4131
        %4153 = vst.msk [vmem:[#allocation3 + $0x10] sm:$0xff] %vm4121, %v4132
        %4154 = vst.msk [vmem:[#allocation3 + $0x18] sm:$0xff] %vm4121, %v4133
        %4155 = vst.msk [vmem:[#allocation3 + $0x20] sm:$0xff] %vm4121, %v4134
        %4156 = vst.msk [vmem:[#allocation3 + $0x28] sm:$0xff] %vm4121, %v4135
        %4157 = vst.msk [vmem:[#allocation3 + $0x30] sm:$0xff] %vm4121, %v4136
        %4158 = vst.msk [vmem:[#allocation3 + $0x38] sm:$0xff] %vm4121, %v4137
        %4159 = vst.msk [vmem:[#allocation3 + $0x40] sm:$0xff] %vm4121, %v4138
        %4160 = vst.msk [vmem:[#allocation3 + $0x48] sm:$0xff] %vm4121, %v4139
        %4161 = vst.msk [vmem:[#allocation3 + $0x50] sm:$0xff] %vm4121, %v4140
        %4162 = vst.msk [vmem:[#allocation3 + $0x58] sm:$0xff] %vm4121, %v4141
        %4163 = vst.msk [vmem:[#allocation3 + $0x60] sm:$0xff] %vm4121, %v4142
        %4164 = vst.msk [vmem:[#allocation3 + $0x68] sm:$0xff] %vm4121, %v4143
        %4165 = vst.msk [vmem:[#allocation3 + $0x70] sm:$0xff] %vm4121, %v4144
        %4166 = vst.msk [vmem:[#allocation3 + $0x78] sm:$0xff] %vm4121, %v4145
        %4167 = vst.msk [vmem:[#allocation3 + $0x80] sm:$0xff] %vm4121, %v4146
        %4168 = vst.msk [vmem:[#allocation3 + $0x88] sm:$0xff] %vm4121, %v4147
        %4169 = vst.msk [vmem:[#allocation3 + $0x90] sm:$0xff] %vm4121, %v4148
        %4170 = vst.msk [vmem:[#allocation3 + $0x98] sm:$0xff] %vm4121, %v4149
        %4171 = vst.msk [vmem:[#allocation3 + $0xa0] sm:$0xff] %vm4121, %v4150
        %s4172 = sand.u32 %s254, 1
        %s4173 = scalar_lea.sflag [#allocation5], %s4172
        %s4174 = sand.u32 %s254, 1
        %s4175 = smul.addr %s4174, 64
        %s4176 = scalar_lea.vmem [#allocation4], %s4175
        // Predicated region
        $region73: #{tpu_custom_call.1} parent=55 // pred_check
          %p4177 = pneg %p264
        $region74: #{tpu_custom_call.1} parent=55 // pred_check_branch
          %4179 = sbr.rel (%p4177) target = $region76
        $region75: #{tpu_custom_call.1} parent=55 // pred_region
          %s4180 = smul.u32 %s27, 4
          %s4181 = sadd.s32 %s4180, %s28
          %s4183 = ssub.s32 1024, 1024
          %4184 = vsyncadd %s4173, %s4183
          %s4185 = smul.addr %s4181, 8
          %s4186 = smul.addr %s4185, 128
          %s4187 = scalar_lea.hbm %s9, %s4186
          %s4188 = sshll.u32 %s4176, 4
          %s4189 = int_to_ptr.vmem [resolvable:$true] %s4188
          %4194 = dma.vmem_to_hbm [thread:$0]  %s4189, 1024, %s4187, %s4173, 128, 128, 8
        $region76: #{tpu_custom_call.1} parent=55 // pred_fallthru
          _
      $region56: #{tpu_custom_call.1} parent=5 // pred_fallthru
        _
      %p4195 = scmp.le.s32.totalorder 2, %s18
      // Predicated region
      $region77: #{tpu_custom_call.1} parent=5 // pred_check
        %p4196 = pneg %p4195
      $region78: #{tpu_custom_call.1} parent=5 // pred_check_branch
        %4198 = sbr.rel (%p4196) target = $region80
      $region79: #{tpu_custom_call.1} parent=5 // pred_region
        %s4199 = ssub.s32 %s18, 2
        // Predicated region
        $region81: #{tpu_custom_call.1} parent=79 // pred_check
          %p4200 = pneg %p270
        $region82: #{tpu_custom_call.1} parent=79 // pred_check_branch
          %4202 = sbr.rel (%p4200) target = $region84
        $region83: #{tpu_custom_call.1} parent=79 // pred_region
          %s4203 = sand.u32 %s255, 1
          %s4204 = scalar_lea.sflag [#allocation5], %s4203
          %s4205 = sand.u32 %s255, 1
          %s4206 = smul.addr %s4205, 64
          %s4207 = scalar_lea.vmem [#allocation4], %s4206
          %4208 = dma.done %s4204, 1024
        $region84: #{tpu_custom_call.1} parent=79 // pred_fallthru
          _
      $region80: #{tpu_custom_call.1} parent=5 // pred_fallthru
        _
    $region6: #{tpu_custom_call.1} parent=1 // loop_footer
      %s22 = sadd.s32 1, %s18
    $region7: #{tpu_custom_call.1} parent=1 // loop_footer_branch
      %17 = sbr.rel target = $region3
    $region8: #{tpu_custom_call.1} parent=1 // loop_exit
      _
    %4209 = vsyncpa [#allocation5], 1
    %s4210 = scalar_lea.sflag [#allocation5], 1
    %4211 = vsyncpa %s4210, 1

// kernel: tpu_custom_call.1
$region0: #{tpu_custom_call.1}
  #allocation0 [shape = 'u32[]', space=smem, size = 0x4, offset = 0x4, fixed_abs, tag = 'smem constant byte address 0x4 - core index']
  #allocation1 [shape = 'u32[144,128]{1,0:T(1,128)}', space=vmem, size = 0x12000, scoped, tag = 'internal scratch']
  #allocation2 [shape = 'f32[168,12]{1,0:T(8,128)}', space=vmem, size = 0x15000, scoped, tag = 'scratch operand']
  #allocation3 [shape = 'f32[168,16]{1,0:T(8,128)}', space=vmem, size = 0x15000, scoped, tag = 'scratch operand']
  %s0 = inlined_call_operand.vmem [shape: f32[2,4,168,16], index: 0, kind: input, shape index: {}]
  %s1 = inlined_call_operand.vmem [shape: f32[2,4,168,16], index: 1, kind: input, shape index: {}]
  %s2 = inlined_call_operand.vmem [shape: f32[168,1], index: 2, kind: input, shape index: {}]
  %s3 = inlined_call_operand.vmem [shape: f32[16,4], index: 3, kind: input, shape index: {}]
  %s4 = inlined_call_operand.vmem [shape: f32[9,12,4], index: 4, kind: input, shape index: {}]
  %s5 = inlined_call_operand.vmem [shape: f32[4,16], index: 5, kind: input, shape index: {}]
  %s6 = inlined_call_operand.vmem [shape: f32[1,4], index: 6, kind: input, shape index: {}]
  %s7 = inlined_call_operand.vmem [shape: f32[1,4], index: 7, kind: input, shape index: {}]
  %s8 = inlined_call_operand.vmem [shape: f32[1,16], index: 8, kind: input, shape index: {}]
  %s9 = inlined_call_operand.hbm [shape: f32[8,8,8,16], index: 9, kind: output, shape index: {}]
  %s10 = sld [smem:[#allocation0]]
  $region85: #{tpu_custom_call.1} parent=0
    _
  %s12 = ssub.s32 1, %s10
  %s13 = scalar_select 0, %s12, %s10
  $region1: #{tpu_custom_call.1} parent=0
    #allocation4 [shape = 'u8[65536]{0}', space=vmem, size = 0x10000, scoped, tag = 'output window, operand 0']
    #allocation5 [shape = 's32[2]{0}', space=sflag, size = 0x8, scoped, tag = 'scoped memory for tpu_custom_call.1']
    %14 = vsyncpa [#allocation5], 0
    %s15 = scalar_lea.sflag [#allocation5], 1
    %16 = vsyncpa %s15, 0
    loop: start=0, step=1, limit=10
    $region2: #{tpu_custom_call.1} parent=1 // loop_pre_header
      _
    $region3: #{tpu_custom_call.1} parent=1 // loop_header
      %s18 = sphi 0, %s22
      %p19 = scmp.ge.s32.totalorder %s18, 10
      %s25 = sphi 0, %s37
      %s26 = sphi 0, %s33
      %s27 = sphi 0, %s25
      %s28 = sphi 0, %s26
      %s29 = sphi 0, %s27
      %s30 = sphi 0, %s28
      %s40 = sphi 0, %s42
      %s43 = sphi 0, %s40
      %s44 = sphi 0, %s43
      %s60 = sphi 0, %s44
      %s74 = sphi 0, %s76
      %s77 = sphi 0, %s74
      %s78 = sphi 0, %s77
      %s94 = sphi 0, %s78
      %s98 = sphi 0, %s98
      %s100 = sphi 0, %s98
      %s101 = sphi 0, %s100
      %s115 = sphi 0, %s101
      %s119 = sphi 0, %s119
      %s121 = sphi 0, %s119
      %s122 = sphi 0, %s121
      %s136 = sphi 0, %s122
      %s140 = sphi 0, %s140
      %s142 = sphi 0, %s140
      %s143 = sphi 0, %s142
      %s157 = sphi 0, %s143
      %s161 = sphi 0, %s161
      %s163 = sphi 0, %s161
      %s164 = sphi 0, %s163
      %s178 = sphi 0, %s164
      %s182 = sphi 0, %s182
      %s184 = sphi 0, %s182
      %s185 = sphi 0, %s184
      %s199 = sphi 0, %s185
      %s203 = sphi 0, %s203
      %s205 = sphi 0, %s203
      %s206 = sphi 0, %s205
      %s220 = sphi 0, %s206
      %s224 = sphi 0, %s224
      %s226 = sphi 0, %s224
      %s227 = sphi 0, %s226
      %s241 = sphi 0, %s227
      %s251 = sphi 0, %s253
      %s254 = sphi 0, %s251
      %s255 = sphi 0, %s254
      %s271 = sphi 0, %s255
    $region4: #{tpu_custom_call.1} parent=1 // loop_header_branch
      %21 = sbr.rel (%p19) target = $region8
    $region5: #{tpu_custom_call.1} parent=1 // loop_body
      %s23 = ssub.s32 %s18, 1
      %s24 = ssub.s32 %s18, 2
      %s31 = sadd.s32 1, %s26
      %p32 = scmp.ge.s32.totalorder %s31, 4
      %s33 = scalar_select %p32, 0, %s31
      %s34 = sadd.s32 1, %s25
      %s35 = scalar_select %p32, %s34, %s25
      %p36 = scmp.ge.s32.totalorder %s35, 2
      %s37 = scalar_select %p36, 0, %s35
      %s38 = ssub.s32 %s25, %s37
      %p39 = scmp.eq.s32.totalorder %s38, 0
      %s41 = sadd.s32 %s40, 1
      %s42 = scalar_select %p39, %s40, %s41
      %p45 = pneg %p39
      %p46 = scmp.eq.s32.totalorder %s18, 7
      %p47 = por %p45, %p46
      %p48 = scmp.ne.s32.totalorder %s40, %s43
      %p49 = scmp.eq.s32.totalorder %s18, 0
      %p50 = por %p48, %p49
      %p51 = scmp.ne.s32.totalorder %s40, %s43
      %p52 = scmp.eq.s32.totalorder %s23, 7
      %p53 = por %p51, %p52
      %p54 = scmp.ne.s32.totalorder %s43, %s44
      %p55 = scmp.eq.s32.totalorder %s23, 0
      %p56 = por %p54, %p55
      %p57 = scmp.ne.s32.totalorder %s43, %s44
      %p58 = scmp.eq.s32.totalorder %s24, 7
      %p59 = por %p57, %p58
      %p61 = scmp.ne.s32.totalorder %s44, %s60
      %p62 = scmp.eq.s32.totalorder %s24, 0
      %p63 = por %p61, %p62
      %s64 = sadd.s32 %s26, 1
      %p65 = scmp.lt.s32.totalorder %s64, 3
      %s66 = scalar_select %p65, %s64, 3
      %s67 = sadd.s32 %s33, 1
      %p68 = scmp.lt.s32.totalorder %s67, 3
      %s69 = scalar_select %p68, %s67, 3
      %s70 = ssub.s32 %s25, %s37
      %s71 = ssub.s32 %s66, %s69
      %s72 = sor.u32 %s70, %s71
      %p73 = scmp.eq.s32.totalorder %s72, 0
      %s75 = sadd.s32 %s74, 1
      %s76 = scalar_select %p73, %s74, %s75
      %p79 = pneg %p73
      %p80 = scmp.eq.s32.totalorder %s18, 7
      %p81 = por %p79, %p80
      %p82 = scmp.ne.s32.totalorder %s74, %s77
      %p83 = scmp.eq.s32.totalorder %s18, 0
      %p84 = por %p82, %p83
      %p85 = scmp.ne.s32.totalorder %s74, %s77
      %p86 = scmp.eq.s32.totalorder %s23, 7
      %p87 = por %p85, %p86
      %p88 = scmp.ne.s32.totalorder %s77, %s78
      %p89 = scmp.eq.s32.totalorder %s23, 0
      %p90 = por %p88, %p89
      %p91 = scmp.ne.s32.totalorder %s77, %s78
      %p92 = scmp.eq.s32.totalorder %s24, 7
      %p93 = por %p91, %p92
      %p95 = scmp.ne.s32.totalorder %s78, %s94
      %p96 = scmp.eq.s32.totalorder %s24, 0
      %p97 = por %p95, %p96
      %s99 = sadd.s32 %s98, 1
      %p102 = scmp.eq.s32.totalorder %s18, 7
      %p103 = scmp.ne.s32.totalorder %s98, %s100
      %p104 = scmp.eq.s32.totalorder %s18, 0
      %p105 = por %p103, %p104
      %p106 = scmp.ne.s32.totalorder %s98, %s100
      %p107 = scmp.eq.s32.totalorder %s23, 7
      %p108 = por %p106, %p107
      %p109 = scmp.ne.s32.totalorder %s100, %s101
      %p110 = scmp.eq.s32.totalorder %s23, 0
      %p111 = por %p109, %p110
      %p112 = scmp.ne.s32.totalorder %s100, %s101
      %p113 = scmp.eq.s32.totalorder %s24, 7
      %p114 = por %p112, %p113
      %p116 = scmp.ne.s32.totalorder %s101, %s115
      %p117 = scmp.eq.s32.totalorder %s24, 0
      %p118 = por %p116, %p117
      %s120 = sadd.s32 %s119, 1
      %p123 = scmp.eq.s32.totalorder %s18, 7
      %p124 = scmp.ne.s32.totalorder %s119, %s121
      %p125 = scmp.eq.s32.totalorder %s18, 0
      %p126 = por %p124, %p125
      %p127 = scmp.ne.s32.totalorder %s119, %s121
      %p128 = scmp.eq.s32.totalorder %s23, 7
      %p129 = por %p127, %p128
      %p130 = scmp.ne.s32.totalorder %s121, %s122
      %p131 = scmp.eq.s32.totalorder %s23, 0
      %p132 = por %p130, %p131
      %p133 = scmp.ne.s32.totalorder %s121, %s122
      %p134 = scmp.eq.s32.totalorder %s24, 7
      %p135 = por %p133, %p134
      %p137 = scmp.ne.s32.totalorder %s122, %s136
      %p138 = scmp.eq.s32.totalorder %s24, 0
      %p139 = por %p137, %p138
      %s141 = sadd.s32 %s140, 1
      %p144 = scmp.eq.s32.totalorder %s18, 7
      %p145 = scmp.ne.s32.totalorder %s140, %s142
      %p146 = scmp.eq.s32.totalorder %s18, 0
      %p147 = por %p145, %p146
      %p148 = scmp.ne.s32.totalorder %s140, %s142
      %p149 = scmp.eq.s32.totalorder %s23, 7
      %p150 = por %p148, %p149
      %p151 = scmp.ne.s32.totalorder %s142, %s143
      %p152 = scmp.eq.s32.totalorder %s23, 0
      %p153 = por %p151, %p152
      %p154 = scmp.ne.s32.totalorder %s142, %s143
      %p155 = scmp.eq.s32.totalorder %s24, 7
      %p156 = por %p154, %p155
      %p158 = scmp.ne.s32.totalorder %s143, %s157
      %p159 = scmp.eq.s32.totalorder %s24, 0
      %p160 = por %p158, %p159
      %s162 = sadd.s32 %s161, 1
      %p165 = scmp.eq.s32.totalorder %s18, 7
      %p166 = scmp.ne.s32.totalorder %s161, %s163
      %p167 = scmp.eq.s32.totalorder %s18, 0
      %p168 = por %p166, %p167
      %p169 = scmp.ne.s32.totalorder %s161, %s163
      %p170 = scmp.eq.s32.totalorder %s23, 7
      %p171 = por %p169, %p170
      %p172 = scmp.ne.s32.totalorder %s163, %s164
      %p173 = scmp.eq.s32.totalorder %s23, 0
      %p174 = por %p172, %p173
      %p175 = scmp.ne.s32.totalorder %s163, %s164
      %p176 = scmp.eq.s32.totalorder %s24, 7
      %p177 = por %p175, %p176
      %p179 = scmp.ne.s32.totalorder %s164, %s178
      %p180 = scmp.eq.s32.totalorder %s24, 0
      %p181 = por %p179, %p180
      %s183 = sadd.s32 %s182, 1
      %p186 = scmp.eq.s32.totalorder %s18, 7
      %p187 = scmp.ne.s32.totalorder %s182, %s184
      %p188 = scmp.eq.s32.totalorder %s18, 0
      %p189 = por %p187, %p188
      %p190 = scmp.ne.s32.totalorder %s182, %s184
      %p191 = scmp.eq.s32.totalorder %s23, 7
      %p192 = por %p190, %p191
      %p193 = scmp.ne.s32.totalorder %s184, %s185
      %p194 = scmp.eq.s32.totalorder %s23, 0
      %p195 = por %p193, %p194
      %p196 = scmp.ne.s32.totalorder %s184, %s185
      %p197 = scmp.eq.s32.totalorder %s24, 7
      %p198 = por %p196, %p197
      %p200 = scmp.ne.s32.totalorder %s185, %s199
      %p201 = scmp.eq.s32.totalorder %s24, 0
      %p202 = por %p200, %p201
      %s204 = sadd.s32 %s203, 1
      %p207 = scmp.eq.s32.totalorder %s18, 7
      %p208 = scmp.ne.s32.totalorder %s203, %s205
      %p209 = scmp.eq.s32.totalorder %s18, 0
      %p210 = por %p208, %p209
      %p211 = scmp.ne.s32.totalorder %s203, %s205
      %p212 = scmp.eq.s32.totalorder %s23, 7
      %p213 = por %p211, %p212
      %p214 = scmp.ne.s32.totalorder %s205, %s206
      %p215 = scmp.eq.s32.totalorder %s23, 0
      %p216 = por %p214, %p215
      %p217 = scmp.ne.s32.totalorder %s205, %s206
      %p218 = scmp.eq.s32.totalorder %s24, 7
      %p219 = por %p217, %p218
      %p221 = scmp.ne.s32.totalorder %s206, %s220
      %p222 = scmp.eq.s32.totalorder %s24, 0
      %p223 = por %p221, %p222
      %s225 = sadd.s32 %s224, 1
      %p228 = scmp.eq.s32.totalorder %s18, 7
      %p229 = scmp.ne.s32.totalorder %s224, %s226
      %p230 = scmp.eq.s32.totalorder %s18, 0
      %p231 = por %p229, %p230
      %p232 = scmp.ne.s32.totalorder %s224, %s226
      %p233 = scmp.eq.s32.totalorder %s23, 7
      %p234 = por %p232, %p233
      %p235 = scmp.ne.s32.totalorder %s226, %s227
      %p236 = scmp.eq.s32.totalorder %s23, 0
      %p237 = por %p235, %p236
      %p238 = scmp.ne.s32.totalorder %s226, %s227
      %p239 = scmp.eq.s32.totalorder %s24, 7
      %p240 = por %p238, %p239
      %p242 = scmp.ne.s32.totalorder %s227, %s241
      %p243 = scmp.eq.s32.totalorder %s24, 0
      %p244 = por %p242, %p243
      %s245 = smul.u32 %s25, 4
      %s246 = sadd.s32 %s245, %s26
      %s247 = smul.u32 %s37, 4
      %s248 = sadd.s32 %s247, %s33
      %s249 = ssub.s32 %s246, %s248
      %p250 = scmp.eq.s32.totalorder %s249, 0
      %s252 = sadd.s32 %s251, 1
      %s253 = scalar_select %p250, %s251, %s252
      %p256 = pneg %p250
      %p257 = scmp.eq.s32.totalorder %s18, 7
      %p258 = por %p256, %p257
      %p259 = scmp.ne.s32.totalorder %s251, %s254
      %p260 = scmp.eq.s32.totalorder %s18, 0
      %p261 = por %p259, %p260
      %p262 = scmp.ne.s32.totalorder %s251, %s254
      %p263 = scmp.eq.s32.totalorder %s23, 7
      %p264 = por %p262, %p263
      %p265 = scmp.ne.s32.totalorder %s254, %s255
      %p266 = scmp.eq.s32.totalorder %s23, 0
      %p267 = por %p265, %p266
      %p268 = scmp.ne.s32.totalorder %s254, %s255
      %p269 = scmp.eq.s32.totalorder %s24, 7
      %p270 = por %p268, %p269
      %p272 = scmp.ne.s32.totalorder %s255, %s271
      %p273 = scmp.eq.s32.totalorder %s24, 0
      %p274 = por %p272, %p273
      %p275 = scmp.le.s32.totalorder 1, %s18
      %p276 = scmp.lt.s32.totalorder %s18, 9
      %p277 = pnand %p275, %p276
      %p278 = pneg %p277
      // Predicated region
      $region9: #{tpu_custom_call.1} parent=5 // pred_check
        _
      $region10: #{tpu_custom_call.1} parent=5 // pred_check_branch
        %280 = sbr.rel (%p277) target = $region12
      $region11: #{tpu_custom_call.1} parent=5 // pred_region
        %s281 = ssub.s32 %s18, 1
        // Predicated region
        $region13: #{tpu_custom_call.1} parent=11 // pred_check
          %p282 = pneg %p111
        $region14: #{tpu_custom_call.1} parent=11 // pred_check_branch
          %284 = sbr.rel (%p282) target = $region16
        $region15: #{tpu_custom_call.1} parent=11 // pred_region
          _
        $region16: #{tpu_custom_call.1} parent=11 // pred_fallthru
          _
        // Predicated region
        $region17: #{tpu_custom_call.1} parent=11 // pred_check
          %p285 = pneg %p132
        $region18: #{tpu_custom_call.1} parent=11 // pred_check_branch
          %287 = sbr.rel (%p285) target = $region20
        $region19: #{tpu_custom_call.1} parent=11 // pred_region
          _
        $region20: #{tpu_custom_call.1} parent=11 // pred_fallthru
          _
        // Predicated region
        $region21: #{tpu_custom_call.1} parent=11 // pred_check
          %p288 = pneg %p153
        $region22: #{tpu_custom_call.1} parent=11 // pred_check_branch
          %290 = sbr.rel (%p288) target = $region24
        $region23: #{tpu_custom_call.1} parent=11 // pred_region
          _
        $region24: #{tpu_custom_call.1} parent=11 // pred_fallthru
          _
        // Predicated region
        $region25: #{tpu_custom_call.1} parent=11 // pred_check
          %p291 = pneg %p174
        $region26: #{tpu_custom_call.1} parent=11 // pred_check_branch
          %293 = sbr.rel (%p291) target = $region28
        $region27: #{tpu_custom_call.1} parent=11 // pred_region
          _
        $region28: #{tpu_custom_call.1} parent=11 // pred_fallthru
          _
        // Predicated region
        $region29: #{tpu_custom_call.1} parent=11 // pred_check
          %p294 = pneg %p195
        $region30: #{tpu_custom_call.1} parent=11 // pred_check_branch
          %296 = sbr.rel (%p294) target = $region32
        $region31: #{tpu_custom_call.1} parent=11 // pred_region
          _
        $region32: #{tpu_custom_call.1} parent=11 // pred_fallthru
          _
        // Predicated region
        $region33: #{tpu_custom_call.1} parent=11 // pred_check
          %p297 = pneg %p216
        $region34: #{tpu_custom_call.1} parent=11 // pred_check_branch
          %299 = sbr.rel (%p297) target = $region36
        $region35: #{tpu_custom_call.1} parent=11 // pred_region
          _
        $region36: #{tpu_custom_call.1} parent=11 // pred_fallthru
          _
        // Predicated region
        $region37: #{tpu_custom_call.1} parent=11 // pred_check
          %p300 = pneg %p237
        $region38: #{tpu_custom_call.1} parent=11 // pred_check_branch
          %302 = sbr.rel (%p300) target = $region40
        $region39: #{tpu_custom_call.1} parent=11 // pred_region
          _
        $region40: #{tpu_custom_call.1} parent=11 // pred_fallthru
          _
      $region12: #{tpu_custom_call.1} parent=5 // pred_fallthru
        _
      %p303 = scmp.lt.s32.totalorder %s18, 8
      // Predicated region
      $region41: #{tpu_custom_call.1} parent=5 // pred_check
        %p304 = pneg %p303
      $region42: #{tpu_custom_call.1} parent=5 // pred_check_branch
        %306 = sbr.rel (%p304) target = $region44
      $region43: #{tpu_custom_call.1} parent=5 // pred_region
        // Predicated region
        $region45: #{tpu_custom_call.1} parent=43 // pred_check
          %p307 = pneg %p50
        $region46: #{tpu_custom_call.1} parent=43 // pred_check_branch
          %309 = sbr.rel (%p307) target = $region48
        $region47: #{tpu_custom_call.1} parent=43 // pred_region
          %p310 = scmp.lt.s32.totalorder %s25, 1
          %s311 = scalar_select %p310, %s25, 1
          %s312 = smul.addr %s311, 84
          %s313 = smul.addr %s312, 8
          %s314 = scalar_lea.vmem %s0, %s313
        $region48: #{tpu_custom_call.1} parent=43 // pred_fallthru
          _
        // Predicated region
        $region49: #{tpu_custom_call.1} parent=43 // pred_check
          %p315 = pneg %p84
        $region50: #{tpu_custom_call.1} parent=43 // pred_check_branch
          %317 = sbr.rel (%p315) target = $region52
        $region51: #{tpu_custom_call.1} parent=43 // pred_region
          %s318 = sadd.s32 %s26, 1
          %p319 = scmp.lt.s32.totalorder %s318, 3
          %s320 = scalar_select %p319, %s318, 3
          %p321 = scmp.lt.s32.totalorder %s25, 1
          %s322 = scalar_select %p321, %s25, 1
          %p323 = scmp.lt.s32.totalorder %s320, 3
          %s324 = scalar_select %p323, %s320, 3
          %s325 = smul.addr %s324, 21
          %s326 = smul.addr %s322, 84
          %s327 = sadd.s32 %s325, %s326
          %s328 = smul.addr %s327, 8
          %s329 = scalar_lea.vmem %s1, %s328
          %s330 = sadd.s32 %s26, 1
          %p331 = scmp.lt.s32.totalorder %s330, 3
          %s332 = scalar_select %p331, %s330, 3
        $region52: #{tpu_custom_call.1} parent=43 // pred_fallthru
          _
      $region44: #{tpu_custom_call.1} parent=5 // pred_fallthru
        _
      %p333 = scmp.le.s32.totalorder 1, %s18
      %p334 = scmp.lt.s32.totalorder %s18, 9
      %p335 = pnand %p333, %p334
      %p336 = pneg %p335
      // Predicated region
      $region53: #{tpu_custom_call.1} parent=5 // pred_check
        _
      $region54: #{tpu_custom_call.1} parent=5 // pred_check_branch
        %338 = sbr.rel (%p335) target = $region56
      $region55: #{tpu_custom_call.1} parent=5 // pred_region
        %s339 = ssub.s32 %s18, 1
        %p340 = scmp.lt.s32.totalorder %s27, 1
        %s341 = scalar_select %p340, %s27, 1
        %s342 = smul.addr %s341, 84
        %s343 = smul.addr %s342, 8
        %s344 = scalar_lea.vmem %s0, %s343
        %p345 = pneg %p56
        %p346 = pneg %p53
        %s347 = sadd.s32 %s28, 1
        %p348 = scmp.lt.s32.totalorder %s347, 3
        %s349 = scalar_select %p348, %s347, 3
        %p350 = scmp.lt.s32.totalorder %s27, 1
        %s351 = scalar_select %p350, %s27, 1
        %p352 = scmp.lt.s32.totalorder %s349, 3
        %s353 = scalar_select %p352, %s349, 3
        %s354 = smul.addr %s353, 21
        %s355 = smul.addr %s351, 84
        %s356 = sadd.s32 %s354, %s355
        %s357 = smul.addr %s356, 8
        %s358 = scalar_lea.vmem %s1, %s357
        %p359 = pneg %p90
        %p360 = pneg %p87
        %p361 = pneg %p111
        %p362 = pneg %p108
        %p363 = pneg %p132
        %p364 = pneg %p129
        %p365 = pneg %p153
        %p366 = pneg %p150
        %p367 = pneg %p174
        %p368 = pneg %p171
        %p369 = pneg %p195
        %p370 = pneg %p192
        %p371 = pneg %p216
        %p372 = pneg %p213
        %p373 = pneg %p237
        %p374 = pneg %p234
        %p375 = pneg %p267
        %p376 = pneg %p264
        %s377 = sand.u32 %s254, 1
        %s378 = scalar_lea.sflag [#allocation5], %s377
        %s379 = sand.u32 %s254, 1
        %s380 = smul.addr %s379, 64
        %s381 = scalar_lea.vmem [#allocation4], %s380
        %p382 = scmp.lt.s32.totalorder %s27, 1
        %s383 = scalar_select %p382, %s27, 1
        %s384 = smul.addr %s383, 84
        %s385 = smul.addr %s384, 8
        %s386 = scalar_lea.vmem %s0, %s385
        %s387 = sadd.s32 %s28, 1
        %p388 = scmp.lt.s32.totalorder %s387, 3
        %s389 = scalar_select %p388, %s387, 3
        %p390 = scmp.lt.s32.totalorder %s27, 1
        %s391 = scalar_select %p390, %s27, 1
        %p392 = scmp.lt.s32.totalorder %s389, 3
        %s393 = scalar_select %p392, %s389, 3
        %s394 = smul.addr %s393, 21
        %s395 = smul.addr %s391, 84
        %s396 = sadd.s32 %s394, %s395
        %s397 = smul.addr %s396, 8
        %s398 = scalar_lea.vmem %s1, %s397
        %s399 = sadd.s32 %s28, 1
        %p400 = scmp.lt.s32.totalorder %s399, 3
        %s401 = scalar_select %p400, %s399, 3
        %s402 = smul.u32 %s27, 4
        %s403 = sadd.s32 %s402, %s28
        %v404 = vld [vmem:[%s2] sm:$0xff]
        %v405 = vld [vmem:[%s2 + $0x8] sm:$0xff]
        %v406 = vld [vmem:[%s2 + $0x10] sm:$0xff]
        %v407 = vld [vmem:[%s2 + $0x18] sm:$0xff]
        %v408 = vld [vmem:[%s2 + $0x20] sm:$0xff]
        %v409 = vld [vmem:[%s2 + $0x28] sm:$0xff]
        %v410 = vld [vmem:[%s2 + $0x30] sm:$0xff]
        %v411 = vld [vmem:[%s2 + $0x38] sm:$0xff]
        %v412 = vld [vmem:[%s2 + $0x40] sm:$0xff]
        %v413 = vld [vmem:[%s2 + $0x48] sm:$0xff]
        %v414 = vld [vmem:[%s2 + $0x50] sm:$0xff]
        %v415 = vld [vmem:[%s2 + $0x58] sm:$0xff]
        %v416 = vld [vmem:[%s2 + $0x60] sm:$0xff]
        %v417 = vld [vmem:[%s2 + $0x68] sm:$0xff]
        %v418 = vld [vmem:[%s2 + $0x70] sm:$0xff]
        %v419 = vld [vmem:[%s2 + $0x78] sm:$0xff]
        %v420 = vld [vmem:[%s2 + $0x80] sm:$0xff]
        %v421 = vld [vmem:[%s2 + $0x88] sm:$0xff]
        %v422 = vld [vmem:[%s2 + $0x90] sm:$0xff]
        %v423 = vld [vmem:[%s2 + $0x98] sm:$0xff]
        %v424 = vld [vmem:[%s2 + $0xa0] sm:$0xff]
        %v425 = vld [vmem:[%s3] sm:$0xff]
        %v426 = vld [vmem:[%s3 + $0x8] sm:$0xff]
        %v427 = vld [vmem:[%s6] sm:$0x1]
        %p428 = scmp.eq.s32.totalorder %s28, 0
        // Predicated region
        $region57: #{tpu_custom_call.1} parent=55 // pred_check
          %p429 = pneg %p428
        $region58: #{tpu_custom_call.1} parent=55 // pred_check_branch
          %431 = sbr.rel (%p429) target = $region60
        $region59: #{tpu_custom_call.1} parent=55 // pred_region
          %v432 = vld [vmem:[%s386] sm:$0xff]
          %v433 = vld [vmem:[%s386 + $0x8] sm:$0xff]
          %v434 = vld [vmem:[%s386 + $0x10] sm:$0xff]
          %v435 = vld [vmem:[%s386 + $0x18] sm:$0xff]
          %v436 = vld [vmem:[%s386 + $0x20] sm:$0xff]
          %v437 = vld [vmem:[%s386 + $0x28] sm:$0xff]
          %v438 = vld [vmem:[%s386 + $0x30] sm:$0xff]
          %v439 = vld [vmem:[%s386 + $0x38] sm:$0xff]
          %v440 = vld [vmem:[%s386 + $0x40] sm:$0xff]
          %v441 = vld [vmem:[%s386 + $0x48] sm:$0xff]
          %v442 = vld [vmem:[%s386 + $0x50] sm:$0xff]
          %v443 = vld [vmem:[%s386 + $0x58] sm:$0xff]
          %v444 = vld [vmem:[%s386 + $0x60] sm:$0xff]
          %v445 = vld [vmem:[%s386 + $0x68] sm:$0xff]
          %v446 = vld [vmem:[%s386 + $0x70] sm:$0xff]
          %v447 = vld [vmem:[%s386 + $0x78] sm:$0xff]
          %v448 = vld [vmem:[%s386 + $0x80] sm:$0xff]
          %v449 = vld [vmem:[%s386 + $0x88] sm:$0xff]
          %v450 = vld [vmem:[%s386 + $0x90] sm:$0xff]
          %v451 = vld [vmem:[%s386 + $0x98] sm:$0xff]
          %v452 = vld [vmem:[%s386 + $0xa0] sm:$0xff]
          %vm453 = vcmask 130048
          %454 = vst.msk [vmem:[#allocation3] sm:$0xff] %vm453, %v432
          %455 = vst.msk [vmem:[#allocation3 + $0x8] sm:$0xff] %vm453, %v433
          %456 = vst.msk [vmem:[#allocation3 + $0x10] sm:$0xff] %vm453, %v434
          %457 = vst.msk [vmem:[#allocation3 + $0x18] sm:$0xff] %vm453, %v435
          %458 = vst.msk [vmem:[#allocation3 + $0x20] sm:$0xff] %vm453, %v436
          %459 = vst.msk [vmem:[#allocation3 + $0x28] sm:$0xff] %vm453, %v437
          %460 = vst.msk [vmem:[#allocation3 + $0x30] sm:$0xff] %vm453, %v438
          %461 = vst.msk [vmem:[#allocation3 + $0x38] sm:$0xff] %vm453, %v439
          %462 = vst.msk [vmem:[#allocation3 + $0x40] sm:$0xff] %vm453, %v440
          %463 = vst.msk [vmem:[#allocation3 + $0x48] sm:$0xff] %vm453, %v441
          %464 = vst.msk [vmem:[#allocation3 + $0x50] sm:$0xff] %vm453, %v442
          %465 = vst.msk [vmem:[#allocation3 + $0x58] sm:$0xff] %vm453, %v443
          %466 = vst.msk [vmem:[#allocation3 + $0x60] sm:$0xff] %vm453, %v444
          %467 = vst.msk [vmem:[#allocation3 + $0x68] sm:$0xff] %vm453, %v445
          %468 = vst.msk [vmem:[#allocation3 + $0x70] sm:$0xff] %vm453, %v446
          %469 = vst.msk [vmem:[#allocation3 + $0x78] sm:$0xff] %vm453, %v447
          %470 = vst.msk [vmem:[#allocation3 + $0x80] sm:$0xff] %vm453, %v448
          %471 = vst.msk [vmem:[#allocation3 + $0x88] sm:$0xff] %vm453, %v449
          %472 = vst.msk [vmem:[#allocation3 + $0x90] sm:$0xff] %vm453, %v450
          %473 = vst.msk [vmem:[#allocation3 + $0x98] sm:$0xff] %vm453, %v451
          %474 = vst.msk [vmem:[#allocation3 + $0xa0] sm:$0xff] %vm453, %v452
          %vm475 = vcmask 31744
          %476 = vst.msk [vmem:[#allocation2] sm:$0xff] %vm475, 0.0
          %477 = vst.msk [vmem:[#allocation2 + $0x8] sm:$0xff] %vm475, 0.0
          %478 = vst.msk [vmem:[#allocation2 + $0x10] sm:$0xff] %vm475, 0.0
          %479 = vst.msk [vmem:[#allocation2 + $0x18] sm:$0xff] %vm475, 0.0
          %480 = vst.msk [vmem:[#allocation2 + $0x20] sm:$0xff] %vm475, 0.0
          %481 = vst.msk [vmem:[#allocation2 + $0x28] sm:$0xff] %vm475, 0.0
          %482 = vst.msk [vmem:[#allocation2 + $0x30] sm:$0xff] %vm475, 0.0
          %483 = vst.msk [vmem:[#allocation2 + $0x38] sm:$0xff] %vm475, 0.0
          %484 = vst.msk [vmem:[#allocation2 + $0x40] sm:$0xff] %vm475, 0.0
          %485 = vst.msk [vmem:[#allocation2 + $0x48] sm:$0xff] %vm475, 0.0
          %486 = vst.msk [vmem:[#allocation2 + $0x50] sm:$0xff] %vm475, 0.0
          %487 = vst.msk [vmem:[#allocation2 + $0x58] sm:$0xff] %vm475, 0.0
          %488 = vst.msk [vmem:[#allocation2 + $0x60] sm:$0xff] %vm475, 0.0
          %489 = vst.msk [vmem:[#allocation2 + $0x68] sm:$0xff] %vm475, 0.0
          %490 = vst.msk [vmem:[#allocation2 + $0x70] sm:$0xff] %vm475, 0.0
          %491 = vst.msk [vmem:[#allocation2 + $0x78] sm:$0xff] %vm475, 0.0
          %492 = vst.msk [vmem:[#allocation2 + $0x80] sm:$0xff] %vm475, 0.0
          %493 = vst.msk [vmem:[#allocation2 + $0x88] sm:$0xff] %vm475, 0.0
          %494 = vst.msk [vmem:[#allocation2 + $0x90] sm:$0xff] %vm475, 0.0
          %495 = vst.msk [vmem:[#allocation2 + $0x98] sm:$0xff] %vm475, 0.0
          %496 = vst.msk [vmem:[#allocation2 + $0xa0] sm:$0xff] %vm475, 0.0
          %v497 = vld [vmem:[%s386] sm:$0xff]
          %v498 = vld [vmem:[%s386 + $0x8] sm:$0xff]
          %v499 = vld [vmem:[%s386 + $0x10] sm:$0xff]
          %v500 = vld [vmem:[%s386 + $0x18] sm:$0xff]
          %v501 = vld [vmem:[%s386 + $0x20] sm:$0xff]
          %v502 = vld [vmem:[%s386 + $0x28] sm:$0xff]
          %v503 = vld [vmem:[%s386 + $0x30] sm:$0xff]
          %v504 = vld [vmem:[%s386 + $0x38] sm:$0xff]
          %v505 = vld [vmem:[%s386 + $0x40] sm:$0xff]
          %v506 = vld [vmem:[%s386 + $0x48] sm:$0xff]
          %v507 = vld [vmem:[%s386 + $0x50] sm:$0xff]
          %v508 = vld [vmem:[%s386 + $0x58] sm:$0xff]
          %v509 = vld [vmem:[%s386 + $0x60] sm:$0xff]
          %v510 = vld [vmem:[%s386 + $0x68] sm:$0xff]
          %v511 = vld [vmem:[%s386 + $0x70] sm:$0xff]
          %v512 = vld [vmem:[%s386 + $0x78] sm:$0xff]
          %v513 = vld [vmem:[%s386 + $0x80] sm:$0xff]
          %v514 = vld [vmem:[%s386 + $0x88] sm:$0xff]
          %v515 = vld [vmem:[%s386 + $0x90] sm:$0xff]
          %v516 = vld [vmem:[%s386 + $0x98] sm:$0xff]
          %v517 = vld [vmem:[%s386 + $0xa0] sm:$0xff]
          %v519 = vlaneseq
          %v520 = vshrl.u32 %v519, 7
          %v521 = vsub.s32 0, %v520
          %v522 = vrot.slane %v427, %v521
          %v525 = vsel %vm453, %v497, 0
          %v528 = vsel %vm453, %v498, 0
          %v531 = vsel %vm453, %v499, 0
          %v534 = vsel %vm453, %v500, 0
          %v537 = vsel %vm453, %v501, 0
          %v540 = vsel %vm453, %v502, 0
          %v543 = vsel %vm453, %v503, 0
          %v546 = vsel %vm453, %v504, 0
          %v549 = vsel %vm453, %v505, 0
          %v552 = vsel %vm453, %v506, 0
          %v555 = vsel %vm453, %v507, 0
          %v558 = vsel %vm453, %v508, 0
          %v561 = vsel %vm453, %v509, 0
          %v564 = vsel %vm453, %v510, 0
          %v567 = vsel %vm453, %v511, 0
          %v570 = vsel %vm453, %v512, 0
          %v573 = vsel %vm453, %v513, 0
          %v576 = vsel %vm453, %v514, 0
          %v579 = vsel %vm453, %v515, 0
          %v582 = vsel %vm453, %v516, 0
          %v585 = vsel %vm453, %v517, 0
          %587 = vmatprep.subr.mxu0 0.0
          %588 = vmatpush1.msra.mxu0 %v425
          %589 = vmatprep.subr.mxu0 0.0
          %590 = vmatpush1.msra.mxu0 %v426
          %591 = vmatprep.subr.mxu0 0.0
          %592 = vmatpush1.msra.mxu0 0.0
          %593 = vmatprep.subr.mxu0 0.0
          %594 = vmatpush1.msra.mxu0 0.0
          %595 = vmatprep.subr.mxu0 0.0
          %596 = vmatpush1.msra.mxu0 0.0
          %597 = vmatprep.subr.mxu0 0.0
          %598 = vmatpush1.msra.mxu0 0.0
          %599 = vmatprep.subr.mxu0 0.0
          %600 = vmatpush1.msra.mxu0 0.0
          %601 = vmatprep.subr.mxu0 0.0
          %602 = vmatpush1.msra.mxu0 0.0
          %603 = vmatprep.subr.mxu0 0.0
          %604 = vmatpush1.msra.mxu0 0.0
          %605 = vmatprep.subr.mxu0 0.0
          %606 = vmatpush1.msra.mxu0 0.0
          %607 = vmatprep.subr.mxu0 0.0
          %608 = vmatpush1.msra.mxu0 0.0
          %609 = vmatprep.subr.mxu0 0.0
          %610 = vmatpush1.msra.mxu0 0.0
          %611 = vmatprep.subr.mxu0 0.0
          %612 = vmatpush1.msra.mxu0 0.0
          %613 = vmatprep.subr.mxu0 0.0
          %614 = vmatpush1.msra.mxu0 0.0
          %615 = vmatprep.subr.mxu0 0.0
          %616 = vmatpush1.msra.mxu0 0.0
          %617 = vmatprep.subr.mxu0 0.0
          %618 = vmatpush1.msra.mxu0 0.0
          %619 = vmatprep.subr.mxu0 0.0
          %620 = vmatpush1.msra.mxu0 0.0
          %621 = vmatprep.subr.mxu0 0.0
          %622 = vmatpush1.msra.mxu0 0.0
          %623 = vmatprep.subr.mxu0 0.0
          %624 = vmatpush1.msra.mxu0 0.0
          %625 = vmatprep.subr.mxu0 0.0
          %626 = vmatpush1.msra.mxu0 0.0
          %627 = vmatprep.subr.mxu0 0.0
          %628 = vmatpush1.msra.mxu0 0.0
          %629 = vmatprep.subr.mxu0 0.0
          %630 = vmatpush1.msra.mxu0 0.0
          %631 = vmatprep.subr.mxu0 0.0
          %632 = vmatpush1.msra.mxu0 0.0
          %633 = vmatprep.subr.mxu0 0.0
          %634 = vmatpush1.msra.mxu0 0.0
          %635 = vmatprep.subr.mxu0 0.0
          %636 = vmatpush1.msra.mxu0 0.0
          %637 = vmatprep.subr.mxu0 0.0
          %638 = vmatpush1.msra.mxu0 0.0
          %639 = vmatprep.subr.mxu0 0.0
          %640 = vmatpush1.msra.mxu0 0.0
          %641 = vmatprep.subr.mxu0 0.0
          %642 = vmatpush1.msra.mxu0 0.0
          %643 = vmatprep.subr.mxu0 0.0
          %644 = vmatpush1.msra.mxu0 0.0
          %645 = vmatprep.subr.mxu0 0.0
          %646 = vmatpush1.msra.mxu0 0.0
          %647 = vmatprep.subr.mxu0 0.0
          %648 = vmatpush1.msra.mxu0 0.0
          %649 = vmatprep.subr.mxu0 0.0
          %650 = vmatpush1.msra.mxu0 0.0
          %651 = vmatprep.mubr.f32.mxu0 0.0
          %652 = vmatmul.mubr.f32.gmra.mrb[0].mxu0 %v525
          %v653 = vpop.f32.mrb[0].mxu0
          %v654 = vadd.f32 %v522, %v653
          %v655 = vpop.f32.mrb[0].mxu0
          %656 = vmatprep.mubr.f32.mxu0 0.0
          %657 = vmatmul.mubr.f32.gmra.mrb[0].mxu0 %v528
          %v658 = vpop.f32.mrb[0].mxu0
          %v659 = vadd.f32 %v522, %v658
          %v660 = vpop.f32.mrb[0].mxu0
          %661 = vmatprep.mubr.f32.mxu0 0.0
          %662 = vmatmul.mubr.f32.gmra.mrb[0].mxu0 %v531
          %v663 = vpop.f32.mrb[0].mxu0
          %v664 = vadd.f32 %v522, %v663
          %v665 = vpop.f32.mrb[0].mxu0
          %666 = vmatprep.mubr.f32.mxu0 0.0
          %667 = vmatmul.mubr.f32.gmra.mrb[0].mxu0 %v534
          %v668 = vpop.f32.mrb[0].mxu0
          %v669 = vadd.f32 %v522, %v668
          %v670 = vpop.f32.mrb[0].mxu0
          %671 = vmatprep.mubr.f32.mxu0 0.0
          %672 = vmatmul.mubr.f32.gmra.mrb[0].mxu0 %v537
          %v673 = vpop.f32.mrb[0].mxu0
          %v674 = vadd.f32 %v522, %v673
          %v675 = vpop.f32.mrb[0].mxu0
          %676 = vmatprep.mubr.f32.mxu0 0.0
          %677 = vmatmul.mubr.f32.gmra.mrb[0].mxu0 %v540
          %v678 = vpop.f32.mrb[0].mxu0
          %v679 = vadd.f32 %v522, %v678
          %v680 = vpop.f32.mrb[0].mxu0
          %681 = vmatprep.mubr.f32.mxu0 0.0
          %682 = vmatmul.mubr.f32.gmra.mrb[0].mxu0 %v543
          %v683 = vpop.f32.mrb[0].mxu0
          %v684 = vadd.f32 %v522, %v683
          %v685 = vpop.f32.mrb[0].mxu0
          %686 = vmatprep.mubr.f32.mxu0 0.0
          %687 = vmatmul.mubr.f32.gmra.mrb[0].mxu0 %v546
          %v688 = vpop.f32.mrb[0].mxu0
          %v689 = vadd.f32 %v522, %v688
          %v690 = vpop.f32.mrb[0].mxu0
          %691 = vmatprep.mubr.f32.mxu0 0.0
          %692 = vmatmul.mubr.f32.gmra.mrb[0].mxu0 %v549
          %v693 = vpop.f32.mrb[0].mxu0
          %v694 = vadd.f32 %v522, %v693
          %v695 = vpop.f32.mrb[0].mxu0
          %696 = vmatprep.mubr.f32.mxu0 0.0
          %697 = vmatmul.mubr.f32.gmra.mrb[0].mxu0 %v552
          %v698 = vpop.f32.mrb[0].mxu0
          %v699 = vadd.f32 %v522, %v698
          %v700 = vpop.f32.mrb[0].mxu0
          %701 = vmatprep.mubr.f32.mxu0 0.0
          %702 = vmatmul.mubr.f32.gmra.mrb[0].mxu0 %v555
          %v703 = vpop.f32.mrb[0].mxu0
          %v704 = vadd.f32 %v522, %v703
          %v705 = vpop.f32.mrb[0].mxu0
          %706 = vmatprep.mubr.f32.mxu0 0.0
          %707 = vmatmul.mubr.f32.gmra.mrb[0].mxu0 %v558
          %v708 = vpop.f32.mrb[0].mxu0
          %v709 = vadd.f32 %v522, %v708
          %v710 = vpop.f32.mrb[0].mxu0
          %711 = vmatprep.mubr.f32.mxu0 0.0
          %712 = vmatmul.mubr.f32.gmra.mrb[0].mxu0 %v561
          %v713 = vpop.f32.mrb[0].mxu0
          %v714 = vadd.f32 %v522, %v713
          %v715 = vpop.f32.mrb[0].mxu0
          %716 = vmatprep.mubr.f32.mxu0 0.0
          %717 = vmatmul.mubr.f32.gmra.mrb[0].mxu0 %v564
          %v718 = vpop.f32.mrb[0].mxu0
          %v719 = vadd.f32 %v522, %v718
          %v720 = vpop.f32.mrb[0].mxu0
          %721 = vmatprep.mubr.f32.mxu0 0.0
          %722 = vmatmul.mubr.f32.gmra.mrb[0].mxu0 %v567
          %v723 = vpop.f32.mrb[0].mxu0
          %v724 = vadd.f32 %v522, %v723
          %v725 = vpop.f32.mrb[0].mxu0
          %726 = vmatprep.mubr.f32.mxu0 0.0
          %727 = vmatmul.mubr.f32.gmra.mrb[0].mxu0 %v570
          %v728 = vpop.f32.mrb[0].mxu0
          %v729 = vadd.f32 %v522, %v728
          %v730 = vpop.f32.mrb[0].mxu0
          %731 = vmatprep.mubr.f32.mxu0 0.0
          %732 = vmatmul.mubr.f32.gmra.mrb[0].mxu0 %v573
          %v733 = vpop.f32.mrb[0].mxu0
          %v734 = vadd.f32 %v522, %v733
          %v735 = vpop.f32.mrb[0].mxu0
          %736 = vmatprep.mubr.f32.mxu0 0.0
          %737 = vmatmul.mubr.f32.gmra.mrb[0].mxu0 %v576
          %v738 = vpop.f32.mrb[0].mxu0
          %v739 = vadd.f32 %v522, %v738
          %v740 = vpop.f32.mrb[0].mxu0
          %741 = vmatprep.mubr.f32.mxu0 0.0
          %742 = vmatmul.mubr.f32.gmra.mrb[0].mxu0 %v579
          %v743 = vpop.f32.mrb[0].mxu0
          %v744 = vadd.f32 %v522, %v743
          %v745 = vpop.f32.mrb[0].mxu0
          %746 = vmatprep.mubr.f32.mxu0 0.0
          %747 = vmatmul.mubr.f32.gmra.mrb[0].mxu0 %v582
          %v748 = vpop.f32.mrb[0].mxu0
          %v749 = vadd.f32 %v522, %v748
          %v750 = vpop.f32.mrb[0].mxu0
          %751 = vmatprep.mubr.f32.mxu0 0.0
          %752 = vmatmul.mubr.f32.gmra.mrb[0].mxu0 %v585
          %v753 = vpop.f32.mrb[0].mxu0
          %v754 = vadd.f32 %v522, %v753
          %v755 = vpop.f32.mrb[0].mxu0
          %756 = vdwg.mxu0
          %v757 = vmax.f32 %v654, 0.0
          %v758 = vmax.f32 %v659, 0.0
          %v759 = vmax.f32 %v664, 0.0
          %v760 = vmax.f32 %v669, 0.0
          %v761 = vmax.f32 %v674, 0.0
          %v762 = vmax.f32 %v679, 0.0
          %v763 = vmax.f32 %v684, 0.0
          %v764 = vmax.f32 %v689, 0.0
          %v765 = vmax.f32 %v694, 0.0
          %v766 = vmax.f32 %v699, 0.0
          %v767 = vmax.f32 %v704, 0.0
          %v768 = vmax.f32 %v709, 0.0
          %v769 = vmax.f32 %v714, 0.0
          %v770 = vmax.f32 %v719, 0.0
          %v771 = vmax.f32 %v724, 0.0
          %v772 = vmax.f32 %v729, 0.0
          %v773 = vmax.f32 %v734, 0.0
          %v774 = vmax.f32 %v739, 0.0
          %v775 = vmax.f32 %v744, 0.0
          %v776 = vmax.f32 %v749, 0.0
          %v777 = vmax.f32 %v754, 0.0
          %779 = vset.pattern.permute.xlu0 0
          %780 = vperm.xlu0 %779, %v404
          %v781 = vpop.permute.xlu0 %780
          %784 = vset.pattern.permute.xlu0 0
          %785 = vperm.xlu0 %784, %v405
          %v786 = vpop.permute.xlu0 %785
          %789 = vset.pattern.permute.xlu0 0
          %790 = vperm.xlu0 %789, %v406
          %v791 = vpop.permute.xlu0 %790
          %794 = vset.pattern.permute.xlu0 0
          %795 = vperm.xlu0 %794, %v407
          %v796 = vpop.permute.xlu0 %795
          %799 = vset.pattern.permute.xlu0 0
          %800 = vperm.xlu0 %799, %v408
          %v801 = vpop.permute.xlu0 %800
          %804 = vset.pattern.permute.xlu0 0
          %805 = vperm.xlu0 %804, %v409
          %v806 = vpop.permute.xlu0 %805
          %809 = vset.pattern.permute.xlu0 0
          %810 = vperm.xlu0 %809, %v410
          %v811 = vpop.permute.xlu0 %810
          %814 = vset.pattern.permute.xlu0 0
          %815 = vperm.xlu0 %814, %v411
          %v816 = vpop.permute.xlu0 %815
          %819 = vset.pattern.permute.xlu0 0
          %820 = vperm.xlu0 %819, %v412
          %v821 = vpop.permute.xlu0 %820
          %824 = vset.pattern.permute.xlu0 0
          %825 = vperm.xlu0 %824, %v413
          %v826 = vpop.permute.xlu0 %825
          %829 = vset.pattern.permute.xlu0 0
          %830 = vperm.xlu0 %829, %v414
          %v831 = vpop.permute.xlu0 %830
          %834 = vset.pattern.permute.xlu0 0
          %835 = vperm.xlu0 %834, %v415
          %v836 = vpop.permute.xlu0 %835
          %839 = vset.pattern.permute.xlu0 0
          %840 = vperm.xlu0 %839, %v416
          %v841 = vpop.permute.xlu0 %840
          %844 = vset.pattern.permute.xlu0 0
          %845 = vperm.xlu0 %844, %v417
          %v846 = vpop.permute.xlu0 %845
          %849 = vset.pattern.permute.xlu0 0
          %850 = vperm.xlu0 %849, %v418
          %v851 = vpop.permute.xlu0 %850
          %854 = vset.pattern.permute.xlu0 0
          %855 = vperm.xlu0 %854, %v419
          %v856 = vpop.permute.xlu0 %855
          %859 = vset.pattern.permute.xlu0 0
          %860 = vperm.xlu0 %859, %v420
          %v861 = vpop.permute.xlu0 %860
          %864 = vset.pattern.permute.xlu0 0
          %865 = vperm.xlu0 %864, %v421
          %v866 = vpop.permute.xlu0 %865
          %869 = vset.pattern.permute.xlu0 0
          %870 = vperm.xlu0 %869, %v422
          %v871 = vpop.permute.xlu0 %870
          %874 = vset.pattern.permute.xlu0 0
          %875 = vperm.xlu0 %874, %v423
          %v876 = vpop.permute.xlu0 %875
          %879 = vset.pattern.permute.xlu0 0
          %880 = vperm.xlu0 %879, %v424
          %v881 = vpop.permute.xlu0 %880
          %v883 = vmul.f32 %v757, %v781
          %v884 = vmul.f32 %v758, %v786
          %v885 = vmul.f32 %v759, %v791
          %v886 = vmul.f32 %v760, %v796
          %v887 = vmul.f32 %v761, %v801
          %v888 = vmul.f32 %v762, %v806
          %v889 = vmul.f32 %v763, %v811
          %v890 = vmul.f32 %v764, %v816
          %v891 = vmul.f32 %v765, %v821
          %v892 = vmul.f32 %v766, %v826
          %v893 = vmul.f32 %v767, %v831
          %v894 = vmul.f32 %v768, %v836
          %v895 = vmul.f32 %v769, %v841
          %v896 = vmul.f32 %v770, %v846
          %v897 = vmul.f32 %v771, %v851
          %v898 = vmul.f32 %v772, %v856
          %v899 = vmul.f32 %v773, %v861
          %v900 = vmul.f32 %v774, %v866
          %v901 = vmul.f32 %v775, %v871
          %v902 = vmul.f32 %v776, %v876
          %v903 = vmul.f32 %v777, %v881
          %925 = vrot.lane.b32.xlu0 %v883, 4
          %v926 = vpop.permute.xlu0 %925
          %927 = vrot.lane.b32.xlu0 %v884, 4
          %v928 = vpop.permute.xlu0 %927
          %929 = vrot.lane.b32.xlu0 %v885, 4
          %v930 = vpop.permute.xlu0 %929
          %931 = vrot.lane.b32.xlu0 %v886, 4
          %v932 = vpop.permute.xlu0 %931
          %933 = vrot.lane.b32.xlu0 %v887, 4
          %v934 = vpop.permute.xlu0 %933
          %935 = vrot.lane.b32.xlu0 %v888, 4
          %v936 = vpop.permute.xlu0 %935
          %937 = vrot.lane.b32.xlu0 %v889, 4
          %v938 = vpop.permute.xlu0 %937
          %939 = vrot.lane.b32.xlu0 %v890, 4
          %v940 = vpop.permute.xlu0 %939
          %941 = vrot.lane.b32.xlu0 %v891, 4
          %v942 = vpop.permute.xlu0 %941
          %943 = vrot.lane.b32.xlu0 %v892, 4
          %v944 = vpop.permute.xlu0 %943
          %945 = vrot.lane.b32.xlu0 %v893, 4
          %v946 = vpop.permute.xlu0 %945
          %947 = vrot.lane.b32.xlu0 %v894, 4
          %v948 = vpop.permute.xlu0 %947
          %949 = vrot.lane.b32.xlu0 %v895, 4
          %v950 = vpop.permute.xlu0 %949
          %951 = vrot.lane.b32.xlu0 %v896, 4
          %v952 = vpop.permute.xlu0 %951
          %953 = vrot.lane.b32.xlu0 %v897, 4
          %v954 = vpop.permute.xlu0 %953
          %955 = vrot.lane.b32.xlu0 %v898, 4
          %v956 = vpop.permute.xlu0 %955
          %957 = vrot.lane.b32.xlu0 %v899, 4
          %v958 = vpop.permute.xlu0 %957
          %959 = vrot.lane.b32.xlu0 %v900, 4
          %v960 = vpop.permute.xlu0 %959
          %961 = vrot.lane.b32.xlu0 %v901, 4
          %v962 = vpop.permute.xlu0 %961
          %963 = vrot.lane.b32.xlu0 %v902, 4
          %v964 = vpop.permute.xlu0 %963
          %965 = vrot.lane.b32.xlu0 %v903, 4
          %v966 = vpop.permute.xlu0 %965
          %vm988 = vcmask 64544
          %989 = vst.msk [vmem:[#allocation2] sm:$0xff] %vm988, %v926
          %990 = vst.msk [vmem:[#allocation2 + $0x8] sm:$0xff] %vm988, %v928
          %991 = vst.msk [vmem:[#allocation2 + $0x10] sm:$0xff] %vm988, %v930
          %992 = vst.msk [vmem:[#allocation2 + $0x18] sm:$0xff] %vm988, %v932
          %993 = vst.msk [vmem:[#allocation2 + $0x20] sm:$0xff] %vm988, %v934
          %994 = vst.msk [vmem:[#allocation2 + $0x28] sm:$0xff] %vm988, %v936
          %995 = vst.msk [vmem:[#allocation2 + $0x30] sm:$0xff] %vm988, %v938
          %996 = vst.msk [vmem:[#allocation2 + $0x38] sm:$0xff] %vm988, %v940
          %997 = vst.msk [vmem:[#allocation2 + $0x40] sm:$0xff] %vm988, %v942
          %998 = vst.msk [vmem:[#allocation2 + $0x48] sm:$0xff] %vm988, %v944
          %999 = vst.msk [vmem:[#allocation2 + $0x50] sm:$0xff] %vm988, %v946
          %1000 = vst.msk [vmem:[#allocation2 + $0x58] sm:$0xff] %vm988, %v948
          %1001 = vst.msk [vmem:[#allocation2 + $0x60] sm:$0xff] %vm988, %v950
          %1002 = vst.msk [vmem:[#allocation2 + $0x68] sm:$0xff] %vm988, %v952
          %1003 = vst.msk [vmem:[#allocation2 + $0x70] sm:$0xff] %vm988, %v954
          %1004 = vst.msk [vmem:[#allocation2 + $0x78] sm:$0xff] %vm988, %v956
          %1005 = vst.msk [vmem:[#allocation2 + $0x80] sm:$0xff] %vm988, %v958
          %1006 = vst.msk [vmem:[#allocation2 + $0x88] sm:$0xff] %vm988, %v960
          %1007 = vst.msk [vmem:[#allocation2 + $0x90] sm:$0xff] %vm988, %v962
          %1008 = vst.msk [vmem:[#allocation2 + $0x98] sm:$0xff] %vm988, %v964
          %1009 = vst.msk [vmem:[#allocation2 + $0xa0] sm:$0xff] %vm988, %v966
        $region60: #{tpu_custom_call.1} parent=55 // pred_fallthru
          _
        %p1010 = scmp.gt.s32.totalorder %s28, 0
        // Predicated region
        $region61: #{tpu_custom_call.1} parent=55 // pred_check
          %p1011 = pneg %p1010
        $region62: #{tpu_custom_call.1} parent=55 // pred_check_branch
          %1013 = sbr.rel (%p1011) target = $region64
        $region63: #{tpu_custom_call.1} parent=55 // pred_region
          %v1014 = vld [vmem:[#allocation2] sm:$0xff]
          %v1015 = vld [vmem:[#allocation2 + $0x8] sm:$0xff]
          %v1016 = vld [vmem:[#allocation2 + $0x10] sm:$0xff]
          %v1017 = vld [vmem:[#allocation2 + $0x18] sm:$0xff]
          %v1018 = vld [vmem:[#allocation2 + $0x20] sm:$0xff]
          %v1019 = vld [vmem:[#allocation2 + $0x28] sm:$0xff]
          %v1020 = vld [vmem:[#allocation2 + $0x30] sm:$0xff]
          %v1021 = vld [vmem:[#allocation2 + $0x38] sm:$0xff]
          %v1022 = vld [vmem:[#allocation2 + $0x40] sm:$0xff]
          %v1023 = vld [vmem:[#allocation2 + $0x48] sm:$0xff]
          %v1024 = vld [vmem:[#allocation2 + $0x50] sm:$0xff]
          %v1025 = vld [vmem:[#allocation2 + $0x58] sm:$0xff]
          %v1026 = vld [vmem:[#allocation2 + $0x60] sm:$0xff]
          %v1027 = vld [vmem:[#allocation2 + $0x68] sm:$0xff]
          %v1028 = vld [vmem:[#allocation2 + $0x70] sm:$0xff]
          %v1029 = vld [vmem:[#allocation2 + $0x78] sm:$0xff]
          %v1030 = vld [vmem:[#allocation2 + $0x80] sm:$0xff]
          %v1031 = vld [vmem:[#allocation2 + $0x88] sm:$0xff]
          %v1032 = vld [vmem:[#allocation2 + $0x90] sm:$0xff]
          %v1033 = vld [vmem:[#allocation2 + $0x98] sm:$0xff]
          %v1034 = vld [vmem:[#allocation2 + $0xa0] sm:$0xff]
          %1056 = vrot.lane.b32.xlu0 %v1014, 124
          %v1057 = vpop.permute.xlu0 %1056
          %1058 = vrot.lane.b32.xlu0 %v1015, 124
          %v1059 = vpop.permute.xlu0 %1058
          %1060 = vrot.lane.b32.xlu0 %v1016, 124
          %v1061 = vpop.permute.xlu0 %1060
          %1062 = vrot.lane.b32.xlu0 %v1017, 124
          %v1063 = vpop.permute.xlu0 %1062
          %1064 = vrot.lane.b32.xlu0 %v1018, 124
          %v1065 = vpop.permute.xlu0 %1064
          %1066 = vrot.lane.b32.xlu0 %v1019, 124
          %v1067 = vpop.permute.xlu0 %1066
          %1068 = vrot.lane.b32.xlu0 %v1020, 124
          %v1069 = vpop.permute.xlu0 %1068
          %1070 = vrot.lane.b32.xlu0 %v1021, 124
          %v1071 = vpop.permute.xlu0 %1070
          %1072 = vrot.lane.b32.xlu0 %v1022, 124
          %v1073 = vpop.permute.xlu0 %1072
          %1074 = vrot.lane.b32.xlu0 %v1023, 124
          %v1075 = vpop.permute.xlu0 %1074
          %1076 = vrot.lane.b32.xlu0 %v1024, 124
          %v1077 = vpop.permute.xlu0 %1076
          %1078 = vrot.lane.b32.xlu0 %v1025, 124
          %v1079 = vpop.permute.xlu0 %1078
          %1080 = vrot.lane.b32.xlu0 %v1026, 124
          %v1081 = vpop.permute.xlu0 %1080
          %1082 = vrot.lane.b32.xlu0 %v1027, 124
          %v1083 = vpop.permute.xlu0 %1082
          %1084 = vrot.lane.b32.xlu0 %v1028, 124
          %v1085 = vpop.permute.xlu0 %1084
          %1086 = vrot.lane.b32.xlu0 %v1029, 124
          %v1087 = vpop.permute.xlu0 %1086
          %1088 = vrot.lane.b32.xlu0 %v1030, 124
          %v1089 = vpop.permute.xlu0 %1088
          %1090 = vrot.lane.b32.xlu0 %v1031, 124
          %v1091 = vpop.permute.xlu0 %1090
          %1092 = vrot.lane.b32.xlu0 %v1032, 124
          %v1093 = vpop.permute.xlu0 %1092
          %1094 = vrot.lane.b32.xlu0 %v1033, 124
          %v1095 = vpop.permute.xlu0 %1094
          %1096 = vrot.lane.b32.xlu0 %v1034, 124
          %v1097 = vpop.permute.xlu0 %1096
          %vm1119 = vcmask 31744
          %1120 = vst.msk [vmem:[#allocation2] sm:$0xff] %vm1119, %v1057
          %1121 = vst.msk [vmem:[#allocation2 + $0x8] sm:$0xff] %vm1119, %v1059
          %1122 = vst.msk [vmem:[#allocation2 + $0x10] sm:$0xff] %vm1119, %v1061
          %1123 = vst.msk [vmem:[#allocation2 + $0x18] sm:$0xff] %vm1119, %v1063
          %1124 = vst.msk [vmem:[#allocation2 + $0x20] sm:$0xff] %vm1119, %v1065
          %1125 = vst.msk [vmem:[#allocation2 + $0x28] sm:$0xff] %vm1119, %v1067
          %1126 = vst.msk [vmem:[#allocation2 + $0x30] sm:$0xff] %vm1119, %v1069
          %1127 = vst.msk [vmem:[#allocation2 + $0x38] sm:$0xff] %vm1119, %v1071
          %1128 = vst.msk [vmem:[#allocation2 + $0x40] sm:$0xff] %vm1119, %v1073
          %1129 = vst.msk [vmem:[#allocation2 + $0x48] sm:$0xff] %vm1119, %v1075
          %1130 = vst.msk [vmem:[#allocation2 + $0x50] sm:$0xff] %vm1119, %v1077
          %1131 = vst.msk [vmem:[#allocation2 + $0x58] sm:$0xff] %vm1119, %v1079
          %1132 = vst.msk [vmem:[#allocation2 + $0x60] sm:$0xff] %vm1119, %v1081
          %1133 = vst.msk [vmem:[#allocation2 + $0x68] sm:$0xff] %vm1119, %v1083
          %1134 = vst.msk [vmem:[#allocation2 + $0x70] sm:$0xff] %vm1119, %v1085
          %1135 = vst.msk [vmem:[#allocation2 + $0x78] sm:$0xff] %vm1119, %v1087
          %1136 = vst.msk [vmem:[#allocation2 + $0x80] sm:$0xff] %vm1119, %v1089
          %1137 = vst.msk [vmem:[#allocation2 + $0x88] sm:$0xff] %vm1119, %v1091
          %1138 = vst.msk [vmem:[#allocation2 + $0x90] sm:$0xff] %vm1119, %v1093
          %1139 = vst.msk [vmem:[#allocation2 + $0x98] sm:$0xff] %vm1119, %v1095
          %1140 = vst.msk [vmem:[#allocation2 + $0xa0] sm:$0xff] %vm1119, %v1097
          %v1141 = vld [vmem:[#allocation2] sm:$0xff]
          %v1142 = vld [vmem:[#allocation2 + $0x8] sm:$0xff]
          %v1143 = vld [vmem:[#allocation2 + $0x10] sm:$0xff]
          %v1144 = vld [vmem:[#allocation2 + $0x18] sm:$0xff]
          %v1145 = vld [vmem:[#allocation2 + $0x20] sm:$0xff]
          %v1146 = vld [vmem:[#allocation2 + $0x28] sm:$0xff]
          %v1147 = vld [vmem:[#allocation2 + $0x30] sm:$0xff]
          %v1148 = vld [vmem:[#allocation2 + $0x38] sm:$0xff]
          %v1149 = vld [vmem:[#allocation2 + $0x40] sm:$0xff]
          %v1150 = vld [vmem:[#allocation2 + $0x48] sm:$0xff]
          %v1151 = vld [vmem:[#allocation2 + $0x50] sm:$0xff]
          %v1152 = vld [vmem:[#allocation2 + $0x58] sm:$0xff]
          %v1153 = vld [vmem:[#allocation2 + $0x60] sm:$0xff]
          %v1154 = vld [vmem:[#allocation2 + $0x68] sm:$0xff]
          %v1155 = vld [vmem:[#allocation2 + $0x70] sm:$0xff]
          %v1156 = vld [vmem:[#allocation2 + $0x78] sm:$0xff]
          %v1157 = vld [vmem:[#allocation2 + $0x80] sm:$0xff]
          %v1158 = vld [vmem:[#allocation2 + $0x88] sm:$0xff]
          %v1159 = vld [vmem:[#allocation2 + $0x90] sm:$0xff]
          %v1160 = vld [vmem:[#allocation2 + $0x98] sm:$0xff]
          %v1161 = vld [vmem:[#allocation2 + $0xa0] sm:$0xff]
          %1183 = vrot.lane.b32.xlu0 %v1141, 124
          %v1184 = vpop.permute.xlu0 %1183
          %1185 = vrot.lane.b32.xlu0 %v1142, 124
          %v1186 = vpop.permute.xlu0 %1185
          %1187 = vrot.lane.b32.xlu0 %v1143, 124
          %v1188 = vpop.permute.xlu0 %1187
          %1189 = vrot.lane.b32.xlu0 %v1144, 124
          %v1190 = vpop.permute.xlu0 %1189
          %1191 = vrot.lane.b32.xlu0 %v1145, 124
          %v1192 = vpop.permute.xlu0 %1191
          %1193 = vrot.lane.b32.xlu0 %v1146, 124
          %v1194 = vpop.permute.xlu0 %1193
          %1195 = vrot.lane.b32.xlu0 %v1147, 124
          %v1196 = vpop.permute.xlu0 %1195
          %1197 = vrot.lane.b32.xlu0 %v1148, 124
          %v1198 = vpop.permute.xlu0 %1197
          %1199 = vrot.lane.b32.xlu0 %v1149, 124
          %v1200 = vpop.permute.xlu0 %1199
          %1201 = vrot.lane.b32.xlu0 %v1150, 124
          %v1202 = vpop.permute.xlu0 %1201
          %1203 = vrot.lane.b32.xlu0 %v1151, 124
          %v1204 = vpop.permute.xlu0 %1203
          %1205 = vrot.lane.b32.xlu0 %v1152, 124
          %v1206 = vpop.permute.xlu0 %1205
          %1207 = vrot.lane.b32.xlu0 %v1153, 124
          %v1208 = vpop.permute.xlu0 %1207
          %1209 = vrot.lane.b32.xlu0 %v1154, 124
          %v1210 = vpop.permute.xlu0 %1209
          %1211 = vrot.lane.b32.xlu0 %v1155, 124
          %v1212 = vpop.permute.xlu0 %1211
          %1213 = vrot.lane.b32.xlu0 %v1156, 124
          %v1214 = vpop.permute.xlu0 %1213
          %1215 = vrot.lane.b32.xlu0 %v1157, 124
          %v1216 = vpop.permute.xlu0 %1215
          %1217 = vrot.lane.b32.xlu0 %v1158, 124
          %v1218 = vpop.permute.xlu0 %1217
          %1219 = vrot.lane.b32.xlu0 %v1159, 124
          %v1220 = vpop.permute.xlu0 %1219
          %1221 = vrot.lane.b32.xlu0 %v1160, 124
          %v1222 = vpop.permute.xlu0 %1221
          %1223 = vrot.lane.b32.xlu0 %v1161, 124
          %v1224 = vpop.permute.xlu0 %1223
          %vm1246 = vcmask 64544
          %1247 = vst.msk [vmem:[#allocation2] sm:$0xff] %vm1246, %v1184
          %1248 = vst.msk [vmem:[#allocation2 + $0x8] sm:$0xff] %vm1246, %v1186
          %1249 = vst.msk [vmem:[#allocation2 + $0x10] sm:$0xff] %vm1246, %v1188
          %1250 = vst.msk [vmem:[#allocation2 + $0x18] sm:$0xff] %vm1246, %v1190
          %1251 = vst.msk [vmem:[#allocation2 + $0x20] sm:$0xff] %vm1246, %v1192
          %1252 = vst.msk [vmem:[#allocation2 + $0x28] sm:$0xff] %vm1246, %v1194
          %1253 = vst.msk [vmem:[#allocation2 + $0x30] sm:$0xff] %vm1246, %v1196
          %1254 = vst.msk [vmem:[#allocation2 + $0x38] sm:$0xff] %vm1246, %v1198
          %1255 = vst.msk [vmem:[#allocation2 + $0x40] sm:$0xff] %vm1246, %v1200
          %1256 = vst.msk [vmem:[#allocation2 + $0x48] sm:$0xff] %vm1246, %v1202
          %1257 = vst.msk [vmem:[#allocation2 + $0x50] sm:$0xff] %vm1246, %v1204
          %1258 = vst.msk [vmem:[#allocation2 + $0x58] sm:$0xff] %vm1246, %v1206
          %1259 = vst.msk [vmem:[#allocation2 + $0x60] sm:$0xff] %vm1246, %v1208
          %1260 = vst.msk [vmem:[#allocation2 + $0x68] sm:$0xff] %vm1246, %v1210
          %1261 = vst.msk [vmem:[#allocation2 + $0x70] sm:$0xff] %vm1246, %v1212
          %1262 = vst.msk [vmem:[#allocation2 + $0x78] sm:$0xff] %vm1246, %v1214
          %1263 = vst.msk [vmem:[#allocation2 + $0x80] sm:$0xff] %vm1246, %v1216
          %1264 = vst.msk [vmem:[#allocation2 + $0x88] sm:$0xff] %vm1246, %v1218
          %1265 = vst.msk [vmem:[#allocation2 + $0x90] sm:$0xff] %vm1246, %v1220
          %1266 = vst.msk [vmem:[#allocation2 + $0x98] sm:$0xff] %vm1246, %v1222
          %1267 = vst.msk [vmem:[#allocation2 + $0xa0] sm:$0xff] %vm1246, %v1224
        $region64: #{tpu_custom_call.1} parent=55 // pred_fallthru
          _
        %s1268 = sadd.s32 %s28, 1
        %p1269 = scmp.lt.s32.totalorder %s1268, 4
        // Predicated region
        $region65: #{tpu_custom_call.1} parent=55 // pred_check
          %p1270 = pneg %p1269
        $region66: #{tpu_custom_call.1} parent=55 // pred_check_branch
          %1272 = sbr.rel (%p1270) target = $region68
        $region67: #{tpu_custom_call.1} parent=55 // pred_region
          %v1273 = vld [vmem:[%s398] sm:$0xff]
          %v1274 = vld [vmem:[%s398 + $0x8] sm:$0xff]
          %v1275 = vld [vmem:[%s398 + $0x10] sm:$0xff]
          %v1276 = vld [vmem:[%s398 + $0x18] sm:$0xff]
          %v1277 = vld [vmem:[%s398 + $0x20] sm:$0xff]
          %v1278 = vld [vmem:[%s398 + $0x28] sm:$0xff]
          %v1279 = vld [vmem:[%s398 + $0x30] sm:$0xff]
          %v1280 = vld [vmem:[%s398 + $0x38] sm:$0xff]
          %v1281 = vld [vmem:[%s398 + $0x40] sm:$0xff]
          %v1282 = vld [vmem:[%s398 + $0x48] sm:$0xff]
          %v1283 = vld [vmem:[%s398 + $0x50] sm:$0xff]
          %v1284 = vld [vmem:[%s398 + $0x58] sm:$0xff]
          %v1285 = vld [vmem:[%s398 + $0x60] sm:$0xff]
          %v1286 = vld [vmem:[%s398 + $0x68] sm:$0xff]
          %v1287 = vld [vmem:[%s398 + $0x70] sm:$0xff]
          %v1288 = vld [vmem:[%s398 + $0x78] sm:$0xff]
          %v1289 = vld [vmem:[%s398 + $0x80] sm:$0xff]
          %v1290 = vld [vmem:[%s398 + $0x88] sm:$0xff]
          %v1291 = vld [vmem:[%s398 + $0x90] sm:$0xff]
          %v1292 = vld [vmem:[%s398 + $0x98] sm:$0xff]
          %v1293 = vld [vmem:[%s398 + $0xa0] sm:$0xff]
          %v1295 = vlaneseq
          %v1296 = vshrl.u32 %v1295, 7
          %v1297 = vsub.s32 0, %v1296
          %v1298 = vrot.slane %v427, %v1297
          %vm1300 = vcmask 130048
          %v1302 = vsel %vm1300, %v1273, 0
          %v1305 = vsel %vm1300, %v1274, 0
          %v1308 = vsel %vm1300, %v1275, 0
          %v1311 = vsel %vm1300, %v1276, 0
          %v1314 = vsel %vm1300, %v1277, 0
          %v1317 = vsel %vm1300, %v1278, 0
          %v1320 = vsel %vm1300, %v1279, 0
          %v1323 = vsel %vm1300, %v1280, 0
          %v1326 = vsel %vm1300, %v1281, 0
          %v1329 = vsel %vm1300, %v1282, 0
          %v1332 = vsel %vm1300, %v1283, 0
          %v1335 = vsel %vm1300, %v1284, 0
          %v1338 = vsel %vm1300, %v1285, 0
          %v1341 = vsel %vm1300, %v1286, 0
          %v1344 = vsel %vm1300, %v1287, 0
          %v1347 = vsel %vm1300, %v1288, 0
          %v1350 = vsel %vm1300, %v1289, 0
          %v1353 = vsel %vm1300, %v1290, 0
          %v1356 = vsel %vm1300, %v1291, 0
          %v1359 = vsel %vm1300, %v1292, 0
          %v1362 = vsel %vm1300, %v1293, 0
          %1364 = vmatprep.subr.mxu0 0.0
          %1365 = vmatpush1.msra.mxu0 %v425
          %1366 = vmatprep.subr.mxu0 0.0
          %1367 = vmatpush1.msra.mxu0 %v426
          %1368 = vmatprep.subr.mxu0 0.0
          %1369 = vmatpush1.msra.mxu0 0.0
          %1370 = vmatprep.subr.mxu0 0.0
          %1371 = vmatpush1.msra.mxu0 0.0
          %1372 = vmatprep.subr.mxu0 0.0
          %1373 = vmatpush1.msra.mxu0 0.0
          %1374 = vmatprep.subr.mxu0 0.0
          %1375 = vmatpush1.msra.mxu0 0.0
          %1376 = vmatprep.subr.mxu0 0.0
          %1377 = vmatpush1.msra.mxu0 0.0
          %1378 = vmatprep.subr.mxu0 0.0
          %1379 = vmatpush1.msra.mxu0 0.0
          %1380 = vmatprep.subr.mxu0 0.0
          %1381 = vmatpush1.msra.mxu0 0.0
          %1382 = vmatprep.subr.mxu0 0.0
          %1383 = vmatpush1.msra.mxu0 0.0
          %1384 = vmatprep.subr.mxu0 0.0
          %1385 = vmatpush1.msra.mxu0 0.0
          %1386 = vmatprep.subr.mxu0 0.0
          %1387 = vmatpush1.msra.mxu0 0.0
          %1388 = vmatprep.subr.mxu0 0.0
          %1389 = vmatpush1.msra.mxu0 0.0
          %1390 = vmatprep.subr.mxu0 0.0
          %1391 = vmatpush1.msra.mxu0 0.0
          %1392 = vmatprep.subr.mxu0 0.0
          %1393 = vmatpush1.msra.mxu0 0.0
          %1394 = vmatprep.subr.mxu0 0.0
          %1395 = vmatpush1.msra.mxu0 0.0
          %1396 = vmatprep.subr.mxu0 0.0
          %1397 = vmatpush1.msra.mxu0 0.0
          %1398 = vmatprep.subr.mxu0 0.0
          %1399 = vmatpush1.msra.mxu0 0.0
          %1400 = vmatprep.subr.mxu0 0.0
          %1401 = vmatpush1.msra.mxu0 0.0
          %1402 = vmatprep.subr.mxu0 0.0
          %1403 = vmatpush1.msra.mxu0 0.0
          %1404 = vmatprep.subr.mxu0 0.0
          %1405 = vmatpush1.msra.mxu0 0.0
          %1406 = vmatprep.subr.mxu0 0.0
          %1407 = vmatpush1.msra.mxu0 0.0
          %1408 = vmatprep.subr.mxu0 0.0
          %1409 = vmatpush1.msra.mxu0 0.0
          %1410 = vmatprep.subr.mxu0 0.0
          %1411 = vmatpush1.msra.mxu0 0.0
          %1412 = vmatprep.subr.mxu0 0.0
          %1413 = vmatpush1.msra.mxu0 0.0
          %1414 = vmatprep.subr.mxu0 0.0
          %1415 = vmatpush1.msra.mxu0 0.0
          %1416 = vmatprep.subr.mxu0 0.0
          %1417 = vmatpush1.msra.mxu0 0.0
          %1418 = vmatprep.subr.mxu0 0.0
          %1419 = vmatpush1.msra.mxu0 0.0
          %1420 = vmatprep.subr.mxu0 0.0
          %1421 = vmatpush1.msra.mxu0 0.0
          %1422 = vmatprep.subr.mxu0 0.0
          %1423 = vmatpush1.msra.mxu0 0.0
          %1424 = vmatprep.subr.mxu0 0.0
          %1425 = vmatpush1.msra.mxu0 0.0
          %1426 = vmatprep.subr.mxu0 0.0
          %1427 = vmatpush1.msra.mxu0 0.0
          %1428 = vmatprep.mubr.f32.mxu0 0.0
          %1429 = vmatmul.mubr.f32.gmra.mrb[0].mxu0 %v1302
          %v1430 = vpop.f32.mrb[0].mxu0
          %v1431 = vadd.f32 %v1298, %v1430
          %v1432 = vpop.f32.mrb[0].mxu0
          %1433 = vmatprep.mubr.f32.mxu0 0.0
          %1434 = vmatmul.mubr.f32.gmra.mrb[0].mxu0 %v1305
          %v1435 = vpop.f32.mrb[0].mxu0
          %v1436 = vadd.f32 %v1298, %v1435
          %v1437 = vpop.f32.mrb[0].mxu0
          %1438 = vmatprep.mubr.f32.mxu0 0.0
          %1439 = vmatmul.mubr.f32.gmra.mrb[0].mxu0 %v1308
          %v1440 = vpop.f32.mrb[0].mxu0
          %v1441 = vadd.f32 %v1298, %v1440
          %v1442 = vpop.f32.mrb[0].mxu0
          %1443 = vmatprep.mubr.f32.mxu0 0.0
          %1444 = vmatmul.mubr.f32.gmra.mrb[0].mxu0 %v1311
          %v1445 = vpop.f32.mrb[0].mxu0
          %v1446 = vadd.f32 %v1298, %v1445
          %v1447 = vpop.f32.mrb[0].mxu0
          %1448 = vmatprep.mubr.f32.mxu0 0.0
          %1449 = vmatmul.mubr.f32.gmra.mrb[0].mxu0 %v1314
          %v1450 = vpop.f32.mrb[0].mxu0
          %v1451 = vadd.f32 %v1298, %v1450
          %v1452 = vpop.f32.mrb[0].mxu0
          %1453 = vmatprep.mubr.f32.mxu0 0.0
          %1454 = vmatmul.mubr.f32.gmra.mrb[0].mxu0 %v1317
          %v1455 = vpop.f32.mrb[0].mxu0
          %v1456 = vadd.f32 %v1298, %v1455
          %v1457 = vpop.f32.mrb[0].mxu0
          %1458 = vmatprep.mubr.f32.mxu0 0.0
          %1459 = vmatmul.mubr.f32.gmra.mrb[0].mxu0 %v1320
          %v1460 = vpop.f32.mrb[0].mxu0
          %v1461 = vadd.f32 %v1298, %v1460
          %v1462 = vpop.f32.mrb[0].mxu0
          %1463 = vmatprep.mubr.f32.mxu0 0.0
          %1464 = vmatmul.mubr.f32.gmra.mrb[0].mxu0 %v1323
          %v1465 = vpop.f32.mrb[0].mxu0
          %v1466 = vadd.f32 %v1298, %v1465
          %v1467 = vpop.f32.mrb[0].mxu0
          %1468 = vmatprep.mubr.f32.mxu0 0.0
          %1469 = vmatmul.mubr.f32.gmra.mrb[0].mxu0 %v1326
          %v1470 = vpop.f32.mrb[0].mxu0
          %v1471 = vadd.f32 %v1298, %v1470
          %v1472 = vpop.f32.mrb[0].mxu0
          %1473 = vmatprep.mubr.f32.mxu0 0.0
          %1474 = vmatmul.mubr.f32.gmra.mrb[0].mxu0 %v1329
          %v1475 = vpop.f32.mrb[0].mxu0
          %v1476 = vadd.f32 %v1298, %v1475
          %v1477 = vpop.f32.mrb[0].mxu0
          %1478 = vmatprep.mubr.f32.mxu0 0.0
          %1479 = vmatmul.mubr.f32.gmra.mrb[0].mxu0 %v1332
          %v1480 = vpop.f32.mrb[0].mxu0
          %v1481 = vadd.f32 %v1298, %v1480
          %v1482 = vpop.f32.mrb[0].mxu0
          %1483 = vmatprep.mubr.f32.mxu0 0.0
          %1484 = vmatmul.mubr.f32.gmra.mrb[0].mxu0 %v1335
          %v1485 = vpop.f32.mrb[0].mxu0
          %v1486 = vadd.f32 %v1298, %v1485
          %v1487 = vpop.f32.mrb[0].mxu0
          %1488 = vmatprep.mubr.f32.mxu0 0.0
          %1489 = vmatmul.mubr.f32.gmra.mrb[0].mxu0 %v1338
          %v1490 = vpop.f32.mrb[0].mxu0
          %v1491 = vadd.f32 %v1298, %v1490
          %v1492 = vpop.f32.mrb[0].mxu0
          %1493 = vmatprep.mubr.f32.mxu0 0.0
          %1494 = vmatmul.mubr.f32.gmra.mrb[0].mxu0 %v1341
          %v1495 = vpop.f32.mrb[0].mxu0
          %v1496 = vadd.f32 %v1298, %v1495
          %v1497 = vpop.f32.mrb[0].mxu0
          %1498 = vmatprep.mubr.f32.mxu0 0.0
          %1499 = vmatmul.mubr.f32.gmra.mrb[0].mxu0 %v1344
          %v1500 = vpop.f32.mrb[0].mxu0
          %v1501 = vadd.f32 %v1298, %v1500
          %v1502 = vpop.f32.mrb[0].mxu0
          %1503 = vmatprep.mubr.f32.mxu0 0.0
          %1504 = vmatmul.mubr.f32.gmra.mrb[0].mxu0 %v1347
          %v1505 = vpop.f32.mrb[0].mxu0
          %v1506 = vadd.f32 %v1298, %v1505
          %v1507 = vpop.f32.mrb[0].mxu0
          %1508 = vmatprep.mubr.f32.mxu0 0.0
          %1509 = vmatmul.mubr.f32.gmra.mrb[0].mxu0 %v1350
          %v1510 = vpop.f32.mrb[0].mxu0
          %v1511 = vadd.f32 %v1298, %v1510
          %v1512 = vpop.f32.mrb[0].mxu0
          %1513 = vmatprep.mubr.f32.mxu0 0.0
          %1514 = vmatmul.mubr.f32.gmra.mrb[0].mxu0 %v1353
          %v1515 = vpop.f32.mrb[0].mxu0
          %v1516 = vadd.f32 %v1298, %v1515
          %v1517 = vpop.f32.mrb[0].mxu0
          %1518 = vmatprep.mubr.f32.mxu0 0.0
          %1519 = vmatmul.mubr.f32.gmra.mrb[0].mxu0 %v1356
          %v1520 = vpop.f32.mrb[0].mxu0
          %v1521 = vadd.f32 %v1298, %v1520
          %v1522 = vpop.f32.mrb[0].mxu0
          %1523 = vmatprep.mubr.f32.mxu0 0.0
          %1524 = vmatmul.mubr.f32.gmra.mrb[0].mxu0 %v1359
          %v1525 = vpop.f32.mrb[0].mxu0
          %v1526 = vadd.f32 %v1298, %v1525
          %v1527 = vpop.f32.mrb[0].mxu0
          %1528 = vmatprep.mubr.f32.mxu0 0.0
          %1529 = vmatmul.mubr.f32.gmra.mrb[0].mxu0 %v1362
          %v1530 = vpop.f32.mrb[0].mxu0
          %v1531 = vadd.f32 %v1298, %v1530
          %v1532 = vpop.f32.mrb[0].mxu0
          %1533 = vdwg.mxu0
          %v1534 = vmax.f32 %v1431, 0.0
          %v1535 = vmax.f32 %v1436, 0.0
          %v1536 = vmax.f32 %v1441, 0.0
          %v1537 = vmax.f32 %v1446, 0.0
          %v1538 = vmax.f32 %v1451, 0.0
          %v1539 = vmax.f32 %v1456, 0.0
          %v1540 = vmax.f32 %v1461, 0.0
          %v1541 = vmax.f32 %v1466, 0.0
          %v1542 = vmax.f32 %v1471, 0.0
          %v1543 = vmax.f32 %v1476, 0.0
          %v1544 = vmax.f32 %v1481, 0.0
          %v1545 = vmax.f32 %v1486, 0.0
          %v1546 = vmax.f32 %v1491, 0.0
          %v1547 = vmax.f32 %v1496, 0.0
          %v1548 = vmax.f32 %v1501, 0.0
          %v1549 = vmax.f32 %v1506, 0.0
          %v1550 = vmax.f32 %v1511, 0.0
          %v1551 = vmax.f32 %v1516, 0.0
          %v1552 = vmax.f32 %v1521, 0.0
          %v1553 = vmax.f32 %v1526, 0.0
          %v1554 = vmax.f32 %v1531, 0.0
          %1556 = vset.pattern.permute.xlu0 0
          %1557 = vperm.xlu0 %1556, %v404
          %v1558 = vpop.permute.xlu0 %1557
          %1561 = vset.pattern.permute.xlu0 0
          %1562 = vperm.xlu0 %1561, %v405
          %v1563 = vpop.permute.xlu0 %1562
          %1566 = vset.pattern.permute.xlu0 0
          %1567 = vperm.xlu0 %1566, %v406
          %v1568 = vpop.permute.xlu0 %1567
          %1571 = vset.pattern.permute.xlu0 0
          %1572 = vperm.xlu0 %1571, %v407
          %v1573 = vpop.permute.xlu0 %1572
          %1576 = vset.pattern.permute.xlu0 0
          %1577 = vperm.xlu0 %1576, %v408
          %v1578 = vpop.permute.xlu0 %1577
          %1581 = vset.pattern.permute.xlu0 0
          %1582 = vperm.xlu0 %1581, %v409
          %v1583 = vpop.permute.xlu0 %1582
          %1586 = vset.pattern.permute.xlu0 0
          %1587 = vperm.xlu0 %1586, %v410
          %v1588 = vpop.permute.xlu0 %1587
          %1591 = vset.pattern.permute.xlu0 0
          %1592 = vperm.xlu0 %1591, %v411
          %v1593 = vpop.permute.xlu0 %1592
          %1596 = vset.pattern.permute.xlu0 0
          %1597 = vperm.xlu0 %1596, %v412
          %v1598 = vpop.permute.xlu0 %1597
          %1601 = vset.pattern.permute.xlu0 0
          %1602 = vperm.xlu0 %1601, %v413
          %v1603 = vpop.permute.xlu0 %1602
          %1606 = vset.pattern.permute.xlu0 0
          %1607 = vperm.xlu0 %1606, %v414
          %v1608 = vpop.permute.xlu0 %1607
          %1611 = vset.pattern.permute.xlu0 0
          %1612 = vperm.xlu0 %1611, %v415
          %v1613 = vpop.permute.xlu0 %1612
          %1616 = vset.pattern.permute.xlu0 0
          %1617 = vperm.xlu0 %1616, %v416
          %v1618 = vpop.permute.xlu0 %1617
          %1621 = vset.pattern.permute.xlu0 0
          %1622 = vperm.xlu0 %1621, %v417
          %v1623 = vpop.permute.xlu0 %1622
          %1626 = vset.pattern.permute.xlu0 0
          %1627 = vperm.xlu0 %1626, %v418
          %v1628 = vpop.permute.xlu0 %1627
          %1631 = vset.pattern.permute.xlu0 0
          %1632 = vperm.xlu0 %1631, %v419
          %v1633 = vpop.permute.xlu0 %1632
          %1636 = vset.pattern.permute.xlu0 0
          %1637 = vperm.xlu0 %1636, %v420
          %v1638 = vpop.permute.xlu0 %1637
          %1641 = vset.pattern.permute.xlu0 0
          %1642 = vperm.xlu0 %1641, %v421
          %v1643 = vpop.permute.xlu0 %1642
          %1646 = vset.pattern.permute.xlu0 0
          %1647 = vperm.xlu0 %1646, %v422
          %v1648 = vpop.permute.xlu0 %1647
          %1651 = vset.pattern.permute.xlu0 0
          %1652 = vperm.xlu0 %1651, %v423
          %v1653 = vpop.permute.xlu0 %1652
          %1656 = vset.pattern.permute.xlu0 0
          %1657 = vperm.xlu0 %1656, %v424
          %v1658 = vpop.permute.xlu0 %1657
          %v1660 = vmul.f32 %v1534, %v1558
          %v1661 = vmul.f32 %v1535, %v1563
          %v1662 = vmul.f32 %v1536, %v1568
          %v1663 = vmul.f32 %v1537, %v1573
          %v1664 = vmul.f32 %v1538, %v1578
          %v1665 = vmul.f32 %v1539, %v1583
          %v1666 = vmul.f32 %v1540, %v1588
          %v1667 = vmul.f32 %v1541, %v1593
          %v1668 = vmul.f32 %v1542, %v1598
          %v1669 = vmul.f32 %v1543, %v1603
          %v1670 = vmul.f32 %v1544, %v1608
          %v1671 = vmul.f32 %v1545, %v1613
          %v1672 = vmul.f32 %v1546, %v1618
          %v1673 = vmul.f32 %v1547, %v1623
          %v1674 = vmul.f32 %v1548, %v1628
          %v1675 = vmul.f32 %v1549, %v1633
          %v1676 = vmul.f32 %v1550, %v1638
          %v1677 = vmul.f32 %v1551, %v1643
          %v1678 = vmul.f32 %v1552, %v1648
          %v1679 = vmul.f32 %v1553, %v1653
          %v1680 = vmul.f32 %v1554, %v1658
          %1702 = vrot.lane.b32.xlu0 %v1660, 8
          %v1703 = vpop.permute.xlu0 %1702
          %1704 = vrot.lane.b32.xlu0 %v1661, 8
          %v1705 = vpop.permute.xlu0 %1704
          %1706 = vrot.lane.b32.xlu0 %v1662, 8
          %v1707 = vpop.permute.xlu0 %1706
          %1708 = vrot.lane.b32.xlu0 %v1663, 8
          %v1709 = vpop.permute.xlu0 %1708
          %1710 = vrot.lane.b32.xlu0 %v1664, 8
          %v1711 = vpop.permute.xlu0 %1710
          %1712 = vrot.lane.b32.xlu0 %v1665, 8
          %v1713 = vpop.permute.xlu0 %1712
          %1714 = vrot.lane.b32.xlu0 %v1666, 8
          %v1715 = vpop.permute.xlu0 %1714
          %1716 = vrot.lane.b32.xlu0 %v1667, 8
          %v1717 = vpop.permute.xlu0 %1716
          %1718 = vrot.lane.b32.xlu0 %v1668, 8
          %v1719 = vpop.permute.xlu0 %1718
          %1720 = vrot.lane.b32.xlu0 %v1669, 8
          %v1721 = vpop.permute.xlu0 %1720
          %1722 = vrot.lane.b32.xlu0 %v1670, 8
          %v1723 = vpop.permute.xlu0 %1722
          %1724 = vrot.lane.b32.xlu0 %v1671, 8
          %v1725 = vpop.permute.xlu0 %1724
          %1726 = vrot.lane.b32.xlu0 %v1672, 8
          %v1727 = vpop.permute.xlu0 %1726
          %1728 = vrot.lane.b32.xlu0 %v1673, 8
          %v1729 = vpop.permute.xlu0 %1728
          %1730 = vrot.lane.b32.xlu0 %v1674, 8
          %v1731 = vpop.permute.xlu0 %1730
          %1732 = vrot.lane.b32.xlu0 %v1675, 8
          %v1733 = vpop.permute.xlu0 %1732
          %1734 = vrot.lane.b32.xlu0 %v1676, 8
          %v1735 = vpop.permute.xlu0 %1734
          %1736 = vrot.lane.b32.xlu0 %v1677, 8
          %v1737 = vpop.permute.xlu0 %1736
          %1738 = vrot.lane.b32.xlu0 %v1678, 8
          %v1739 = vpop.permute.xlu0 %1738
          %1740 = vrot.lane.b32.xlu0 %v1679, 8
          %v1741 = vpop.permute.xlu0 %1740
          %1742 = vrot.lane.b32.xlu0 %v1680, 8
          %v1743 = vpop.permute.xlu0 %1742
          %vm1765 = vcmask 97344
          %1766 = vst.msk [vmem:[#allocation2] sm:$0xff] %vm1765, %v1703
          %1767 = vst.msk [vmem:[#allocation2 + $0x8] sm:$0xff] %vm1765, %v1705
          %1768 = vst.msk [vmem:[#allocation2 + $0x10] sm:$0xff] %vm1765, %v1707
          %1769 = vst.msk [vmem:[#allocation2 + $0x18] sm:$0xff] %vm1765, %v1709
          %1770 = vst.msk [vmem:[#allocation2 + $0x20] sm:$0xff] %vm1765, %v1711
          %1771 = vst.msk [vmem:[#allocation2 + $0x28] sm:$0xff] %vm1765, %v1713
          %1772 = vst.msk [vmem:[#allocation2 + $0x30] sm:$0xff] %vm1765, %v1715
          %1773 = vst.msk [vmem:[#allocation2 + $0x38] sm:$0xff] %vm1765, %v1717
          %1774 = vst.msk [vmem:[#allocation2 + $0x40] sm:$0xff] %vm1765, %v1719
          %1775 = vst.msk [vmem:[#allocation2 + $0x48] sm:$0xff] %vm1765, %v1721
          %1776 = vst.msk [vmem:[#allocation2 + $0x50] sm:$0xff] %vm1765, %v1723
          %1777 = vst.msk [vmem:[#allocation2 + $0x58] sm:$0xff] %vm1765, %v1725
          %1778 = vst.msk [vmem:[#allocation2 + $0x60] sm:$0xff] %vm1765, %v1727
          %1779 = vst.msk [vmem:[#allocation2 + $0x68] sm:$0xff] %vm1765, %v1729
          %1780 = vst.msk [vmem:[#allocation2 + $0x70] sm:$0xff] %vm1765, %v1731
          %1781 = vst.msk [vmem:[#allocation2 + $0x78] sm:$0xff] %vm1765, %v1733
          %1782 = vst.msk [vmem:[#allocation2 + $0x80] sm:$0xff] %vm1765, %v1735
          %1783 = vst.msk [vmem:[#allocation2 + $0x88] sm:$0xff] %vm1765, %v1737
          %1784 = vst.msk [vmem:[#allocation2 + $0x90] sm:$0xff] %vm1765, %v1739
          %1785 = vst.msk [vmem:[#allocation2 + $0x98] sm:$0xff] %vm1765, %v1741
          %1786 = vst.msk [vmem:[#allocation2 + $0xa0] sm:$0xff] %vm1765, %v1743
        $region68: #{tpu_custom_call.1} parent=55 // pred_fallthru
          _
        %p1787 = scmp.ge.s32.totalorder %s1268, 4
        // Predicated region
        $region69: #{tpu_custom_call.1} parent=55 // pred_check
          %p1788 = pneg %p1787
        $region70: #{tpu_custom_call.1} parent=55 // pred_check_branch
          %1790 = sbr.rel (%p1788) target = $region72
        $region71: #{tpu_custom_call.1} parent=55 // pred_region
          %vm1791 = vcmask 97344
          %1792 = vst.msk [vmem:[#allocation2] sm:$0xff] %vm1791, 0.0
          %1793 = vst.msk [vmem:[#allocation2 + $0x8] sm:$0xff] %vm1791, 0.0
          %1794 = vst.msk [vmem:[#allocation2 + $0x10] sm:$0xff] %vm1791, 0.0
          %1795 = vst.msk [vmem:[#allocation2 + $0x18] sm:$0xff] %vm1791, 0.0
          %1796 = vst.msk [vmem:[#allocation2 + $0x20] sm:$0xff] %vm1791, 0.0
          %1797 = vst.msk [vmem:[#allocation2 + $0x28] sm:$0xff] %vm1791, 0.0
          %1798 = vst.msk [vmem:[#allocation2 + $0x30] sm:$0xff] %vm1791, 0.0
          %1799 = vst.msk [vmem:[#allocation2 + $0x38] sm:$0xff] %vm1791, 0.0
          %1800 = vst.msk [vmem:[#allocation2 + $0x40] sm:$0xff] %vm1791, 0.0
          %1801 = vst.msk [vmem:[#allocation2 + $0x48] sm:$0xff] %vm1791, 0.0
          %1802 = vst.msk [vmem:[#allocation2 + $0x50] sm:$0xff] %vm1791, 0.0
          %1803 = vst.msk [vmem:[#allocation2 + $0x58] sm:$0xff] %vm1791, 0.0
          %1804 = vst.msk [vmem:[#allocation2 + $0x60] sm:$0xff] %vm1791, 0.0
          %1805 = vst.msk [vmem:[#allocation2 + $0x68] sm:$0xff] %vm1791, 0.0
          %1806 = vst.msk [vmem:[#allocation2 + $0x70] sm:$0xff] %vm1791, 0.0
          %1807 = vst.msk [vmem:[#allocation2 + $0x78] sm:$0xff] %vm1791, 0.0
          %1808 = vst.msk [vmem:[#allocation2 + $0x80] sm:$0xff] %vm1791, 0.0
          %1809 = vst.msk [vmem:[#allocation2 + $0x88] sm:$0xff] %vm1791, 0.0
          %1810 = vst.msk [vmem:[#allocation2 + $0x90] sm:$0xff] %vm1791, 0.0
          %1811 = vst.msk [vmem:[#allocation2 + $0x98] sm:$0xff] %vm1791, 0.0
          %1812 = vst.msk [vmem:[#allocation2 + $0xa0] sm:$0xff] %vm1791, 0.0
        $region72: #{tpu_custom_call.1} parent=55 // pred_fallthru
          _
        %v1813 = vld [vmem:[#allocation2] sm:$0xff]
        %v1814 = vld [vmem:[#allocation2 + $0x8] sm:$0xff]
        %v1815 = vld [vmem:[#allocation2 + $0x10] sm:$0xff]
        %v1816 = vld [vmem:[#allocation2 + $0x18] sm:$0xff]
        %v1817 = vld [vmem:[#allocation2 + $0x20] sm:$0xff]
        %v1818 = vld [vmem:[#allocation2 + $0x28] sm:$0xff]
        %v1819 = vld [vmem:[#allocation2 + $0x30] sm:$0xff]
        %v1820 = vld [vmem:[#allocation2 + $0x38] sm:$0xff]
        %v1821 = vld [vmem:[#allocation2 + $0x40] sm:$0xff]
        %v1822 = vld [vmem:[#allocation2 + $0x48] sm:$0xff]
        %v1823 = vld [vmem:[#allocation2 + $0x50] sm:$0xff]
        %v1824 = vld [vmem:[#allocation2 + $0x58] sm:$0xff]
        %v1825 = vld [vmem:[#allocation2 + $0x60] sm:$0xff]
        %v1826 = vld [vmem:[#allocation2 + $0x68] sm:$0xff]
        %v1827 = vld [vmem:[#allocation2 + $0x70] sm:$0xff]
        %v1828 = vld [vmem:[#allocation2 + $0x78] sm:$0xff]
        %v1829 = vld [vmem:[%s4] sm:$0xff]
        %v1830 = vld [vmem:[%s4 + $0x8] sm:$0xf]
        %v1831 = vld [vmem:[#allocation2 + $0x1] sm:$0xff]
        %v1832 = vld [vmem:[#allocation2 + $0x9] sm:$0xff]
        %v1833 = vld [vmem:[#allocation2 + $0x11] sm:$0xff]
        %v1834 = vld [vmem:[#allocation2 + $0x19] sm:$0xff]
        %v1835 = vld [vmem:[#allocation2 + $0x21] sm:$0xff]
        %v1836 = vld [vmem:[#allocation2 + $0x29] sm:$0xff]
        %v1837 = vld [vmem:[#allocation2 + $0x31] sm:$0xff]
        %v1838 = vld [vmem:[#allocation2 + $0x39] sm:$0xff]
        %v1839 = vld [vmem:[#allocation2 + $0x41] sm:$0xff]
        %v1840 = vld [vmem:[#allocation2 + $0x49] sm:$0xff]
        %v1841 = vld [vmem:[#allocation2 + $0x51] sm:$0xff]
        %v1842 = vld [vmem:[#allocation2 + $0x59] sm:$0xff]
        %v1843 = vld [vmem:[#allocation2 + $0x61] sm:$0xff]
        %v1844 = vld [vmem:[#allocation2 + $0x69] sm:$0xff]
        %v1845 = vld [vmem:[#allocation2 + $0x71] sm:$0xff]
        %v1846 = vld [vmem:[#allocation2 + $0x79] sm:$0xff]
        %s1847 = scalar_lea.vmem %s4, 16
        %v1848 = vld [vmem:[%s1847] sm:$0xff]
        %v1849 = vld [vmem:[%s1847 + $0x8] sm:$0xf]
        %vm1850 = vcmask 97280
        %v1852 = vsel %vm1850, %v1831, 0
        %v1855 = vsel %vm1850, %v1832, 0
        %v1858 = vsel %vm1850, %v1833, 0
        %v1861 = vsel %vm1850, %v1834, 0
        %v1864 = vsel %vm1850, %v1835, 0
        %v1867 = vsel %vm1850, %v1836, 0
        %v1870 = vsel %vm1850, %v1837, 0
        %v1873 = vsel %vm1850, %v1838, 0
        %v1876 = vsel %vm1850, %v1839, 0
        %v1879 = vsel %vm1850, %v1840, 0
        %v1882 = vsel %vm1850, %v1841, 0
        %v1885 = vsel %vm1850, %v1842, 0
        %v1888 = vsel %vm1850, %v1843, 0
        %v1891 = vsel %vm1850, %v1844, 0
        %v1894 = vsel %vm1850, %v1845, 0
        %v1897 = vsel %vm1850, %v1846, 0
        %vm1899 = vcmask 1043456
        %v1901 = vsel %vm1899, %v1849, 0
        %1903 = vmatprep.subr.mxu0 0.0
        %1904 = vmatpush1.msra.mxu0 %v1848
        %1905 = vmatprep.subr.mxu0 0.0
        %1906 = vmatpush1.msra.mxu0 %v1901
        %1907 = vmatprep.subr.mxu0 0.0
        %1908 = vmatpush1.msra.mxu0 0.0
        %1909 = vmatprep.subr.mxu0 0.0
        %1910 = vmatpush1.msra.mxu0 0.0
        %1911 = vmatprep.subr.mxu0 0.0
        %1912 = vmatpush1.msra.mxu0 0.0
        %1913 = vmatprep.subr.mxu0 0.0
        %1914 = vmatpush1.msra.mxu0 0.0
        %1915 = vmatprep.subr.mxu0 0.0
        %1916 = vmatpush1.msra.mxu0 0.0
        %1917 = vmatprep.subr.mxu0 0.0
        %1918 = vmatpush1.msra.mxu0 0.0
        %1919 = vmatprep.subr.mxu0 0.0
        %1920 = vmatpush1.msra.mxu0 0.0
        %1921 = vmatprep.subr.mxu0 0.0
        %1922 = vmatpush1.msra.mxu0 0.0
        %1923 = vmatprep.subr.mxu0 0.0
        %1924 = vmatpush1.msra.mxu0 0.0
        %1925 = vmatprep.subr.mxu0 0.0
        %1926 = vmatpush1.msra.mxu0 0.0
        %1927 = vmatprep.subr.mxu0 0.0
        %1928 = vmatpush1.msra.mxu0 0.0
        %1929 = vmatprep.subr.mxu0 0.0
        %1930 = vmatpush1.msra.mxu0 0.0
        %1931 = vmatprep.subr.mxu0 0.0
        %1932 = vmatpush1.msra.mxu0 0.0
        %1933 = vmatprep.subr.mxu0 0.0
        %1934 = vmatpush1.msra.mxu0 0.0
        %1935 = vmatprep.subr.mxu0 0.0
        %1936 = vmatpush1.msra.mxu0 0.0
        %1937 = vmatprep.subr.mxu0 0.0
        %1938 = vmatpush1.msra.mxu0 0.0
        %1939 = vmatprep.subr.mxu0 0.0
        %1940 = vmatpush1.msra.mxu0 0.0
        %1941 = vmatprep.subr.mxu0 0.0
        %1942 = vmatpush1.msra.mxu0 0.0
        %1943 = vmatprep.subr.mxu0 0.0
        %1944 = vmatpush1.msra.mxu0 0.0
        %1945 = vmatprep.subr.mxu0 0.0
        %1946 = vmatpush1.msra.mxu0 0.0
        %1947 = vmatprep.subr.mxu0 0.0
        %1948 = vmatpush1.msra.mxu0 0.0
        %1949 = vmatprep.subr.mxu0 0.0
        %1950 = vmatpush1.msra.mxu0 0.0
        %1951 = vmatprep.subr.mxu0 0.0
        %1952 = vmatpush1.msra.mxu0 0.0
        %1953 = vmatprep.subr.mxu0 0.0
        %1954 = vmatpush1.msra.mxu0 0.0
        %1955 = vmatprep.subr.mxu0 0.0
        %1956 = vmatpush1.msra.mxu0 0.0
        %1957 = vmatprep.subr.mxu0 0.0
        %1958 = vmatpush1.msra.mxu0 0.0
        %1959 = vmatprep.subr.mxu0 0.0
        %1960 = vmatpush1.msra.mxu0 0.0
        %1961 = vmatprep.subr.mxu0 0.0
        %1962 = vmatpush1.msra.mxu0 0.0
        %1963 = vmatprep.subr.mxu0 0.0
        %1964 = vmatpush1.msra.mxu0 0.0
        %1965 = vmatprep.subr.mxu0 0.0
        %1966 = vmatpush1.msra.mxu0 0.0
        %1967 = vmatprep.mubr.f32.mxu0 0.0
        %1968 = vmatmul.mubr.f32.gmra.mrb[0].mxu0 %v1852
        %v1969 = vpop.f32.mrb[0].mxu0
        %v1970 = vadd.f32 0.0, %v1969
        %v1971 = vpop.f32.mrb[0].mxu0
        %1972 = vmatprep.mubr.f32.mxu0 0.0
        %1973 = vmatmul.mubr.f32.gmra.mrb[0].mxu0 %v1855
        %v1974 = vpop.f32.mrb[0].mxu0
        %v1975 = vadd.f32 0.0, %v1974
        %v1976 = vpop.f32.mrb[0].mxu0
        %1977 = vmatprep.mubr.f32.mxu0 0.0
        %1978 = vmatmul.mubr.f32.gmra.mrb[0].mxu0 %v1858
        %v1979 = vpop.f32.mrb[0].mxu0
        %v1980 = vadd.f32 0.0, %v1979
        %v1981 = vpop.f32.mrb[0].mxu0
        %1982 = vmatprep.mubr.f32.mxu0 0.0
        %1983 = vmatmul.mubr.f32.gmra.mrb[0].mxu0 %v1861
        %v1984 = vpop.f32.mrb[0].mxu0
        %v1985 = vadd.f32 0.0, %v1984
        %v1986 = vpop.f32.mrb[0].mxu0
        %1987 = vmatprep.mubr.f32.mxu0 0.0
        %1988 = vmatmul.mubr.f32.gmra.mrb[0].mxu0 %v1864
        %v1989 = vpop.f32.mrb[0].mxu0
        %v1990 = vadd.f32 0.0, %v1989
        %v1991 = vpop.f32.mrb[0].mxu0
        %1992 = vmatprep.mubr.f32.mxu0 0.0
        %1993 = vmatmul.mubr.f32.gmra.mrb[0].mxu0 %v1867
        %v1994 = vpop.f32.mrb[0].mxu0
        %v1995 = vadd.f32 0.0, %v1994
        %v1996 = vpop.f32.mrb[0].mxu0
        %1997 = vmatprep.mubr.f32.mxu0 0.0
        %1998 = vmatmul.mubr.f32.gmra.mrb[0].mxu0 %v1870
        %v1999 = vpop.f32.mrb[0].mxu0
        %v2000 = vadd.f32 0.0, %v1999
        %v2001 = vpop.f32.mrb[0].mxu0
        %2002 = vmatprep.mubr.f32.mxu0 0.0
        %2003 = vmatmul.mubr.f32.gmra.mrb[0].mxu0 %v1873
        %v2004 = vpop.f32.mrb[0].mxu0
        %v2005 = vadd.f32 0.0, %v2004
        %v2006 = vpop.f32.mrb[0].mxu0
        %2007 = vmatprep.mubr.f32.mxu0 0.0
        %2008 = vmatmul.mubr.f32.gmra.mrb[0].mxu0 %v1876
        %v2009 = vpop.f32.mrb[0].mxu0
        %v2010 = vadd.f32 0.0, %v2009
        %v2011 = vpop.f32.mrb[0].mxu0
        %2012 = vmatprep.mubr.f32.mxu0 0.0
        %2013 = vmatmul.mubr.f32.gmra.mrb[0].mxu0 %v1879
        %v2014 = vpop.f32.mrb[0].mxu0
        %v2015 = vadd.f32 0.0, %v2014
        %v2016 = vpop.f32.mrb[0].mxu0
        %2017 = vmatprep.mubr.f32.mxu0 0.0
        %2018 = vmatmul.mubr.f32.gmra.mrb[0].mxu0 %v1882
        %v2019 = vpop.f32.mrb[0].mxu0
        %v2020 = vadd.f32 0.0, %v2019
        %v2021 = vpop.f32.mrb[0].mxu0
        %2022 = vmatprep.mubr.f32.mxu0 0.0
        %2023 = vmatmul.mubr.f32.gmra.mrb[0].mxu0 %v1885
        %v2024 = vpop.f32.mrb[0].mxu0
        %v2025 = vadd.f32 0.0, %v2024
        %v2026 = vpop.f32.mrb[0].mxu0
        %2027 = vmatprep.mubr.f32.mxu0 0.0
        %2028 = vmatmul.mubr.f32.gmra.mrb[0].mxu0 %v1888
        %v2029 = vpop.f32.mrb[0].mxu0
        %v2030 = vadd.f32 0.0, %v2029
        %v2031 = vpop.f32.mrb[0].mxu0
        %2032 = vmatprep.mubr.f32.mxu0 0.0
        %2033 = vmatmul.mubr.f32.gmra.mrb[0].mxu0 %v1891
        %v2034 = vpop.f32.mrb[0].mxu0
        %v2035 = vadd.f32 0.0, %v2034
        %v2036 = vpop.f32.mrb[0].mxu0
        %2037 = vmatprep.mubr.f32.mxu0 0.0
        %2038 = vmatmul.mubr.f32.gmra.mrb[0].mxu0 %v1894
        %v2039 = vpop.f32.mrb[0].mxu0
        %v2040 = vadd.f32 0.0, %v2039
        %v2041 = vpop.f32.mrb[0].mxu0
        %2042 = vmatprep.mubr.f32.mxu0 0.0
        %2043 = vmatmul.mubr.f32.gmra.mrb[0].mxu0 %v1897
        %v2044 = vpop.f32.mrb[0].mxu0
        %v2045 = vadd.f32 0.0, %v2044
        %v2046 = vpop.f32.mrb[0].mxu0
        %2047 = vdwg.mxu0
        %v2049 = vsel %vm1850, %v1813, 0
        %v2052 = vsel %vm1850, %v1814, 0
        %v2055 = vsel %vm1850, %v1815, 0
        %v2058 = vsel %vm1850, %v1816, 0
        %v2061 = vsel %vm1850, %v1817, 0
        %v2064 = vsel %vm1850, %v1818, 0
        %v2067 = vsel %vm1850, %v1819, 0
        %v2070 = vsel %vm1850, %v1820, 0
        %v2073 = vsel %vm1850, %v1821, 0
        %v2076 = vsel %vm1850, %v1822, 0
        %v2079 = vsel %vm1850, %v1823, 0
        %v2082 = vsel %vm1850, %v1824, 0
        %v2085 = vsel %vm1850, %v1825, 0
        %v2088 = vsel %vm1850, %v1826, 0
        %v2091 = vsel %vm1850, %v1827, 0
        %v2094 = vsel %vm1850, %v1828, 0
        %v2097 = vsel %vm1899, %v1830, 0
        %2099 = vmatprep.subr.mxu0 0.0
        %2100 = vmatpush1.msra.mxu0 %v1829
        %2101 = vmatprep.subr.mxu0 0.0
        %2102 = vmatpush1.msra.mxu0 %v2097
        %2103 = vmatprep.subr.mxu0 0.0
        %2104 = vmatpush1.msra.mxu0 0.0
        %2105 = vmatprep.subr.mxu0 0.0
        %2106 = vmatpush1.msra.mxu0 0.0
        %2107 = vmatprep.subr.mxu0 0.0
        %2108 = vmatpush1.msra.mxu0 0.0
        %2109 = vmatprep.subr.mxu0 0.0
        %2110 = vmatpush1.msra.mxu0 0.0
        %2111 = vmatprep.subr.mxu0 0.0
        %2112 = vmatpush1.msra.mxu0 0.0
        %2113 = vmatprep.subr.mxu0 0.0
        %2114 = vmatpush1.msra.mxu0 0.0
        %2115 = vmatprep.subr.mxu0 0.0
        %2116 = vmatpush1.msra.mxu0 0.0
        %2117 = vmatprep.subr.mxu0 0.0
        %2118 = vmatpush1.msra.mxu0 0.0
        %2119 = vmatprep.subr.mxu0 0.0
        %2120 = vmatpush1.msra.mxu0 0.0
        %2121 = vmatprep.subr.mxu0 0.0
        %2122 = vmatpush1.msra.mxu0 0.0
        %2123 = vmatprep.subr.mxu0 0.0
        %2124 = vmatpush1.msra.mxu0 0.0
        %2125 = vmatprep.subr.mxu0 0.0
        %2126 = vmatpush1.msra.mxu0 0.0
        %2127 = vmatprep.subr.mxu0 0.0
        %2128 = vmatpush1.msra.mxu0 0.0
        %2129 = vmatprep.subr.mxu0 0.0
        %2130 = vmatpush1.msra.mxu0 0.0
        %2131 = vmatprep.subr.mxu0 0.0
        %2132 = vmatpush1.msra.mxu0 0.0
        %2133 = vmatprep.subr.mxu0 0.0
        %2134 = vmatpush1.msra.mxu0 0.0
        %2135 = vmatprep.subr.mxu0 0.0
        %2136 = vmatpush1.msra.mxu0 0.0
        %2137 = vmatprep.subr.mxu0 0.0
        %2138 = vmatpush1.msra.mxu0 0.0
        %2139 = vmatprep.subr.mxu0 0.0
        %2140 = vmatpush1.msra.mxu0 0.0
        %2141 = vmatprep.subr.mxu0 0.0
        %2142 = vmatpush1.msra.mxu0 0.0
        %2143 = vmatprep.subr.mxu0 0.0
        %2144 = vmatpush1.msra.mxu0 0.0
        %2145 = vmatprep.subr.mxu0 0.0
        %2146 = vmatpush1.msra.mxu0 0.0
        %2147 = vmatprep.subr.mxu0 0.0
        %2148 = vmatpush1.msra.mxu0 0.0
        %2149 = vmatprep.subr.mxu0 0.0
        %2150 = vmatpush1.msra.mxu0 0.0
        %2151 = vmatprep.subr.mxu0 0.0
        %2152 = vmatpush1.msra.mxu0 0.0
        %2153 = vmatprep.subr.mxu0 0.0
        %2154 = vmatpush1.msra.mxu0 0.0
        %2155 = vmatprep.subr.mxu0 0.0
        %2156 = vmatpush1.msra.mxu0 0.0
        %2157 = vmatprep.subr.mxu0 0.0
        %2158 = vmatpush1.msra.mxu0 0.0
        %2159 = vmatprep.subr.mxu0 0.0
        %2160 = vmatpush1.msra.mxu0 0.0
        %2161 = vmatprep.subr.mxu0 0.0
        %2162 = vmatpush1.msra.mxu0 0.0
        %2163 = vmatprep.mubr.f32.mxu0 0.0
        %2164 = vmatmul.mubr.f32.gmra.mrb[0].mxu0 %v2049
        %v2165 = vpop.f32.mrb[0].mxu0
        %v2166 = vadd.f32 %v1970, %v2165
        %v2167 = vpop.f32.mrb[0].mxu0
        %2168 = vmatprep.mubr.f32.mxu0 0.0
        %2169 = vmatmul.mubr.f32.gmra.mrb[0].mxu0 %v2052
        %v2170 = vpop.f32.mrb[0].mxu0
        %v2171 = vadd.f32 %v1975, %v2170
        %v2172 = vpop.f32.mrb[0].mxu0
        %2173 = vmatprep.mubr.f32.mxu0 0.0
        %2174 = vmatmul.mubr.f32.gmra.mrb[0].mxu0 %v2055
        %v2175 = vpop.f32.mrb[0].mxu0
        %v2176 = vadd.f32 %v1980, %v2175
        %v2177 = vpop.f32.mrb[0].mxu0
        %2178 = vmatprep.mubr.f32.mxu0 0.0
        %2179 = vmatmul.mubr.f32.gmra.mrb[0].mxu0 %v2058
        %v2180 = vpop.f32.mrb[0].mxu0
        %v2181 = vadd.f32 %v1985, %v2180
        %v2182 = vpop.f32.mrb[0].mxu0
        %2183 = vmatprep.mubr.f32.mxu0 0.0
        %2184 = vmatmul.mubr.f32.gmra.mrb[0].mxu0 %v2061
        %v2185 = vpop.f32.mrb[0].mxu0
        %v2186 = vadd.f32 %v1990, %v2185
        %v2187 = vpop.f32.mrb[0].mxu0
        %2188 = vmatprep.mubr.f32.mxu0 0.0
        %2189 = vmatmul.mubr.f32.gmra.mrb[0].mxu0 %v2064
        %v2190 = vpop.f32.mrb[0].mxu0
        %v2191 = vadd.f32 %v1995, %v2190
        %v2192 = vpop.f32.mrb[0].mxu0
        %2193 = vmatprep.mubr.f32.mxu0 0.0
        %2194 = vmatmul.mubr.f32.gmra.mrb[0].mxu0 %v2067
        %v2195 = vpop.f32.mrb[0].mxu0
        %v2196 = vadd.f32 %v2000, %v2195
        %v2197 = vpop.f32.mrb[0].mxu0
        %2198 = vmatprep.mubr.f32.mxu0 0.0
        %2199 = vmatmul.mubr.f32.gmra.mrb[0].mxu0 %v2070
        %v2200 = vpop.f32.mrb[0].mxu0
        %v2201 = vadd.f32 %v2005, %v2200
        %v2202 = vpop.f32.mrb[0].mxu0
        %2203 = vmatprep.mubr.f32.mxu0 0.0
        %2204 = vmatmul.mubr.f32.gmra.mrb[0].mxu0 %v2073
        %v2205 = vpop.f32.mrb[0].mxu0
        %v2206 = vadd.f32 %v2010, %v2205
        %v2207 = vpop.f32.mrb[0].mxu0
        %2208 = vmatprep.mubr.f32.mxu0 0.0
        %2209 = vmatmul.mubr.f32.gmra.mrb[0].mxu0 %v2076
        %v2210 = vpop.f32.mrb[0].mxu0
        %v2211 = vadd.f32 %v2015, %v2210
        %v2212 = vpop.f32.mrb[0].mxu0
        %2213 = vmatprep.mubr.f32.mxu0 0.0
        %2214 = vmatmul.mubr.f32.gmra.mrb[0].mxu0 %v2079
        %v2215 = vpop.f32.mrb[0].mxu0
        %v2216 = vadd.f32 %v2020, %v2215
        %v2217 = vpop.f32.mrb[0].mxu0
        %2218 = vmatprep.mubr.f32.mxu0 0.0
        %2219 = vmatmul.mubr.f32.gmra.mrb[0].mxu0 %v2082
        %v2220 = vpop.f32.mrb[0].mxu0
        %v2221 = vadd.f32 %v2025, %v2220
        %v2222 = vpop.f32.mrb[0].mxu0
        %2223 = vmatprep.mubr.f32.mxu0 0.0
        %2224 = vmatmul.mubr.f32.gmra.mrb[0].mxu0 %v2085
        %v2225 = vpop.f32.mrb[0].mxu0
        %v2226 = vadd.f32 %v2030, %v2225
        %v2227 = vpop.f32.mrb[0].mxu0
        %2228 = vmatprep.mubr.f32.mxu0 0.0
        %2229 = vmatmul.mubr.f32.gmra.mrb[0].mxu0 %v2088
        %v2230 = vpop.f32.mrb[0].mxu0
        %v2231 = vadd.f32 %v2035, %v2230
        %v2232 = vpop.f32.mrb[0].mxu0
        %2233 = vmatprep.mubr.f32.mxu0 0.0
        %2234 = vmatmul.mubr.f32.gmra.mrb[0].mxu0 %v2091
        %v2235 = vpop.f32.mrb[0].mxu0
        %v2236 = vadd.f32 %v2040, %v2235
        %v2237 = vpop.f32.mrb[0].mxu0
        %2238 = vmatprep.mubr.f32.mxu0 0.0
        %2239 = vmatmul.mubr.f32.gmra.mrb[0].mxu0 %v2094
        %v2240 = vpop.f32.mrb[0].mxu0
        %v2241 = vadd.f32 %v2045, %v2240
        %v2242 = vpop.f32.mrb[0].mxu0
        %2243 = vdwg.mxu0
        %v2244 = vld [vmem:[#allocation2 + $0x2] sm:$0xff]
        %v2245 = vld [vmem:[#allocation2 + $0xa] sm:$0xff]
        %v2246 = vld [vmem:[#allocation2 + $0x12] sm:$0xff]
        %v2247 = vld [vmem:[#allocation2 + $0x1a] sm:$0xff]
        %v2248 = vld [vmem:[#allocation2 + $0x22] sm:$0xff]
        %v2249 = vld [vmem:[#allocation2 + $0x2a] sm:$0xff]
        %v2250 = vld [vmem:[#allocation2 + $0x32] sm:$0xff]
        %v2251 = vld [vmem:[#allocation2 + $0x3a] sm:$0xff]
        %v2252 = vld [vmem:[#allocation2 + $0x42] sm:$0xff]
        %v2253 = vld [vmem:[#allocation2 + $0x4a] sm:$0xff]
        %v2254 = vld [vmem:[#allocation2 + $0x52] sm:$0xff]
        %v2255 = vld [vmem:[#allocation2 + $0x5a] sm:$0xff]
        %v2256 = vld [vmem:[#allocation2 + $0x62] sm:$0xff]
        %v2257 = vld [vmem:[#allocation2 + $0x6a] sm:$0xff]
        %v2258 = vld [vmem:[#allocation2 + $0x72] sm:$0xff]
        %v2259 = vld [vmem:[#allocation2 + $0x7a] sm:$0xff]
        %s2260 = scalar_lea.vmem %s4, 32
        %v2261 = vld [vmem:[%s2260] sm:$0xff]
        %v2262 = vld [vmem:[%s2260 + $0x8] sm:$0xf]
        %v2264 = vsel %vm1850, %v2244, 0
        %v2267 = vsel %vm1850, %v2245, 0
        %v2270 = vsel %vm1850, %v2246, 0
        %v2273 = vsel %vm1850, %v2247, 0
        %v2276 = vsel %vm1850, %v2248, 0
        %v2279 = vsel %vm1850, %v2249, 0
        %v2282 = vsel %vm1850, %v2250, 0
        %v2285 = vsel %vm1850, %v2251, 0
        %v2288 = vsel %vm1850, %v2252, 0
        %v2291 = vsel %vm1850, %v2253, 0
        %v2294 = vsel %vm1850, %v2254, 0
        %v2297 = vsel %vm1850, %v2255, 0
        %v2300 = vsel %vm1850, %v2256, 0
        %v2303 = vsel %vm1850, %v2257, 0
        %v2306 = vsel %vm1850, %v2258, 0
        %v2309 = vsel %vm1850, %v2259, 0
        %v2312 = vsel %vm1899, %v2262, 0
        %2314 = vmatprep.subr.mxu0 0.0
        %2315 = vmatpush1.msra.mxu0 %v2261
        %2316 = vmatprep.subr.mxu0 0.0
        %2317 = vmatpush1.msra.mxu0 %v2312
        %2318 = vmatprep.subr.mxu0 0.0
        %2319 = vmatpush1.msra.mxu0 0.0
        %2320 = vmatprep.subr.mxu0 0.0
        %2321 = vmatpush1.msra.mxu0 0.0
        %2322 = vmatprep.subr.mxu0 0.0
        %2323 = vmatpush1.msra.mxu0 0.0
        %2324 = vmatprep.subr.mxu0 0.0
        %2325 = vmatpush1.msra.mxu0 0.0
        %2326 = vmatprep.subr.mxu0 0.0
        %2327 = vmatpush1.msra.mxu0 0.0
        %2328 = vmatprep.subr.mxu0 0.0
        %2329 = vmatpush1.msra.mxu0 0.0
        %2330 = vmatprep.subr.mxu0 0.0
        %2331 = vmatpush1.msra.mxu0 0.0
        %2332 = vmatprep.subr.mxu0 0.0
        %2333 = vmatpush1.msra.mxu0 0.0
        %2334 = vmatprep.subr.mxu0 0.0
        %2335 = vmatpush1.msra.mxu0 0.0
        %2336 = vmatprep.subr.mxu0 0.0
        %2337 = vmatpush1.msra.mxu0 0.0
        %2338 = vmatprep.subr.mxu0 0.0
        %2339 = vmatpush1.msra.mxu0 0.0
        %2340 = vmatprep.subr.mxu0 0.0
        %2341 = vmatpush1.msra.mxu0 0.0
        %2342 = vmatprep.subr.mxu0 0.0
        %2343 = vmatpush1.msra.mxu0 0.0
        %2344 = vmatprep.subr.mxu0 0.0
        %2345 = vmatpush1.msra.mxu0 0.0
        %2346 = vmatprep.subr.mxu0 0.0
        %2347 = vmatpush1.msra.mxu0 0.0
        %2348 = vmatprep.subr.mxu0 0.0
        %2349 = vmatpush1.msra.mxu0 0.0
        %2350 = vmatprep.subr.mxu0 0.0
        %2351 = vmatpush1.msra.mxu0 0.0
        %2352 = vmatprep.subr.mxu0 0.0
        %2353 = vmatpush1.msra.mxu0 0.0
        %2354 = vmatprep.subr.mxu0 0.0
        %2355 = vmatpush1.msra.mxu0 0.0
        %2356 = vmatprep.subr.mxu0 0.0
        %2357 = vmatpush1.msra.mxu0 0.0
        %2358 = vmatprep.subr.mxu0 0.0
        %2359 = vmatpush1.msra.mxu0 0.0
        %2360 = vmatprep.subr.mxu0 0.0
        %2361 = vmatpush1.msra.mxu0 0.0
        %2362 = vmatprep.subr.mxu0 0.0
        %2363 = vmatpush1.msra.mxu0 0.0
        %2364 = vmatprep.subr.mxu0 0.0
        %2365 = vmatpush1.msra.mxu0 0.0
        %2366 = vmatprep.subr.mxu0 0.0
        %2367 = vmatpush1.msra.mxu0 0.0
        %2368 = vmatprep.subr.mxu0 0.0
        %2369 = vmatpush1.msra.mxu0 0.0
        %2370 = vmatprep.subr.mxu0 0.0
        %2371 = vmatpush1.msra.mxu0 0.0
        %2372 = vmatprep.subr.mxu0 0.0
        %2373 = vmatpush1.msra.mxu0 0.0
        %2374 = vmatprep.subr.mxu0 0.0
        %2375 = vmatpush1.msra.mxu0 0.0
        %2376 = vmatprep.subr.mxu0 0.0
        %2377 = vmatpush1.msra.mxu0 0.0
        %2378 = vmatprep.mubr.f32.mxu0 0.0
        %2379 = vmatmul.mubr.f32.gmra.mrb[0].mxu0 %v2264
        %v2380 = vpop.f32.mrb[0].mxu0
        %v2381 = vadd.f32 0.0, %v2380
        %v2382 = vpop.f32.mrb[0].mxu0
        %2383 = vmatprep.mubr.f32.mxu0 0.0
        %2384 = vmatmul.mubr.f32.gmra.mrb[0].mxu0 %v2267
        %v2385 = vpop.f32.mrb[0].mxu0
        %v2386 = vadd.f32 0.0, %v2385
        %v2387 = vpop.f32.mrb[0].mxu0
        %2388 = vmatprep.mubr.f32.mxu0 0.0
        %2389 = vmatmul.mubr.f32.gmra.mrb[0].mxu0 %v2270
        %v2390 = vpop.f32.mrb[0].mxu0
        %v2391 = vadd.f32 0.0, %v2390
        %v2392 = vpop.f32.mrb[0].mxu0
        %2393 = vmatprep.mubr.f32.mxu0 0.0
        %2394 = vmatmul.mubr.f32.gmra.mrb[0].mxu0 %v2273
        %v2395 = vpop.f32.mrb[0].mxu0
        %v2396 = vadd.f32 0.0, %v2395
        %v2397 = vpop.f32.mrb[0].mxu0
        %2398 = vmatprep.mubr.f32.mxu0 0.0
        %2399 = vmatmul.mubr.f32.gmra.mrb[0].mxu0 %v2276
        %v2400 = vpop.f32.mrb[0].mxu0
        %v2401 = vadd.f32 0.0, %v2400
        %v2402 = vpop.f32.mrb[0].mxu0
        %2403 = vmatprep.mubr.f32.mxu0 0.0
        %2404 = vmatmul.mubr.f32.gmra.mrb[0].mxu0 %v2279
        %v2405 = vpop.f32.mrb[0].mxu0
        %v2406 = vadd.f32 0.0, %v2405
        %v2407 = vpop.f32.mrb[0].mxu0
        %2408 = vmatprep.mubr.f32.mxu0 0.0
        %2409 = vmatmul.mubr.f32.gmra.mrb[0].mxu0 %v2282
        %v2410 = vpop.f32.mrb[0].mxu0
        %v2411 = vadd.f32 0.0, %v2410
        %v2412 = vpop.f32.mrb[0].mxu0
        %2413 = vmatprep.mubr.f32.mxu0 0.0
        %2414 = vmatmul.mubr.f32.gmra.mrb[0].mxu0 %v2285
        %v2415 = vpop.f32.mrb[0].mxu0
        %v2416 = vadd.f32 0.0, %v2415
        %v2417 = vpop.f32.mrb[0].mxu0
        %2418 = vmatprep.mubr.f32.mxu0 0.0
        %2419 = vmatmul.mubr.f32.gmra.mrb[0].mxu0 %v2288
        %v2420 = vpop.f32.mrb[0].mxu0
        %v2421 = vadd.f32 0.0, %v2420
        %v2422 = vpop.f32.mrb[0].mxu0
        %2423 = vmatprep.mubr.f32.mxu0 0.0
        %2424 = vmatmul.mubr.f32.gmra.mrb[0].mxu0 %v2291
        %v2425 = vpop.f32.mrb[0].mxu0
        %v2426 = vadd.f32 0.0, %v2425
        %v2427 = vpop.f32.mrb[0].mxu0
        %2428 = vmatprep.mubr.f32.mxu0 0.0
        %2429 = vmatmul.mubr.f32.gmra.mrb[0].mxu0 %v2294
        %v2430 = vpop.f32.mrb[0].mxu0
        %v2431 = vadd.f32 0.0, %v2430
        %v2432 = vpop.f32.mrb[0].mxu0
        %2433 = vmatprep.mubr.f32.mxu0 0.0
        %2434 = vmatmul.mubr.f32.gmra.mrb[0].mxu0 %v2297
        %v2435 = vpop.f32.mrb[0].mxu0
        %v2436 = vadd.f32 0.0, %v2435
        %v2437 = vpop.f32.mrb[0].mxu0
        %2438 = vmatprep.mubr.f32.mxu0 0.0
        %2439 = vmatmul.mubr.f32.gmra.mrb[0].mxu0 %v2300
        %v2440 = vpop.f32.mrb[0].mxu0
        %v2441 = vadd.f32 0.0, %v2440
        %v2442 = vpop.f32.mrb[0].mxu0
        %2443 = vmatprep.mubr.f32.mxu0 0.0
        %2444 = vmatmul.mubr.f32.gmra.mrb[0].mxu0 %v2303
        %v2445 = vpop.f32.mrb[0].mxu0
        %v2446 = vadd.f32 0.0, %v2445
        %v2447 = vpop.f32.mrb[0].mxu0
        %2448 = vmatprep.mubr.f32.mxu0 0.0
        %2449 = vmatmul.mubr.f32.gmra.mrb[0].mxu0 %v2306
        %v2450 = vpop.f32.mrb[0].mxu0
        %v2451 = vadd.f32 0.0, %v2450
        %v2452 = vpop.f32.mrb[0].mxu0
        %2453 = vmatprep.mubr.f32.mxu0 0.0
        %2454 = vmatmul.mubr.f32.gmra.mrb[0].mxu0 %v2309
        %v2455 = vpop.f32.mrb[0].mxu0
        %v2456 = vadd.f32 0.0, %v2455
        %v2457 = vpop.f32.mrb[0].mxu0
        %2458 = vdwg.mxu0
        %v2459 = vadd.f32 %v2166, %v2381
        %v2460 = vadd.f32 %v2171, %v2386
        %v2461 = vadd.f32 %v2176, %v2391
        %v2462 = vadd.f32 %v2181, %v2396
        %v2463 = vadd.f32 %v2186, %v2401
        %v2464 = vadd.f32 %v2191, %v2406
        %v2465 = vadd.f32 %v2196, %v2411
        %v2466 = vadd.f32 %v2201, %v2416
        %v2467 = vadd.f32 %v2206, %v2421
        %v2468 = vadd.f32 %v2211, %v2426
        %v2469 = vadd.f32 %v2216, %v2431
        %v2470 = vadd.f32 %v2221, %v2436
        %v2471 = vadd.f32 %v2226, %v2441
        %v2472 = vadd.f32 %v2231, %v2446
        %v2473 = vadd.f32 %v2236, %v2451
        %v2474 = vadd.f32 %v2241, %v2456
        %v2475 = vld [vmem:[#allocation2 + $0x10] sm:$0xff]
        %v2476 = vld [vmem:[#allocation2 + $0x18] sm:$0xff]
        %v2477 = vld [vmem:[#allocation2 + $0x20] sm:$0xff]
        %v2478 = vld [vmem:[#allocation2 + $0x28] sm:$0xff]
        %v2479 = vld [vmem:[#allocation2 + $0x30] sm:$0xff]
        %v2480 = vld [vmem:[#allocation2 + $0x38] sm:$0xff]
        %v2481 = vld [vmem:[#allocation2 + $0x40] sm:$0xff]
        %v2482 = vld [vmem:[#allocation2 + $0x48] sm:$0xff]
        %v2483 = vld [vmem:[#allocation2 + $0x50] sm:$0xff]
        %v2484 = vld [vmem:[#allocation2 + $0x58] sm:$0xff]
        %v2485 = vld [vmem:[#allocation2 + $0x60] sm:$0xff]
        %v2486 = vld [vmem:[#allocation2 + $0x68] sm:$0xff]
        %v2487 = vld [vmem:[#allocation2 + $0x70] sm:$0xff]
        %v2488 = vld [vmem:[#allocation2 + $0x78] sm:$0xff]
        %v2489 = vld [vmem:[#allocation2 + $0x80] sm:$0xff]
        %v2490 = vld [vmem:[#allocation2 + $0x88] sm:$0xff]
        %s2491 = scalar_lea.vmem %s4, 48
        %v2492 = vld [vmem:[%s2491] sm:$0xff]
        %v2493 = vld [vmem:[%s2491 + $0x8] sm:$0xf]
        %v2495 = vsel %vm1850, %v2475, 0
        %v2498 = vsel %vm1850, %v2476, 0
        %v2501 = vsel %vm1850, %v2477, 0
        %v2504 = vsel %vm1850, %v2478, 0
        %v2507 = vsel %vm1850, %v2479, 0
        %v2510 = vsel %vm1850, %v2480, 0
        %v2513 = vsel %vm1850, %v2481, 0
        %v2516 = vsel %vm1850, %v2482, 0
        %v2519 = vsel %vm1850, %v2483, 0
        %v2522 = vsel %vm1850, %v2484, 0
        %v2525 = vsel %vm1850, %v2485, 0
        %v2528 = vsel %vm1850, %v2486, 0
        %v2531 = vsel %vm1850, %v2487, 0
        %v2534 = vsel %vm1850, %v2488, 0
        %v2537 = vsel %vm1850, %v2489, 0
        %v2540 = vsel %vm1850, %v2490, 0
        %v2543 = vsel %vm1899, %v2493, 0
        %2545 = vmatprep.subr.mxu0 0.0
        %2546 = vmatpush1.msra.mxu0 %v2492
        %2547 = vmatprep.subr.mxu0 0.0
        %2548 = vmatpush1.msra.mxu0 %v2543
        %2549 = vmatprep.subr.mxu0 0.0
        %2550 = vmatpush1.msra.mxu0 0.0
        %2551 = vmatprep.subr.mxu0 0.0
        %2552 = vmatpush1.msra.mxu0 0.0
        %2553 = vmatprep.subr.mxu0 0.0
        %2554 = vmatpush1.msra.mxu0 0.0
        %2555 = vmatprep.subr.mxu0 0.0
        %2556 = vmatpush1.msra.mxu0 0.0
        %2557 = vmatprep.subr.mxu0 0.0
        %2558 = vmatpush1.msra.mxu0 0.0
        %2559 = vmatprep.subr.mxu0 0.0
        %2560 = vmatpush1.msra.mxu0 0.0
        %2561 = vmatprep.subr.mxu0 0.0
        %2562 = vmatpush1.msra.mxu0 0.0
        %2563 = vmatprep.subr.mxu0 0.0
        %2564 = vmatpush1.msra.mxu0 0.0
        %2565 = vmatprep.subr.mxu0 0.0
        %2566 = vmatpush1.msra.mxu0 0.0
        %2567 = vmatprep.subr.mxu0 0.0
        %2568 = vmatpush1.msra.mxu0 0.0
        %2569 = vmatprep.subr.mxu0 0.0
        %2570 = vmatpush1.msra.mxu0 0.0
        %2571 = vmatprep.subr.mxu0 0.0
        %2572 = vmatpush1.msra.mxu0 0.0
        %2573 = vmatprep.subr.mxu0 0.0
        %2574 = vmatpush1.msra.mxu0 0.0
        %2575 = vmatprep.subr.mxu0 0.0
        %2576 = vmatpush1.msra.mxu0 0.0
        %2577 = vmatprep.subr.mxu0 0.0
        %2578 = vmatpush1.msra.mxu0 0.0
        %2579 = vmatprep.subr.mxu0 0.0
        %2580 = vmatpush1.msra.mxu0 0.0
        %2581 = vmatprep.subr.mxu0 0.0
        %2582 = vmatpush1.msra.mxu0 0.0
        %2583 = vmatprep.subr.mxu0 0.0
        %2584 = vmatpush1.msra.mxu0 0.0
        %2585 = vmatprep.subr.mxu0 0.0
        %2586 = vmatpush1.msra.mxu0 0.0
        %2587 = vmatprep.subr.mxu0 0.0
        %2588 = vmatpush1.msra.mxu0 0.0
        %2589 = vmatprep.subr.mxu0 0.0
        %2590 = vmatpush1.msra.mxu0 0.0
        %2591 = vmatprep.subr.mxu0 0.0
        %2592 = vmatpush1.msra.mxu0 0.0
        %2593 = vmatprep.subr.mxu0 0.0
        %2594 = vmatpush1.msra.mxu0 0.0
        %2595 = vmatprep.subr.mxu0 0.0
        %2596 = vmatpush1.msra.mxu0 0.0
        %2597 = vmatprep.subr.mxu0 0.0
        %2598 = vmatpush1.msra.mxu0 0.0
        %2599 = vmatprep.subr.mxu0 0.0
        %2600 = vmatpush1.msra.mxu0 0.0
        %2601 = vmatprep.subr.mxu0 0.0
        %2602 = vmatpush1.msra.mxu0 0.0
        %2603 = vmatprep.subr.mxu0 0.0
        %2604 = vmatpush1.msra.mxu0 0.0
        %2605 = vmatprep.subr.mxu0 0.0
        %2606 = vmatpush1.msra.mxu0 0.0
        %2607 = vmatprep.subr.mxu0 0.0
        %2608 = vmatpush1.msra.mxu0 0.0
        %2609 = vmatprep.mubr.f32.mxu0 0.0
        %2610 = vmatmul.mubr.f32.gmra.mrb[0].mxu0 %v2495
        %v2611 = vpop.f32.mrb[0].mxu0
        %v2612 = vadd.f32 0.0, %v2611
        %v2613 = vpop.f32.mrb[0].mxu0
        %2614 = vmatprep.mubr.f32.mxu0 0.0
        %2615 = vmatmul.mubr.f32.gmra.mrb[0].mxu0 %v2498
        %v2616 = vpop.f32.mrb[0].mxu0
        %v2617 = vadd.f32 0.0, %v2616
        %v2618 = vpop.f32.mrb[0].mxu0
        %2619 = vmatprep.mubr.f32.mxu0 0.0
        %2620 = vmatmul.mubr.f32.gmra.mrb[0].mxu0 %v2501
        %v2621 = vpop.f32.mrb[0].mxu0
        %v2622 = vadd.f32 0.0, %v2621
        %v2623 = vpop.f32.mrb[0].mxu0
        %2624 = vmatprep.mubr.f32.mxu0 0.0
        %2625 = vmatmul.mubr.f32.gmra.mrb[0].mxu0 %v2504
        %v2626 = vpop.f32.mrb[0].mxu0
        %v2627 = vadd.f32 0.0, %v2626
        %v2628 = vpop.f32.mrb[0].mxu0
        %2629 = vmatprep.mubr.f32.mxu0 0.0
        %2630 = vmatmul.mubr.f32.gmra.mrb[0].mxu0 %v2507
        %v2631 = vpop.f32.mrb[0].mxu0
        %v2632 = vadd.f32 0.0, %v2631
        %v2633 = vpop.f32.mrb[0].mxu0
        %2634 = vmatprep.mubr.f32.mxu0 0.0
        %2635 = vmatmul.mubr.f32.gmra.mrb[0].mxu0 %v2510
        %v2636 = vpop.f32.mrb[0].mxu0
        %v2637 = vadd.f32 0.0, %v2636
        %v2638 = vpop.f32.mrb[0].mxu0
        %2639 = vmatprep.mubr.f32.mxu0 0.0
        %2640 = vmatmul.mubr.f32.gmra.mrb[0].mxu0 %v2513
        %v2641 = vpop.f32.mrb[0].mxu0
        %v2642 = vadd.f32 0.0, %v2641
        %v2643 = vpop.f32.mrb[0].mxu0
        %2644 = vmatprep.mubr.f32.mxu0 0.0
        %2645 = vmatmul.mubr.f32.gmra.mrb[0].mxu0 %v2516
        %v2646 = vpop.f32.mrb[0].mxu0
        %v2647 = vadd.f32 0.0, %v2646
        %v2648 = vpop.f32.mrb[0].mxu0
        %2649 = vmatprep.mubr.f32.mxu0 0.0
        %2650 = vmatmul.mubr.f32.gmra.mrb[0].mxu0 %v2519
        %v2651 = vpop.f32.mrb[0].mxu0
        %v2652 = vadd.f32 0.0, %v2651
        %v2653 = vpop.f32.mrb[0].mxu0
        %2654 = vmatprep.mubr.f32.mxu0 0.0
        %2655 = vmatmul.mubr.f32.gmra.mrb[0].mxu0 %v2522
        %v2656 = vpop.f32.mrb[0].mxu0
        %v2657 = vadd.f32 0.0, %v2656
        %v2658 = vpop.f32.mrb[0].mxu0
        %2659 = vmatprep.mubr.f32.mxu0 0.0
        %2660 = vmatmul.mubr.f32.gmra.mrb[0].mxu0 %v2525
        %v2661 = vpop.f32.mrb[0].mxu0
        %v2662 = vadd.f32 0.0, %v2661
        %v2663 = vpop.f32.mrb[0].mxu0
        %2664 = vmatprep.mubr.f32.mxu0 0.0
        %2665 = vmatmul.mubr.f32.gmra.mrb[0].mxu0 %v2528
        %v2666 = vpop.f32.mrb[0].mxu0
        %v2667 = vadd.f32 0.0, %v2666
        %v2668 = vpop.f32.mrb[0].mxu0
        %2669 = vmatprep.mubr.f32.mxu0 0.0
        %2670 = vmatmul.mubr.f32.gmra.mrb[0].mxu0 %v2531
        %v2671 = vpop.f32.mrb[0].mxu0
        %v2672 = vadd.f32 0.0, %v2671
        %v2673 = vpop.f32.mrb[0].mxu0
        %2674 = vmatprep.mubr.f32.mxu0 0.0
        %2675 = vmatmul.mubr.f32.gmra.mrb[0].mxu0 %v2534
        %v2676 = vpop.f32.mrb[0].mxu0
        %v2677 = vadd.f32 0.0, %v2676
        %v2678 = vpop.f32.mrb[0].mxu0
        %2679 = vmatprep.mubr.f32.mxu0 0.0
        %2680 = vmatmul.mubr.f32.gmra.mrb[0].mxu0 %v2537
        %v2681 = vpop.f32.mrb[0].mxu0
        %v2682 = vadd.f32 0.0, %v2681
        %v2683 = vpop.f32.mrb[0].mxu0
        %2684 = vmatprep.mubr.f32.mxu0 0.0
        %2685 = vmatmul.mubr.f32.gmra.mrb[0].mxu0 %v2540
        %v2686 = vpop.f32.mrb[0].mxu0
        %v2687 = vadd.f32 0.0, %v2686
        %v2688 = vpop.f32.mrb[0].mxu0
        %2689 = vdwg.mxu0
        %v2690 = vadd.f32 %v2459, %v2612
        %v2691 = vadd.f32 %v2460, %v2617
        %v2692 = vadd.f32 %v2461, %v2622
        %v2693 = vadd.f32 %v2462, %v2627
        %v2694 = vadd.f32 %v2463, %v2632
        %v2695 = vadd.f32 %v2464, %v2637
        %v2696 = vadd.f32 %v2465, %v2642
        %v2697 = vadd.f32 %v2466, %v2647
        %v2698 = vadd.f32 %v2467, %v2652
        %v2699 = vadd.f32 %v2468, %v2657
        %v2700 = vadd.f32 %v2469, %v2662
        %v2701 = vadd.f32 %v2470, %v2667
        %v2702 = vadd.f32 %v2471, %v2672
        %v2703 = vadd.f32 %v2472, %v2677
        %v2704 = vadd.f32 %v2473, %v2682
        %v2705 = vadd.f32 %v2474, %v2687
        %v2706 = vld [vmem:[#allocation2 + $0x11] sm:$0xff]
        %v2707 = vld [vmem:[#allocation2 + $0x19] sm:$0xff]
        %v2708 = vld [vmem:[#allocation2 + $0x21] sm:$0xff]
        %v2709 = vld [vmem:[#allocation2 + $0x29] sm:$0xff]
        %v2710 = vld [vmem:[#allocation2 + $0x31] sm:$0xff]
        %v2711 = vld [vmem:[#allocation2 + $0x39] sm:$0xff]
        %v2712 = vld [vmem:[#allocation2 + $0x41] sm:$0xff]
        %v2713 = vld [vmem:[#allocation2 + $0x49] sm:$0xff]
        %v2714 = vld [vmem:[#allocation2 + $0x51] sm:$0xff]
        %v2715 = vld [vmem:[#allocation2 + $0x59] sm:$0xff]
        %v2716 = vld [vmem:[#allocation2 + $0x61] sm:$0xff]
        %v2717 = vld [vmem:[#allocation2 + $0x69] sm:$0xff]
        %v2718 = vld [vmem:[#allocation2 + $0x71] sm:$0xff]
        %v2719 = vld [vmem:[#allocation2 + $0x79] sm:$0xff]
        %v2720 = vld [vmem:[#allocation2 + $0x81] sm:$0xff]
        %v2721 = vld [vmem:[#allocation2 + $0x89] sm:$0xff]
        %s2722 = scalar_lea.vmem %s4, 64
        %v2723 = vld [vmem:[%s2722] sm:$0xff]
        %v2724 = vld [vmem:[%s2722 + $0x8] sm:$0xf]
        %v2726 = vsel %vm1850, %v2706, 0
        %v2729 = vsel %vm1850, %v2707, 0
        %v2732 = vsel %vm1850, %v2708, 0
        %v2735 = vsel %vm1850, %v2709, 0
        %v2738 = vsel %vm1850, %v2710, 0
        %v2741 = vsel %vm1850, %v2711, 0
        %v2744 = vsel %vm1850, %v2712, 0
        %v2747 = vsel %vm1850, %v2713, 0
        %v2750 = vsel %vm1850, %v2714, 0
        %v2753 = vsel %vm1850, %v2715, 0
        %v2756 = vsel %vm1850, %v2716, 0
        %v2759 = vsel %vm1850, %v2717, 0
        %v2762 = vsel %vm1850, %v2718, 0
        %v2765 = vsel %vm1850, %v2719, 0
        %v2768 = vsel %vm1850, %v2720, 0
        %v2771 = vsel %vm1850, %v2721, 0
        %v2774 = vsel %vm1899, %v2724, 0
        %2776 = vmatprep.subr.mxu0 0.0
        %2777 = vmatpush1.msra.mxu0 %v2723
        %2778 = vmatprep.subr.mxu0 0.0
        %2779 = vmatpush1.msra.mxu0 %v2774
        %2780 = vmatprep.subr.mxu0 0.0
        %2781 = vmatpush1.msra.mxu0 0.0
        %2782 = vmatprep.subr.mxu0 0.0
        %2783 = vmatpush1.msra.mxu0 0.0
        %2784 = vmatprep.subr.mxu0 0.0
        %2785 = vmatpush1.msra.mxu0 0.0
        %2786 = vmatprep.subr.mxu0 0.0
        %2787 = vmatpush1.msra.mxu0 0.0
        %2788 = vmatprep.subr.mxu0 0.0
        %2789 = vmatpush1.msra.mxu0 0.0
        %2790 = vmatprep.subr.mxu0 0.0
        %2791 = vmatpush1.msra.mxu0 0.0
        %2792 = vmatprep.subr.mxu0 0.0
        %2793 = vmatpush1.msra.mxu0 0.0
        %2794 = vmatprep.subr.mxu0 0.0
        %2795 = vmatpush1.msra.mxu0 0.0
        %2796 = vmatprep.subr.mxu0 0.0
        %2797 = vmatpush1.msra.mxu0 0.0
        %2798 = vmatprep.subr.mxu0 0.0
        %2799 = vmatpush1.msra.mxu0 0.0
        %2800 = vmatprep.subr.mxu0 0.0
        %2801 = vmatpush1.msra.mxu0 0.0
        %2802 = vmatprep.subr.mxu0 0.0
        %2803 = vmatpush1.msra.mxu0 0.0
        %2804 = vmatprep.subr.mxu0 0.0
        %2805 = vmatpush1.msra.mxu0 0.0
        %2806 = vmatprep.subr.mxu0 0.0
        %2807 = vmatpush1.msra.mxu0 0.0
        %2808 = vmatprep.subr.mxu0 0.0
        %2809 = vmatpush1.msra.mxu0 0.0
        %2810 = vmatprep.subr.mxu0 0.0
        %2811 = vmatpush1.msra.mxu0 0.0
        %2812 = vmatprep.subr.mxu0 0.0
        %2813 = vmatpush1.msra.mxu0 0.0
        %2814 = vmatprep.subr.mxu0 0.0
        %2815 = vmatpush1.msra.mxu0 0.0
        %2816 = vmatprep.subr.mxu0 0.0
        %2817 = vmatpush1.msra.mxu0 0.0
        %2818 = vmatprep.subr.mxu0 0.0
        %2819 = vmatpush1.msra.mxu0 0.0
        %2820 = vmatprep.subr.mxu0 0.0
        %2821 = vmatpush1.msra.mxu0 0.0
        %2822 = vmatprep.subr.mxu0 0.0
        %2823 = vmatpush1.msra.mxu0 0.0
        %2824 = vmatprep.subr.mxu0 0.0
        %2825 = vmatpush1.msra.mxu0 0.0
        %2826 = vmatprep.subr.mxu0 0.0
        %2827 = vmatpush1.msra.mxu0 0.0
        %2828 = vmatprep.subr.mxu0 0.0
        %2829 = vmatpush1.msra.mxu0 0.0
        %2830 = vmatprep.subr.mxu0 0.0
        %2831 = vmatpush1.msra.mxu0 0.0
        %2832 = vmatprep.subr.mxu0 0.0
        %2833 = vmatpush1.msra.mxu0 0.0
        %2834 = vmatprep.subr.mxu0 0.0
        %2835 = vmatpush1.msra.mxu0 0.0
        %2836 = vmatprep.subr.mxu0 0.0
        %2837 = vmatpush1.msra.mxu0 0.0
        %2838 = vmatprep.subr.mxu0 0.0
        %2839 = vmatpush1.msra.mxu0 0.0
        %2840 = vmatprep.mubr.f32.mxu0 0.0
        %2841 = vmatmul.mubr.f32.gmra.mrb[0].mxu0 %v2726
        %v2842 = vpop.f32.mrb[0].mxu0
        %v2843 = vadd.f32 0.0, %v2842
        %v2844 = vpop.f32.mrb[0].mxu0
        %2845 = vmatprep.mubr.f32.mxu0 0.0
        %2846 = vmatmul.mubr.f32.gmra.mrb[0].mxu0 %v2729
        %v2847 = vpop.f32.mrb[0].mxu0
        %v2848 = vadd.f32 0.0, %v2847
        %v2849 = vpop.f32.mrb[0].mxu0
        %2850 = vmatprep.mubr.f32.mxu0 0.0
        %2851 = vmatmul.mubr.f32.gmra.mrb[0].mxu0 %v2732
        %v2852 = vpop.f32.mrb[0].mxu0
        %v2853 = vadd.f32 0.0, %v2852
        %v2854 = vpop.f32.mrb[0].mxu0
        %2855 = vmatprep.mubr.f32.mxu0 0.0
        %2856 = vmatmul.mubr.f32.gmra.mrb[0].mxu0 %v2735
        %v2857 = vpop.f32.mrb[0].mxu0
        %v2858 = vadd.f32 0.0, %v2857
        %v2859 = vpop.f32.mrb[0].mxu0
        %2860 = vmatprep.mubr.f32.mxu0 0.0
        %2861 = vmatmul.mubr.f32.gmra.mrb[0].mxu0 %v2738
        %v2862 = vpop.f32.mrb[0].mxu0
        %v2863 = vadd.f32 0.0, %v2862
        %v2864 = vpop.f32.mrb[0].mxu0
        %2865 = vmatprep.mubr.f32.mxu0 0.0
        %2866 = vmatmul.mubr.f32.gmra.mrb[0].mxu0 %v2741
        %v2867 = vpop.f32.mrb[0].mxu0
        %v2868 = vadd.f32 0.0, %v2867
        %v2869 = vpop.f32.mrb[0].mxu0
        %2870 = vmatprep.mubr.f32.mxu0 0.0
        %2871 = vmatmul.mubr.f32.gmra.mrb[0].mxu0 %v2744
        %v2872 = vpop.f32.mrb[0].mxu0
        %v2873 = vadd.f32 0.0, %v2872
        %v2874 = vpop.f32.mrb[0].mxu0
        %2875 = vmatprep.mubr.f32.mxu0 0.0
        %2876 = vmatmul.mubr.f32.gmra.mrb[0].mxu0 %v2747
        %v2877 = vpop.f32.mrb[0].mxu0
        %v2878 = vadd.f32 0.0, %v2877
        %v2879 = vpop.f32.mrb[0].mxu0
        %2880 = vmatprep.mubr.f32.mxu0 0.0
        %2881 = vmatmul.mubr.f32.gmra.mrb[0].mxu0 %v2750
        %v2882 = vpop.f32.mrb[0].mxu0
        %v2883 = vadd.f32 0.0, %v2882
        %v2884 = vpop.f32.mrb[0].mxu0
        %2885 = vmatprep.mubr.f32.mxu0 0.0
        %2886 = vmatmul.mubr.f32.gmra.mrb[0].mxu0 %v2753
        %v2887 = vpop.f32.mrb[0].mxu0
        %v2888 = vadd.f32 0.0, %v2887
        %v2889 = vpop.f32.mrb[0].mxu0
        %2890 = vmatprep.mubr.f32.mxu0 0.0
        %2891 = vmatmul.mubr.f32.gmra.mrb[0].mxu0 %v2756
        %v2892 = vpop.f32.mrb[0].mxu0
        %v2893 = vadd.f32 0.0, %v2892
        %v2894 = vpop.f32.mrb[0].mxu0
        %2895 = vmatprep.mubr.f32.mxu0 0.0
        %2896 = vmatmul.mubr.f32.gmra.mrb[0].mxu0 %v2759
        %v2897 = vpop.f32.mrb[0].mxu0
        %v2898 = vadd.f32 0.0, %v2897
        %v2899 = vpop.f32.mrb[0].mxu0
        %2900 = vmatprep.mubr.f32.mxu0 0.0
        %2901 = vmatmul.mubr.f32.gmra.mrb[0].mxu0 %v2762
        %v2902 = vpop.f32.mrb[0].mxu0
        %v2903 = vadd.f32 0.0, %v2902
        %v2904 = vpop.f32.mrb[0].mxu0
        %2905 = vmatprep.mubr.f32.mxu0 0.0
        %2906 = vmatmul.mubr.f32.gmra.mrb[0].mxu0 %v2765
        %v2907 = vpop.f32.mrb[0].mxu0
        %v2908 = vadd.f32 0.0, %v2907
        %v2909 = vpop.f32.mrb[0].mxu0
        %2910 = vmatprep.mubr.f32.mxu0 0.0
        %2911 = vmatmul.mubr.f32.gmra.mrb[0].mxu0 %v2768
        %v2912 = vpop.f32.mrb[0].mxu0
        %v2913 = vadd.f32 0.0, %v2912
        %v2914 = vpop.f32.mrb[0].mxu0
        %2915 = vmatprep.mubr.f32.mxu0 0.0
        %2916 = vmatmul.mubr.f32.gmra.mrb[0].mxu0 %v2771
        %v2917 = vpop.f32.mrb[0].mxu0
        %v2918 = vadd.f32 0.0, %v2917
        %v2919 = vpop.f32.mrb[0].mxu0
        %2920 = vdwg.mxu0
        %v2921 = vadd.f32 %v2690, %v2843
        %v2922 = vadd.f32 %v2691, %v2848
        %v2923 = vadd.f32 %v2692, %v2853
        %v2924 = vadd.f32 %v2693, %v2858
        %v2925 = vadd.f32 %v2694, %v2863
        %v2926 = vadd.f32 %v2695, %v2868
        %v2927 = vadd.f32 %v2696, %v2873
        %v2928 = vadd.f32 %v2697, %v2878
        %v2929 = vadd.f32 %v2698, %v2883
        %v2930 = vadd.f32 %v2699, %v2888
        %v2931 = vadd.f32 %v2700, %v2893
        %v2932 = vadd.f32 %v2701, %v2898
        %v2933 = vadd.f32 %v2702, %v2903
        %v2934 = vadd.f32 %v2703, %v2908
        %v2935 = vadd.f32 %v2704, %v2913
        %v2936 = vadd.f32 %v2705, %v2918
        %v2937 = vld [vmem:[#allocation2 + $0x12] sm:$0xff]
        %v2938 = vld [vmem:[#allocation2 + $0x1a] sm:$0xff]
        %v2939 = vld [vmem:[#allocation2 + $0x22] sm:$0xff]
        %v2940 = vld [vmem:[#allocation2 + $0x2a] sm:$0xff]
        %v2941 = vld [vmem:[#allocation2 + $0x32] sm:$0xff]
        %v2942 = vld [vmem:[#allocation2 + $0x3a] sm:$0xff]
        %v2943 = vld [vmem:[#allocation2 + $0x42] sm:$0xff]
        %v2944 = vld [vmem:[#allocation2 + $0x4a] sm:$0xff]
        %v2945 = vld [vmem:[#allocation2 + $0x52] sm:$0xff]
        %v2946 = vld [vmem:[#allocation2 + $0x5a] sm:$0xff]
        %v2947 = vld [vmem:[#allocation2 + $0x62] sm:$0xff]
        %v2948 = vld [vmem:[#allocation2 + $0x6a] sm:$0xff]
        %v2949 = vld [vmem:[#allocation2 + $0x72] sm:$0xff]
        %v2950 = vld [vmem:[#allocation2 + $0x7a] sm:$0xff]
        %v2951 = vld [vmem:[#allocation2 + $0x82] sm:$0xff]
        %v2952 = vld [vmem:[#allocation2 + $0x8a] sm:$0xff]
        %s2953 = scalar_lea.vmem %s4, 80
        %v2954 = vld [vmem:[%s2953] sm:$0xff]
        %v2955 = vld [vmem:[%s2953 + $0x8] sm:$0xf]
        %v2957 = vsel %vm1850, %v2937, 0
        %v2960 = vsel %vm1850, %v2938, 0
        %v2963 = vsel %vm1850, %v2939, 0
        %v2966 = vsel %vm1850, %v2940, 0
        %v2969 = vsel %vm1850, %v2941, 0
        %v2972 = vsel %vm1850, %v2942, 0
        %v2975 = vsel %vm1850, %v2943, 0
        %v2978 = vsel %vm1850, %v2944, 0
        %v2981 = vsel %vm1850, %v2945, 0
        %v2984 = vsel %vm1850, %v2946, 0
        %v2987 = vsel %vm1850, %v2947, 0
        %v2990 = vsel %vm1850, %v2948, 0
        %v2993 = vsel %vm1850, %v2949, 0
        %v2996 = vsel %vm1850, %v2950, 0
        %v2999 = vsel %vm1850, %v2951, 0
        %v3002 = vsel %vm1850, %v2952, 0
        %v3005 = vsel %vm1899, %v2955, 0
        %3007 = vmatprep.subr.mxu0 0.0
        %3008 = vmatpush1.msra.mxu0 %v2954
        %3009 = vmatprep.subr.mxu0 0.0
        %3010 = vmatpush1.msra.mxu0 %v3005
        %3011 = vmatprep.subr.mxu0 0.0
        %3012 = vmatpush1.msra.mxu0 0.0
        %3013 = vmatprep.subr.mxu0 0.0
        %3014 = vmatpush1.msra.mxu0 0.0
        %3015 = vmatprep.subr.mxu0 0.0
        %3016 = vmatpush1.msra.mxu0 0.0
        %3017 = vmatprep.subr.mxu0 0.0
        %3018 = vmatpush1.msra.mxu0 0.0
        %3019 = vmatprep.subr.mxu0 0.0
        %3020 = vmatpush1.msra.mxu0 0.0
        %3021 = vmatprep.subr.mxu0 0.0
        %3022 = vmatpush1.msra.mxu0 0.0
        %3023 = vmatprep.subr.mxu0 0.0
        %3024 = vmatpush1.msra.mxu0 0.0
        %3025 = vmatprep.subr.mxu0 0.0
        %3026 = vmatpush1.msra.mxu0 0.0
        %3027 = vmatprep.subr.mxu0 0.0
        %3028 = vmatpush1.msra.mxu0 0.0
        %3029 = vmatprep.subr.mxu0 0.0
        %3030 = vmatpush1.msra.mxu0 0.0
        %3031 = vmatprep.subr.mxu0 0.0
        %3032 = vmatpush1.msra.mxu0 0.0
        %3033 = vmatprep.subr.mxu0 0.0
        %3034 = vmatpush1.msra.mxu0 0.0
        %3035 = vmatprep.subr.mxu0 0.0
        %3036 = vmatpush1.msra.mxu0 0.0
        %3037 = vmatprep.subr.mxu0 0.0
        %3038 = vmatpush1.msra.mxu0 0.0
        %3039 = vmatprep.subr.mxu0 0.0
        %3040 = vmatpush1.msra.mxu0 0.0
        %3041 = vmatprep.subr.mxu0 0.0
        %3042 = vmatpush1.msra.mxu0 0.0
        %3043 = vmatprep.subr.mxu0 0.0
        %3044 = vmatpush1.msra.mxu0 0.0
        %3045 = vmatprep.subr.mxu0 0.0
        %3046 = vmatpush1.msra.mxu0 0.0
        %3047 = vmatprep.subr.mxu0 0.0
        %3048 = vmatpush1.msra.mxu0 0.0
        %3049 = vmatprep.subr.mxu0 0.0
        %3050 = vmatpush1.msra.mxu0 0.0
        %3051 = vmatprep.subr.mxu0 0.0
        %3052 = vmatpush1.msra.mxu0 0.0
        %3053 = vmatprep.subr.mxu0 0.0
        %3054 = vmatpush1.msra.mxu0 0.0
        %3055 = vmatprep.subr.mxu0 0.0
        %3056 = vmatpush1.msra.mxu0 0.0
        %3057 = vmatprep.subr.mxu0 0.0
        %3058 = vmatpush1.msra.mxu0 0.0
        %3059 = vmatprep.subr.mxu0 0.0
        %3060 = vmatpush1.msra.mxu0 0.0
        %3061 = vmatprep.subr.mxu0 0.0
        %3062 = vmatpush1.msra.mxu0 0.0
        %3063 = vmatprep.subr.mxu0 0.0
        %3064 = vmatpush1.msra.mxu0 0.0
        %3065 = vmatprep.subr.mxu0 0.0
        %3066 = vmatpush1.msra.mxu0 0.0
        %3067 = vmatprep.subr.mxu0 0.0
        %3068 = vmatpush1.msra.mxu0 0.0
        %3069 = vmatprep.subr.mxu0 0.0
        %3070 = vmatpush1.msra.mxu0 0.0
        %3071 = vmatprep.mubr.f32.mxu0 0.0
        %3072 = vmatmul.mubr.f32.gmra.mrb[0].mxu0 %v2957
        %v3073 = vpop.f32.mrb[0].mxu0
        %v3074 = vadd.f32 0.0, %v3073
        %v3075 = vpop.f32.mrb[0].mxu0
        %3076 = vmatprep.mubr.f32.mxu0 0.0
        %3077 = vmatmul.mubr.f32.gmra.mrb[0].mxu0 %v2960
        %v3078 = vpop.f32.mrb[0].mxu0
        %v3079 = vadd.f32 0.0, %v3078
        %v3080 = vpop.f32.mrb[0].mxu0
        %3081 = vmatprep.mubr.f32.mxu0 0.0
        %3082 = vmatmul.mubr.f32.gmra.mrb[0].mxu0 %v2963
        %v3083 = vpop.f32.mrb[0].mxu0
        %v3084 = vadd.f32 0.0, %v3083
        %v3085 = vpop.f32.mrb[0].mxu0
        %3086 = vmatprep.mubr.f32.mxu0 0.0
        %3087 = vmatmul.mubr.f32.gmra.mrb[0].mxu0 %v2966
        %v3088 = vpop.f32.mrb[0].mxu0
        %v3089 = vadd.f32 0.0, %v3088
        %v3090 = vpop.f32.mrb[0].mxu0
        %3091 = vmatprep.mubr.f32.mxu0 0.0
        %3092 = vmatmul.mubr.f32.gmra.mrb[0].mxu0 %v2969
        %v3093 = vpop.f32.mrb[0].mxu0
        %v3094 = vadd.f32 0.0, %v3093
        %v3095 = vpop.f32.mrb[0].mxu0
        %3096 = vmatprep.mubr.f32.mxu0 0.0
        %3097 = vmatmul.mubr.f32.gmra.mrb[0].mxu0 %v2972
        %v3098 = vpop.f32.mrb[0].mxu0
        %v3099 = vadd.f32 0.0, %v3098
        %v3100 = vpop.f32.mrb[0].mxu0
        %3101 = vmatprep.mubr.f32.mxu0 0.0
        %3102 = vmatmul.mubr.f32.gmra.mrb[0].mxu0 %v2975
        %v3103 = vpop.f32.mrb[0].mxu0
        %v3104 = vadd.f32 0.0, %v3103
        %v3105 = vpop.f32.mrb[0].mxu0
        %3106 = vmatprep.mubr.f32.mxu0 0.0
        %3107 = vmatmul.mubr.f32.gmra.mrb[0].mxu0 %v2978
        %v3108 = vpop.f32.mrb[0].mxu0
        %v3109 = vadd.f32 0.0, %v3108
        %v3110 = vpop.f32.mrb[0].mxu0
        %3111 = vmatprep.mubr.f32.mxu0 0.0
        %3112 = vmatmul.mubr.f32.gmra.mrb[0].mxu0 %v2981
        %v3113 = vpop.f32.mrb[0].mxu0
        %v3114 = vadd.f32 0.0, %v3113
        %v3115 = vpop.f32.mrb[0].mxu0
        %3116 = vmatprep.mubr.f32.mxu0 0.0
        %3117 = vmatmul.mubr.f32.gmra.mrb[0].mxu0 %v2984
        %v3118 = vpop.f32.mrb[0].mxu0
        %v3119 = vadd.f32 0.0, %v3118
        %v3120 = vpop.f32.mrb[0].mxu0
        %3121 = vmatprep.mubr.f32.mxu0 0.0
        %3122 = vmatmul.mubr.f32.gmra.mrb[0].mxu0 %v2987
        %v3123 = vpop.f32.mrb[0].mxu0
        %v3124 = vadd.f32 0.0, %v3123
        %v3125 = vpop.f32.mrb[0].mxu0
        %3126 = vmatprep.mubr.f32.mxu0 0.0
        %3127 = vmatmul.mubr.f32.gmra.mrb[0].mxu0 %v2990
        %v3128 = vpop.f32.mrb[0].mxu0
        %v3129 = vadd.f32 0.0, %v3128
        %v3130 = vpop.f32.mrb[0].mxu0
        %3131 = vmatprep.mubr.f32.mxu0 0.0
        %3132 = vmatmul.mubr.f32.gmra.mrb[0].mxu0 %v2993
        %v3133 = vpop.f32.mrb[0].mxu0
        %v3134 = vadd.f32 0.0, %v3133
        %v3135 = vpop.f32.mrb[0].mxu0
        %3136 = vmatprep.mubr.f32.mxu0 0.0
        %3137 = vmatmul.mubr.f32.gmra.mrb[0].mxu0 %v2996
        %v3138 = vpop.f32.mrb[0].mxu0
        %v3139 = vadd.f32 0.0, %v3138
        %v3140 = vpop.f32.mrb[0].mxu0
        %3141 = vmatprep.mubr.f32.mxu0 0.0
        %3142 = vmatmul.mubr.f32.gmra.mrb[0].mxu0 %v2999
        %v3143 = vpop.f32.mrb[0].mxu0
        %v3144 = vadd.f32 0.0, %v3143
        %v3145 = vpop.f32.mrb[0].mxu0
        %3146 = vmatprep.mubr.f32.mxu0 0.0
        %3147 = vmatmul.mubr.f32.gmra.mrb[0].mxu0 %v3002
        %v3148 = vpop.f32.mrb[0].mxu0
        %v3149 = vadd.f32 0.0, %v3148
        %v3150 = vpop.f32.mrb[0].mxu0
        %3151 = vdwg.mxu0
        %v3152 = vadd.f32 %v2921, %v3074
        %v3153 = vadd.f32 %v2922, %v3079
        %v3154 = vadd.f32 %v2923, %v3084
        %v3155 = vadd.f32 %v2924, %v3089
        %v3156 = vadd.f32 %v2925, %v3094
        %v3157 = vadd.f32 %v2926, %v3099
        %v3158 = vadd.f32 %v2927, %v3104
        %v3159 = vadd.f32 %v2928, %v3109
        %v3160 = vadd.f32 %v2929, %v3114
        %v3161 = vadd.f32 %v2930, %v3119
        %v3162 = vadd.f32 %v2931, %v3124
        %v3163 = vadd.f32 %v2932, %v3129
        %v3164 = vadd.f32 %v2933, %v3134
        %v3165 = vadd.f32 %v2934, %v3139
        %v3166 = vadd.f32 %v2935, %v3144
        %v3167 = vadd.f32 %v2936, %v3149
        %v3168 = vld [vmem:[#allocation2 + $0x20] sm:$0xff]
        %v3169 = vld [vmem:[#allocation2 + $0x28] sm:$0xff]
        %v3170 = vld [vmem:[#allocation2 + $0x30] sm:$0xff]
        %v3171 = vld [vmem:[#allocation2 + $0x38] sm:$0xff]
        %v3172 = vld [vmem:[#allocation2 + $0x40] sm:$0xff]
        %v3173 = vld [vmem:[#allocation2 + $0x48] sm:$0xff]
        %v3174 = vld [vmem:[#allocation2 + $0x50] sm:$0xff]
        %v3175 = vld [vmem:[#allocation2 + $0x58] sm:$0xff]
        %v3176 = vld [vmem:[#allocation2 + $0x60] sm:$0xff]
        %v3177 = vld [vmem:[#allocation2 + $0x68] sm:$0xff]
        %v3178 = vld [vmem:[#allocation2 + $0x70] sm:$0xff]
        %v3179 = vld [vmem:[#allocation2 + $0x78] sm:$0xff]
        %v3180 = vld [vmem:[#allocation2 + $0x80] sm:$0xff]
        %v3181 = vld [vmem:[#allocation2 + $0x88] sm:$0xff]
        %v3182 = vld [vmem:[#allocation2 + $0x90] sm:$0xff]
        %v3183 = vld [vmem:[#allocation2 + $0x98] sm:$0xff]
        %s3184 = scalar_lea.vmem %s4, 96
        %v3185 = vld [vmem:[%s3184] sm:$0xff]
        %v3186 = vld [vmem:[%s3184 + $0x8] sm:$0xf]
        %v3188 = vsel %vm1850, %v3168, 0
        %v3191 = vsel %vm1850, %v3169, 0
        %v3194 = vsel %vm1850, %v3170, 0
        %v3197 = vsel %vm1850, %v3171, 0
        %v3200 = vsel %vm1850, %v3172, 0
        %v3203 = vsel %vm1850, %v3173, 0
        %v3206 = vsel %vm1850, %v3174, 0
        %v3209 = vsel %vm1850, %v3175, 0
        %v3212 = vsel %vm1850, %v3176, 0
        %v3215 = vsel %vm1850, %v3177, 0
        %v3218 = vsel %vm1850, %v3178, 0
        %v3221 = vsel %vm1850, %v3179, 0
        %v3224 = vsel %vm1850, %v3180, 0
        %v3227 = vsel %vm1850, %v3181, 0
        %v3230 = vsel %vm1850, %v3182, 0
        %v3233 = vsel %vm1850, %v3183, 0
        %v3236 = vsel %vm1899, %v3186, 0
        %3238 = vmatprep.subr.mxu0 0.0
        %3239 = vmatpush1.msra.mxu0 %v3185
        %3240 = vmatprep.subr.mxu0 0.0
        %3241 = vmatpush1.msra.mxu0 %v3236
        %3242 = vmatprep.subr.mxu0 0.0
        %3243 = vmatpush1.msra.mxu0 0.0
        %3244 = vmatprep.subr.mxu0 0.0
        %3245 = vmatpush1.msra.mxu0 0.0
        %3246 = vmatprep.subr.mxu0 0.0
        %3247 = vmatpush1.msra.mxu0 0.0
        %3248 = vmatprep.subr.mxu0 0.0
        %3249 = vmatpush1.msra.mxu0 0.0
        %3250 = vmatprep.subr.mxu0 0.0
        %3251 = vmatpush1.msra.mxu0 0.0
        %3252 = vmatprep.subr.mxu0 0.0
        %3253 = vmatpush1.msra.mxu0 0.0
        %3254 = vmatprep.subr.mxu0 0.0
        %3255 = vmatpush1.msra.mxu0 0.0
        %3256 = vmatprep.subr.mxu0 0.0
        %3257 = vmatpush1.msra.mxu0 0.0
        %3258 = vmatprep.subr.mxu0 0.0
        %3259 = vmatpush1.msra.mxu0 0.0
        %3260 = vmatprep.subr.mxu0 0.0
        %3261 = vmatpush1.msra.mxu0 0.0
        %3262 = vmatprep.subr.mxu0 0.0
        %3263 = vmatpush1.msra.mxu0 0.0
        %3264 = vmatprep.subr.mxu0 0.0
        %3265 = vmatpush1.msra.mxu0 0.0
        %3266 = vmatprep.subr.mxu0 0.0
        %3267 = vmatpush1.msra.mxu0 0.0
        %3268 = vmatprep.subr.mxu0 0.0
        %3269 = vmatpush1.msra.mxu0 0.0
        %3270 = vmatprep.subr.mxu0 0.0
        %3271 = vmatpush1.msra.mxu0 0.0
        %3272 = vmatprep.subr.mxu0 0.0
        %3273 = vmatpush1.msra.mxu0 0.0
        %3274 = vmatprep.subr.mxu0 0.0
        %3275 = vmatpush1.msra.mxu0 0.0
        %3276 = vmatprep.subr.mxu0 0.0
        %3277 = vmatpush1.msra.mxu0 0.0
        %3278 = vmatprep.subr.mxu0 0.0
        %3279 = vmatpush1.msra.mxu0 0.0
        %3280 = vmatprep.subr.mxu0 0.0
        %3281 = vmatpush1.msra.mxu0 0.0
        %3282 = vmatprep.subr.mxu0 0.0
        %3283 = vmatpush1.msra.mxu0 0.0
        %3284 = vmatprep.subr.mxu0 0.0
        %3285 = vmatpush1.msra.mxu0 0.0
        %3286 = vmatprep.subr.mxu0 0.0
        %3287 = vmatpush1.msra.mxu0 0.0
        %3288 = vmatprep.subr.mxu0 0.0
        %3289 = vmatpush1.msra.mxu0 0.0
        %3290 = vmatprep.subr.mxu0 0.0
        %3291 = vmatpush1.msra.mxu0 0.0
        %3292 = vmatprep.subr.mxu0 0.0
        %3293 = vmatpush1.msra.mxu0 0.0
        %3294 = vmatprep.subr.mxu0 0.0
        %3295 = vmatpush1.msra.mxu0 0.0
        %3296 = vmatprep.subr.mxu0 0.0
        %3297 = vmatpush1.msra.mxu0 0.0
        %3298 = vmatprep.subr.mxu0 0.0
        %3299 = vmatpush1.msra.mxu0 0.0
        %3300 = vmatprep.subr.mxu0 0.0
        %3301 = vmatpush1.msra.mxu0 0.0
        %3302 = vmatprep.mubr.f32.mxu0 0.0
        %3303 = vmatmul.mubr.f32.gmra.mrb[0].mxu0 %v3188
        %v3304 = vpop.f32.mrb[0].mxu0
        %v3305 = vadd.f32 0.0, %v3304
        %v3306 = vpop.f32.mrb[0].mxu0
        %3307 = vmatprep.mubr.f32.mxu0 0.0
        %3308 = vmatmul.mubr.f32.gmra.mrb[0].mxu0 %v3191
        %v3309 = vpop.f32.mrb[0].mxu0
        %v3310 = vadd.f32 0.0, %v3309
        %v3311 = vpop.f32.mrb[0].mxu0
        %3312 = vmatprep.mubr.f32.mxu0 0.0
        %3313 = vmatmul.mubr.f32.gmra.mrb[0].mxu0 %v3194
        %v3314 = vpop.f32.mrb[0].mxu0
        %v3315 = vadd.f32 0.0, %v3314
        %v3316 = vpop.f32.mrb[0].mxu0
        %3317 = vmatprep.mubr.f32.mxu0 0.0
        %3318 = vmatmul.mubr.f32.gmra.mrb[0].mxu0 %v3197
        %v3319 = vpop.f32.mrb[0].mxu0
        %v3320 = vadd.f32 0.0, %v3319
        %v3321 = vpop.f32.mrb[0].mxu0
        %3322 = vmatprep.mubr.f32.mxu0 0.0
        %3323 = vmatmul.mubr.f32.gmra.mrb[0].mxu0 %v3200
        %v3324 = vpop.f32.mrb[0].mxu0
        %v3325 = vadd.f32 0.0, %v3324
        %v3326 = vpop.f32.mrb[0].mxu0
        %3327 = vmatprep.mubr.f32.mxu0 0.0
        %3328 = vmatmul.mubr.f32.gmra.mrb[0].mxu0 %v3203
        %v3329 = vpop.f32.mrb[0].mxu0
        %v3330 = vadd.f32 0.0, %v3329
        %v3331 = vpop.f32.mrb[0].mxu0
        %3332 = vmatprep.mubr.f32.mxu0 0.0
        %3333 = vmatmul.mubr.f32.gmra.mrb[0].mxu0 %v3206
        %v3334 = vpop.f32.mrb[0].mxu0
        %v3335 = vadd.f32 0.0, %v3334
        %v3336 = vpop.f32.mrb[0].mxu0
        %3337 = vmatprep.mubr.f32.mxu0 0.0
        %3338 = vmatmul.mubr.f32.gmra.mrb[0].mxu0 %v3209
        %v3339 = vpop.f32.mrb[0].mxu0
        %v3340 = vadd.f32 0.0, %v3339
        %v3341 = vpop.f32.mrb[0].mxu0
        %3342 = vmatprep.mubr.f32.mxu0 0.0
        %3343 = vmatmul.mubr.f32.gmra.mrb[0].mxu0 %v3212
        %v3344 = vpop.f32.mrb[0].mxu0
        %v3345 = vadd.f32 0.0, %v3344
        %v3346 = vpop.f32.mrb[0].mxu0
        %3347 = vmatprep.mubr.f32.mxu0 0.0
        %3348 = vmatmul.mubr.f32.gmra.mrb[0].mxu0 %v3215
        %v3349 = vpop.f32.mrb[0].mxu0
        %v3350 = vadd.f32 0.0, %v3349
        %v3351 = vpop.f32.mrb[0].mxu0
        %3352 = vmatprep.mubr.f32.mxu0 0.0
        %3353 = vmatmul.mubr.f32.gmra.mrb[0].mxu0 %v3218
        %v3354 = vpop.f32.mrb[0].mxu0
        %v3355 = vadd.f32 0.0, %v3354
        %v3356 = vpop.f32.mrb[0].mxu0
        %3357 = vmatprep.mubr.f32.mxu0 0.0
        %3358 = vmatmul.mubr.f32.gmra.mrb[0].mxu0 %v3221
        %v3359 = vpop.f32.mrb[0].mxu0
        %v3360 = vadd.f32 0.0, %v3359
        %v3361 = vpop.f32.mrb[0].mxu0
        %3362 = vmatprep.mubr.f32.mxu0 0.0
        %3363 = vmatmul.mubr.f32.gmra.mrb[0].mxu0 %v3224
        %v3364 = vpop.f32.mrb[0].mxu0
        %v3365 = vadd.f32 0.0, %v3364
        %v3366 = vpop.f32.mrb[0].mxu0
        %3367 = vmatprep.mubr.f32.mxu0 0.0
        %3368 = vmatmul.mubr.f32.gmra.mrb[0].mxu0 %v3227
        %v3369 = vpop.f32.mrb[0].mxu0
        %v3370 = vadd.f32 0.0, %v3369
        %v3371 = vpop.f32.mrb[0].mxu0
        %3372 = vmatprep.mubr.f32.mxu0 0.0
        %3373 = vmatmul.mubr.f32.gmra.mrb[0].mxu0 %v3230
        %v3374 = vpop.f32.mrb[0].mxu0
        %v3375 = vadd.f32 0.0, %v3374
        %v3376 = vpop.f32.mrb[0].mxu0
        %3377 = vmatprep.mubr.f32.mxu0 0.0
        %3378 = vmatmul.mubr.f32.gmra.mrb[0].mxu0 %v3233
        %v3379 = vpop.f32.mrb[0].mxu0
        %v3380 = vadd.f32 0.0, %v3379
        %v3381 = vpop.f32.mrb[0].mxu0
        %3382 = vdwg.mxu0
        %v3383 = vadd.f32 %v3152, %v3305
        %v3384 = vadd.f32 %v3153, %v3310
        %v3385 = vadd.f32 %v3154, %v3315
        %v3386 = vadd.f32 %v3155, %v3320
        %v3387 = vadd.f32 %v3156, %v3325
        %v3388 = vadd.f32 %v3157, %v3330
        %v3389 = vadd.f32 %v3158, %v3335
        %v3390 = vadd.f32 %v3159, %v3340
        %v3391 = vadd.f32 %v3160, %v3345
        %v3392 = vadd.f32 %v3161, %v3350
        %v3393 = vadd.f32 %v3162, %v3355
        %v3394 = vadd.f32 %v3163, %v3360
        %v3395 = vadd.f32 %v3164, %v3365
        %v3396 = vadd.f32 %v3165, %v3370
        %v3397 = vadd.f32 %v3166, %v3375
        %v3398 = vadd.f32 %v3167, %v3380
        %v3399 = vld [vmem:[#allocation2 + $0x21] sm:$0xff]
        %v3400 = vld [vmem:[#allocation2 + $0x29] sm:$0xff]
        %v3401 = vld [vmem:[#allocation2 + $0x31] sm:$0xff]
        %v3402 = vld [vmem:[#allocation2 + $0x39] sm:$0xff]
        %v3403 = vld [vmem:[#allocation2 + $0x41] sm:$0xff]
        %v3404 = vld [vmem:[#allocation2 + $0x49] sm:$0xff]
        %v3405 = vld [vmem:[#allocation2 + $0x51] sm:$0xff]
        %v3406 = vld [vmem:[#allocation2 + $0x59] sm:$0xff]
        %v3407 = vld [vmem:[#allocation2 + $0x61] sm:$0xff]
        %v3408 = vld [vmem:[#allocation2 + $0x69] sm:$0xff]
        %v3409 = vld [vmem:[#allocation2 + $0x71] sm:$0xff]
        %v3410 = vld [vmem:[#allocation2 + $0x79] sm:$0xff]
        %v3411 = vld [vmem:[#allocation2 + $0x81] sm:$0xff]
        %v3412 = vld [vmem:[#allocation2 + $0x89] sm:$0xff]
        %v3413 = vld [vmem:[#allocation2 + $0x91] sm:$0xff]
        %v3414 = vld [vmem:[#allocation2 + $0x99] sm:$0xff]
        %s3415 = scalar_lea.vmem %s4, 112
        %v3416 = vld [vmem:[%s3415] sm:$0xff]
        %v3417 = vld [vmem:[%s3415 + $0x8] sm:$0xf]
        %v3419 = vsel %vm1850, %v3399, 0
        %v3422 = vsel %vm1850, %v3400, 0
        %v3425 = vsel %vm1850, %v3401, 0
        %v3428 = vsel %vm1850, %v3402, 0
        %v3431 = vsel %vm1850, %v3403, 0
        %v3434 = vsel %vm1850, %v3404, 0
        %v3437 = vsel %vm1850, %v3405, 0
        %v3440 = vsel %vm1850, %v3406, 0
        %v3443 = vsel %vm1850, %v3407, 0
        %v3446 = vsel %vm1850, %v3408, 0
        %v3449 = vsel %vm1850, %v3409, 0
        %v3452 = vsel %vm1850, %v3410, 0
        %v3455 = vsel %vm1850, %v3411, 0
        %v3458 = vsel %vm1850, %v3412, 0
        %v3461 = vsel %vm1850, %v3413, 0
        %v3464 = vsel %vm1850, %v3414, 0
        %v3467 = vsel %vm1899, %v3417, 0
        %3469 = vmatprep.subr.mxu0 0.0
        %3470 = vmatpush1.msra.mxu0 %v3416
        %3471 = vmatprep.subr.mxu0 0.0
        %3472 = vmatpush1.msra.mxu0 %v3467
        %3473 = vmatprep.subr.mxu0 0.0
        %3474 = vmatpush1.msra.mxu0 0.0
        %3475 = vmatprep.subr.mxu0 0.0
        %3476 = vmatpush1.msra.mxu0 0.0
        %3477 = vmatprep.subr.mxu0 0.0
        %3478 = vmatpush1.msra.mxu0 0.0
        %3479 = vmatprep.subr.mxu0 0.0
        %3480 = vmatpush1.msra.mxu0 0.0
        %3481 = vmatprep.subr.mxu0 0.0
        %3482 = vmatpush1.msra.mxu0 0.0
        %3483 = vmatprep.subr.mxu0 0.0
        %3484 = vmatpush1.msra.mxu0 0.0
        %3485 = vmatprep.subr.mxu0 0.0
        %3486 = vmatpush1.msra.mxu0 0.0
        %3487 = vmatprep.subr.mxu0 0.0
        %3488 = vmatpush1.msra.mxu0 0.0
        %3489 = vmatprep.subr.mxu0 0.0
        %3490 = vmatpush1.msra.mxu0 0.0
        %3491 = vmatprep.subr.mxu0 0.0
        %3492 = vmatpush1.msra.mxu0 0.0
        %3493 = vmatprep.subr.mxu0 0.0
        %3494 = vmatpush1.msra.mxu0 0.0
        %3495 = vmatprep.subr.mxu0 0.0
        %3496 = vmatpush1.msra.mxu0 0.0
        %3497 = vmatprep.subr.mxu0 0.0
        %3498 = vmatpush1.msra.mxu0 0.0
        %3499 = vmatprep.subr.mxu0 0.0
        %3500 = vmatpush1.msra.mxu0 0.0
        %3501 = vmatprep.subr.mxu0 0.0
        %3502 = vmatpush1.msra.mxu0 0.0
        %3503 = vmatprep.subr.mxu0 0.0
        %3504 = vmatpush1.msra.mxu0 0.0
        %3505 = vmatprep.subr.mxu0 0.0
        %3506 = vmatpush1.msra.mxu0 0.0
        %3507 = vmatprep.subr.mxu0 0.0
        %3508 = vmatpush1.msra.mxu0 0.0
        %3509 = vmatprep.subr.mxu0 0.0
        %3510 = vmatpush1.msra.mxu0 0.0
        %3511 = vmatprep.subr.mxu0 0.0
        %3512 = vmatpush1.msra.mxu0 0.0
        %3513 = vmatprep.subr.mxu0 0.0
        %3514 = vmatpush1.msra.mxu0 0.0
        %3515 = vmatprep.subr.mxu0 0.0
        %3516 = vmatpush1.msra.mxu0 0.0
        %3517 = vmatprep.subr.mxu0 0.0
        %3518 = vmatpush1.msra.mxu0 0.0
        %3519 = vmatprep.subr.mxu0 0.0
        %3520 = vmatpush1.msra.mxu0 0.0
        %3521 = vmatprep.subr.mxu0 0.0
        %3522 = vmatpush1.msra.mxu0 0.0
        %3523 = vmatprep.subr.mxu0 0.0
        %3524 = vmatpush1.msra.mxu0 0.0
        %3525 = vmatprep.subr.mxu0 0.0
        %3526 = vmatpush1.msra.mxu0 0.0
        %3527 = vmatprep.subr.mxu0 0.0
        %3528 = vmatpush1.msra.mxu0 0.0
        %3529 = vmatprep.subr.mxu0 0.0
        %3530 = vmatpush1.msra.mxu0 0.0
        %3531 = vmatprep.subr.mxu0 0.0
        %3532 = vmatpush1.msra.mxu0 0.0
        %3533 = vmatprep.mubr.f32.mxu0 0.0
        %3534 = vmatmul.mubr.f32.gmra.mrb[0].mxu0 %v3419
        %v3535 = vpop.f32.mrb[0].mxu0
        %v3536 = vadd.f32 0.0, %v3535
        %v3537 = vpop.f32.mrb[0].mxu0
        %3538 = vmatprep.mubr.f32.mxu0 0.0
        %3539 = vmatmul.mubr.f32.gmra.mrb[0].mxu0 %v3422
        %v3540 = vpop.f32.mrb[0].mxu0
        %v3541 = vadd.f32 0.0, %v3540
        %v3542 = vpop.f32.mrb[0].mxu0
        %3543 = vmatprep.mubr.f32.mxu0 0.0
        %3544 = vmatmul.mubr.f32.gmra.mrb[0].mxu0 %v3425
        %v3545 = vpop.f32.mrb[0].mxu0
        %v3546 = vadd.f32 0.0, %v3545
        %v3547 = vpop.f32.mrb[0].mxu0
        %3548 = vmatprep.mubr.f32.mxu0 0.0
        %3549 = vmatmul.mubr.f32.gmra.mrb[0].mxu0 %v3428
        %v3550 = vpop.f32.mrb[0].mxu0
        %v3551 = vadd.f32 0.0, %v3550
        %v3552 = vpop.f32.mrb[0].mxu0
        %3553 = vmatprep.mubr.f32.mxu0 0.0
        %3554 = vmatmul.mubr.f32.gmra.mrb[0].mxu0 %v3431
        %v3555 = vpop.f32.mrb[0].mxu0
        %v3556 = vadd.f32 0.0, %v3555
        %v3557 = vpop.f32.mrb[0].mxu0
        %3558 = vmatprep.mubr.f32.mxu0 0.0
        %3559 = vmatmul.mubr.f32.gmra.mrb[0].mxu0 %v3434
        %v3560 = vpop.f32.mrb[0].mxu0
        %v3561 = vadd.f32 0.0, %v3560
        %v3562 = vpop.f32.mrb[0].mxu0
        %3563 = vmatprep.mubr.f32.mxu0 0.0
        %3564 = vmatmul.mubr.f32.gmra.mrb[0].mxu0 %v3437
        %v3565 = vpop.f32.mrb[0].mxu0
        %v3566 = vadd.f32 0.0, %v3565
        %v3567 = vpop.f32.mrb[0].mxu0
        %3568 = vmatprep.mubr.f32.mxu0 0.0
        %3569 = vmatmul.mubr.f32.gmra.mrb[0].mxu0 %v3440
        %v3570 = vpop.f32.mrb[0].mxu0
        %v3571 = vadd.f32 0.0, %v3570
        %v3572 = vpop.f32.mrb[0].mxu0
        %3573 = vmatprep.mubr.f32.mxu0 0.0
        %3574 = vmatmul.mubr.f32.gmra.mrb[0].mxu0 %v3443
        %v3575 = vpop.f32.mrb[0].mxu0
        %v3576 = vadd.f32 0.0, %v3575
        %v3577 = vpop.f32.mrb[0].mxu0
        %3578 = vmatprep.mubr.f32.mxu0 0.0
        %3579 = vmatmul.mubr.f32.gmra.mrb[0].mxu0 %v3446
        %v3580 = vpop.f32.mrb[0].mxu0
        %v3581 = vadd.f32 0.0, %v3580
        %v3582 = vpop.f32.mrb[0].mxu0
        %3583 = vmatprep.mubr.f32.mxu0 0.0
        %3584 = vmatmul.mubr.f32.gmra.mrb[0].mxu0 %v3449
        %v3585 = vpop.f32.mrb[0].mxu0
        %v3586 = vadd.f32 0.0, %v3585
        %v3587 = vpop.f32.mrb[0].mxu0
        %3588 = vmatprep.mubr.f32.mxu0 0.0
        %3589 = vmatmul.mubr.f32.gmra.mrb[0].mxu0 %v3452
        %v3590 = vpop.f32.mrb[0].mxu0
        %v3591 = vadd.f32 0.0, %v3590
        %v3592 = vpop.f32.mrb[0].mxu0
        %3593 = vmatprep.mubr.f32.mxu0 0.0
        %3594 = vmatmul.mubr.f32.gmra.mrb[0].mxu0 %v3455
        %v3595 = vpop.f32.mrb[0].mxu0
        %v3596 = vadd.f32 0.0, %v3595
        %v3597 = vpop.f32.mrb[0].mxu0
        %3598 = vmatprep.mubr.f32.mxu0 0.0
        %3599 = vmatmul.mubr.f32.gmra.mrb[0].mxu0 %v3458
        %v3600 = vpop.f32.mrb[0].mxu0
        %v3601 = vadd.f32 0.0, %v3600
        %v3602 = vpop.f32.mrb[0].mxu0
        %3603 = vmatprep.mubr.f32.mxu0 0.0
        %3604 = vmatmul.mubr.f32.gmra.mrb[0].mxu0 %v3461
        %v3605 = vpop.f32.mrb[0].mxu0
        %v3606 = vadd.f32 0.0, %v3605
        %v3607 = vpop.f32.mrb[0].mxu0
        %3608 = vmatprep.mubr.f32.mxu0 0.0
        %3609 = vmatmul.mubr.f32.gmra.mrb[0].mxu0 %v3464
        %v3610 = vpop.f32.mrb[0].mxu0
        %v3611 = vadd.f32 0.0, %v3610
        %v3612 = vpop.f32.mrb[0].mxu0
        %3613 = vdwg.mxu0
        %v3614 = vadd.f32 %v3383, %v3536
        %v3615 = vadd.f32 %v3384, %v3541
        %v3616 = vadd.f32 %v3385, %v3546
        %v3617 = vadd.f32 %v3386, %v3551
        %v3618 = vadd.f32 %v3387, %v3556
        %v3619 = vadd.f32 %v3388, %v3561
        %v3620 = vadd.f32 %v3389, %v3566
        %v3621 = vadd.f32 %v3390, %v3571
        %v3622 = vadd.f32 %v3391, %v3576
        %v3623 = vadd.f32 %v3392, %v3581
        %v3624 = vadd.f32 %v3393, %v3586
        %v3625 = vadd.f32 %v3394, %v3591
        %v3626 = vadd.f32 %v3395, %v3596
        %v3627 = vadd.f32 %v3396, %v3601
        %v3628 = vadd.f32 %v3397, %v3606
        %v3629 = vadd.f32 %v3398, %v3611
        %v3630 = vld [vmem:[#allocation2 + $0x22] sm:$0xff]
        %v3631 = vld [vmem:[#allocation2 + $0x2a] sm:$0xff]
        %v3632 = vld [vmem:[#allocation2 + $0x32] sm:$0xff]
        %v3633 = vld [vmem:[#allocation2 + $0x3a] sm:$0xff]
        %v3634 = vld [vmem:[#allocation2 + $0x42] sm:$0xff]
        %v3635 = vld [vmem:[#allocation2 + $0x4a] sm:$0xff]
        %v3636 = vld [vmem:[#allocation2 + $0x52] sm:$0xff]
        %v3637 = vld [vmem:[#allocation2 + $0x5a] sm:$0xff]
        %v3638 = vld [vmem:[#allocation2 + $0x62] sm:$0xff]
        %v3639 = vld [vmem:[#allocation2 + $0x6a] sm:$0xff]
        %v3640 = vld [vmem:[#allocation2 + $0x72] sm:$0xff]
        %v3641 = vld [vmem:[#allocation2 + $0x7a] sm:$0xff]
        %v3642 = vld [vmem:[#allocation2 + $0x82] sm:$0xff]
        %v3643 = vld [vmem:[#allocation2 + $0x8a] sm:$0xff]
        %v3644 = vld [vmem:[#allocation2 + $0x92] sm:$0xff]
        %v3645 = vld [vmem:[#allocation2 + $0x9a] sm:$0xff]
        %s3646 = scalar_lea.vmem %s4, 128
        %v3647 = vld [vmem:[%s3646] sm:$0xff]
        %v3648 = vld [vmem:[%s3646 + $0x8] sm:$0xf]
        %v3650 = vsel %vm1850, %v3630, 0
        %v3653 = vsel %vm1850, %v3631, 0
        %v3656 = vsel %vm1850, %v3632, 0
        %v3659 = vsel %vm1850, %v3633, 0
        %v3662 = vsel %vm1850, %v3634, 0
        %v3665 = vsel %vm1850, %v3635, 0
        %v3668 = vsel %vm1850, %v3636, 0
        %v3671 = vsel %vm1850, %v3637, 0
        %v3674 = vsel %vm1850, %v3638, 0
        %v3677 = vsel %vm1850, %v3639, 0
        %v3680 = vsel %vm1850, %v3640, 0
        %v3683 = vsel %vm1850, %v3641, 0
        %v3686 = vsel %vm1850, %v3642, 0
        %v3689 = vsel %vm1850, %v3643, 0
        %v3692 = vsel %vm1850, %v3644, 0
        %v3695 = vsel %vm1850, %v3645, 0
        %v3698 = vsel %vm1899, %v3648, 0
        %3700 = vmatprep.subr.mxu0 0.0
        %3701 = vmatpush1.msra.mxu0 %v3647
        %3702 = vmatprep.subr.mxu0 0.0
        %3703 = vmatpush1.msra.mxu0 %v3698
        %3704 = vmatprep.subr.mxu0 0.0
        %3705 = vmatpush1.msra.mxu0 0.0
        %3706 = vmatprep.subr.mxu0 0.0
        %3707 = vmatpush1.msra.mxu0 0.0
        %3708 = vmatprep.subr.mxu0 0.0
        %3709 = vmatpush1.msra.mxu0 0.0
        %3710 = vmatprep.subr.mxu0 0.0
        %3711 = vmatpush1.msra.mxu0 0.0
        %3712 = vmatprep.subr.mxu0 0.0
        %3713 = vmatpush1.msra.mxu0 0.0
        %3714 = vmatprep.subr.mxu0 0.0
        %3715 = vmatpush1.msra.mxu0 0.0
        %3716 = vmatprep.subr.mxu0 0.0
        %3717 = vmatpush1.msra.mxu0 0.0
        %3718 = vmatprep.subr.mxu0 0.0
        %3719 = vmatpush1.msra.mxu0 0.0
        %3720 = vmatprep.subr.mxu0 0.0
        %3721 = vmatpush1.msra.mxu0 0.0
        %3722 = vmatprep.subr.mxu0 0.0
        %3723 = vmatpush1.msra.mxu0 0.0
        %3724 = vmatprep.subr.mxu0 0.0
        %3725 = vmatpush1.msra.mxu0 0.0
        %3726 = vmatprep.subr.mxu0 0.0
        %3727 = vmatpush1.msra.mxu0 0.0
        %3728 = vmatprep.subr.mxu0 0.0
        %3729 = vmatpush1.msra.mxu0 0.0
        %3730 = vmatprep.subr.mxu0 0.0
        %3731 = vmatpush1.msra.mxu0 0.0
        %3732 = vmatprep.subr.mxu0 0.0
        %3733 = vmatpush1.msra.mxu0 0.0
        %3734 = vmatprep.subr.mxu0 0.0
        %3735 = vmatpush1.msra.mxu0 0.0
        %3736 = vmatprep.subr.mxu0 0.0
        %3737 = vmatpush1.msra.mxu0 0.0
        %3738 = vmatprep.subr.mxu0 0.0
        %3739 = vmatpush1.msra.mxu0 0.0
        %3740 = vmatprep.subr.mxu0 0.0
        %3741 = vmatpush1.msra.mxu0 0.0
        %3742 = vmatprep.subr.mxu0 0.0
        %3743 = vmatpush1.msra.mxu0 0.0
        %3744 = vmatprep.subr.mxu0 0.0
        %3745 = vmatpush1.msra.mxu0 0.0
        %3746 = vmatprep.subr.mxu0 0.0
        %3747 = vmatpush1.msra.mxu0 0.0
        %3748 = vmatprep.subr.mxu0 0.0
        %3749 = vmatpush1.msra.mxu0 0.0
        %3750 = vmatprep.subr.mxu0 0.0
        %3751 = vmatpush1.msra.mxu0 0.0
        %3752 = vmatprep.subr.mxu0 0.0
        %3753 = vmatpush1.msra.mxu0 0.0
        %3754 = vmatprep.subr.mxu0 0.0
        %3755 = vmatpush1.msra.mxu0 0.0
        %3756 = vmatprep.subr.mxu0 0.0
        %3757 = vmatpush1.msra.mxu0 0.0
        %3758 = vmatprep.subr.mxu0 0.0
        %3759 = vmatpush1.msra.mxu0 0.0
        %3760 = vmatprep.subr.mxu0 0.0
        %3761 = vmatpush1.msra.mxu0 0.0
        %3762 = vmatprep.subr.mxu0 0.0
        %3763 = vmatpush1.msra.mxu0 0.0
        %3764 = vmatprep.mubr.f32.mxu0 0.0
        %3765 = vmatmul.mubr.f32.gmra.mrb[0].mxu0 %v3650
        %v3766 = vpop.f32.mrb[0].mxu0
        %v3767 = vadd.f32 0.0, %v3766
        %v3768 = vpop.f32.mrb[0].mxu0
        %3769 = vmatprep.mubr.f32.mxu0 0.0
        %3770 = vmatmul.mubr.f32.gmra.mrb[0].mxu0 %v3653
        %v3771 = vpop.f32.mrb[0].mxu0
        %v3772 = vadd.f32 0.0, %v3771
        %v3773 = vpop.f32.mrb[0].mxu0
        %3774 = vmatprep.mubr.f32.mxu0 0.0
        %3775 = vmatmul.mubr.f32.gmra.mrb[0].mxu0 %v3656
        %v3776 = vpop.f32.mrb[0].mxu0
        %v3777 = vadd.f32 0.0, %v3776
        %v3778 = vpop.f32.mrb[0].mxu0
        %3779 = vmatprep.mubr.f32.mxu0 0.0
        %3780 = vmatmul.mubr.f32.gmra.mrb[0].mxu0 %v3659
        %v3781 = vpop.f32.mrb[0].mxu0
        %v3782 = vadd.f32 0.0, %v3781
        %v3783 = vpop.f32.mrb[0].mxu0
        %3784 = vmatprep.mubr.f32.mxu0 0.0
        %3785 = vmatmul.mubr.f32.gmra.mrb[0].mxu0 %v3662
        %v3786 = vpop.f32.mrb[0].mxu0
        %v3787 = vadd.f32 0.0, %v3786
        %v3788 = vpop.f32.mrb[0].mxu0
        %3789 = vmatprep.mubr.f32.mxu0 0.0
        %3790 = vmatmul.mubr.f32.gmra.mrb[0].mxu0 %v3665
        %v3791 = vpop.f32.mrb[0].mxu0
        %v3792 = vadd.f32 0.0, %v3791
        %v3793 = vpop.f32.mrb[0].mxu0
        %3794 = vmatprep.mubr.f32.mxu0 0.0
        %3795 = vmatmul.mubr.f32.gmra.mrb[0].mxu0 %v3668
        %v3796 = vpop.f32.mrb[0].mxu0
        %v3797 = vadd.f32 0.0, %v3796
        %v3798 = vpop.f32.mrb[0].mxu0
        %3799 = vmatprep.mubr.f32.mxu0 0.0
        %3800 = vmatmul.mubr.f32.gmra.mrb[0].mxu0 %v3671
        %v3801 = vpop.f32.mrb[0].mxu0
        %v3802 = vadd.f32 0.0, %v3801
        %v3803 = vpop.f32.mrb[0].mxu0
        %3804 = vmatprep.mubr.f32.mxu0 0.0
        %3805 = vmatmul.mubr.f32.gmra.mrb[0].mxu0 %v3674
        %v3806 = vpop.f32.mrb[0].mxu0
        %v3807 = vadd.f32 0.0, %v3806
        %v3808 = vpop.f32.mrb[0].mxu0
        %3809 = vmatprep.mubr.f32.mxu0 0.0
        %3810 = vmatmul.mubr.f32.gmra.mrb[0].mxu0 %v3677
        %v3811 = vpop.f32.mrb[0].mxu0
        %v3812 = vadd.f32 0.0, %v3811
        %v3813 = vpop.f32.mrb[0].mxu0
        %3814 = vmatprep.mubr.f32.mxu0 0.0
        %3815 = vmatmul.mubr.f32.gmra.mrb[0].mxu0 %v3680
        %v3816 = vpop.f32.mrb[0].mxu0
        %v3817 = vadd.f32 0.0, %v3816
        %v3818 = vpop.f32.mrb[0].mxu0
        %3819 = vmatprep.mubr.f32.mxu0 0.0
        %3820 = vmatmul.mubr.f32.gmra.mrb[0].mxu0 %v3683
        %v3821 = vpop.f32.mrb[0].mxu0
        %v3822 = vadd.f32 0.0, %v3821
        %v3823 = vpop.f32.mrb[0].mxu0
        %3824 = vmatprep.mubr.f32.mxu0 0.0
        %3825 = vmatmul.mubr.f32.gmra.mrb[0].mxu0 %v3686
        %v3826 = vpop.f32.mrb[0].mxu0
        %v3827 = vadd.f32 0.0, %v3826
        %v3828 = vpop.f32.mrb[0].mxu0
        %3829 = vmatprep.mubr.f32.mxu0 0.0
        %3830 = vmatmul.mubr.f32.gmra.mrb[0].mxu0 %v3689
        %v3831 = vpop.f32.mrb[0].mxu0
        %v3832 = vadd.f32 0.0, %v3831
        %v3833 = vpop.f32.mrb[0].mxu0
        %3834 = vmatprep.mubr.f32.mxu0 0.0
        %3835 = vmatmul.mubr.f32.gmra.mrb[0].mxu0 %v3692
        %v3836 = vpop.f32.mrb[0].mxu0
        %v3837 = vadd.f32 0.0, %v3836
        %v3838 = vpop.f32.mrb[0].mxu0
        %3839 = vmatprep.mubr.f32.mxu0 0.0
        %3840 = vmatmul.mubr.f32.gmra.mrb[0].mxu0 %v3695
        %v3841 = vpop.f32.mrb[0].mxu0
        %v3842 = vadd.f32 0.0, %v3841
        %v3843 = vpop.f32.mrb[0].mxu0
        %3844 = vdwg.mxu0
        %v3845 = vadd.f32 %v3614, %v3767
        %v3846 = vadd.f32 %v3615, %v3772
        %v3847 = vadd.f32 %v3616, %v3777
        %v3848 = vadd.f32 %v3617, %v3782
        %v3849 = vadd.f32 %v3618, %v3787
        %v3850 = vadd.f32 %v3619, %v3792
        %v3851 = vadd.f32 %v3620, %v3797
        %v3852 = vadd.f32 %v3621, %v3802
        %v3853 = vadd.f32 %v3622, %v3807
        %v3854 = vadd.f32 %v3623, %v3812
        %v3855 = vadd.f32 %v3624, %v3817
        %v3856 = vadd.f32 %v3625, %v3822
        %v3857 = vadd.f32 %v3626, %v3827
        %v3858 = vadd.f32 %v3627, %v3832
        %v3859 = vadd.f32 %v3628, %v3837
        %v3860 = vadd.f32 %v3629, %v3842
        %v3861 = vld [vmem:[%s7] sm:$0x1]
        %v3863 = vlaneseq
        %v3864 = vshrl.u32 %v3863, 7
        %v3865 = vsub.s32 0, %v3864
        %v3866 = vrot.slane %v3861, %v3865
        %v3868 = vadd.f32 %v3845, %v3866
        %v3869 = vadd.f32 %v3846, %v3866
        %v3870 = vadd.f32 %v3847, %v3866
        %v3871 = vadd.f32 %v3848, %v3866
        %v3872 = vadd.f32 %v3849, %v3866
        %v3873 = vadd.f32 %v3850, %v3866
        %v3874 = vadd.f32 %v3851, %v3866
        %v3875 = vadd.f32 %v3852, %v3866
        %v3876 = vadd.f32 %v3853, %v3866
        %v3877 = vadd.f32 %v3854, %v3866
        %v3878 = vadd.f32 %v3855, %v3866
        %v3879 = vadd.f32 %v3856, %v3866
        %v3880 = vadd.f32 %v3857, %v3866
        %v3881 = vadd.f32 %v3858, %v3866
        %v3882 = vadd.f32 %v3859, %v3866
        %v3883 = vadd.f32 %v3860, %v3866
        %v3884 = vmax.f32 %v3868, 0.0
        %v3885 = vmax.f32 %v3869, 0.0
        %v3886 = vmax.f32 %v3870, 0.0
        %v3887 = vmax.f32 %v3871, 0.0
        %v3888 = vmax.f32 %v3872, 0.0
        %v3889 = vmax.f32 %v3873, 0.0
        %v3890 = vmax.f32 %v3874, 0.0
        %v3891 = vmax.f32 %v3875, 0.0
        %v3892 = vmax.f32 %v3876, 0.0
        %v3893 = vmax.f32 %v3877, 0.0
        %v3894 = vmax.f32 %v3878, 0.0
        %v3895 = vmax.f32 %v3879, 0.0
        %v3896 = vmax.f32 %v3880, 0.0
        %v3897 = vmax.f32 %v3881, 0.0
        %v3898 = vmax.f32 %v3882, 0.0
        %v3899 = vmax.f32 %v3883, 0.0
        %v3900 = vld [vmem:[%s5] sm:$0xf]
        %v3901 = vld [vmem:[%s8] sm:$0x1]
        %v3903 = vlaneseq
        %v3904 = vshrl.u32 %v3903, 7
        %v3905 = vsub.s32 0, %v3904
        %v3906 = vrot.slane %v3901, %v3905
        %vm3908 = vcmask 31744
        %v3910 = vsel %vm3908, %v3884, 0
        %v3913 = vsel %vm3908, %v3885, 0
        %v3916 = vsel %vm3908, %v3886, 0
        %v3919 = vsel %vm3908, %v3887, 0
        %v3922 = vsel %vm3908, %v3888, 0
        %v3925 = vsel %vm3908, %v3889, 0
        %v3928 = vsel %vm3908, %v3890, 0
        %v3931 = vsel %vm3908, %v3891, 0
        %v3934 = vsel %vm3908, %v3892, 0
        %v3937 = vsel %vm3908, %v3893, 0
        %v3940 = vsel %vm3908, %v3894, 0
        %v3943 = vsel %vm3908, %v3895, 0
        %v3946 = vsel %vm3908, %v3896, 0
        %v3949 = vsel %vm3908, %v3897, 0
        %v3952 = vsel %vm3908, %v3898, 0
        %v3955 = vsel %vm3908, %v3899, 0
        %v3958 = vsel %vm1899, %v3900, 0
        %3960 = vmatprep.subr.mxu0 0.0
        %3961 = vmatpush1.msra.mxu0 %v3958
        %3962 = vmatprep.subr.mxu0 0.0
        %3963 = vmatpush1.msra.mxu0 0.0
        %3964 = vmatprep.subr.mxu0 0.0
        %3965 = vmatpush1.msra.mxu0 0.0
        %3966 = vmatprep.subr.mxu0 0.0
        %3967 = vmatpush1.msra.mxu0 0.0
        %3968 = vmatprep.subr.mxu0 0.0
        %3969 = vmatpush1.msra.mxu0 0.0
        %3970 = vmatprep.subr.mxu0 0.0
        %3971 = vmatpush1.msra.mxu0 0.0
        %3972 = vmatprep.subr.mxu0 0.0
        %3973 = vmatpush1.msra.mxu0 0.0
        %3974 = vmatprep.subr.mxu0 0.0
        %3975 = vmatpush1.msra.mxu0 0.0
        %3976 = vmatprep.subr.mxu0 0.0
        %3977 = vmatpush1.msra.mxu0 0.0
        %3978 = vmatprep.subr.mxu0 0.0
        %3979 = vmatpush1.msra.mxu0 0.0
        %3980 = vmatprep.subr.mxu0 0.0
        %3981 = vmatpush1.msra.mxu0 0.0
        %3982 = vmatprep.subr.mxu0 0.0
        %3983 = vmatpush1.msra.mxu0 0.0
        %3984 = vmatprep.subr.mxu0 0.0
        %3985 = vmatpush1.msra.mxu0 0.0
        %3986 = vmatprep.subr.mxu0 0.0
        %3987 = vmatpush1.msra.mxu0 0.0
        %3988 = vmatprep.subr.mxu0 0.0
        %3989 = vmatpush1.msra.mxu0 0.0
        %3990 = vmatprep.subr.mxu0 0.0
        %3991 = vmatpush1.msra.mxu0 0.0
        %3992 = vmatprep.subr.mxu0 0.0
        %3993 = vmatpush1.msra.mxu0 0.0
        %3994 = vmatprep.subr.mxu0 0.0
        %3995 = vmatpush1.msra.mxu0 0.0
        %3996 = vmatprep.subr.mxu0 0.0
        %3997 = vmatpush1.msra.mxu0 0.0
        %3998 = vmatprep.subr.mxu0 0.0
        %3999 = vmatpush1.msra.mxu0 0.0
        %4000 = vmatprep.subr.mxu0 0.0
        %4001 = vmatpush1.msra.mxu0 0.0
        %4002 = vmatprep.subr.mxu0 0.0
        %4003 = vmatpush1.msra.mxu0 0.0
        %4004 = vmatprep.subr.mxu0 0.0
        %4005 = vmatpush1.msra.mxu0 0.0
        %4006 = vmatprep.subr.mxu0 0.0
        %4007 = vmatpush1.msra.mxu0 0.0
        %4008 = vmatprep.subr.mxu0 0.0
        %4009 = vmatpush1.msra.mxu0 0.0
        %4010 = vmatprep.subr.mxu0 0.0
        %4011 = vmatpush1.msra.mxu0 0.0
        %4012 = vmatprep.subr.mxu0 0.0
        %4013 = vmatpush1.msra.mxu0 0.0
        %4014 = vmatprep.subr.mxu0 0.0
        %4015 = vmatpush1.msra.mxu0 0.0
        %4016 = vmatprep.subr.mxu0 0.0
        %4017 = vmatpush1.msra.mxu0 0.0
        %4018 = vmatprep.subr.mxu0 0.0
        %4019 = vmatpush1.msra.mxu0 0.0
        %4020 = vmatprep.subr.mxu0 0.0
        %4021 = vmatpush1.msra.mxu0 0.0
        %4022 = vmatprep.subr.mxu0 0.0
        %4023 = vmatpush1.msra.mxu0 0.0
        %4024 = vmatprep.mubr.f32.mxu0 0.0
        %4025 = vmatmul.mubr.f32.gmra.mrb[0].mxu0 %v3910
        %v4026 = vpop.f32.mrb[0].mxu0
        %v4027 = vadd.f32 %v3906, %v4026
        %v4028 = vpop.f32.mrb[0].mxu0
        %4029 = vmatprep.mubr.f32.mxu0 0.0
        %4030 = vmatmul.mubr.f32.gmra.mrb[0].mxu0 %v3913
        %v4031 = vpop.f32.mrb[0].mxu0
        %v4032 = vpop.f32.mrb[0].mxu0
        %4033 = vmatprep.mubr.f32.mxu0 0.0
        %4034 = vmatmul.mubr.f32.gmra.mrb[0].mxu0 %v3916
        %v4035 = vpop.f32.mrb[0].mxu0
        %v4036 = vadd.f32 %v3906, %v4035
        %v4037 = vpop.f32.mrb[0].mxu0
        %4038 = vmatprep.mubr.f32.mxu0 0.0
        %4039 = vmatmul.mubr.f32.gmra.mrb[0].mxu0 %v3919
        %v4040 = vpop.f32.mrb[0].mxu0
        %v4041 = vpop.f32.mrb[0].mxu0
        %4042 = vmatprep.mubr.f32.mxu0 0.0
        %4043 = vmatmul.mubr.f32.gmra.mrb[0].mxu0 %v3922
        %v4044 = vpop.f32.mrb[0].mxu0
        %v4045 = vadd.f32 %v3906, %v4044
        %v4046 = vpop.f32.mrb[0].mxu0
        %4047 = vmatprep.mubr.f32.mxu0 0.0
        %4048 = vmatmul.mubr.f32.gmra.mrb[0].mxu0 %v3925
        %v4049 = vpop.f32.mrb[0].mxu0
        %v4050 = vpop.f32.mrb[0].mxu0
        %4051 = vmatprep.mubr.f32.mxu0 0.0
        %4052 = vmatmul.mubr.f32.gmra.mrb[0].mxu0 %v3928
        %v4053 = vpop.f32.mrb[0].mxu0
        %v4054 = vadd.f32 %v3906, %v4053
        %v4055 = vpop.f32.mrb[0].mxu0
        %4056 = vmatprep.mubr.f32.mxu0 0.0
        %4057 = vmatmul.mubr.f32.gmra.mrb[0].mxu0 %v3931
        %v4058 = vpop.f32.mrb[0].mxu0
        %v4059 = vpop.f32.mrb[0].mxu0
        %4060 = vmatprep.mubr.f32.mxu0 0.0
        %4061 = vmatmul.mubr.f32.gmra.mrb[0].mxu0 %v3934
        %v4062 = vpop.f32.mrb[0].mxu0
        %v4063 = vadd.f32 %v3906, %v4062
        %v4064 = vpop.f32.mrb[0].mxu0
        %4065 = vmatprep.mubr.f32.mxu0 0.0
        %4066 = vmatmul.mubr.f32.gmra.mrb[0].mxu0 %v3937
        %v4067 = vpop.f32.mrb[0].mxu0
        %v4068 = vpop.f32.mrb[0].mxu0
        %4069 = vmatprep.mubr.f32.mxu0 0.0
        %4070 = vmatmul.mubr.f32.gmra.mrb[0].mxu0 %v3940
        %v4071 = vpop.f32.mrb[0].mxu0
        %v4072 = vadd.f32 %v3906, %v4071
        %v4073 = vpop.f32.mrb[0].mxu0
        %4074 = vmatprep.mubr.f32.mxu0 0.0
        %4075 = vmatmul.mubr.f32.gmra.mrb[0].mxu0 %v3943
        %v4076 = vpop.f32.mrb[0].mxu0
        %v4077 = vpop.f32.mrb[0].mxu0
        %4078 = vmatprep.mubr.f32.mxu0 0.0
        %4079 = vmatmul.mubr.f32.gmra.mrb[0].mxu0 %v3946
        %v4080 = vpop.f32.mrb[0].mxu0
        %v4081 = vadd.f32 %v3906, %v4080
        %v4082 = vpop.f32.mrb[0].mxu0
        %4083 = vmatprep.mubr.f32.mxu0 0.0
        %4084 = vmatmul.mubr.f32.gmra.mrb[0].mxu0 %v3949
        %v4085 = vpop.f32.mrb[0].mxu0
        %v4086 = vpop.f32.mrb[0].mxu0
        %4087 = vmatprep.mubr.f32.mxu0 0.0
        %4088 = vmatmul.mubr.f32.gmra.mrb[0].mxu0 %v3952
        %v4089 = vpop.f32.mrb[0].mxu0
        %v4090 = vadd.f32 %v3906, %v4089
        %v4091 = vpop.f32.mrb[0].mxu0
        %4092 = vmatprep.mubr.f32.mxu0 0.0
        %4093 = vmatmul.mubr.f32.gmra.mrb[0].mxu0 %v3955
        %v4094 = vpop.f32.mrb[0].mxu0
        %v4095 = vpop.f32.mrb[0].mxu0
        %4096 = vdwg.mxu0
        %v4097 = vld [vmem:[#allocation3 + $0x11] sm:$0xff]
        %v4098 = vld [vmem:[#allocation3 + $0x21] sm:$0xff]
        %v4099 = vld [vmem:[#allocation3 + $0x31] sm:$0xff]
        %v4100 = vld [vmem:[#allocation3 + $0x41] sm:$0xff]
        %v4101 = vld [vmem:[#allocation3 + $0x51] sm:$0xff]
        %v4102 = vld [vmem:[#allocation3 + $0x61] sm:$0xff]
        %v4103 = vld [vmem:[#allocation3 + $0x71] sm:$0xff]
        %v4104 = vld [vmem:[#allocation3 + $0x81] sm:$0xff]
        %v4105 = vadd.f32 %v4027, %v4097
        %v4106 = vadd.f32 %v4036, %v4098
        %v4107 = vadd.f32 %v4045, %v4099
        %v4108 = vadd.f32 %v4054, %v4100
        %v4109 = vadd.f32 %v4063, %v4101
        %v4110 = vadd.f32 %v4072, %v4102
        %v4111 = vadd.f32 %v4081, %v4103
        %v4112 = vadd.f32 %v4090, %v4104
        %v4113 = vmax.f32 %v4105, 0.0
        %v4114 = vmax.f32 %v4106, 0.0
        %v4115 = vmax.f32 %v4107, 0.0
        %v4116 = vmax.f32 %v4108, 0.0
        %v4117 = vmax.f32 %v4109, 0.0
        %v4118 = vmax.f32 %v4110, 0.0
        %v4119 = vmax.f32 %v4111, 0.0
        %v4120 = vmax.f32 %v4112, 0.0
        %vm4121 = vcmask 130048
        %4122 = vst.msk [vmem:[%s381] sm:$0xff] %vm4121, %v4113
        %4123 = vst.msk [vmem:[%s381 + $0x8] sm:$0xff] %vm4121, %v4114
        %4124 = vst.msk [vmem:[%s381 + $0x10] sm:$0xff] %vm4121, %v4115
        %4125 = vst.msk [vmem:[%s381 + $0x18] sm:$0xff] %vm4121, %v4116
        %4126 = vst.msk [vmem:[%s381 + $0x20] sm:$0xff] %vm4121, %v4117
        %4127 = vst.msk [vmem:[%s381 + $0x28] sm:$0xff] %vm4121, %v4118
        %4128 = vst.msk [vmem:[%s381 + $0x30] sm:$0xff] %vm4121, %v4119
        %4129 = vst.msk [vmem:[%s381 + $0x38] sm:$0xff] %vm4121, %v4120
        %v4130 = vld [vmem:[%s398] sm:$0xff]
        %v4131 = vld [vmem:[%s398 + $0x8] sm:$0xff]
        %v4132 = vld [vmem:[%s398 + $0x10] sm:$0xff]
        %v4133 = vld [vmem:[%s398 + $0x18] sm:$0xff]
        %v4134 = vld [vmem:[%s398 + $0x20] sm:$0xff]
        %v4135 = vld [vmem:[%s398 + $0x28] sm:$0xff]
        %v4136 = vld [vmem:[%s398 + $0x30] sm:$0xff]
        %v4137 = vld [vmem:[%s398 + $0x38] sm:$0xff]
        %v4138 = vld [vmem:[%s398 + $0x40] sm:$0xff]
        %v4139 = vld [vmem:[%s398 + $0x48] sm:$0xff]
        %v4140 = vld [vmem:[%s398 + $0x50] sm:$0xff]
        %v4141 = vld [vmem:[%s398 + $0x58] sm:$0xff]
        %v4142 = vld [vmem:[%s398 + $0x60] sm:$0xff]
        %v4143 = vld [vmem:[%s398 + $0x68] sm:$0xff]
        %v4144 = vld [vmem:[%s398 + $0x70] sm:$0xff]
        %v4145 = vld [vmem:[%s398 + $0x78] sm:$0xff]
        %v4146 = vld [vmem:[%s398 + $0x80] sm:$0xff]
        %v4147 = vld [vmem:[%s398 + $0x88] sm:$0xff]
        %v4148 = vld [vmem:[%s398 + $0x90] sm:$0xff]
        %v4149 = vld [vmem:[%s398 + $0x98] sm:$0xff]
        %v4150 = vld [vmem:[%s398 + $0xa0] sm:$0xff]
        %4151 = vst.msk [vmem:[#allocation3] sm:$0xff] %vm4121, %v4130
        %4152 = vst.msk [vmem:[#allocation3 + $0x8] sm:$0xff] %vm4121, %v4131
        %4153 = vst.msk [vmem:[#allocation3 + $0x10] sm:$0xff] %vm4121, %v4132
        %4154 = vst.msk [vmem:[#allocation3 + $0x18] sm:$0xff] %vm4121, %v4133
        %4155 = vst.msk [vmem:[#allocation3 + $0x20] sm:$0xff] %vm4121, %v4134
        %4156 = vst.msk [vmem:[#allocation3 + $0x28] sm:$0xff] %vm4121, %v4135
        %4157 = vst.msk [vmem:[#allocation3 + $0x30] sm:$0xff] %vm4121, %v4136
        %4158 = vst.msk [vmem:[#allocation3 + $0x38] sm:$0xff] %vm4121, %v4137
        %4159 = vst.msk [vmem:[#allocation3 + $0x40] sm:$0xff] %vm4121, %v4138
        %4160 = vst.msk [vmem:[#allocation3 + $0x48] sm:$0xff] %vm4121, %v4139
        %4161 = vst.msk [vmem:[#allocation3 + $0x50] sm:$0xff] %vm4121, %v4140
        %4162 = vst.msk [vmem:[#allocation3 + $0x58] sm:$0xff] %vm4121, %v4141
        %4163 = vst.msk [vmem:[#allocation3 + $0x60] sm:$0xff] %vm4121, %v4142
        %4164 = vst.msk [vmem:[#allocation3 + $0x68] sm:$0xff] %vm4121, %v4143
        %4165 = vst.msk [vmem:[#allocation3 + $0x70] sm:$0xff] %vm4121, %v4144
        %4166 = vst.msk [vmem:[#allocation3 + $0x78] sm:$0xff] %vm4121, %v4145
        %4167 = vst.msk [vmem:[#allocation3 + $0x80] sm:$0xff] %vm4121, %v4146
        %4168 = vst.msk [vmem:[#allocation3 + $0x88] sm:$0xff] %vm4121, %v4147
        %4169 = vst.msk [vmem:[#allocation3 + $0x90] sm:$0xff] %vm4121, %v4148
        %4170 = vst.msk [vmem:[#allocation3 + $0x98] sm:$0xff] %vm4121, %v4149
        %4171 = vst.msk [vmem:[#allocation3 + $0xa0] sm:$0xff] %vm4121, %v4150
        %s4172 = sand.u32 %s254, 1
        %s4173 = scalar_lea.sflag [#allocation5], %s4172
        %s4174 = sand.u32 %s254, 1
        %s4175 = smul.addr %s4174, 64
        %s4176 = scalar_lea.vmem [#allocation4], %s4175
        // Predicated region
        $region73: #{tpu_custom_call.1} parent=55 // pred_check
          %p4177 = pneg %p264
        $region74: #{tpu_custom_call.1} parent=55 // pred_check_branch
          %4179 = sbr.rel (%p4177) target = $region76
        $region75: #{tpu_custom_call.1} parent=55 // pred_region
          %s4180 = smul.u32 %s27, 4
          %s4181 = sadd.s32 %s4180, %s28
          %s4183 = ssub.s32 1024, 1024
          %4184 = vsyncadd %s4173, %s4183
          %s4185 = smul.addr %s4181, 8
          %s4186 = smul.addr %s4185, 128
          %s4187 = scalar_lea.hbm %s9, %s4186
          %s4188 = sshll.u32 %s4176, 4
          %s4189 = int_to_ptr.vmem [resolvable:$true] %s4188
          %4194 = dma.vmem_to_hbm [thread:$0]  %s4189, 1024, %s4187, %s4173, 128, 128, 8
        $region76: #{tpu_custom_call.1} parent=55 // pred_fallthru
          _
      $region56: #{tpu_custom_call.1} parent=5 // pred_fallthru
        _
      %p4195 = scmp.le.s32.totalorder 2, %s18
      // Predicated region
      $region77: #{tpu_custom_call.1} parent=5 // pred_check
        %p4196 = pneg %p4195
      $region78: #{tpu_custom_call.1} parent=5 // pred_check_branch
        %4198 = sbr.rel (%p4196) target = $region80
      $region79: #{tpu_custom_call.1} parent=5 // pred_region
        %s4199 = ssub.s32 %s18, 2
        // Predicated region
        $region81: #{tpu_custom_call.1} parent=79 // pred_check
          %p4200 = pneg %p270
        $region82: #{tpu_custom_call.1} parent=79 // pred_check_branch
          %4202 = sbr.rel (%p4200) target = $region84
        $region83: #{tpu_custom_call.1} parent=79 // pred_region
          %s4203 = sand.u32 %s255, 1
          %s4204 = scalar_lea.sflag [#allocation5], %s4203
          %s4205 = sand.u32 %s255, 1
          %s4206 = smul.addr %s4205, 64
          %s4207 = scalar_lea.vmem [#allocation4], %s4206
          %4208 = dma.done %s4204, 1024
        $region84: #{tpu_custom_call.1} parent=79 // pred_fallthru
          _
      $region80: #{tpu_custom_call.1} parent=5 // pred_fallthru
        _
    $region6: #{tpu_custom_call.1} parent=1 // loop_footer
      %s22 = sadd.s32 1, %s18
    $region7: #{tpu_custom_call.1} parent=1 // loop_footer_branch
      %17 = sbr.rel target = $region3
    $region8: #{tpu_custom_call.1} parent=1 // loop_exit
      _
    %4209 = vsyncpa [#allocation5], 1
    %s4210 = scalar_lea.sflag [#allocation5], 1
    %4211 = vsyncpa %s4210, 1

</llo_original>
